<compile_context>
chip_gen: v5e
topology: v5e:2x2
jax: 0.10.0
libtpu: 0.0.40
codegen_flags: <defaults>
</compile_context>

<pallas_src>
import functools
import math

import jax
import jax.numpy as jnp
from jax.experimental import pallas as pl
from jax.experimental.pallas import tpu as pltpu

LANE = 128
NEG_SLOPE = 0.01  # TODO(synk): BottleNeck source not provided; assuming
                  # LeakyReLU(0.01) activations inside the residual branch.


def _round_up(n, m=LANE):
    return ((n + m - 1) // m) * m


def _pad_last(x, target):
    c = x.shape[-1]
    if c == target:
        return x
    return jnp.pad(x, [(0, 0)] * (x.ndim - 1) + [(0, target - c)])


def _cparams():
    return pltpu.CompilerParams(
        dimension_semantics=("parallel",),       # shard batch across TCs (v7x)
        vmem_limit_bytes=32 * 1024 * 1024,       # safe on v5e/v6e/v7x
    )


# ----------------------------------------------------------------------------
# Pallas kernels
# ----------------------------------------------------------------------------
def _bottleneck_kernel(x_ref, w1_ref, b1_ref, w2_ref, b2_ref, a_ref, *rest,
                       H, W, has_shortcut):
    """Fused BottleNeck on one image:
       h  = LeakyReLU(conv3x3(x) + b1)
       h2 = LeakyReLU(conv3x3(h) + b2)
       s  = conv1x1(x) + bs     (if channel change) else x
       out = s + alpha * h2

    x_ref   : (1, H, W, Cin)   bf16
    w1_ref  : (9, Cin, Cop)    bf16
    b1_ref  : (1, Cop)         f32
    w2_ref  : (9, Cop, Cop)    bf16
    b2_ref  : (1, Cop)         f32
    a_ref   : (1, 1)           f32   (SMEM rezero alpha)
    [ws_ref : (1, Cin, Cop)    bf16]
    [bs_ref : (1, Cop)         f32 ]
    o_ref   : (1, H, W, Cop)   bf16
    xpad_ref: (H+2, W+2, Cin)  bf16  VMEM scratch (zero halo input)
    hpad_ref: (H+2, W+2, Cop)  bf16  VMEM scratch (zero halo intermediate)
    """
    if has_shortcut:
        ws_ref, bs_ref, o_ref, xpad_ref, hpad_ref = rest
    else:
        o_ref, xpad_ref, hpad_ref = rest
    cin = x_ref.shape[-1]
    cop = o_ref.shape[-1]

    # Build zero-halo copy of the input tile in VMEM (no HBM pad pass).
    xpad_ref[...] = jnp.zeros_like(xpad_ref)
    xpad_ref[1:H + 1, 1:W + 1, :] = x_ref[0]

    # conv1: 9 unrolled taps -> MXU, f32 accumulation, bias + LeakyReLU.
    acc = jnp.zeros((H * W, cop), jnp.float32)
    for t in range(9):
        di, dj = divmod(t, 3)
        tap = xpad_ref[di:di + H, dj:dj + W, :]
        acc = acc + jnp.dot(tap.reshape(H * W, cin), w1_ref[t],
                            preferred_element_type=jnp.float32)
    acc = acc + b1_ref[...]
    acc = jnp.where(acc >= 0.0, acc, NEG_SLOPE * acc)

    # Intermediate stays in VMEM (zero halo) and feeds conv2 directly.
    hpad_ref[...] = jnp.zeros_like(hpad_ref)
    hpad_ref[1:H + 1, 1:W + 1, :] = acc.reshape(H, W, cop).astype(hpad_ref.dtype)

    # conv2: bias + LeakyReLU.
    acc2 = jnp.zeros((H * W, cop), jnp.float32)
    for t in range(9):
        di, dj = divmod(t, 3)
        tap = hpad_ref[di:di + H, dj:dj + W, :]
        acc2 = acc2 + jnp.dot(tap.reshape(H * W, cop), w2_ref[t],
                              preferred_element_type=jnp.float32)
    acc2 = acc2 + b2_ref[...]
    acc2 = jnp.where(acc2 >= 0.0, acc2, NEG_SLOPE * acc2)

    # Shortcut (identity or fused 1x1 conv) + rezero residual.
    x_center = x_ref[0].reshape(H * W, cin)
    if has_shortcut:
        s = jnp.dot(x_center, ws_ref[0],
                    preferred_element_type=jnp.float32) + bs_ref[...]
    else:
        s = x_center.astype(jnp.float32)
    out = s + a_ref[0, 0] * acc2
    o_ref[...] = out.reshape(o_ref.shape).astype(o_ref.dtype)


def _taps_matmul_kernel(t_ref, w_ref, b_ref, o_ref, *, act):
    """o = act(sum_t taps[t] @ w[t] + b) for one image (stride-2 / 1x1 convs).

    t_ref : (KK, 1, M, Cp)  bf16
    w_ref : (KK, Cp, Cop)   bf16
    b_ref : (1, Cop)        f32
    o_ref : (1, M, Cop)     bf16
    """
    kk = t_ref.shape[0]
    m = t_ref.shape[2]
    cop = o_ref.shape[-1]
    acc = jnp.zeros((m, cop), jnp.float32)
    for t in range(kk):
        acc = acc + jnp.dot(t_ref[t, 0], w_ref[t],
                            preferred_element_type=jnp.float32)
    acc = acc + b_ref[...]
    if act == "leaky_relu":
        acc = jnp.where(acc >= 0.0, acc, NEG_SLOPE * acc)
    o_ref[...] = acc.reshape(o_ref.shape).astype(o_ref.dtype)


# ----------------------------------------------------------------------------
# Wrappers
# ----------------------------------------------------------------------------
def bottleneck_fwd(prep, x):
    """One fused Pallas call per BottleNeck (grid over batch)."""
    B, H, W, Cin = x.shape
    Cop = prep["w1"].shape[-1]
    Hp, Wp = H + 2, W + 2
    has_shortcut = "ws" in prep

    kernel = functools.partial(_bottleneck_kernel, H=H, W=W,
                               has_shortcut=has_shortcut)
    in_specs = [
        pl.BlockSpec((1, H, W, Cin), lambda n: (n, 0, 0, 0)),
        pl.BlockSpec((9, Cin, Cop), lambda n: (0, 0, 0)),
        pl.BlockSpec((1, Cop), lambda n: (0, 0)),
        pl.BlockSpec((9, Cop, Cop), lambda n: (0, 0, 0)),
        pl.BlockSpec((1, Cop), lambda n: (0, 0)),
        pl.BlockSpec(memory_space=pltpu.MemorySpace.SMEM),
    ]
    args = [x, prep["w1"], prep["b1"], prep["w2"], prep["b2"], prep["alpha"]]
    flops = 2 * B * H * W * 9 * (Cin * Cop + Cop * Cop)
    bytes_accessed = (x.size * 2 + prep["w1"].size * 2 + prep["w2"].size * 2
                      + 2 * Cop * 4 + B * H * W * Cop * 2)
    if has_shortcut:
        in_specs += [pl.BlockSpec((1, Cin, Cop), lambda n: (0, 0, 0)),
                     pl.BlockSpec((1, Cop), lambda n: (0, 0))]
        args += [prep["ws"], prep["bs"]]
        flops += 2 * B * H * W * Cin * Cop
        bytes_accessed += prep["ws"].size * 2 + Cop * 4

    return pl.pallas_call(
        kernel,
        out_shape=jax.ShapeDtypeStruct((B, H, W, Cop), jnp.bfloat16),
        grid=(B,),
        in_specs=in_specs,
        out_specs=pl.BlockSpec((1, H, W, Cop), lambda n: (n, 0, 0, 0)),
        scratch_shapes=[pltpu.VMEM((Hp, Wp, Cin), jnp.bfloat16),
                        pltpu.VMEM((Hp, Wp, Cop), jnp.bfloat16)],
        compiler_params=_cparams(),
        cost_estimate=pl.CostEstimate(flops=flops, transcendentals=0,
                                      bytes_accessed=bytes_accessed),
    )(*args)


def _conv_taps(taps, w_taps, bias, act=None):
    KK, B, M, Cp = taps.shape
    Cop = w_taps.shape[-1]
    kernel = functools.partial(_taps_matmul_kernel, act=act)
    flops = 2 * B * M * KK * Cp * Cop
    bytes_accessed = taps.size * 2 + w_taps.size * 2 + bias.size * 4 + B * M * Cop * 2
    return pl.pallas_call(
        kernel,
        out_shape=jax.ShapeDtypeStruct((B, M, Cop), jnp.bfloat16),
        grid=(B,),
        in_specs=[
            pl.BlockSpec((KK, 1, M, Cp), lambda n: (0, n, 0, 0)),
            pl.BlockSpec((KK, Cp, Cop), lambda n: (0, 0, 0)),
            pl.BlockSpec((1, Cop), lambda n: (0, 0)),
        ],
        out_specs=pl.BlockSpec((1, M, Cop), lambda n: (n, 0, 0)),
        compiler_params=_cparams(),
        cost_estimate=pl.CostEstimate(flops=flops, transcendentals=0,
                                      bytes_accessed=bytes_accessed),
    )(taps, w_taps, bias)


def conv3x3_s2(x, w9, bias, act=None):
    """3x3, stride 2, padding 1 (the single 'down' conv). Taps extracted at
    output (half) resolution in plain JAX, then one fused MXU kernel."""
    B, H, W, Cp = x.shape
    Ho, Wo = H // 2, W // 2
    xp = jnp.pad(x, ((0, 0), (1, 1), (1, 1), (0, 0)))
    taps = []
    for i in range(3):
        for j in range(3):
            taps.append(
                xp[:, i:i + 2 * Ho - 1:2, j:j + 2 * Wo - 1:2, :]
                .reshape(B, Ho * Wo, Cp))
    taps = jnp.stack(taps, axis=0)                  # (9, B, Ho*Wo, Cp)
    out = _conv_taps(taps, w9, bias, act=act)
    return out.reshape(B, Ho, Wo, -1)


def conv1x1(x, w1, bias, act=None):
    B, H, W, Cp = x.shape
    taps = x.reshape(1, B, H * W, Cp)
    out = _conv_taps(taps, w1, bias, act=act)
    return out.reshape(B, H, W, -1)


def upsample_nearest2x(x):
    # UpsamplingNearest2d(scale_factor=2): each pixel replicated 2x2.
    B, H, W, C = x.shape
    x = jnp.broadcast_to(x[:, :, None, :, None, :], (B, H, 2, W, 2, C))
    return x.reshape(B, 2 * H, 2 * W, C)


# ----------------------------------------------------------------------------
# Parameter init (deterministic, PyTorch-Conv2d-style uniform bounds)
# ----------------------------------------------------------------------------
def init_conv(key, cin, cout, k):
    wk, bk = jax.random.split(key)
    bound = 1.0 / math.sqrt(cin * k * k)
    w = jax.random.uniform(wk, (k, k, cin, cout), jnp.float32, -bound, bound)
    b = jax.random.uniform(bk, (cout,), jnp.float32, -bound, bound)
    return {"w": w, "b": b}


# TODO(synk): BottleNeck is not defined in the provided source; assuming the
# common rezero residual block: conv3x3 -> LeakyReLU -> conv3x3 -> LeakyReLU,
# 1x1 shortcut conv when channel counts differ, out = shortcut + alpha*branch
# with alpha = 0 (learnable) when rezero else 1.
def init_bottleneck(key, cin, cout, rezero):
    k1, k2, k3 = jax.random.split(key, 3)
    p = {
        "conv1": init_conv(k1, cin, cout, 3),
        "conv2": init_conv(k2, cout, cout, 3),
        "alpha": (jnp.zeros((), jnp.float32) if rezero
                  else jnp.ones((), jnp.float32)),
    }
    if cin != cout:
        p["shortcut"] = init_conv(k3, cin, cout, 1)
    return p


def init_stacked(key, cin, cout, rezero):
    k1, k2, k3 = jax.random.split(key, 3)
    return [init_bottleneck(k1, cin, cout, rezero),
            init_bottleneck(k2, cout, cout, rezero),
            init_bottleneck(k3, cout, cout, rezero)]


def init_unet(key, in_channel, mid_channel, rezero):
    k_down, k_sb1, k_mid, k_sb2 = jax.random.split(key, 4)
    return {
        "down": init_conv(k_down, in_channel, mid_channel, 3),          # Conv2d(in, mid, 3, 2, 1)
        "sb1": init_stacked(k_sb1, mid_channel, mid_channel, rezero),   # basic_block(mid, mid)
        # TODO(synk): mid_module is a constructor argument in the PyTorch code;
        # using a 1x1 conv mid_channel -> 2*mid_channel as a stand-in so the
        # channel accounting of the surrounding Sequential is preserved.
        "mid": init_conv(k_mid, mid_channel, 2 * mid_channel, 1),
        "sb2": init_stacked(k_sb2, 2 * mid_channel, in_channel, rezero),  # basic_block(2*mid, in)
    }


# ----------------------------------------------------------------------------
# One-time weight packing (outside the jitted forward)
# ----------------------------------------------------------------------------
def _prep_conv(p):
    """HWIO weights -> (k*k, Cin_pad, Cout_pad) bf16; bias -> (1, Cout_pad) f32."""
    kh, kw, cin, cout = p["w"].shape
    cin_p, cout_p = _round_up(cin), _round_up(cout)
    w = p["w"].reshape(kh * kw, cin, cout)
    w = jnp.pad(w, ((0, 0), (0, cin_p - cin), (0, cout_p - cout))).astype(jnp.bfloat16)
    b = jnp.pad(p["b"], (0, cout_p - cout)).reshape(1, cout_p).astype(jnp.float32)
    return w, b


def prepare_bottleneck(p):
    w1, b1 = _prep_conv(p["conv1"])
    w2, b2 = _prep_conv(p["conv2"])
    out = {"w1": w1, "b1": b1, "w2": w2, "b2": b2,
           "alpha": jnp.asarray(p["alpha"], jnp.float32).reshape(1, 1)}
    if "shortcut" in p:
        ws, bs = _prep_conv(p["shortcut"])
        out["ws"], out["bs"] = ws, bs
    return out


def prepare_unet(params):
    wd, bd = _prep_conv(params["down"])
    wm, bm = _prep_conv(params["mid"])
    return {
        "down_w": wd, "down_b": bd,
        "sb1": [prepare_bottleneck(p) for p in params["sb1"]],
        "mid_w": wm, "mid_b": bm,
        "sb2": [prepare_bottleneck(p) for p in params["sb2"]],
    }


# ----------------------------------------------------------------------------
# Forward
# ----------------------------------------------------------------------------
@jax.jit
def unet_forward(prep, x_nchw):
    # NCHW (PyTorch) -> NHWC (kernel layout)
    x = jnp.transpose(x_nchw, (0, 2, 3, 1)).astype(jnp.float32)
    B, H, W, Cin = x.shape

    # channel-pad to 128 lanes, bf16 for the MXU kernels
    xk = _pad_last(x, _round_up(Cin)).astype(jnp.bfloat16)

    h = conv3x3_s2(xk, prep["down_w"], prep["down_b"], act=None)  # Conv2d(in, mid, 3, 2, 1)
    for p in prep["sb1"]:                                         # basic_block(mid, mid)
        h = bottleneck_fwd(p, h)
    h = conv1x1(h, prep["mid_w"], prep["mid_b"], act=None)        # mid_module stand-in
    for p in prep["sb2"]:                                         # basic_block(2*mid, in)
        h = bottleneck_fwd(p, h)

    h = h[..., :Cin].astype(jnp.float32)               # drop lane padding
    h = upsample_nearest2x(h)                          # UpsamplingNearest2d(2)

    y = jnp.concatenate([x, h], axis=-1)               # torch.cat(..., dim=1)
    return jnp.transpose(y, (0, 3, 1, 2))              # back to NCHW


# ----------------------------------------------------------------------------
if __name__ == "__main__":
    B, in_channel, mid_channel, H, W = 2, 4, 8, 16, 16
    rezero = False

    key = jax.random.PRNGKey(0)
    xkey, pkey = jax.random.split(key)
    x_nchw = jax.random.normal(xkey, (B, in_channel, H, W), jnp.float32)
    params = init_unet(pkey, in_channel, mid_channel, rezero)
    prep = prepare_unet(params)        # one-time weight packing

    y = unet_forward(prep, x_nchw)
    y = jax.block_until_ready(y)

    assert y.shape == (B, 2 * in_channel, H, W), y.shape
    assert bool(jnp.isfinite(y).all())
    print("KERNEL_OK")
</pallas_src>

<mosaic_0001>
module attributes {stable_mosaic.version = 11 : i64} {
  func.func @_taps_matmul_kernel(%arg0: i32, %arg1: memref<1x1x64x128xbf16, #tpu.memory_space<vmem>>, %arg2: memref<1x128x128xbf16, #tpu.memory_space<vmem>>, %arg3: memref<1x128xf32, #tpu.memory_space<vmem>>, %arg4: memref<1x64x128xbf16, #tpu.memory_space<vmem>>) attributes {dimension_semantics = [#tpu.dimension_semantics<parallel>], iteration_bounds = array<i64: 2>, scalar_prefetch = 0 : i64, scratch_operands = 0 : i64, tpu.core_type = #tpu.core_type<tc>, window_params = [{transform_indices = @transform_0, window_bounds = array<i64: 1, 1, 64, 128>}, {pipeline_mode = #tpu.pipeline_mode<synchronous>, transform_indices = @transform_1, window_bounds = array<i64: 1, 128, 128>}, {pipeline_mode = #tpu.pipeline_mode<synchronous>, transform_indices = @transform_2, window_bounds = array<i64: 1, 128>}, {transform_indices = @transform_3, window_bounds = array<i64: 1, 64, 128>}]} {
    %cst = arith.constant 0.000000e+00 : f32
    %0 = vector.broadcast %cst : f32 to vector<64x128xf32>
    %c0 = arith.constant 0 : index
    %c0_0 = arith.constant 0 : index
    %c0_1 = arith.constant 0 : index
    %c0_2 = arith.constant 0 : index
    %1 = vector.load %arg1[%c0, %c0_0, %c0_1, %c0_2] : memref<1x1x64x128xbf16, #tpu.memory_space<vmem>>, vector<1x1x64x128xbf16>
    %2 = vector.shape_cast %1 : vector<1x1x64x128xbf16> to vector<64x128xbf16>
    %c0_3 = arith.constant 0 : index
    %c0_4 = arith.constant 0 : index
    %c0_5 = arith.constant 0 : index
    %3 = vector.load %arg2[%c0_3, %c0_4, %c0_5] : memref<1x128x128xbf16, #tpu.memory_space<vmem>>, vector<1x128x128xbf16>
    %4 = vector.shape_cast %3 : vector<1x128x128xbf16> to vector<128x128xbf16>
    %cst_6 = arith.constant dense<0.000000e+00> : vector<64x128xf32>
    %5 = tpu.matmul %2, %4, %cst_6 {dimension_numbers = #tpu.dot_dimension_numbers<[1], [0], [0], [1], [0, 0, 1, 1], [], []>} : vector<64x128xbf16>, vector<128x128xbf16>, vector<64x128xf32> -> vector<64x128xf32>
    %6 = arith.addf %0, %5 : vector<64x128xf32>
    %c0_7 = arith.constant 0 : index
    %c0_8 = arith.constant 0 : index
    %7 = vector.load %arg3[%c0_7, %c0_8] : memref<1x128xf32, #tpu.memory_space<vmem>>, vector<1x128xf32>
    %8 = vector.broadcast %7 : vector<1x128xf32> to vector<64x128xf32>
    %9 = arith.addf %6, %8 : vector<64x128xf32>
    %10 = vector.shape_cast %9 : vector<64x128xf32> to vector<1x64x128xf32>
    %11 = arith.truncf %10 : vector<1x64x128xf32> to vector<1x64x128xbf16>
    %c0_9 = arith.constant 0 : index
    %c0_10 = arith.constant 0 : index
    %c0_11 = arith.constant 0 : index
    %12 = vector.load %arg4[%c0_9, %c0_10, %c0_11] : memref<1x64x128xbf16, #tpu.memory_space<vmem>>, vector<1x64x128xbf16>
    tpu.vector_store %arg4[%c0_9, %c0_10, %c0_11], %11 {strides = array<i32>} : memref<1x64x128xbf16, #tpu.memory_space<vmem>>, vector<1x64x128xbf16>,
    return
  }
  func.func @transform_0(%arg0: i32) -> (i32, i32, i32, i32) {
    %c0_i32 = arith.constant 0 : i32
    %c0_i32_0 = arith.constant 0 : i32
    %c0_i32_1 = arith.constant 0 : i32
    %c0_i32_2 = arith.constant 0 : i32
    return %c0_i32, %arg0, %c0_i32_0, %c0_i32_1 : i32, i32, i32, i32
  }
  func.func @transform_1(%arg0: i32) -> (i32, i32, i32) {
    %c0_i32 = arith.constant 0 : i32
    %c0_i32_0 = arith.constant 0 : i32
    %c0_i32_1 = arith.constant 0 : i32
    %c0_i32_2 = arith.constant 0 : i32
    return %c0_i32, %c0_i32_0, %c0_i32_1 : i32, i32, i32
  }
  func.func @transform_2(%arg0: i32) -> (i32, i32) {
    %c0_i32 = arith.constant 0 : i32
    %c0_i32_0 = arith.constant 0 : i32
    %c0_i32_1 = arith.constant 0 : i32
    return %c0_i32, %c0_i32_0 : i32, i32
  }
  func.func @transform_3(%arg0: i32) -> (i32, i32, i32) {
    %c0_i32 = arith.constant 0 : i32
    %c0_i32_0 = arith.constant 0 : i32
    %c0_i32_1 = arith.constant 0 : i32
    return %arg0, %c0_i32, %c0_i32_0 : i32, i32, i32
  }
}

module attributes {stable_mosaic.version = 11 : i64} {
  func.func @_bottleneck_kernel(%arg0: i32, %arg1: memref<1x8x8x128xbf16, #tpu.memory_space<vmem>>, %arg2: memref<9x128x128xbf16, #tpu.memory_space<vmem>>, %arg3: memref<1x128xf32, #tpu.memory_space<vmem>>, %arg4: memref<9x128x128xbf16, #tpu.memory_space<vmem>>, %arg5: memref<1x128xf32, #tpu.memory_space<vmem>>, %arg6: memref<1x1xf32, #tpu.memory_space<smem>>, %arg7: memref<1x8x8x128xbf16, #tpu.memory_space<vmem>>, %arg8: memref<10x10x128xbf16, #tpu.memory_space<vmem>>, %arg9: memref<10x10x128xbf16, #tpu.memory_space<vmem>>) attributes {dimension_semantics = [#tpu.dimension_semantics<parallel>], iteration_bounds = array<i64: 2>, scalar_prefetch = 0 : i64, scratch_operands = 2 : i64, tpu.core_type = #tpu.core_type<tc>, window_params = [{transform_indices = @transform_0, window_bounds = array<i64: 1, 8, 8, 128>}, {pipeline_mode = #tpu.pipeline_mode<synchronous>, transform_indices = @transform_1, window_bounds = array<i64: 9, 128, 128>}, {pipeline_mode = #tpu.pipeline_mode<synchronous>, transform_indices = @transform_2, window_bounds = array<i64: 1, 128>}, {pipeline_mode = #tpu.pipeline_mode<synchronous>, transform_indices = @transform_3, window_bounds = array<i64: 9, 128, 128>}, {pipeline_mode = #tpu.pipeline_mode<synchronous>, transform_indices = @transform_4, window_bounds = array<i64: 1, 128>}, {transform_indices = @transform_5, window_bounds = array<i64: 1, 1>}, {transform_indices = @transform_6, window_bounds = array<i64: 1, 8, 8, 128>}]} {
    %cst = arith.constant 0.000000e+00 : bf16
    %0 = vector.broadcast %cst : bf16 to vector<10x10x128xbf16>
    %c0 = arith.constant 0 : index
    %c0_0 = arith.constant 0 : index
    %c0_1 = arith.constant 0 : index
    %1 = vector.load %arg8[%c0, %c0_0, %c0_1] : memref<10x10x128xbf16, #tpu.memory_space<vmem>>, vector<10x10x128xbf16>
    tpu.vector_store %arg8[%c0, %c0_0, %c0_1], %0 {strides = array<i32>} : memref<10x10x128xbf16, #tpu.memory_space<vmem>>, vector<10x10x128xbf16>,
    %c0_2 = arith.constant 0 : index
    %c0_3 = arith.constant 0 : index
    %c0_4 = arith.constant 0 : index
    %c0_5 = arith.constant 0 : index
    %2 = vector.load %arg1[%c0_2, %c0_3, %c0_4, %c0_5] : memref<1x8x8x128xbf16, #tpu.memory_space<vmem>>, vector<1x8x8x128xbf16>
    %3 = vector.shape_cast %2 : vector<1x8x8x128xbf16> to vector<8x8x128xbf16>
    %c1 = arith.constant 1 : index
    %c1_6 = arith.constant 1 : index
    %c0_7 = arith.constant 0 : index
    %4 = vector.load %arg8[%c1, %c1_6, %c0_7] : memref<10x10x128xbf16, #tpu.memory_space<vmem>>, vector<8x8x128xbf16>
    tpu.vector_store %arg8[%c1, %c1_6, %c0_7], %3 {strides = array<i32>} : memref<10x10x128xbf16, #tpu.memory_space<vmem>>, vector<8x8x128xbf16>,
    %cst_8 = arith.constant 0.000000e+00 : f32
    %5 = vector.broadcast %cst_8 : f32 to vector<64x128xf32>
    %c0_9 = arith.constant 0 : index
    %c0_10 = arith.constant 0 : index
    %c0_11 = arith.constant 0 : index
    %6 = vector.load %arg8[%c0_9, %c0_10, %c0_11] : memref<10x10x128xbf16, #tpu.memory_space<vmem>>, vector<8x8x128xbf16>
    %7 = vector.shape_cast %6 : vector<8x8x128xbf16> to vector<64x128xbf16>
    %c0_12 = arith.constant 0 : index
    %c0_13 = arith.constant 0 : index
    %c0_14 = arith.constant 0 : index
    %8 = vector.load %arg2[%c0_12, %c0_13, %c0_14] : memref<9x128x128xbf16, #tpu.memory_space<vmem>>, vector<1x128x128xbf16>
    %9 = vector.shape_cast %8 : vector<1x128x128xbf16> to vector<128x128xbf16>
    %cst_15 = arith.constant dense<0.000000e+00> : vector<64x128xf32>
    %10 = tpu.matmul %7, %9, %cst_15 {dimension_numbers = #tpu.dot_dimension_numbers<[1], [0], [0], [1], [0, 0, 1, 1], [], []>} : vector<64x128xbf16>, vector<128x128xbf16>, vector<64x128xf32> -> vector<64x128xf32>
    %11 = arith.addf %5, %10 : vector<64x128xf32>
    %c0_16 = arith.constant 0 : index
    %c1_17 = arith.constant 1 : index
    %c0_18 = arith.constant 0 : index
    %12 = vector.load %arg8[%c0_16, %c1_17, %c0_18] : memref<10x10x128xbf16, #tpu.memory_space<vmem>>, vector<8x8x128xbf16>
    %13 = vector.shape_cast %12 : vector<8x8x128xbf16> to vector<64x128xbf16>
    %c1_19 = arith.constant 1 : index
    %c0_20 = arith.constant 0 : index
    %c0_21 = arith.constant 0 : index
    %14 = vector.load %arg2[%c1_19, %c0_20, %c0_21] : memref<9x128x128xbf16, #tpu.memory_space<vmem>>, vector<1x128x128xbf16>
    %15 = vector.shape_cast %14 : vector<1x128x128xbf16> to vector<128x128xbf16>
    %cst_22 = arith.constant dense<0.000000e+00> : vector<64x128xf32>
    %16 = tpu.matmul %13, %15, %cst_22 {dimension_numbers = #tpu.dot_dimension_numbers<[1], [0], [0], [1], [0, 0, 1, 1], [], []>} : vector<64x128xbf16>, vector<128x128xbf16>, vector<64x128xf32> -> vector<64x128xf32>
    %17 = arith.addf %11, %16 : vector<64x128xf32>
    %c0_23 = arith.constant 0 : index
    %c2 = arith.constant 2 : index
    %c0_24 = arith.constant 0 : index
    %18 = vector.load %arg8[%c0_23, %c2, %c0_24] : memref<10x10x128xbf16, #tpu.memory_space<vmem>>, vector<8x8x128xbf16>
    %19 = vector.shape_cast %18 : vector<8x8x128xbf16> to vector<64x128xbf16>
    %c2_25 = arith.constant 2 : index
    %c0_26 = arith.constant 0 : index
    %c0_27 = arith.constant 0 : index
    %20 = vector.load %arg2[%c2_25, %c0_26, %c0_27] : memref<9x128x128xbf16, #tpu.memory_space<vmem>>, vector<1x128x128xbf16>
    %21 = vector.shape_cast %20 : vector<1x128x128xbf16> to vector<128x128xbf16>
    %cst_28 = arith.constant dense<0.000000e+00> : vector<64x128xf32>
    %22 = tpu.matmul %19, %21, %cst_28 {dimension_numbers = #tpu.dot_dimension_numbers<[1], [0], [0], [1], [0, 0, 1, 1], [], []>} : vector<64x128xbf16>, vector<128x128xbf16>, vector<64x128xf32> -> vector<64x128xf32>
    %23 = arith.addf %17, %22 : vector<64x128xf32>
    %c1_29 = arith.constant 1 : index
    %c0_30 = arith.constant 0 : index
    %c0_31 = arith.constant 0 : index
    %24 = vector.load %arg8[%c1_29, %c0_30, %c0_31] : memref<10x10x128xbf16, #tpu.memory_space<vmem>>, vector<8x8x128xbf16>
    %25 = vector.shape_cast %24 : vector<8x8x128xbf16> to vector<64x128xbf16>
    %c3 = arith.constant 3 : index
    %c0_32 = arith.constant 0 : index
    %c0_33 = arith.constant 0 : index
    %26 = vector.load %arg2[%c3, %c0_32, %c0_33] : memref<9x128x128xbf16, #tpu.memory_space<vmem>>, vector<1x128x128xbf16>
    %27 = vector.shape_cast %26 : vector<1x128x128xbf16> to vector<128x128xbf16>
    %cst_34 = arith.constant dense<0.000000e+00> : vector<64x128xf32>
    %28 = tpu.matmul %25, %27, %cst_34 {dimension_numbers = #tpu.dot_dimension_numbers<[1], [0], [0], [1], [0, 0, 1, 1], [], []>} : vector<64x128xbf16>, vector<128x128xbf16>, vector<64x128xf32> -> vector<64x128xf32>
    %29 = arith.addf %23, %28 : vector<64x128xf32>
    %c1_35 = arith.constant 1 : index
    %c1_36 = arith.constant 1 : index
    %c0_37 = arith.constant 0 : index
    %30 = vector.load %arg8[%c1_35, %c1_36, %c0_37] : memref<10x10x128xbf16, #tpu.memory_space<vmem>>, vector<8x8x128xbf16>
    %31 = vector.shape_cast %30 : vector<8x8x128xbf16> to vector<64x128xbf16>
    %c4 = arith.constant 4 : index
    %c0_38 = arith.constant 0 : index
    %c0_39 = arith.constant 0 : index
    %32 = vector.load %arg2[%c4, %c0_38, %c0_39] : memref<9x128x128xbf16, #tpu.memory_space<vmem>>, vector<1x128x128xbf16>
    %33 = vector.shape_cast %32 : vector<1x128x128xbf16> to vector<128x128xbf16>
    %cst_40 = arith.constant dense<0.000000e+00> : vector<64x128xf32>
    %34 = tpu.matmul %31, %33, %cst_40 {dimension_numbers = #tpu.dot_dimension_numbers<[1], [0], [0], [1], [0, 0, 1, 1], [], []>} : vector<64x128xbf16>, vector<128x128xbf16>, vector<64x128xf32> -> vector<64x128xf32>
    %35 = arith.addf %29, %34 : vector<64x128xf32>
    %c1_41 = arith.constant 1 : index
    %c2_42 = arith.constant 2 : index
    %c0_43 = arith.constant 0 : index
    %36 = vector.load %arg8[%c1_41, %c2_42, %c0_43] : memref<10x10x128xbf16, #tpu.memory_space<vmem>>, vector<8x8x128xbf16>
    %37 = vector.shape_cast %36 : vector<8x8x128xbf16> to vector<64x128xbf16>
    %c5 = arith.constant 5 : index
    %c0_44 = arith.constant 0 : index
    %c0_45 = arith.constant 0 : index
    %38 = vector.load %arg2[%c5, %c0_44, %c0_45] : memref<9x128x128xbf16, #tpu.memory_space<vmem>>, vector<1x128x128xbf16>
    %39 = vector.shape_cast %38 : vector<1x128x128xbf16> to vector<128x128xbf16>
    %cst_46 = arith.constant dense<0.000000e+00> : vector<64x128xf32>
    %40 = tpu.matmul %37, %39, %cst_46 {dimension_numbers = #tpu.dot_dimension_numbers<[1], [0], [0], [1], [0, 0, 1, 1], [], []>} : vector<64x128xbf16>, vector<128x128xbf16>, vector<64x128xf32> -> vector<64x128xf32>
    %41 = arith.addf %35, %40 : vector<64x128xf32>
    %c2_47 = arith.constant 2 : index
    %c0_48 = arith.constant 0 : index
    %c0_49 = arith.constant 0 : index
    %42 = vector.load %arg8[%c2_47, %c0_48, %c0_49] : memref<10x10x128xbf16, #tpu.memory_space<vmem>>, vector<8x8x128xbf16>
    %43 = vector.shape_cast %42 : vector<8x8x128xbf16> to vector<64x128xbf16>
    %c6 = arith.constant 6 : index
    %c0_50 = arith.constant 0 : index
    %c0_51 = arith.constant 0 : index
    %44 = vector.load %arg2[%c6, %c0_50, %c0_51] : memref<9x128x128xbf16, #tpu.memory_space<vmem>>, vector<1x128x128xbf16>
    %45 = vector.shape_cast %44 : vector<1x128x128xbf16> to vector<128x128xbf16>
    %cst_52 = arith.constant dense<0.000000e+00> : vector<64x128xf32>
    %46 = tpu.matmul %43, %45, %cst_52 {dimension_numbers = #tpu.dot_dimension_numbers<[1], [0], [0], [1], [0, 0, 1, 1], [], []>} : vector<64x128xbf16>, vector<128x128xbf16>, vector<64x128xf32> -> vector<64x128xf32>
    %47 = arith.addf %41, %46 : vector<64x128xf32>
    %c2_53 = arith.constant 2 : index
    %c1_54 = arith.constant 1 : index
    %c0_55 = arith.constant 0 : index
    %48 = vector.load %arg8[%c2_53, %c1_54, %c0_55] : memref<10x10x128xbf16, #tpu.memory_space<vmem>>, vector<8x8x128xbf16>
    %49 = vector.shape_cast %48 : vector<8x8x128xbf16> to vector<64x128xbf16>
    %c7 = arith.constant 7 : index
    %c0_56 = arith.constant 0 : index
    %c0_57 = arith.constant 0 : index
    %50 = vector.load %arg2[%c7, %c0_56, %c0_57] : memref<9x128x128xbf16, #tpu.memory_space<vmem>>, vector<1x128x128xbf16>
    %51 = vector.shape_cast %50 : vector<1x128x128xbf16> to vector<128x128xbf16>
    %cst_58 = arith.constant dense<0.000000e+00> : vector<64x128xf32>
    %52 = tpu.matmul %49, %51, %cst_58 {dimension_numbers = #tpu.dot_dimension_numbers<[1], [0], [0], [1], [0, 0, 1, 1], [], []>} : vector<64x128xbf16>, vector<128x128xbf16>, vector<64x128xf32> -> vector<64x128xf32>
    %53 = arith.addf %47, %52 : vector<64x128xf32>
    %c2_59 = arith.constant 2 : index
    %c2_60 = arith.constant 2 : index
    %c0_61 = arith.constant 0 : index
    %54 = vector.load %arg8[%c2_59, %c2_60, %c0_61] : memref<10x10x128xbf16, #tpu.memory_space<vmem>>, vector<8x8x128xbf16>
    %55 = vector.shape_cast %54 : vector<8x8x128xbf16> to vector<64x128xbf16>
    %c8 = arith.constant 8 : index
    %c0_62 = arith.constant 0 : index
    %c0_63 = arith.constant 0 : index
    %56 = vector.load %arg2[%c8, %c0_62, %c0_63] : memref<9x128x128xbf16, #tpu.memory_space<vmem>>, vector<1x128x128xbf16>
    %57 = vector.shape_cast %56 : vector<1x128x128xbf16> to vector<128x128xbf16>
    %cst_64 = arith.constant dense<0.000000e+00> : vector<64x128xf32>
    %58 = tpu.matmul %55, %57, %cst_64 {dimension_numbers = #tpu.dot_dimension_numbers<[1], [0], [0], [1], [0, 0, 1, 1], [], []>} : vector<64x128xbf16>, vector<128x128xbf16>, vector<64x128xf32> -> vector<64x128xf32>
    %59 = arith.addf %53, %58 : vector<64x128xf32>
    %c0_65 = arith.constant 0 : index
    %c0_66 = arith.constant 0 : index
    %60 = vector.load %arg3[%c0_65, %c0_66] : memref<1x128xf32, #tpu.memory_space<vmem>>, vector<1x128xf32>
    %61 = vector.broadcast %60 : vector<1x128xf32> to vector<64x128xf32>
    %62 = arith.addf %59, %61 : vector<64x128xf32>
    %cst_67 = arith.constant 0.000000e+00 : f32
    %63 = vector.broadcast %cst_67 : f32 to vector<64x128xf32>
    %64 = arith.cmpf oge, %62, %63 : vector<64x128xf32>
    %cst_68 = arith.constant 0.00999999977 : f32
    %65 = vector.broadcast %cst_68 : f32 to vector<64x128xf32>
    %66 = arith.mulf %65, %62 : vector<64x128xf32>
    %67 = arith.select %64, %62, %66 : vector<64x128xi1>, vector<64x128xf32>
    %cst_69 = arith.constant 0.000000e+00 : bf16
    %68 = vector.broadcast %cst_69 : bf16 to vector<10x10x128xbf16>
    %c0_70 = arith.constant 0 : index
    %c0_71 = arith.constant 0 : index
    %c0_72 = arith.constant 0 : index
    %69 = vector.load %arg9[%c0_70, %c0_71, %c0_72] : memref<10x10x128xbf16, #tpu.memory_space<vmem>>, vector<10x10x128xbf16>
    tpu.vector_store %arg9[%c0_70, %c0_71, %c0_72], %68 {strides = array<i32>} : memref<10x10x128xbf16, #tpu.memory_space<vmem>>, vector<10x10x128xbf16>,
    %70 = vector.shape_cast %67 : vector<64x128xf32> to vector<8x8x128xf32>
    %71 = arith.truncf %70 : vector<8x8x128xf32> to vector<8x8x128xbf16>
    %c1_73 = arith.constant 1 : index
    %c1_74 = arith.constant 1 : index
    %c0_75 = arith.constant 0 : index
    %72 = vector.load %arg9[%c1_73, %c1_74, %c0_75] : memref<10x10x128xbf16, #tpu.memory_space<vmem>>, vector<8x8x128xbf16>
    tpu.vector_store %arg9[%c1_73, %c1_74, %c0_75], %71 {strides = array<i32>} : memref<10x10x128xbf16, #tpu.memory_space<vmem>>, vector<8x8x128xbf16>,
    %cst_76 = arith.constant 0.000000e+00 : f32
    %73 = vector.broadcast %cst_76 : f32 to vector<64x128xf32>
    %c0_77 = arith.constant 0 : index
    %c0_78 = arith.constant 0 : index
    %c0_79 = arith.constant 0 : index
    %74 = vector.load %arg9[%c0_77, %c0_78, %c0_79] : memref<10x10x128xbf16, #tpu.memory_space<vmem>>, vector<8x8x128xbf16>
    %75 = vector.shape_cast %74 : vector<8x8x128xbf16> to vector<64x128xbf16>
    %c0_80 = arith.constant 0 : index
    %c0_81 = arith.constant 0 : index
    %c0_82 = arith.constant 0 : index
    %76 = vector.load %arg4[%c0_80, %c0_81, %c0_82] : memref<9x128x128xbf16, #tpu.memory_space<vmem>>, vector<1x128x128xbf16>
    %77 = vector.shape_cast %76 : vector<1x128x128xbf16> to vector<128x128xbf16>
    %cst_83 = arith.constant dense<0.000000e+00> : vector<64x128xf32>
    %78 = tpu.matmul %75, %77, %cst_83 {dimension_numbers = #tpu.dot_dimension_numbers<[1], [0], [0], [1], [0, 0, 1, 1], [], []>} : vector<64x128xbf16>, vector<128x128xbf16>, vector<64x128xf32> -> vector<64x128xf32>
    %79 = arith.addf %73, %78 : vector<64x128xf32>
    %c0_84 = arith.constant 0 : index
    %c1_85 = arith.constant 1 : index
    %c0_86 = arith.constant 0 : index
    %80 = vector.load %arg9[%c0_84, %c1_85, %c0_86] : memref<10x10x128xbf16, #tpu.memory_space<vmem>>, vector<8x8x128xbf16>
    %81 = vector.shape_cast %80 : vector<8x8x128xbf16> to vector<64x128xbf16>
    %c1_87 = arith.constant 1 : index
    %c0_88 = arith.constant 0 : index
    %c0_89 = arith.constant 0 : index
    %82 = vector.load %arg4[%c1_87, %c0_88, %c0_89] : memref<9x128x128xbf16, #tpu.memory_space<vmem>>, vector<1x128x128xbf16>
    %83 = vector.shape_cast %82 : vector<1x128x128xbf16> to vector<128x128xbf16>
    %cst_90 = arith.constant dense<0.000000e+00> : vector<64x128xf32>
    %84 = tpu.matmul %81, %83, %cst_90 {dimension_numbers = #tpu.dot_dimension_numbers<[1], [0], [0], [1], [0, 0, 1, 1], [], []>} : vector<64x128xbf16>, vector<128x128xbf16>, vector<64x128xf32> -> vector<64x128xf32>
    %85 = arith.addf %79, %84 : vector<64x128xf32>
    %c0_91 = arith.constant 0 : index
    %c2_92 = arith.constant 2 : index
    %c0_93 = arith.constant 0 : index
    %86 = vector.load %arg9[%c0_91, %c2_92, %c0_93] : memref<10x10x128xbf16, #tpu.memory_space<vmem>>, vector<8x8x128xbf16>
    %87 = vector.shape_cast %86 : vector<8x8x128xbf16> to vector<64x128xbf16>
    %c2_94 = arith.constant 2 : index
    %c0_95 = arith.constant 0 : index
    %c0_96 = arith.constant 0 : index
    %88 = vector.load %arg4[%c2_94, %c0_95, %c0_96] : memref<9x128x128xbf16, #tpu.memory_space<vmem>>, vector<1x128x128xbf16>
    %89 = vector.shape_cast %88 : vector<1x128x128xbf16> to vector<128x128xbf16>
    %cst_97 = arith.constant dense<0.000000e+00> : vector<64x128xf32>
    %90 = tpu.matmul %87, %89, %cst_97 {dimension_numbers = #tpu.dot_dimension_numbers<[1], [0], [0], [1], [0, 0, 1, 1], [], []>} : vector<64x128xbf16>, vector<128x128xbf16>, vector<64x128xf32> -> vector<64x128xf32>
    %91 = arith.addf %85, %90 : vector<64x128xf32>
    %c1_98 = arith.constant 1 : index
    %c0_99 = arith.constant 0 : index
    %c0_100 = arith.constant 0 : index
    %92 = vector.load %arg9[%c1_98, %c0_99, %c0_100] : memref<10x10x128xbf16, #tpu.memory_space<vmem>>, vector<8x8x128xbf16>
    %93 = vector.shape_cast %92 : vector<8x8x128xbf16> to vector<64x128xbf16>
    %c3_101 = arith.constant 3 : index
    %c0_102 = arith.constant 0 : index
    %c0_103 = arith.constant 0 : index
    %94 = vector.load %arg4[%c3_101, %c0_102, %c0_103] : memref<9x128x128xbf16, #tpu.memory_space<vmem>>, vector<1x128x128xbf16>
    %95 = vector.shape_cast %94 : vector<1x128x128xbf16> to vector<128x128xbf16>
    %cst_104 = arith.constant dense<0.000000e+00> : vector<64x128xf32>
    %96 = tpu.matmul %93, %95, %cst_104 {dimension_numbers = #tpu.dot_dimension_numbers<[1], [0], [0], [1], [0, 0, 1, 1], [], []>} : vector<64x128xbf16>, vector<128x128xbf16>, vector<64x128xf32> -> vector<64x128xf32>
    %97 = arith.addf %91, %96 : vector<64x128xf32>
    %c1_105 = arith.constant 1 : index
    %c1_106 = arith.constant 1 : index
    %c0_107 = arith.constant 0 : index
    %98 = vector.load %arg9[%c1_105, %c1_106, %c0_107] : memref<10x10x128xbf16, #tpu.memory_space<vmem>>, vector<8x8x128xbf16>
    %99 = vector.shape_cast %98 : vector<8x8x128xbf16> to vector<64x128xbf16>
    %c4_108 = arith.constant 4 : index
    %c0_109 = arith.constant 0 : index
    %c0_110 = arith.constant 0 : index
    %100 = vector.load %arg4[%c4_108, %c0_109, %c0_110] : memref<9x128x128xbf16, #tpu.memory_space<vmem>>, vector<1x128x128xbf16>
    %101 = vector.shape_cast %100 : vector<1x128x128xbf16> to vector<128x128xbf16>
    %cst_111 = arith.constant dense<0.000000e+00> : vector<64x128xf32>
    %102 = tpu.matmul %99, %101, %cst_111 {dimension_numbers = #tpu.dot_dimension_numbers<[1], [0], [0], [1], [0, 0, 1, 1], [], []>} : vector<64x128xbf16>, vector<128x128xbf16>, vector<64x128xf32> -> vector<64x128xf32>
    %103 = arith.addf %97, %102 : vector<64x128xf32>
    %c1_112 = arith.constant 1 : index
    %c2_113 = arith.constant 2 : index
    %c0_114 = arith.constant 0 : index
    %104 = vector.load %arg9[%c1_112, %c2_113, %c0_114] : memref<10x10x128xbf16, #tpu.memory_space<vmem>>, vector<8x8x128xbf16>
    %105 = vector.shape_cast %104 : vector<8x8x128xbf16> to vector<64x128xbf16>
    %c5_115 = arith.constant 5 : index
    %c0_116 = arith.constant 0 : index
    %c0_117 = arith.constant 0 : index
    %106 = vector.load %arg4[%c5_115, %c0_116, %c0_117] : memref<9x128x128xbf16, #tpu.memory_space<vmem>>, vector<1x128x128xbf16>
    %107 = vector.shape_cast %106 : vector<1x128x128xbf16> to vector<128x128xbf16>
    %cst_118 = arith.constant dense<0.000000e+00> : vector<64x128xf32>
    %108 = tpu.matmul %105, %107, %cst_118 {dimension_numbers = #tpu.dot_dimension_numbers<[1], [0], [0], [1], [0, 0, 1, 1], [], []>} : vector<64x128xbf16>, vector<128x128xbf16>, vector<64x128xf32> -> vector<64x128xf32>
    %109 = arith.addf %103, %108 : vector<64x128xf32>
    %c2_119 = arith.constant 2 : index
    %c0_120 = arith.constant 0 : index
    %c0_121 = arith.constant 0 : index
    %110 = vector.load %arg9[%c2_119, %c0_120, %c0_121] : memref<10x10x128xbf16, #tpu.memory_space<vmem>>, vector<8x8x128xbf16>
    %111 = vector.shape_cast %110 : vector<8x8x128xbf16> to vector<64x128xbf16>
    %c6_122 = arith.constant 6 : index
    %c0_123 = arith.constant 0 : index
    %c0_124 = arith.constant 0 : index
    %112 = vector.load %arg4[%c6_122, %c0_123, %c0_124] : memref<9x128x128xbf16, #tpu.memory_space<vmem>>, vector<1x128x128xbf16>
    %113 = vector.shape_cast %112 : vector<1x128x128xbf16> to vector<128x128xbf16>
    %cst_125 = arith.constant dense<0.000000e+00> : vector<64x128xf32>
    %114 = tpu.matmul %111, %113, %cst_125 {dimension_numbers = #tpu.dot_dimension_numbers<[1], [0], [0], [1], [0, 0, 1, 1], [], []>} : vector<64x128xbf16>, vector<128x128xbf16>, vector<64x128xf32> -> vector<64x128xf32>
    %115 = arith.addf %109, %114 : vector<64x128xf32>
    %c2_126 = arith.constant 2 : index
    %c1_127 = arith.constant 1 : index
    %c0_128 = arith.constant 0 : index
    %116 = vector.load %arg9[%c2_126, %c1_127, %c0_128] : memref<10x10x128xbf16, #tpu.memory_space<vmem>>, vector<8x8x128xbf16>
    %117 = vector.shape_cast %116 : vector<8x8x128xbf16> to vector<64x128xbf16>
    %c7_129 = arith.constant 7 : index
    %c0_130 = arith.constant 0 : index
    %c0_131 = arith.constant 0 : index
    %118 = vector.load %arg4[%c7_129, %c0_130, %c0_131] : memref<9x128x128xbf16, #tpu.memory_space<vmem>>, vector<1x128x128xbf16>
    %119 = vector.shape_cast %118 : vector<1x128x128xbf16> to vector<128x128xbf16>
    %cst_132 = arith.constant dense<0.000000e+00> : vector<64x128xf32>
    %120 = tpu.matmul %117, %119, %cst_132 {dimension_numbers = #tpu.dot_dimension_numbers<[1], [0], [0], [1], [0, 0, 1, 1], [], []>} : vector<64x128xbf16>, vector<128x128xbf16>, vector<64x128xf32> -> vector<64x128xf32>
    %121 = arith.addf %115, %120 : vector<64x128xf32>
    %c2_133 = arith.constant 2 : index
    %c2_134 = arith.constant 2 : index
    %c0_135 = arith.constant 0 : index
    %122 = vector.load %arg9[%c2_133, %c2_134, %c0_135] : memref<10x10x128xbf16, #tpu.memory_space<vmem>>, vector<8x8x128xbf16>
    %123 = vector.shape_cast %122 : vector<8x8x128xbf16> to vector<64x128xbf16>
    %c8_136 = arith.constant 8 : index
    %c0_137 = arith.constant 0 : index
    %c0_138 = arith.constant 0 : index
    %124 = vector.load %arg4[%c8_136, %c0_137, %c0_138] : memref<9x128x128xbf16, #tpu.memory_space<vmem>>, vector<1x128x128xbf16>
    %125 = vector.shape_cast %124 : vector<1x128x128xbf16> to vector<128x128xbf16>
    %cst_139 = arith.constant dense<0.000000e+00> : vector<64x128xf32>
    %126 = tpu.matmul %123, %125, %cst_139 {dimension_numbers = #tpu.dot_dimension_numbers<[1], [0], [0], [1], [0, 0, 1, 1], [], []>} : vector<64x128xbf16>, vector<128x128xbf16>, vector<64x128xf32> -> vector<64x128xf32>
    %127 = arith.addf %121, %126 : vector<64x128xf32>
    %c0_140 = arith.constant 0 : index
    %c0_141 = arith.constant 0 : index
    %128 = vector.load %arg5[%c0_140, %c0_141] : memref<1x128xf32, #tpu.memory_space<vmem>>, vector<1x128xf32>
    %129 = vector.broadcast %128 : vector<1x128xf32> to vector<64x128xf32>
    %130 = arith.addf %127, %129 : vector<64x128xf32>
    %cst_142 = arith.constant 0.000000e+00 : f32
    %131 = vector.broadcast %cst_142 : f32 to vector<64x128xf32>
    %132 = arith.cmpf oge, %130, %131 : vector<64x128xf32>
    %cst_143 = arith.constant 0.00999999977 : f32
    %133 = vector.broadcast %cst_143 : f32 to vector<64x128xf32>
    %134 = arith.mulf %133, %130 : vector<64x128xf32>
    %135 = arith.select %132, %130, %134 : vector<64x128xi1>, vector<64x128xf32>
    %c0_144 = arith.constant 0 : index
    %c0_145 = arith.constant 0 : index
    %c0_146 = arith.constant 0 : index
    %c0_147 = arith.constant 0 : index
    %136 = vector.load %arg1[%c0_144, %c0_145, %c0_146, %c0_147] : memref<1x8x8x128xbf16, #tpu.memory_space<vmem>>, vector<1x8x8x128xbf16>
    %137 = vector.shape_cast %136 : vector<1x8x8x128xbf16> to vector<8x8x128xbf16>
    %138 = vector.shape_cast %137 : vector<8x8x128xbf16> to vector<64x128xbf16>
    %139 = arith.extf %138 : vector<64x128xbf16> to vector<64x128xf32>
    %c0_148 = arith.constant 0 : index
    %c0_149 = arith.constant 0 : index
    %140 = memref.load %arg6[%c0_148, %c0_149] : memref<1x1xf32, #tpu.memory_space<smem>>
    %141 = vector.broadcast %140 : f32 to vector<64x128xf32>
    %142 = arith.mulf %141, %135 : vector<64x128xf32>
    %143 = arith.addf %139, %142 : vector<64x128xf32>
    %144 = vector.shape_cast %143 : vector<64x128xf32> to vector<1x8x8x128xf32>
    %145 = arith.truncf %144 : vector<1x8x8x128xf32> to vector<1x8x8x128xbf16>
    %c0_150 = arith.constant 0 : index
    %c0_151 = arith.constant 0 : index
    %c0_152 = arith.constant 0 : index
    %c0_153 = arith.constant 0 : index
    %146 = vector.load %arg7[%c0_150, %c0_151, %c0_152, %c0_153] : memref<1x8x8x128xbf16, #tpu.memory_space<vmem>>, vector<1x8x8x128xbf16>
    tpu.vector_store %arg7[%c0_150, %c0_151, %c0_152, %c0_153], %145 {strides = array<i32>} : memref<1x8x8x128xbf16, #tpu.memory_space<vmem>>, vector<1x8x8x128xbf16>,
    return
  }
  func.func @transform_0(%arg0: i32) -> (i32, i32, i32, i32) {
    %c0_i32 = arith.constant 0 : i32
    %c0_i32_0 = arith.constant 0 : i32
    %c0_i32_1 = arith.constant 0 : i32
    %c0_i32_2 = arith.constant 0 : i32
    return %arg0, %c0_i32, %c0_i32_0, %c0_i32_1 : i32, i32, i32, i32
  }
  func.func @transform_1(%arg0: i32) -> (i32, i32, i32) {
    %c0_i32 = arith.constant 0 : i32
    %c0_i32_0 = arith.constant 0 : i32
    %c0_i32_1 = arith.constant 0 : i32
    %c0_i32_2 = arith.constant 0 : i32
    return %c0_i32, %c0_i32_0, %c0_i32_1 : i32, i32, i32
  }
  func.func @transform_2(%arg0: i32) -> (i32, i32) {
    %c0_i32 = arith.constant 0 : i32
    %c0_i32_0 = arith.constant 0 : i32
    %c0_i32_1 = arith.constant 0 : i32
    return %c0_i32, %c0_i32_0 : i32, i32
  }
  func.func @transform_3(%arg0: i32) -> (i32, i32, i32) {
    %c0_i32 = arith.constant 0 : i32
    %c0_i32_0 = arith.constant 0 : i32
    %c0_i32_1 = arith.constant 0 : i32
    %c0_i32_2 = arith.constant 0 : i32
    return %c0_i32, %c0_i32_0, %c0_i32_1 : i32, i32, i32
  }
  func.func @transform_4(%arg0: i32) -> (i32, i32) {
    %c0_i32 = arith.constant 0 : i32
    %c0_i32_0 = arith.constant 0 : i32
    %c0_i32_1 = arith.constant 0 : i32
    return %c0_i32, %c0_i32_0 : i32, i32
  }
  func.func @transform_5(%arg0: i32) -> (i32, i32) {
    %c0_i32 = arith.constant 0 : i32
    %c0_i32_0 = arith.constant 0 : i32
    %c0_i32_1 = arith.constant 0 : i32
    return %c0_i32, %c0_i32_0 : i32, i32
  }
  func.func @transform_6(%arg0: i32) -> (i32, i32, i32, i32) {
    %c0_i32 = arith.constant 0 : i32
    %c0_i32_0 = arith.constant 0 : i32
    %c0_i32_1 = arith.constant 0 : i32
    %c0_i32_2 = arith.constant 0 : i32
    return %arg0, %c0_i32, %c0_i32_0, %c0_i32_1 : i32, i32, i32, i32
  }
}

module attributes {stable_mosaic.version = 11 : i64} {
  func.func @_bottleneck_kernel(%arg0: i32, %arg1: memref<1x8x8x128xbf16, #tpu.memory_space<vmem>>, %arg2: memref<9x128x128xbf16, #tpu.memory_space<vmem>>, %arg3: memref<1x128xf32, #tpu.memory_space<vmem>>, %arg4: memref<9x128x128xbf16, #tpu.memory_space<vmem>>, %arg5: memref<1x128xf32, #tpu.memory_space<vmem>>, %arg6: memref<1x1xf32, #tpu.memory_space<smem>>, %arg7: memref<1x128x128xbf16, #tpu.memory_space<vmem>>, %arg8: memref<1x128xf32, #tpu.memory_space<vmem>>, %arg9: memref<1x8x8x128xbf16, #tpu.memory_space<vmem>>, %arg10: memref<10x10x128xbf16, #tpu.memory_space<vmem>>, %arg11: memref<10x10x128xbf16, #tpu.memory_space<vmem>>) attributes {dimension_semantics = [#tpu.dimension_semantics<parallel>], iteration_bounds = array<i64: 2>, scalar_prefetch = 0 : i64, scratch_operands = 2 : i64, tpu.core_type = #tpu.core_type<tc>, window_params = [{transform_indices = @transform_0, window_bounds = array<i64: 1, 8, 8, 128>}, {pipeline_mode = #tpu.pipeline_mode<synchronous>, transform_indices = @transform_1, window_bounds = array<i64: 9, 128, 128>}, {pipeline_mode = #tpu.pipeline_mode<synchronous>, transform_indices = @transform_2, window_bounds = array<i64: 1, 128>}, {pipeline_mode = #tpu.pipeline_mode<synchronous>, transform_indices = @transform_3, window_bounds = array<i64: 9, 128, 128>}, {pipeline_mode = #tpu.pipeline_mode<synchronous>, transform_indices = @transform_4, window_bounds = array<i64: 1, 128>}, {transform_indices = @transform_5, window_bounds = array<i64: 1, 1>}, {pipeline_mode = #tpu.pipeline_mode<synchronous>, transform_indices = @transform_6, window_bounds = array<i64: 1, 128, 128>}, {pipeline_mode = #tpu.pipeline_mode<synchronous>, transform_indices = @transform_7, window_bounds = array<i64: 1, 128>}, {transform_indices = @transform_8, window_bounds = array<i64: 1, 8, 8, 128>}]} {
    %cst = arith.constant 0.000000e+00 : bf16
    %0 = vector.broadcast %cst : bf16 to vector<10x10x128xbf16>
    %c0 = arith.constant 0 : index
    %c0_0 = arith.constant 0 : index
    %c0_1 = arith.constant 0 : index
    %1 = vector.load %arg10[%c0, %c0_0, %c0_1] : memref<10x10x128xbf16, #tpu.memory_space<vmem>>, vector<10x10x128xbf16>
    tpu.vector_store %arg10[%c0, %c0_0, %c0_1], %0 {strides = array<i32>} : memref<10x10x128xbf16, #tpu.memory_space<vmem>>, vector<10x10x128xbf16>,
    %c0_2 = arith.constant 0 : index
    %c0_3 = arith.constant 0 : index
    %c0_4 = arith.constant 0 : index
    %c0_5 = arith.constant 0 : index
    %2 = vector.load %arg1[%c0_2, %c0_3, %c0_4, %c0_5] : memref<1x8x8x128xbf16, #tpu.memory_space<vmem>>, vector<1x8x8x128xbf16>
    %3 = vector.shape_cast %2 : vector<1x8x8x128xbf16> to vector<8x8x128xbf16>
    %c1 = arith.constant 1 : index
    %c1_6 = arith.constant 1 : index
    %c0_7 = arith.constant 0 : index
    %4 = vector.load %arg10[%c1, %c1_6, %c0_7] : memref<10x10x128xbf16, #tpu.memory_space<vmem>>, vector<8x8x128xbf16>
    tpu.vector_store %arg10[%c1, %c1_6, %c0_7], %3 {strides = array<i32>} : memref<10x10x128xbf16, #tpu.memory_space<vmem>>, vector<8x8x128xbf16>,
    %cst_8 = arith.constant 0.000000e+00 : f32
    %5 = vector.broadcast %cst_8 : f32 to vector<64x128xf32>
    %c0_9 = arith.constant 0 : index
    %c0_10 = arith.constant 0 : index
    %c0_11 = arith.constant 0 : index
    %6 = vector.load %arg10[%c0_9, %c0_10, %c0_11] : memref<10x10x128xbf16, #tpu.memory_space<vmem>>, vector<8x8x128xbf16>
    %7 = vector.shape_cast %6 : vector<8x8x128xbf16> to vector<64x128xbf16>
    %c0_12 = arith.constant 0 : index
    %c0_13 = arith.constant 0 : index
    %c0_14 = arith.constant 0 : index
    %8 = vector.load %arg2[%c0_12, %c0_13, %c0_14] : memref<9x128x128xbf16, #tpu.memory_space<vmem>>, vector<1x128x128xbf16>
    %9 = vector.shape_cast %8 : vector<1x128x128xbf16> to vector<128x128xbf16>
    %cst_15 = arith.constant dense<0.000000e+00> : vector<64x128xf32>
    %10 = tpu.matmul %7, %9, %cst_15 {dimension_numbers = #tpu.dot_dimension_numbers<[1], [0], [0], [1], [0, 0, 1, 1], [], []>} : vector<64x128xbf16>, vector<128x128xbf16>, vector<64x128xf32> -> vector<64x128xf32>
    %11 = arith.addf %5, %10 : vector<64x128xf32>
    %c0_16 = arith.constant 0 : index
    %c1_17 = arith.constant 1 : index
    %c0_18 = arith.constant 0 : index
    %12 = vector.load %arg10[%c0_16, %c1_17, %c0_18] : memref<10x10x128xbf16, #tpu.memory_space<vmem>>, vector<8x8x128xbf16>
    %13 = vector.shape_cast %12 : vector<8x8x128xbf16> to vector<64x128xbf16>
    %c1_19 = arith.constant 1 : index
    %c0_20 = arith.constant 0 : index
    %c0_21 = arith.constant 0 : index
    %14 = vector.load %arg2[%c1_19, %c0_20, %c0_21] : memref<9x128x128xbf16, #tpu.memory_space<vmem>>, vector<1x128x128xbf16>
    %15 = vector.shape_cast %14 : vector<1x128x128xbf16> to vector<128x128xbf16>
    %cst_22 = arith.constant dense<0.000000e+00> : vector<64x128xf32>
    %16 = tpu.matmul %13, %15, %cst_22 {dimension_numbers = #tpu.dot_dimension_numbers<[1], [0], [0], [1], [0, 0, 1, 1], [], []>} : vector<64x128xbf16>, vector<128x128xbf16>, vector<64x128xf32> -> vector<64x128xf32>
    %17 = arith.addf %11, %16 : vector<64x128xf32>
    %c0_23 = arith.constant 0 : index
    %c2 = arith.constant 2 : index
    %c0_24 = arith.constant 0 : index
    %18 = vector.load %arg10[%c0_23, %c2, %c0_24] : memref<10x10x128xbf16, #tpu.memory_space<vmem>>, vector<8x8x128xbf16>
    %19 = vector.shape_cast %18 : vector<8x8x128xbf16> to vector<64x128xbf16>
    %c2_25 = arith.constant 2 : index
    %c0_26 = arith.constant 0 : index
    %c0_27 = arith.constant 0 : index
    %20 = vector.load %arg2[%c2_25, %c0_26, %c0_27] : memref<9x128x128xbf16, #tpu.memory_space<vmem>>, vector<1x128x128xbf16>
    %21 = vector.shape_cast %20 : vector<1x128x128xbf16> to vector<128x128xbf16>
    %cst_28 = arith.constant dense<0.000000e+00> : vector<64x128xf32>
    %22 = tpu.matmul %19, %21, %cst_28 {dimension_numbers = #tpu.dot_dimension_numbers<[1], [0], [0], [1], [0, 0, 1, 1], [], []>} : vector<64x128xbf16>, vector<128x128xbf16>, vector<64x128xf32> -> vector<64x128xf32>
    %23 = arith.addf %17, %22 : vector<64x128xf32>
    %c1_29 = arith.constant 1 : index
    %c0_30 = arith.constant 0 : index
    %c0_31 = arith.constant 0 : index
    %24 = vector.load %arg10[%c1_29, %c0_30, %c0_31] : memref<10x10x128xbf16, #tpu.memory_space<vmem>>, vector<8x8x128xbf16>
    %25 = vector.shape_cast %24 : vector<8x8x128xbf16> to vector<64x128xbf16>
    %c3 = arith.constant 3 : index
    %c0_32 = arith.constant 0 : index
    %c0_33 = arith.constant 0 : index
    %26 = vector.load %arg2[%c3, %c0_32, %c0_33] : memref<9x128x128xbf16, #tpu.memory_space<vmem>>, vector<1x128x128xbf16>
    %27 = vector.shape_cast %26 : vector<1x128x128xbf16> to vector<128x128xbf16>
    %cst_34 = arith.constant dense<0.000000e+00> : vector<64x128xf32>
    %28 = tpu.matmul %25, %27, %cst_34 {dimension_numbers = #tpu.dot_dimension_numbers<[1], [0], [0], [1], [0, 0, 1, 1], [], []>} : vector<64x128xbf16>, vector<128x128xbf16>, vector<64x128xf32> -> vector<64x128xf32>
    %29 = arith.addf %23, %28 : vector<64x128xf32>
    %c1_35 = arith.constant 1 : index
    %c1_36 = arith.constant 1 : index
    %c0_37 = arith.constant 0 : index
    %30 = vector.load %arg10[%c1_35, %c1_36, %c0_37] : memref<10x10x128xbf16, #tpu.memory_space<vmem>>, vector<8x8x128xbf16>
    %31 = vector.shape_cast %30 : vector<8x8x128xbf16> to vector<64x128xbf16>
    %c4 = arith.constant 4 : index
    %c0_38 = arith.constant 0 : index
    %c0_39 = arith.constant 0 : index
    %32 = vector.load %arg2[%c4, %c0_38, %c0_39] : memref<9x128x128xbf16, #tpu.memory_space<vmem>>, vector<1x128x128xbf16>
    %33 = vector.shape_cast %32 : vector<1x128x128xbf16> to vector<128x128xbf16>
    %cst_40 = arith.constant dense<0.000000e+00> : vector<64x128xf32>
    %34 = tpu.matmul %31, %33, %cst_40 {dimension_numbers = #tpu.dot_dimension_numbers<[1], [0], [0], [1], [0, 0, 1, 1], [], []>} : vector<64x128xbf16>, vector<128x128xbf16>, vector<64x128xf32> -> vector<64x128xf32>
    %35 = arith.addf %29, %34 : vector<64x128xf32>
    %c1_41 = arith.constant 1 : index
    %c2_42 = arith.constant 2 : index
    %c0_43 = arith.constant 0 : index
    %36 = vector.load %arg10[%c1_41, %c2_42, %c0_43] : memref<10x10x128xbf16, #tpu.memory_space<vmem>>, vector<8x8x128xbf16>
    %37 = vector.shape_cast %36 : vector<8x8x128xbf16> to vector<64x128xbf16>
    %c5 = arith.constant 5 : index
    %c0_44 = arith.constant 0 : index
    %c0_45 = arith.constant 0 : index
    %38 = vector.load %arg2[%c5, %c0_44, %c0_45] : memref<9x128x128xbf16, #tpu.memory_space<vmem>>, vector<1x128x128xbf16>
    %39 = vector.shape_cast %38 : vector<1x128x128xbf16> to vector<128x128xbf16>
    %cst_46 = arith.constant dense<0.000000e+00> : vector<64x128xf32>
    %40 = tpu.matmul %37, %39, %cst_46 {dimension_numbers = #tpu.dot_dimension_numbers<[1], [0], [0], [1], [0, 0, 1, 1], [], []>} : vector<64x128xbf16>, vector<128x128xbf16>, vector<64x128xf32> -> vector<64x128xf32>
    %41 = arith.addf %35, %40 : vector<64x128xf32>
    %c2_47 = arith.constant 2 : index
    %c0_48 = arith.constant 0 : index
    %c0_49 = arith.constant 0 : index
    %42 = vector.load %arg10[%c2_47, %c0_48, %c0_49] : memref<10x10x128xbf16, #tpu.memory_space<vmem>>, vector<8x8x128xbf16>
    %43 = vector.shape_cast %42 : vector<8x8x128xbf16> to vector<64x128xbf16>
    %c6 = arith.constant 6 : index
    %c0_50 = arith.constant 0 : index
    %c0_51 = arith.constant 0 : index
    %44 = vector.load %arg2[%c6, %c0_50, %c0_51] : memref<9x128x128xbf16, #tpu.memory_space<vmem>>, vector<1x128x128xbf16>
    %45 = vector.shape_cast %44 : vector<1x128x128xbf16> to vector<128x128xbf16>
    %cst_52 = arith.constant dense<0.000000e+00> : vector<64x128xf32>
    %46 = tpu.matmul %43, %45, %cst_52 {dimension_numbers = #tpu.dot_dimension_numbers<[1], [0], [0], [1], [0, 0, 1, 1], [], []>} : vector<64x128xbf16>, vector<128x128xbf16>, vector<64x128xf32> -> vector<64x128xf32>
    %47 = arith.addf %41, %46 : vector<64x128xf32>
    %c2_53 = arith.constant 2 : index
    %c1_54 = arith.constant 1 : index
    %c0_55 = arith.constant 0 : index
    %48 = vector.load %arg10[%c2_53, %c1_54, %c0_55] : memref<10x10x128xbf16, #tpu.memory_space<vmem>>, vector<8x8x128xbf16>
    %49 = vector.shape_cast %48 : vector<8x8x128xbf16> to vector<64x128xbf16>
    %c7 = arith.constant 7 : index
    %c0_56 = arith.constant 0 : index
    %c0_57 = arith.constant 0 : index
    %50 = vector.load %arg2[%c7, %c0_56, %c0_57] : memref<9x128x128xbf16, #tpu.memory_space<vmem>>, vector<1x128x128xbf16>
    %51 = vector.shape_cast %50 : vector<1x128x128xbf16> to vector<128x128xbf16>
    %cst_58 = arith.constant dense<0.000000e+00> : vector<64x128xf32>
    %52 = tpu.matmul %49, %51, %cst_58 {dimension_numbers = #tpu.dot_dimension_numbers<[1], [0], [0], [1], [0, 0, 1, 1], [], []>} : vector<64x128xbf16>, vector<128x128xbf16>, vector<64x128xf32> -> vector<64x128xf32>
    %53 = arith.addf %47, %52 : vector<64x128xf32>
    %c2_59 = arith.constant 2 : index
    %c2_60 = arith.constant 2 : index
    %c0_61 = arith.constant 0 : index
    %54 = vector.load %arg10[%c2_59, %c2_60, %c0_61] : memref<10x10x128xbf16, #tpu.memory_space<vmem>>, vector<8x8x128xbf16>
    %55 = vector.shape_cast %54 : vector<8x8x128xbf16> to vector<64x128xbf16>
    %c8 = arith.constant 8 : index
    %c0_62 = arith.constant 0 : index
    %c0_63 = arith.constant 0 : index
    %56 = vector.load %arg2[%c8, %c0_62, %c0_63] : memref<9x128x128xbf16, #tpu.memory_space<vmem>>, vector<1x128x128xbf16>
    %57 = vector.shape_cast %56 : vector<1x128x128xbf16> to vector<128x128xbf16>
    %cst_64 = arith.constant dense<0.000000e+00> : vector<64x128xf32>
    %58 = tpu.matmul %55, %57, %cst_64 {dimension_numbers = #tpu.dot_dimension_numbers<[1], [0], [0], [1], [0, 0, 1, 1], [], []>} : vector<64x128xbf16>, vector<128x128xbf16>, vector<64x128xf32> -> vector<64x128xf32>
    %59 = arith.addf %53, %58 : vector<64x128xf32>
    %c0_65 = arith.constant 0 : index
    %c0_66 = arith.constant 0 : index
    %60 = vector.load %arg3[%c0_65, %c0_66] : memref<1x128xf32, #tpu.memory_space<vmem>>, vector<1x128xf32>
    %61 = vector.broadcast %60 : vector<1x128xf32> to vector<64x128xf32>
    %62 = arith.addf %59, %61 : vector<64x128xf32>
    %cst_67 = arith.constant 0.000000e+00 : f32
    %63 = vector.broadcast %cst_67 : f32 to vector<64x128xf32>
    %64 = arith.cmpf oge, %62, %63 : vector<64x128xf32>
    %cst_68 = arith.constant 0.00999999977 : f32
    %65 = vector.broadcast %cst_68 : f32 to vector<64x128xf32>
    %66 = arith.mulf %65, %62 : vector<64x128xf32>
    %67 = arith.select %64, %62, %66 : vector<64x128xi1>, vector<64x128xf32>
    %cst_69 = arith.constant 0.000000e+00 : bf16
    %68 = vector.broadcast %cst_69 : bf16 to vector<10x10x128xbf16>
    %c0_70 = arith.constant 0 : index
    %c0_71 = arith.constant 0 : index
    %c0_72 = arith.constant 0 : index
    %69 = vector.load %arg11[%c0_70, %c0_71, %c0_72] : memref<10x10x128xbf16, #tpu.memory_space<vmem>>, vector<10x10x128xbf16>
    tpu.vector_store %arg11[%c0_70, %c0_71, %c0_72], %68 {strides = array<i32>} : memref<10x10x128xbf16, #tpu.memory_space<vmem>>, vector<10x10x128xbf16>,
    %70 = vector.shape_cast %67 : vector<64x128xf32> to vector<8x8x128xf32>
    %71 = arith.truncf %70 : vector<8x8x128xf32> to vector<8x8x128xbf16>
    %c1_73 = arith.constant 1 : index
    %c1_74 = arith.constant 1 : index
    %c0_75 = arith.constant 0 : index
    %72 = vector.load %arg11[%c1_73, %c1_74, %c0_75] : memref<10x10x128xbf16, #tpu.memory_space<vmem>>, vector<8x8x128xbf16>
    tpu.vector_store %arg11[%c1_73, %c1_74, %c0_75], %71 {strides = array<i32>} : memref<10x10x128xbf16, #tpu.memory_space<vmem>>, vector<8x8x128xbf16>,
    %cst_76 = arith.constant 0.000000e+00 : f32
    %73 = vector.broadcast %cst_76 : f32 to vector<64x128xf32>
    %c0_77 = arith.constant 0 : index
    %c0_78 = arith.constant 0 : index
    %c0_79 = arith.constant 0 : index
    %74 = vector.load %arg11[%c0_77, %c0_78, %c0_79] : memref<10x10x128xbf16, #tpu.memory_space<vmem>>, vector<8x8x128xbf16>
    %75 = vector.shape_cast %74 : vector<8x8x128xbf16> to vector<64x128xbf16>
    %c0_80 = arith.constant 0 : index
    %c0_81 = arith.constant 0 : index
    %c0_82 = arith.constant 0 : index
    %76 = vector.load %arg4[%c0_80, %c0_81, %c0_82] : memref<9x128x128xbf16, #tpu.memory_space<vmem>>, vector<1x128x128xbf16>
    %77 = vector.shape_cast %76 : vector<1x128x128xbf16> to vector<128x128xbf16>
    %cst_83 = arith.constant dense<0.000000e+00> : vector<64x128xf32>
    %78 = tpu.matmul %75, %77, %cst_83 {dimension_numbers = #tpu.dot_dimension_numbers<[1], [0], [0], [1], [0, 0, 1, 1], [], []>} : vector<64x128xbf16>, vector<128x128xbf16>, vector<64x128xf32> -> vector<64x128xf32>
    %79 = arith.addf %73, %78 : vector<64x128xf32>
    %c0_84 = arith.constant 0 : index
    %c1_85 = arith.constant 1 : index
    %c0_86 = arith.constant 0 : index
    %80 = vector.load %arg11[%c0_84, %c1_85, %c0_86] : memref<10x10x128xbf16, #tpu.memory_space<vmem>>, vector<8x8x128xbf16>
    %81 = vector.shape_cast %80 : vector<8x8x128xbf16> to vector<64x128xbf16>
    %c1_87 = arith.constant 1 : index
    %c0_88 = arith.constant 0 : index
    %c0_89 = arith.constant 0 : index
    %82 = vector.load %arg4[%c1_87, %c0_88, %c0_89] : memref<9x128x128xbf16, #tpu.memory_space<vmem>>, vector<1x128x128xbf16>
    %83 = vector.shape_cast %82 : vector<1x128x128xbf16> to vector<128x128xbf16>
    %cst_90 = arith.constant dense<0.000000e+00> : vector<64x128xf32>
    %84 = tpu.matmul %81, %83, %cst_90 {dimension_numbers = #tpu.dot_dimension_numbers<[1], [0], [0], [1], [0, 0, 1, 1], [], []>} : vector<64x128xbf16>, vector<128x128xbf16>, vector<64x128xf32> -> vector<64x128xf32>
    %85 = arith.addf %79, %84 : vector<64x128xf32>
    %c0_91 = arith.constant 0 : index
    %c2_92 = arith.constant 2 : index
    %c0_93 = arith.constant 0 : index
    %86 = vector.load %arg11[%c0_91, %c2_92, %c0_93] : memref<10x10x128xbf16, #tpu.memory_space<vmem>>, vector<8x8x128xbf16>
    %87 = vector.shape_cast %86 : vector<8x8x128xbf16> to vector<64x128xbf16>
    %c2_94 = arith.constant 2 : index
    %c0_95 = arith.constant 0 : index
    %c0_96 = arith.constant 0 : index
    %88 = vector.load %arg4[%c2_94, %c0_95, %c0_96] : memref<9x128x128xbf16, #tpu.memory_space<vmem>>, vector<1x128x128xbf16>
    %89 = vector.shape_cast %88 : vector<1x128x128xbf16> to vector<128x128xbf16>
    %cst_97 = arith.constant dense<0.000000e+00> : vector<64x128xf32>
    %90 = tpu.matmul %87, %89, %cst_97 {dimension_numbers = #tpu.dot_dimension_numbers<[1], [0], [0], [1], [0, 0, 1, 1], [], []>} : vector<64x128xbf16>, vector<128x128xbf16>, vector<64x128xf32> -> vector<64x128xf32>
    %91 = arith.addf %85, %90 : vector<64x128xf32>
    %c1_98 = arith.constant 1 : index
    %c0_99 = arith.constant 0 : index
    %c0_100 = arith.constant 0 : index
    %92 = vector.load %arg11[%c1_98, %c0_99, %c0_100] : memref<10x10x128xbf16, #tpu.memory_space<vmem>>, vector<8x8x128xbf16>
    %93 = vector.shape_cast %92 : vector<8x8x128xbf16> to vector<64x128xbf16>
    %c3_101 = arith.constant 3 : index
    %c0_102 = arith.constant 0 : index
    %c0_103 = arith.constant 0 : index
    %94 = vector.load %arg4[%c3_101, %c0_102, %c0_103] : memref<9x128x128xbf16, #tpu.memory_space<vmem>>, vector<1x128x128xbf16>
    %95 = vector.shape_cast %94 : vector<1x128x128xbf16> to vector<128x128xbf16>
    %cst_104 = arith.constant dense<0.000000e+00> : vector<64x128xf32>
    %96 = tpu.matmul %93, %95, %cst_104 {dimension_numbers = #tpu.dot_dimension_numbers<[1], [0], [0], [1], [0, 0, 1, 1], [], []>} : vector<64x128xbf16>, vector<128x128xbf16>, vector<64x128xf32> -> vector<64x128xf32>
    %97 = arith.addf %91, %96 : vector<64x128xf32>
    %c1_105 = arith.constant 1 : index
    %c1_106 = arith.constant 1 : index
    %c0_107 = arith.constant 0 : index
    %98 = vector.load %arg11[%c1_105, %c1_106, %c0_107] : memref<10x10x128xbf16, #tpu.memory_space<vmem>>, vector<8x8x128xbf16>
    %99 = vector.shape_cast %98 : vector<8x8x128xbf16> to vector<64x128xbf16>
    %c4_108 = arith.constant 4 : index
    %c0_109 = arith.constant 0 : index
    %c0_110 = arith.constant 0 : index
    %100 = vector.load %arg4[%c4_108, %c0_109, %c0_110] : memref<9x128x128xbf16, #tpu.memory_space<vmem>>, vector<1x128x128xbf16>
    %101 = vector.shape_cast %100 : vector<1x128x128xbf16> to vector<128x128xbf16>
    %cst_111 = arith.constant dense<0.000000e+00> : vector<64x128xf32>
    %102 = tpu.matmul %99, %101, %cst_111 {dimension_numbers = #tpu.dot_dimension_numbers<[1], [0], [0], [1], [0, 0, 1, 1], [], []>} : vector<64x128xbf16>, vector<128x128xbf16>, vector<64x128xf32> -> vector<64x128xf32>
    %103 = arith.addf %97, %102 : vector<64x128xf32>
    %c1_112 = arith.constant 1 : index
    %c2_113 = arith.constant 2 : index
    %c0_114 = arith.constant 0 : index
    %104 = vector.load %arg11[%c1_112, %c2_113, %c0_114] : memref<10x10x128xbf16, #tpu.memory_space<vmem>>, vector<8x8x128xbf16>
    %105 = vector.shape_cast %104 : vector<8x8x128xbf16> to vector<64x128xbf16>
    %c5_115 = arith.constant 5 : index
    %c0_116 = arith.constant 0 : index
    %c0_117 = arith.constant 0 : index
    %106 = vector.load %arg4[%c5_115, %c0_116, %c0_117] : memref<9x128x128xbf16, #tpu.memory_space<vmem>>, vector<1x128x128xbf16>
    %107 = vector.shape_cast %106 : vector<1x128x128xbf16> to vector<128x128xbf16>
    %cst_118 = arith.constant dense<0.000000e+00> : vector<64x128xf32>
    %108 = tpu.matmul %105, %107, %cst_118 {dimension_numbers = #tpu.dot_dimension_numbers<[1], [0], [0], [1], [0, 0, 1, 1], [], []>} : vector<64x128xbf16>, vector<128x128xbf16>, vector<64x128xf32> -> vector<64x128xf32>
    %109 = arith.addf %103, %108 : vector<64x128xf32>
    %c2_119 = arith.constant 2 : index
    %c0_120 = arith.constant 0 : index
    %c0_121 = arith.constant 0 : index
    %110 = vector.load %arg11[%c2_119, %c0_120, %c0_121] : memref<10x10x128xbf16, #tpu.memory_space<vmem>>, vector<8x8x128xbf16>
    %111 = vector.shape_cast %110 : vector<8x8x128xbf16> to vector<64x128xbf16>
    %c6_122 = arith.constant 6 : index
    %c0_123 = arith.constant 0 : index
    %c0_124 = arith.constant 0 : index
    %112 = vector.load %arg4[%c6_122, %c0_123, %c0_124] : memref<9x128x128xbf16, #tpu.memory_space<vmem>>, vector<1x128x128xbf16>
    %113 = vector.shape_cast %112 : vector<1x128x128xbf16> to vector<128x128xbf16>
    %cst_125 = arith.constant dense<0.000000e+00> : vector<64x128xf32>
    %114 = tpu.matmul %111, %113, %cst_125 {dimension_numbers = #tpu.dot_dimension_numbers<[1], [0], [0], [1], [0, 0, 1, 1], [], []>} : vector<64x128xbf16>, vector<128x128xbf16>, vector<64x128xf32> -> vector<64x128xf32>
    %115 = arith.addf %109, %114 : vector<64x128xf32>
    %c2_126 = arith.constant 2 : index
    %c1_127 = arith.constant 1 : index
    %c0_128 = arith.constant 0 : index
    %116 = vector.load %arg11[%c2_126, %c1_127, %c0_128] : memref<10x10x128xbf16, #tpu.memory_space<vmem>>, vector<8x8x128xbf16>
    %117 = vector.shape_cast %116 : vector<8x8x128xbf16> to vector<64x128xbf16>
    %c7_129 = arith.constant 7 : index
    %c0_130 = arith.constant 0 : index
    %c0_131 = arith.constant 0 : index
    %118 = vector.load %arg4[%c7_129, %c0_130, %c0_131] : memref<9x128x128xbf16, #tpu.memory_space<vmem>>, vector<1x128x128xbf16>
    %119 = vector.shape_cast %118 : vector<1x128x128xbf16> to vector<128x128xbf16>
    %cst_132 = arith.constant dense<0.000000e+00> : vector<64x128xf32>
    %120 = tpu.matmul %117, %119, %cst_132 {dimension_numbers = #tpu.dot_dimension_numbers<[1], [0], [0], [1], [0, 0, 1, 1], [], []>} : vector<64x128xbf16>, vector<128x128xbf16>, vector<64x128xf32> -> vector<64x128xf32>
    %121 = arith.addf %115, %120 : vector<64x128xf32>
    %c2_133 = arith.constant 2 : index
    %c2_134 = arith.constant 2 : index
    %c0_135 = arith.constant 0 : index
    %122 = vector.load %arg11[%c2_133, %c2_134, %c0_135] : memref<10x10x128xbf16, #tpu.memory_space<vmem>>, vector<8x8x128xbf16>
    %123 = vector.shape_cast %122 : vector<8x8x128xbf16> to vector<64x128xbf16>
    %c8_136 = arith.constant 8 : index
    %c0_137 = arith.constant 0 : index
    %c0_138 = arith.constant 0 : index
    %124 = vector.load %arg4[%c8_136, %c0_137, %c0_138] : memref<9x128x128xbf16, #tpu.memory_space<vmem>>, vector<1x128x128xbf16>
    %125 = vector.shape_cast %124 : vector<1x128x128xbf16> to vector<128x128xbf16>
    %cst_139 = arith.constant dense<0.000000e+00> : vector<64x128xf32>
    %126 = tpu.matmul %123, %125, %cst_139 {dimension_numbers = #tpu.dot_dimension_numbers<[1], [0], [0], [1], [0, 0, 1, 1], [], []>} : vector<64x128xbf16>, vector<128x128xbf16>, vector<64x128xf32> -> vector<64x128xf32>
    %127 = arith.addf %121, %126 : vector<64x128xf32>
    %c0_140 = arith.constant 0 : index
    %c0_141 = arith.constant 0 : index
    %128 = vector.load %arg5[%c0_140, %c0_141] : memref<1x128xf32, #tpu.memory_space<vmem>>, vector<1x128xf32>
    %129 = vector.broadcast %128 : vector<1x128xf32> to vector<64x128xf32>
    %130 = arith.addf %127, %129 : vector<64x128xf32>
    %cst_142 = arith.constant 0.000000e+00 : f32
    %131 = vector.broadcast %cst_142 : f32 to vector<64x128xf32>
    %132 = arith.cmpf oge, %130, %131 : vector<64x128xf32>
    %cst_143 = arith.constant 0.00999999977 : f32
    %133 = vector.broadcast %cst_143 : f32 to vector<64x128xf32>
    %134 = arith.mulf %133, %130 : vector<64x128xf32>
    %135 = arith.select %132, %130, %134 : vector<64x128xi1>, vector<64x128xf32>
    %c0_144 = arith.constant 0 : index
    %c0_145 = arith.constant 0 : index
    %c0_146 = arith.constant 0 : index
    %c0_147 = arith.constant 0 : index
    %136 = vector.load %arg1[%c0_144, %c0_145, %c0_146, %c0_147] : memref<1x8x8x128xbf16, #tpu.memory_space<vmem>>, vector<1x8x8x128xbf16>
    %137 = vector.shape_cast %136 : vector<1x8x8x128xbf16> to vector<8x8x128xbf16>
    %138 = vector.shape_cast %137 : vector<8x8x128xbf16> to vector<64x128xbf16>
    %c0_148 = arith.constant 0 : index
    %c0_149 = arith.constant 0 : index
    %c0_150 = arith.constant 0 : index
    %139 = vector.load %arg7[%c0_148, %c0_149, %c0_150] : memref<1x128x128xbf16, #tpu.memory_space<vmem>>, vector<1x128x128xbf16>
    %140 = vector.shape_cast %139 : vector<1x128x128xbf16> to vector<128x128xbf16>
    %cst_151 = arith.constant dense<0.000000e+00> : vector<64x128xf32>
    %141 = tpu.matmul %138, %140, %cst_151 {dimension_numbers = #tpu.dot_dimension_numbers<[1], [0], [0], [1], [0, 0, 1, 1], [], []>} : vector<64x128xbf16>, vector<128x128xbf16>, vector<64x128xf32> -> vector<64x128xf32>
    %c0_152 = arith.constant 0 : index
    %c0_153 = arith.constant 0 : index
    %142 = vector.load %arg8[%c0_152, %c0_153] : memref<1x128xf32, #tpu.memory_space<vmem>>, vector<1x128xf32>
    %143 = vector.broadcast %142 : vector<1x128xf32> to vector<64x128xf32>
    %144 = arith.addf %141, %143 : vector<64x128xf32>
    %c0_154 = arith.constant 0 : index
    %c0_155 = arith.constant 0 : index
    %145 = memref.load %arg6[%c0_154, %c0_155] : memref<1x1xf32, #tpu.memory_space<smem>>
    %146 = vector.broadcast %145 : f32 to vector<64x128xf32>
    %147 = arith.mulf %146, %135 : vector<64x128xf32>
    %148 = arith.addf %144, %147 : vector<64x128xf32>
    %149 = vector.shape_cast %148 : vector<64x128xf32> to vector<1x8x8x128xf32>
    %150 = arith.truncf %149 : vector<1x8x8x128xf32> to vector<1x8x8x128xbf16>
    %c0_156 = arith.constant 0 : index
    %c0_157 = arith.constant 0 : index
    %c0_158 = arith.constant 0 : index
    %c0_159 = arith.constant 0 : index
    %151 = vector.load %arg9[%c0_156, %c0_157, %c0_158, %c0_159] : memref<1x8x8x128xbf16, #tpu.memory_space<vmem>>, vector<1x8x8x128xbf16>
    tpu.vector_store %arg9[%c0_156, %c0_157, %c0_158, %c0_159], %150 {strides = array<i32>} : memref<1x8x8x128xbf16, #tpu.memory_space<vmem>>, vector<1x8x8x128xbf16>,
    return
  }
  func.func @transform_0(%arg0: i32) -> (i32, i32, i32, i32) {
    %c0_i32 = arith.constant 0 : i32
    %c0_i32_0 = arith.constant 0 : i32
    %c0_i32_1 = arith.constant 0 : i32
    %c0_i32_2 = arith.constant 0 : i32
    return %arg0, %c0_i32, %c0_i32_0, %c0_i32_1 : i32, i32, i32, i32
  }
  func.func @transform_1(%arg0: i32) -> (i32, i32, i32) {
    %c0_i32 = arith.constant 0 : i32
    %c0_i32_0 = arith.constant 0 : i32
    %c0_i32_1 = arith.constant 0 : i32
    %c0_i32_2 = arith.constant 0 : i32
    return %c0_i32, %c0_i32_0, %c0_i32_1 : i32, i32, i32
  }
  func.func @transform_2(%arg0: i32) -> (i32, i32) {
    %c0_i32 = arith.constant 0 : i32
    %c0_i32_0 = arith.constant 0 : i32
    %c0_i32_1 = arith.constant 0 : i32
    return %c0_i32, %c0_i32_0 : i32, i32
  }
  func.func @transform_3(%arg0: i32) -> (i32, i32, i32) {
    %c0_i32 = arith.constant 0 : i32
    %c0_i32_0 = arith.constant 0 : i32
    %c0_i32_1 = arith.constant 0 : i32
    %c0_i32_2 = arith.constant 0 : i32
    return %c0_i32, %c0_i32_0, %c0_i32_1 : i32, i32, i32
  }
  func.func @transform_4(%arg0: i32) -> (i32, i32) {
    %c0_i32 = arith.constant 0 : i32
    %c0_i32_0 = arith.constant 0 : i32
    %c0_i32_1 = arith.constant 0 : i32
    return %c0_i32, %c0_i32_0 : i32, i32
  }
  func.func @transform_5(%arg0: i32) -> (i32, i32) {
    %c0_i32 = arith.constant 0 : i32
    %c0_i32_0 = arith.constant 0 : i32
    %c0_i32_1 = arith.constant 0 : i32
    return %c0_i32, %c0_i32_0 : i32, i32
  }
  func.func @transform_6(%arg0: i32) -> (i32, i32, i32) {
    %c0_i32 = arith.constant 0 : i32
    %c0_i32_0 = arith.constant 0 : i32
    %c0_i32_1 = arith.constant 0 : i32
    %c0_i32_2 = arith.constant 0 : i32
    return %c0_i32, %c0_i32_0, %c0_i32_1 : i32, i32, i32
  }
  func.func @transform_7(%arg0: i32) -> (i32, i32) {
    %c0_i32 = arith.constant 0 : i32
    %c0_i32_0 = arith.constant 0 : i32
    %c0_i32_1 = arith.constant 0 : i32
    return %c0_i32, %c0_i32_0 : i32, i32
  }
  func.func @transform_8(%arg0: i32) -> (i32, i32, i32, i32) {
    %c0_i32 = arith.constant 0 : i32
    %c0_i32_0 = arith.constant 0 : i32
    %c0_i32_1 = arith.constant 0 : i32
    %c0_i32_2 = arith.constant 0 : i32
    return %arg0, %c0_i32, %c0_i32_0, %c0_i32_1 : i32, i32, i32, i32
  }
}

module attributes {stable_mosaic.version = 11 : i64} {
  func.func @_taps_matmul_kernel(%arg0: i32, %arg1: memref<9x1x64x128xbf16, #tpu.memory_space<vmem>>, %arg2: memref<9x128x128xbf16, #tpu.memory_space<vmem>>, %arg3: memref<1x128xf32, #tpu.memory_space<vmem>>, %arg4: memref<1x64x128xbf16, #tpu.memory_space<vmem>>) attributes {dimension_semantics = [#tpu.dimension_semantics<parallel>], iteration_bounds = array<i64: 2>, scalar_prefetch = 0 : i64, scratch_operands = 0 : i64, tpu.core_type = #tpu.core_type<tc>, window_params = [{transform_indices = @transform_0, window_bounds = array<i64: 9, 1, 64, 128>}, {pipeline_mode = #tpu.pipeline_mode<synchronous>, transform_indices = @transform_1, window_bounds = array<i64: 9, 128, 128>}, {pipeline_mode = #tpu.pipeline_mode<synchronous>, transform_indices = @transform_2, window_bounds = array<i64: 1, 128>}, {transform_indices = @transform_3, window_bounds = array<i64: 1, 64, 128>}]} {
    %cst = arith.constant 0.000000e+00 : f32
    %0 = vector.broadcast %cst : f32 to vector<64x128xf32>
    %c0 = arith.constant 0 : index
    %c0_0 = arith.constant 0 : index
    %c0_1 = arith.constant 0 : index
    %c0_2 = arith.constant 0 : index
    %1 = vector.load %arg1[%c0, %c0_0, %c0_1, %c0_2] : memref<9x1x64x128xbf16, #tpu.memory_space<vmem>>, vector<1x1x64x128xbf16>
    %2 = vector.shape_cast %1 : vector<1x1x64x128xbf16> to vector<64x128xbf16>
    %c0_3 = arith.constant 0 : index
    %c0_4 = arith.constant 0 : index
    %c0_5 = arith.constant 0 : index
    %3 = vector.load %arg2[%c0_3, %c0_4, %c0_5] : memref<9x128x128xbf16, #tpu.memory_space<vmem>>, vector<1x128x128xbf16>
    %4 = vector.shape_cast %3 : vector<1x128x128xbf16> to vector<128x128xbf16>
    %cst_6 = arith.constant dense<0.000000e+00> : vector<64x128xf32>
    %5 = tpu.matmul %2, %4, %cst_6 {dimension_numbers = #tpu.dot_dimension_numbers<[1], [0], [0], [1], [0, 0, 1, 1], [], []>} : vector<64x128xbf16>, vector<128x128xbf16>, vector<64x128xf32> -> vector<64x128xf32>
    %6 = arith.addf %0, %5 : vector<64x128xf32>
    %c1 = arith.constant 1 : index
    %c0_7 = arith.constant 0 : index
    %c0_8 = arith.constant 0 : index
    %c0_9 = arith.constant 0 : index
    %7 = vector.load %arg1[%c1, %c0_7, %c0_8, %c0_9] : memref<9x1x64x128xbf16, #tpu.memory_space<vmem>>, vector<1x1x64x128xbf16>
    %8 = vector.shape_cast %7 : vector<1x1x64x128xbf16> to vector<64x128xbf16>
    %c1_10 = arith.constant 1 : index
    %c0_11 = arith.constant 0 : index
    %c0_12 = arith.constant 0 : index
    %9 = vector.load %arg2[%c1_10, %c0_11, %c0_12] : memref<9x128x128xbf16, #tpu.memory_space<vmem>>, vector<1x128x128xbf16>
    %10 = vector.shape_cast %9 : vector<1x128x128xbf16> to vector<128x128xbf16>
    %cst_13 = arith.constant dense<0.000000e+00> : vector<64x128xf32>
    %11 = tpu.matmul %8, %10, %cst_13 {dimension_numbers = #tpu.dot_dimension_numbers<[1], [0], [0], [1], [0, 0, 1, 1], [], []>} : vector<64x128xbf16>, vector<128x128xbf16>, vector<64x128xf32> -> vector<64x128xf32>
    %12 = arith.addf %6, %11 : vector<64x128xf32>
    %c2 = arith.constant 2 : index
    %c0_14 = arith.constant 0 : index
    %c0_15 = arith.constant 0 : index
    %c0_16 = arith.constant 0 : index
    %13 = vector.load %arg1[%c2, %c0_14, %c0_15, %c0_16] : memref<9x1x64x128xbf16, #tpu.memory_space<vmem>>, vector<1x1x64x128xbf16>
    %14 = vector.shape_cast %13 : vector<1x1x64x128xbf16> to vector<64x128xbf16>
    %c2_17 = arith.constant 2 : index
    %c0_18 = arith.constant 0 : index
    %c0_19 = arith.constant 0 : index
    %15 = vector.load %arg2[%c2_17, %c0_18, %c0_19] : memref<9x128x128xbf16, #tpu.memory_space<vmem>>, vector<1x128x128xbf16>
    %16 = vector.shape_cast %15 : vector<1x128x128xbf16> to vector<128x128xbf16>
    %cst_20 = arith.constant dense<0.000000e+00> : vector<64x128xf32>
    %17 = tpu.matmul %14, %16, %cst_20 {dimension_numbers = #tpu.dot_dimension_numbers<[1], [0], [0], [1], [0, 0, 1, 1], [], []>} : vector<64x128xbf16>, vector<128x128xbf16>, vector<64x128xf32> -> vector<64x128xf32>
    %18 = arith.addf %12, %17 : vector<64x128xf32>
    %c3 = arith.constant 3 : index
    %c0_21 = arith.constant 0 : index
    %c0_22 = arith.constant 0 : index
    %c0_23 = arith.constant 0 : index
    %19 = vector.load %arg1[%c3, %c0_21, %c0_22, %c0_23] : memref<9x1x64x128xbf16, #tpu.memory_space<vmem>>, vector<1x1x64x128xbf16>
    %20 = vector.shape_cast %19 : vector<1x1x64x128xbf16> to vector<64x128xbf16>
    %c3_24 = arith.constant 3 : index
    %c0_25 = arith.constant 0 : index
    %c0_26 = arith.constant 0 : index
    %21 = vector.load %arg2[%c3_24, %c0_25, %c0_26] : memref<9x128x128xbf16, #tpu.memory_space<vmem>>, vector<1x128x128xbf16>
    %22 = vector.shape_cast %21 : vector<1x128x128xbf16> to vector<128x128xbf16>
    %cst_27 = arith.constant dense<0.000000e+00> : vector<64x128xf32>
    %23 = tpu.matmul %20, %22, %cst_27 {dimension_numbers = #tpu.dot_dimension_numbers<[1], [0], [0], [1], [0, 0, 1, 1], [], []>} : vector<64x128xbf16>, vector<128x128xbf16>, vector<64x128xf32> -> vector<64x128xf32>
    %24 = arith.addf %18, %23 : vector<64x128xf32>
    %c4 = arith.constant 4 : index
    %c0_28 = arith.constant 0 : index
    %c0_29 = arith.constant 0 : index
    %c0_30 = arith.constant 0 : index
    %25 = vector.load %arg1[%c4, %c0_28, %c0_29, %c0_30] : memref<9x1x64x128xbf16, #tpu.memory_space<vmem>>, vector<1x1x64x128xbf16>
    %26 = vector.shape_cast %25 : vector<1x1x64x128xbf16> to vector<64x128xbf16>
    %c4_31 = arith.constant 4 : index
    %c0_32 = arith.constant 0 : index
    %c0_33 = arith.constant 0 : index
    %27 = vector.load %arg2[%c4_31, %c0_32, %c0_33] : memref<9x128x128xbf16, #tpu.memory_space<vmem>>, vector<1x128x128xbf16>
    %28 = vector.shape_cast %27 : vector<1x128x128xbf16> to vector<128x128xbf16>
    %cst_34 = arith.constant dense<0.000000e+00> : vector<64x128xf32>
    %29 = tpu.matmul %26, %28, %cst_34 {dimension_numbers = #tpu.dot_dimension_numbers<[1], [0], [0], [1], [0, 0, 1, 1], [], []>} : vector<64x128xbf16>, vector<128x128xbf16>, vector<64x128xf32> -> vector<64x128xf32>
    %30 = arith.addf %24, %29 : vector<64x128xf32>
    %c5 = arith.constant 5 : index
    %c0_35 = arith.constant 0 : index
    %c0_36 = arith.constant 0 : index
    %c0_37 = arith.constant 0 : index
    %31 = vector.load %arg1[%c5, %c0_35, %c0_36, %c0_37] : memref<9x1x64x128xbf16, #tpu.memory_space<vmem>>, vector<1x1x64x128xbf16>
    %32 = vector.shape_cast %31 : vector<1x1x64x128xbf16> to vector<64x128xbf16>
    %c5_38 = arith.constant 5 : index
    %c0_39 = arith.constant 0 : index
    %c0_40 = arith.constant 0 : index
    %33 = vector.load %arg2[%c5_38, %c0_39, %c0_40] : memref<9x128x128xbf16, #tpu.memory_space<vmem>>, vector<1x128x128xbf16>
    %34 = vector.shape_cast %33 : vector<1x128x128xbf16> to vector<128x128xbf16>
    %cst_41 = arith.constant dense<0.000000e+00> : vector<64x128xf32>
    %35 = tpu.matmul %32, %34, %cst_41 {dimension_numbers = #tpu.dot_dimension_numbers<[1], [0], [0], [1], [0, 0, 1, 1], [], []>} : vector<64x128xbf16>, vector<128x128xbf16>, vector<64x128xf32> -> vector<64x128xf32>
    %36 = arith.addf %30, %35 : vector<64x128xf32>
    %c6 = arith.constant 6 : index
    %c0_42 = arith.constant 0 : index
    %c0_43 = arith.constant 0 : index
    %c0_44 = arith.constant 0 : index
    %37 = vector.load %arg1[%c6, %c0_42, %c0_43, %c0_44] : memref<9x1x64x128xbf16, #tpu.memory_space<vmem>>, vector<1x1x64x128xbf16>
    %38 = vector.shape_cast %37 : vector<1x1x64x128xbf16> to vector<64x128xbf16>
    %c6_45 = arith.constant 6 : index
    %c0_46 = arith.constant 0 : index
    %c0_47 = arith.constant 0 : index
    %39 = vector.load %arg2[%c6_45, %c0_46, %c0_47] : memref<9x128x128xbf16, #tpu.memory_space<vmem>>, vector<1x128x128xbf16>
    %40 = vector.shape_cast %39 : vector<1x128x128xbf16> to vector<128x128xbf16>
    %cst_48 = arith.constant dense<0.000000e+00> : vector<64x128xf32>
    %41 = tpu.matmul %38, %40, %cst_48 {dimension_numbers = #tpu.dot_dimension_numbers<[1], [0], [0], [1], [0, 0, 1, 1], [], []>} : vector<64x128xbf16>, vector<128x128xbf16>, vector<64x128xf32> -> vector<64x128xf32>
    %42 = arith.addf %36, %41 : vector<64x128xf32>
    %c7 = arith.constant 7 : index
    %c0_49 = arith.constant 0 : index
    %c0_50 = arith.constant 0 : index
    %c0_51 = arith.constant 0 : index
    %43 = vector.load %arg1[%c7, %c0_49, %c0_50, %c0_51] : memref<9x1x64x128xbf16, #tpu.memory_space<vmem>>, vector<1x1x64x128xbf16>
    %44 = vector.shape_cast %43 : vector<1x1x64x128xbf16> to vector<64x128xbf16>
    %c7_52 = arith.constant 7 : index
    %c0_53 = arith.constant 0 : index
    %c0_54 = arith.constant 0 : index
    %45 = vector.load %arg2[%c7_52, %c0_53, %c0_54] : memref<9x128x128xbf16, #tpu.memory_space<vmem>>, vector<1x128x128xbf16>
    %46 = vector.shape_cast %45 : vector<1x128x128xbf16> to vector<128x128xbf16>
    %cst_55 = arith.constant dense<0.000000e+00> : vector<64x128xf32>
    %47 = tpu.matmul %44, %46, %cst_55 {dimension_numbers = #tpu.dot_dimension_numbers<[1], [0], [0], [1], [0, 0, 1, 1], [], []>} : vector<64x128xbf16>, vector<128x128xbf16>, vector<64x128xf32> -> vector<64x128xf32>
    %48 = arith.addf %42, %47 : vector<64x128xf32>
    %c8 = arith.constant 8 : index
    %c0_56 = arith.constant 0 : index
    %c0_57 = arith.constant 0 : index
    %c0_58 = arith.constant 0 : index
    %49 = vector.load %arg1[%c8, %c0_56, %c0_57, %c0_58] : memref<9x1x64x128xbf16, #tpu.memory_space<vmem>>, vector<1x1x64x128xbf16>
    %50 = vector.shape_cast %49 : vector<1x1x64x128xbf16> to vector<64x128xbf16>
    %c8_59 = arith.constant 8 : index
    %c0_60 = arith.constant 0 : index
    %c0_61 = arith.constant 0 : index
    %51 = vector.load %arg2[%c8_59, %c0_60, %c0_61] : memref<9x128x128xbf16, #tpu.memory_space<vmem>>, vector<1x128x128xbf16>
    %52 = vector.shape_cast %51 : vector<1x128x128xbf16> to vector<128x128xbf16>
    %cst_62 = arith.constant dense<0.000000e+00> : vector<64x128xf32>
    %53 = tpu.matmul %50, %52, %cst_62 {dimension_numbers = #tpu.dot_dimension_numbers<[1], [0], [0], [1], [0, 0, 1, 1], [], []>} : vector<64x128xbf16>, vector<128x128xbf16>, vector<64x128xf32> -> vector<64x128xf32>
    %54 = arith.addf %48, %53 : vector<64x128xf32>
    %c0_63 = arith.constant 0 : index
    %c0_64 = arith.constant 0 : index
    %55 = vector.load %arg3[%c0_63, %c0_64] : memref<1x128xf32, #tpu.memory_space<vmem>>, vector<1x128xf32>
    %56 = vector.broadcast %55 : vector<1x128xf32> to vector<64x128xf32>
    %57 = arith.addf %54, %56 : vector<64x128xf32>
    %58 = vector.shape_cast %57 : vector<64x128xf32> to vector<1x64x128xf32>
    %59 = arith.truncf %58 : vector<1x64x128xf32> to vector<1x64x128xbf16>
    %c0_65 = arith.constant 0 : index
    %c0_66 = arith.constant 0 : index
    %c0_67 = arith.constant 0 : index
    %60 = vector.load %arg4[%c0_65, %c0_66, %c0_67] : memref<1x64x128xbf16, #tpu.memory_space<vmem>>, vector<1x64x128xbf16>
    tpu.vector_store %arg4[%c0_65, %c0_66, %c0_67], %59 {strides = array<i32>} : memref<1x64x128xbf16, #tpu.memory_space<vmem>>, vector<1x64x128xbf16>,
    return
  }
  func.func @transform_0(%arg0: i32) -> (i32, i32, i32, i32) {
    %c0_i32 = arith.constant 0 : i32
    %c0_i32_0 = arith.constant 0 : i32
    %c0_i32_1 = arith.constant 0 : i32
    %c0_i32_2 = arith.constant 0 : i32
    return %c0_i32, %arg0, %c0_i32_0, %c0_i32_1 : i32, i32, i32, i32
  }
  func.func @transform_1(%arg0: i32) -> (i32, i32, i32) {
    %c0_i32 = arith.constant 0 : i32
    %c0_i32_0 = arith.constant 0 : i32
    %c0_i32_1 = arith.constant 0 : i32
    %c0_i32_2 = arith.constant 0 : i32
    return %c0_i32, %c0_i32_0, %c0_i32_1 : i32, i32, i32
  }
  func.func @transform_2(%arg0: i32) -> (i32, i32) {
    %c0_i32 = arith.constant 0 : i32
    %c0_i32_0 = arith.constant 0 : i32
    %c0_i32_1 = arith.constant 0 : i32
    return %c0_i32, %c0_i32_0 : i32, i32
  }
  func.func @transform_3(%arg0: i32) -> (i32, i32, i32) {
    %c0_i32 = arith.constant 0 : i32
    %c0_i32_0 = arith.constant 0 : i32
    %c0_i32_1 = arith.constant 0 : i32
    return %arg0, %c0_i32, %c0_i32_0 : i32, i32, i32
  }
}

</mosaic_0001>

<llo_original>
// kernel: unet_forward.12
$region0: #{unet_forward.12}
  #allocation0 [shape = 'u32[]', space=smem, size = 0x4, offset = 0x4, fixed_abs, tag = 'smem constant byte address 0x4 - core index']
  #allocation1 [shape = 'u32[72,128]{1,0:T(1,128)}', space=vmem, size = 0x9000, scoped, tag = 'internal scratch']
  %s0 = inlined_call_operand.vmem [shape: bf16[1,2,64,128], index: 0, kind: input, shape index: {}]
  %s1 = inlined_call_operand.vmem [shape: bf16[1,128,128], index: 1, kind: input, shape index: {}]
  %s2 = inlined_call_operand.vmem [shape: f32[1,128], index: 2, kind: input, shape index: {}]
  %s3 = inlined_call_operand.vmem [shape: bf16[2,64,128], index: 3, kind: output, shape index: {}]
  %s4 = sld [smem:[#allocation0]]
  $region45: #{unet_forward.12} parent=0
    _
  %s6 = ssub.s32 1, %s4
  %s7 = scalar_select 0, %s6, %s4
  loop: start=0, step=1, limit=4
  $region2: #{unet_forward.12} parent=0 // loop_pre_header
    _
  $region3: #{unet_forward.12} parent=0 // loop_header
    %s9 = sphi 0, %s13
    %p10 = scmp.ge.s32.totalorder %s9, 4
    %s19 = sphi 0, %s21
    %s22 = sphi 0, %s19
    %s23 = sphi 0, %s22
    %s39 = sphi 0, %s23
    %s43 = sphi 0, %s43
    %s45 = sphi 0, %s43
    %s46 = sphi 0, %s45
    %s60 = sphi 0, %s46
    %s64 = sphi 0, %s64
    %s66 = sphi 0, %s64
    %s67 = sphi 0, %s66
    %s81 = sphi 0, %s67
    %s87 = sphi 0, %s89
    %s90 = sphi 0, %s87
    %s91 = sphi 0, %s90
    %s107 = sphi 0, %s91
  $region4: #{unet_forward.12} parent=0 // loop_header_branch
    %12 = sbr.rel (%p10) target = $region8
  $region5: #{unet_forward.12} parent=0 // loop_body
    %s14 = ssub.s32 %s9, 1
    %s15 = ssub.s32 %s9, 2
    %s16 = sadd.s32 %s9, 1
    %s17 = ssub.s32 %s9, %s16
    %p18 = scmp.eq.s32.totalorder %s17, 0
    %s20 = sadd.s32 %s19, 1
    %s21 = scalar_select %p18, %s19, %s20
    %p24 = pneg %p18
    %p25 = scmp.eq.s32.totalorder %s9, 1
    %p26 = por %p24, %p25
    %p27 = scmp.ne.s32.totalorder %s19, %s22
    %p28 = scmp.eq.s32.totalorder %s9, 0
    %p29 = por %p27, %p28
    %p30 = scmp.ne.s32.totalorder %s19, %s22
    %p31 = scmp.eq.s32.totalorder %s14, 1
    %p32 = por %p30, %p31
    %p33 = scmp.ne.s32.totalorder %s22, %s23
    %p34 = scmp.eq.s32.totalorder %s14, 0
    %p35 = por %p33, %p34
    %p36 = scmp.ne.s32.totalorder %s22, %s23
    %p37 = scmp.eq.s32.totalorder %s15, 1
    %p38 = por %p36, %p37
    %p40 = scmp.ne.s32.totalorder %s23, %s39
    %p41 = scmp.eq.s32.totalorder %s15, 0
    %p42 = por %p40, %p41
    %s44 = sadd.s32 %s43, 1
    %p47 = scmp.eq.s32.totalorder %s9, 1
    %p48 = scmp.ne.s32.totalorder %s43, %s45
    %p49 = scmp.eq.s32.totalorder %s9, 0
    %p50 = por %p48, %p49
    %p51 = scmp.ne.s32.totalorder %s43, %s45
    %p52 = scmp.eq.s32.totalorder %s14, 1
    %p53 = por %p51, %p52
    %p54 = scmp.ne.s32.totalorder %s45, %s46
    %p55 = scmp.eq.s32.totalorder %s14, 0
    %p56 = por %p54, %p55
    %p57 = scmp.ne.s32.totalorder %s45, %s46
    %p58 = scmp.eq.s32.totalorder %s15, 1
    %p59 = por %p57, %p58
    %p61 = scmp.ne.s32.totalorder %s46, %s60
    %p62 = scmp.eq.s32.totalorder %s15, 0
    %p63 = por %p61, %p62
    %s65 = sadd.s32 %s64, 1
    %p68 = scmp.eq.s32.totalorder %s9, 1
    %p69 = scmp.ne.s32.totalorder %s64, %s66
    %p70 = scmp.eq.s32.totalorder %s9, 0
    %p71 = por %p69, %p70
    %p72 = scmp.ne.s32.totalorder %s64, %s66
    %p73 = scmp.eq.s32.totalorder %s14, 1
    %p74 = por %p72, %p73
    %p75 = scmp.ne.s32.totalorder %s66, %s67
    %p76 = scmp.eq.s32.totalorder %s14, 0
    %p77 = por %p75, %p76
    %p78 = scmp.ne.s32.totalorder %s66, %s67
    %p79 = scmp.eq.s32.totalorder %s15, 1
    %p80 = por %p78, %p79
    %p82 = scmp.ne.s32.totalorder %s67, %s81
    %p83 = scmp.eq.s32.totalorder %s15, 0
    %p84 = por %p82, %p83
    %s85 = ssub.s32 %s9, %s16
    %p86 = scmp.eq.s32.totalorder %s85, 0
    %s88 = sadd.s32 %s87, 1
    %s89 = scalar_select %p86, %s87, %s88
    %p92 = pneg %p86
    %p93 = scmp.eq.s32.totalorder %s9, 1
    %p94 = por %p92, %p93
    %p95 = scmp.ne.s32.totalorder %s87, %s90
    %p96 = scmp.eq.s32.totalorder %s9, 0
    %p97 = por %p95, %p96
    %p98 = scmp.ne.s32.totalorder %s87, %s90
    %p99 = scmp.eq.s32.totalorder %s14, 1
    %p100 = por %p98, %p99
    %p101 = scmp.ne.s32.totalorder %s90, %s91
    %p102 = scmp.eq.s32.totalorder %s14, 0
    %p103 = por %p101, %p102
    %p104 = scmp.ne.s32.totalorder %s90, %s91
    %p105 = scmp.eq.s32.totalorder %s15, 1
    %p106 = por %p104, %p105
    %p108 = scmp.ne.s32.totalorder %s91, %s107
    %p109 = scmp.eq.s32.totalorder %s15, 0
    %p110 = por %p108, %p109
    %p111 = scmp.le.s32.totalorder 1, %s9
    %p112 = scmp.lt.s32.totalorder %s9, 3
    %p113 = pnand %p111, %p112
    %p114 = pneg %p113
    // Predicated region
    $region9: #{unet_forward.12} parent=5 // pred_check
      _
    $region10: #{unet_forward.12} parent=5 // pred_check_branch
      %116 = sbr.rel (%p113) target = $region12
    $region11: #{unet_forward.12} parent=5 // pred_region
      %s117 = ssub.s32 %s9, 1
      // Predicated region
      $region13: #{unet_forward.12} parent=11 // pred_check
        %p118 = pneg %p56
      $region14: #{unet_forward.12} parent=11 // pred_check_branch
        %120 = sbr.rel (%p118) target = $region16
      $region15: #{unet_forward.12} parent=11 // pred_region
        _
      $region16: #{unet_forward.12} parent=11 // pred_fallthru
        _
      // Predicated region
      $region17: #{unet_forward.12} parent=11 // pred_check
        %p121 = pneg %p77
      $region18: #{unet_forward.12} parent=11 // pred_check_branch
        %123 = sbr.rel (%p121) target = $region20
      $region19: #{unet_forward.12} parent=11 // pred_region
        _
      $region20: #{unet_forward.12} parent=11 // pred_fallthru
        _
    $region12: #{unet_forward.12} parent=5 // pred_fallthru
      _
    %p124 = scmp.lt.s32.totalorder %s9, 2
    // Predicated region
    $region21: #{unet_forward.12} parent=5 // pred_check
      %p125 = pneg %p124
    $region22: #{unet_forward.12} parent=5 // pred_check_branch
      %127 = sbr.rel (%p125) target = $region24
    $region23: #{unet_forward.12} parent=5 // pred_region
      // Predicated region
      $region25: #{unet_forward.12} parent=23 // pred_check
        %p128 = pneg %p29
      $region26: #{unet_forward.12} parent=23 // pred_check_branch
        %130 = sbr.rel (%p128) target = $region28
      $region27: #{unet_forward.12} parent=23 // pred_region
        %p131 = scmp.lt.s32.totalorder %s9, 1
        %s132 = scalar_select %p131, %s9, 1
        %s133 = smul.addr %s132, 8
        %s134 = smul.addr %s133, 4
        %s135 = scalar_lea.vmem %s0, %s134
      $region28: #{unet_forward.12} parent=23 // pred_fallthru
        _
    $region24: #{unet_forward.12} parent=5 // pred_fallthru
      _
    %p136 = scmp.le.s32.totalorder 1, %s9
    %p137 = scmp.lt.s32.totalorder %s9, 3
    %p138 = pnand %p136, %p137
    %p139 = pneg %p138
    // Predicated region
    $region29: #{unet_forward.12} parent=5 // pred_check
      _
    $region30: #{unet_forward.12} parent=5 // pred_check_branch
      %141 = sbr.rel (%p138) target = $region32
    $region31: #{unet_forward.12} parent=5 // pred_region
      %s142 = ssub.s32 %s9, 1
      %p143 = scmp.lt.s32.totalorder %s14, 1
      %s144 = scalar_select %p143, %s14, 1
      %s145 = smul.addr %s144, 8
      %s146 = smul.addr %s145, 4
      %s147 = scalar_lea.vmem %s0, %s146
      %p148 = pneg %p35
      %p149 = pneg %p32
      %p150 = pneg %p56
      %p151 = pneg %p53
      %p152 = pneg %p77
      %p153 = pneg %p74
      %p154 = pneg %p103
      %p155 = pneg %p100
      %p156 = scmp.lt.s32.totalorder %s14, 1
      %s157 = scalar_select %p156, %s14, 1
      %s158 = smul.addr %s157, 8
      %s159 = smul.addr %s158, 4
      %s160 = scalar_lea.vmem %s3, %s159
      %p161 = scmp.lt.s32.totalorder %s14, 1
      %s162 = scalar_select %p161, %s14, 1
      %s163 = smul.addr %s162, 8
      %s164 = smul.addr %s163, 4
      %s165 = scalar_lea.vmem %s0, %s164
      %p166 = scmp.lt.s32.totalorder %s14, 1
      %s167 = scalar_select %p166, %s14, 1
      %s168 = smul.addr %s167, 8
      %s169 = smul.addr %s168, 4
      %s170 = scalar_lea.vmem %s3, %s169
      %v171 = vld [vmem:[%s165] sm:$0xf]
      %v172 = vld [vmem:[%s165 + $0x4] sm:$0xf]
      %v173 = vld [vmem:[%s165 + $0x8] sm:$0xf]
      %v174 = vld [vmem:[%s165 + $0xc] sm:$0xf]
      %v175 = vld [vmem:[%s165 + $0x10] sm:$0xf]
      %v176 = vld [vmem:[%s165 + $0x14] sm:$0xf]
      %v177 = vld [vmem:[%s165 + $0x18] sm:$0xf]
      %v178 = vld [vmem:[%s165 + $0x1c] sm:$0xf]
      %v179 = vld [vmem:[%s1] sm:$0xf]
      %v180 = vld [vmem:[%s1 + $0x4] sm:$0xf]
      %v181 = vld [vmem:[%s1 + $0x8] sm:$0xf]
      %v182 = vld [vmem:[%s1 + $0xc] sm:$0xf]
      %v183 = vld [vmem:[%s1 + $0x10] sm:$0xf]
      %v184 = vld [vmem:[%s1 + $0x14] sm:$0xf]
      %v185 = vld [vmem:[%s1 + $0x18] sm:$0xf]
      %v186 = vld [vmem:[%s1 + $0x1c] sm:$0xf]
      %v187 = vld [vmem:[%s1 + $0x20] sm:$0xf]
      %v188 = vld [vmem:[%s1 + $0x24] sm:$0xf]
      %v189 = vld [vmem:[%s1 + $0x28] sm:$0xf]
      %v190 = vld [vmem:[%s1 + $0x2c] sm:$0xf]
      %v191 = vld [vmem:[%s1 + $0x30] sm:$0xf]
      %v192 = vld [vmem:[%s1 + $0x34] sm:$0xf]
      %v193 = vld [vmem:[%s1 + $0x38] sm:$0xf]
      %v194 = vld [vmem:[%s1 + $0x3c] sm:$0xf]
      %v195 = vld [vmem:[%s2] sm:$0x1]
      %v197 = vperm.slane %v195, 0
      %v207 = vunpack.c.l.b16 %v171
      %v208 = vunpack.c.l.b16 %v172
      %v209 = vunpack.c.l.b16 %v173
      %v210 = vunpack.c.l.b16 %v174
      %v211 = vunpack.c.l.b16 %v175
      %v212 = vunpack.c.l.b16 %v176
      %v213 = vunpack.c.l.b16 %v177
      %v214 = vunpack.c.l.b16 %v178
      %v215 = vpack.c.b16 %v208, %v207
      %v216 = vpack.c.b16 %v210, %v209
      %v217 = vpack.c.b16 %v212, %v211
      %v218 = vpack.c.b16 %v214, %v213
      %v239 = vunpack.c.l.b16 %v179
      %v240 = vunpack.c.l.b16 %v180
      %v241 = vunpack.c.l.b16 %v181
      %v242 = vunpack.c.l.b16 %v182
      %v243 = vunpack.c.l.b16 %v183
      %v244 = vunpack.c.l.b16 %v184
      %v245 = vunpack.c.l.b16 %v185
      %v246 = vunpack.c.l.b16 %v186
      %v247 = vunpack.c.l.b16 %v187
      %v248 = vunpack.c.l.b16 %v188
      %v249 = vunpack.c.l.b16 %v189
      %v250 = vunpack.c.l.b16 %v190
      %v251 = vunpack.c.l.b16 %v191
      %v252 = vunpack.c.l.b16 %v192
      %v253 = vunpack.c.l.b16 %v193
      %v254 = vunpack.c.l.b16 %v194
      %v255 = vpack.c.b16 %v240, %v239
      %v256 = vpack.c.b16 %v242, %v241
      %v257 = vpack.c.b16 %v244, %v243
      %v258 = vpack.c.b16 %v246, %v245
      %v259 = vpack.c.b16 %v248, %v247
      %v260 = vpack.c.b16 %v250, %v249
      %v261 = vpack.c.b16 %v252, %v251
      %v262 = vpack.c.b16 %v254, %v253
      %271 = vmatpush.bf16.msra.mxu0 %v262
      %272 = vmatpush.bf16.msra.mxu0 %v261
      %273 = vmatpush.bf16.msra.mxu0 %v260
      %274 = vmatpush.bf16.msra.mxu0 %v259
      %275 = vmatpush.bf16.msra.mxu0 %v258
      %276 = vmatpush.bf16.msra.mxu0 %v257
      %277 = vmatpush.bf16.msra.mxu0 %v256
      %278 = vmatpush.bf16.msra.mxu0 %v255
      %279 = vmatmul.bf16.gmra.mxu0 %v215
      %v280 = vpop.f32.mrf.mxu0
      %v281 = vadd.f32 %v197, %v280
      %v282 = vpop.f32.mrf.mxu0
      %v283 = vadd.f32 %v197, %v282
      %284 = vmatmul.bf16.gmra.mxu0 %v216
      %v285 = vpop.f32.mrf.mxu0
      %v286 = vadd.f32 %v197, %v285
      %v287 = vpop.f32.mrf.mxu0
      %v288 = vadd.f32 %v197, %v287
      %289 = vmatmul.bf16.gmra.mxu0 %v217
      %v290 = vpop.f32.mrf.mxu0
      %v291 = vadd.f32 %v197, %v290
      %v292 = vpop.f32.mrf.mxu0
      %v293 = vadd.f32 %v197, %v292
      %294 = vmatmul.bf16.gmra.mxu0 %v218
      %v295 = vpop.f32.mrf.mxu0
      %v296 = vadd.f32 %v197, %v295
      %v297 = vpop.f32.mrf.mxu0
      %v298 = vadd.f32 %v197, %v297
      %299 = vdwg.mxu0
      %v300 = vpack.c.bf16 %v281, %v281
      %v301 = vpack.c.bf16 %v283, %v283
      %v302 = vpack.c.bf16 %v286, %v286
      %v303 = vpack.c.bf16 %v288, %v288
      %v304 = vpack.c.bf16 %v291, %v291
      %v305 = vpack.c.bf16 %v293, %v293
      %v306 = vpack.c.bf16 %v296, %v296
      %v307 = vpack.c.bf16 %v298, %v298
      %308 = vst [vmem:[%s170] sm:$0xf] %v300
      %309 = vst [vmem:[%s170 + $0x4] sm:$0xf] %v301
      %310 = vst [vmem:[%s170 + $0x8] sm:$0xf] %v302
      %311 = vst [vmem:[%s170 + $0xc] sm:$0xf] %v303
      %312 = vst [vmem:[%s170 + $0x10] sm:$0xf] %v304
      %313 = vst [vmem:[%s170 + $0x14] sm:$0xf] %v305
      %314 = vst [vmem:[%s170 + $0x18] sm:$0xf] %v306
      %315 = vst [vmem:[%s170 + $0x1c] sm:$0xf] %v307
      %p316 = scmp.lt.s32.totalorder %s14, 1
      %s317 = scalar_select %p316, %s14, 1
      %s318 = smul.addr %s317, 8
      %s319 = smul.addr %s318, 4
      %s320 = scalar_lea.vmem %s3, %s319
      // Predicated region
      $region33: #{unet_forward.12} parent=31 // pred_check
        %p321 = pneg %p100
      $region34: #{unet_forward.12} parent=31 // pred_check_branch
        %323 = sbr.rel (%p321) target = $region36
      $region35: #{unet_forward.12} parent=31 // pred_region
        _
      $region36: #{unet_forward.12} parent=31 // pred_fallthru
        _
    $region32: #{unet_forward.12} parent=5 // pred_fallthru
      _
    %p324 = scmp.le.s32.totalorder 2, %s9
    // Predicated region
    $region37: #{unet_forward.12} parent=5 // pred_check
      %p325 = pneg %p324
    $region38: #{unet_forward.12} parent=5 // pred_check_branch
      %327 = sbr.rel (%p325) target = $region40
    $region39: #{unet_forward.12} parent=5 // pred_region
      %s328 = ssub.s32 %s9, 2
      // Predicated region
      $region41: #{unet_forward.12} parent=39 // pred_check
        %p329 = pneg %p106
      $region42: #{unet_forward.12} parent=39 // pred_check_branch
        %331 = sbr.rel (%p329) target = $region44
      $region43: #{unet_forward.12} parent=39 // pred_region
        %p332 = scmp.lt.s32.totalorder %s15, 1
        %s333 = scalar_select %p332, %s15, 1
        %s334 = smul.addr %s333, 8
        %s335 = smul.addr %s334, 4
        %s336 = scalar_lea.vmem %s3, %s335
      $region44: #{unet_forward.12} parent=39 // pred_fallthru
        _
    $region40: #{unet_forward.12} parent=5 // pred_fallthru
      _
  $region6: #{unet_forward.12} parent=0 // loop_footer
    %s13 = sadd.s32 1, %s9
  $region7: #{unet_forward.12} parent=0 // loop_footer_branch
    %8 = sbr.rel target = $region3
  $region8: #{unet_forward.12} parent=0 // loop_exit
    _

// kernel: unet_forward.8
$region0: #{unet_forward.8}
  #allocation0 [shape = 'u32[]', space=smem, size = 0x4, offset = 0x4, fixed_abs, tag = 'smem constant byte address 0x4 - core index']
  #allocation1 [shape = 'u32[72,128]{1,0:T(1,128)}', space=vmem, size = 0x9000, scoped, tag = 'internal scratch']
  %s0 = inlined_call_operand.vmem [shape: bf16[9,2,64,128], index: 0, kind: input, shape index: {}]
  %s1 = inlined_call_operand.vmem [shape: bf16[9,128,128], index: 1, kind: input, shape index: {}]
  %s2 = inlined_call_operand.vmem [shape: f32[1,128], index: 2, kind: input, shape index: {}]
  %s3 = inlined_call_operand.vmem [shape: bf16[2,64,128], index: 3, kind: output, shape index: {}]
  %s4 = sld [smem:[#allocation0]]
  $region86: #{unet_forward.8} parent=0
    _
  %s6 = ssub.s32 1, %s4
  %s7 = scalar_select 0, %s6, %s4
  $region1: #{unet_forward.8} parent=0
    #allocation2 [shape = 'u8[294912]{0}', space=vmem, size = 0x48000, scoped, tag = 'input window, operand 0']
    loop: start=0, step=1, limit=4
    $region2: #{unet_forward.8} parent=1 // loop_pre_header
      _
    $region3: #{unet_forward.8} parent=1 // loop_header
      %s9 = sphi 0, %s13
      %p10 = scmp.ge.s32.totalorder %s9, 4
      %s19 = sphi 0, %s21
      %s22 = sphi 0, %s19
      %s23 = sphi 0, %s22
      %s39 = sphi 0, %s23
      %s43 = sphi 0, %s43
      %s45 = sphi 0, %s43
      %s46 = sphi 0, %s45
      %s60 = sphi 0, %s46
      %s64 = sphi 0, %s64
      %s66 = sphi 0, %s64
      %s67 = sphi 0, %s66
      %s81 = sphi 0, %s67
      %s87 = sphi 0, %s89
      %s90 = sphi 0, %s87
      %s91 = sphi 0, %s90
      %s107 = sphi 0, %s91
    $region4: #{unet_forward.8} parent=1 // loop_header_branch
      %12 = sbr.rel (%p10) target = $region8
    $region5: #{unet_forward.8} parent=1 // loop_body
      %s14 = ssub.s32 %s9, 1
      %s15 = ssub.s32 %s9, 2
      %s16 = sadd.s32 %s9, 1
      %s17 = ssub.s32 %s9, %s16
      %p18 = scmp.eq.s32.totalorder %s17, 0
      %s20 = sadd.s32 %s19, 1
      %s21 = scalar_select %p18, %s19, %s20
      %p24 = pneg %p18
      %p25 = scmp.eq.s32.totalorder %s9, 1
      %p26 = por %p24, %p25
      %p27 = scmp.ne.s32.totalorder %s19, %s22
      %p28 = scmp.eq.s32.totalorder %s9, 0
      %p29 = por %p27, %p28
      %p30 = scmp.ne.s32.totalorder %s19, %s22
      %p31 = scmp.eq.s32.totalorder %s14, 1
      %p32 = por %p30, %p31
      %p33 = scmp.ne.s32.totalorder %s22, %s23
      %p34 = scmp.eq.s32.totalorder %s14, 0
      %p35 = por %p33, %p34
      %p36 = scmp.ne.s32.totalorder %s22, %s23
      %p37 = scmp.eq.s32.totalorder %s15, 1
      %p38 = por %p36, %p37
      %p40 = scmp.ne.s32.totalorder %s23, %s39
      %p41 = scmp.eq.s32.totalorder %s15, 0
      %p42 = por %p40, %p41
      %s44 = sadd.s32 %s43, 1
      %p47 = scmp.eq.s32.totalorder %s9, 1
      %p48 = scmp.ne.s32.totalorder %s43, %s45
      %p49 = scmp.eq.s32.totalorder %s9, 0
      %p50 = por %p48, %p49
      %p51 = scmp.ne.s32.totalorder %s43, %s45
      %p52 = scmp.eq.s32.totalorder %s14, 1
      %p53 = por %p51, %p52
      %p54 = scmp.ne.s32.totalorder %s45, %s46
      %p55 = scmp.eq.s32.totalorder %s14, 0
      %p56 = por %p54, %p55
      %p57 = scmp.ne.s32.totalorder %s45, %s46
      %p58 = scmp.eq.s32.totalorder %s15, 1
      %p59 = por %p57, %p58
      %p61 = scmp.ne.s32.totalorder %s46, %s60
      %p62 = scmp.eq.s32.totalorder %s15, 0
      %p63 = por %p61, %p62
      %s65 = sadd.s32 %s64, 1
      %p68 = scmp.eq.s32.totalorder %s9, 1
      %p69 = scmp.ne.s32.totalorder %s64, %s66
      %p70 = scmp.eq.s32.totalorder %s9, 0
      %p71 = por %p69, %p70
      %p72 = scmp.ne.s32.totalorder %s64, %s66
      %p73 = scmp.eq.s32.totalorder %s14, 1
      %p74 = por %p72, %p73
      %p75 = scmp.ne.s32.totalorder %s66, %s67
      %p76 = scmp.eq.s32.totalorder %s14, 0
      %p77 = por %p75, %p76
      %p78 = scmp.ne.s32.totalorder %s66, %s67
      %p79 = scmp.eq.s32.totalorder %s15, 1
      %p80 = por %p78, %p79
      %p82 = scmp.ne.s32.totalorder %s67, %s81
      %p83 = scmp.eq.s32.totalorder %s15, 0
      %p84 = por %p82, %p83
      %s85 = ssub.s32 %s9, %s16
      %p86 = scmp.eq.s32.totalorder %s85, 0
      %s88 = sadd.s32 %s87, 1
      %s89 = scalar_select %p86, %s87, %s88
      %p92 = pneg %p86
      %p93 = scmp.eq.s32.totalorder %s9, 1
      %p94 = por %p92, %p93
      %p95 = scmp.ne.s32.totalorder %s87, %s90
      %p96 = scmp.eq.s32.totalorder %s9, 0
      %p97 = por %p95, %p96
      %p98 = scmp.ne.s32.totalorder %s87, %s90
      %p99 = scmp.eq.s32.totalorder %s14, 1
      %p100 = por %p98, %p99
      %p101 = scmp.ne.s32.totalorder %s90, %s91
      %p102 = scmp.eq.s32.totalorder %s14, 0
      %p103 = por %p101, %p102
      %p104 = scmp.ne.s32.totalorder %s90, %s91
      %p105 = scmp.eq.s32.totalorder %s15, 1
      %p106 = por %p104, %p105
      %p108 = scmp.ne.s32.totalorder %s91, %s107
      %p109 = scmp.eq.s32.totalorder %s15, 0
      %p110 = por %p108, %p109
      %p111 = scmp.le.s32.totalorder 1, %s9
      %p112 = scmp.lt.s32.totalorder %s9, 3
      %p113 = pnand %p111, %p112
      %p114 = pneg %p113
      // Predicated region
      $region9: #{unet_forward.8} parent=5 // pred_check
        _
      $region10: #{unet_forward.8} parent=5 // pred_check_branch
        %116 = sbr.rel (%p113) target = $region12
      $region11: #{unet_forward.8} parent=5 // pred_region
        %s117 = ssub.s32 %s9, 1
        // Predicated region
        $region13: #{unet_forward.8} parent=11 // pred_check
          %p118 = pneg %p56
        $region14: #{unet_forward.8} parent=11 // pred_check_branch
          %120 = sbr.rel (%p118) target = $region16
        $region15: #{unet_forward.8} parent=11 // pred_region
          _
        $region16: #{unet_forward.8} parent=11 // pred_fallthru
          _
        // Predicated region
        $region17: #{unet_forward.8} parent=11 // pred_check
          %p121 = pneg %p77
        $region18: #{unet_forward.8} parent=11 // pred_check_branch
          %123 = sbr.rel (%p121) target = $region20
        $region19: #{unet_forward.8} parent=11 // pred_region
          _
        $region20: #{unet_forward.8} parent=11 // pred_fallthru
          _
      $region12: #{unet_forward.8} parent=5 // pred_fallthru
        _
      %p124 = scmp.lt.s32.totalorder %s9, 2
      // Predicated region
      $region21: #{unet_forward.8} parent=5 // pred_check
        %p125 = pneg %p124
      $region22: #{unet_forward.8} parent=5 // pred_check_branch
        %127 = sbr.rel (%p125) target = $region24
      $region23: #{unet_forward.8} parent=5 // pred_region
        // Predicated region
        $region25: #{unet_forward.8} parent=23 // pred_check
          %p128 = pneg %p29
        $region26: #{unet_forward.8} parent=23 // pred_check_branch
          %130 = sbr.rel (%p128) target = $region28
        $region27: #{unet_forward.8} parent=23 // pred_region
          %s131 = sand.u32 %s19, 1
          %s132 = sand.u32 %s19, 1
          %s133 = smul.addr %s132, 288
          %s134 = scalar_lea.vmem [#allocation2], %s133
          %s135 = smul.addr %s9, 8
          %s136 = smul.addr %s135, 4
          %s137 = scalar_lea.vmem %s0, %s136
          // Predicated region
          $region29: #{unet_forward.8} parent=27 // pred_check
            _
          $region30: #{unet_forward.8} parent=27 // pred_check_branch
            %139 = sbr.rel (0) target = $region32
          $region31: #{unet_forward.8} parent=27 // pred_region
            // Predicated region
            $region33: #{unet_forward.8} parent=31 // pred_check
              _
            $region34: #{unet_forward.8} parent=31 // pred_check_branch
              %141 = sbr.rel target = $region36
            $region35: #{unet_forward.8} parent=31 // pred_region
              // Predicated region
              $region48: #{unet_forward.8} parent=35 // pred_check
                _
              $region49: #{unet_forward.8} parent=35 // pred_check_branch
                %299 = sbr.rel (0) target = $region51
              $region50: #{unet_forward.8} parent=35 // pred_region
                loop: start=0, step=1, limit=1
                $region52: #{unet_forward.8} parent=50 // loop_pre_header
                  _
                $region53: #{unet_forward.8} parent=50 // loop_header
                  %s301 = sphi 0, %s305
                  %p302 = scmp.ge.s32.totalorder %s301, 1
                  %s306 = sphi %s137, %s137
                  %s307 = sphi %s134, %s134
                $region54: #{unet_forward.8} parent=50 // loop_header_branch
                  %304 = sbr.rel (%p302) target = $region58
                $region55: #{unet_forward.8} parent=50 // loop_body
                  _
                $region56: #{unet_forward.8} parent=50 // loop_footer
                  %s305 = sadd.s32 1, %s301
                $region57: #{unet_forward.8} parent=50 // loop_footer_branch
                  %300 = sbr.rel target = $region53
                $region58: #{unet_forward.8} parent=50 // loop_exit
                  _
                %s309 = ssub.s32 16, 1
                loop: start=0, step=1, limit=1
                $region59: #{unet_forward.8} parent=50 // loop_pre_header
                  _
                $region60: #{unet_forward.8} parent=50 // loop_header
                  %s311 = sphi 0, %s315
                  %p312 = scmp.ge.s32.totalorder %s311, 1
                  %s316 = sphi %s137, %s137
                  %s317 = sphi %s134, %s134
                $region61: #{unet_forward.8} parent=50 // loop_header_branch
                  %314 = sbr.rel (%p312) target = $region65
                $region62: #{unet_forward.8} parent=50 // loop_body
                  %v318 = vld [vmem:[%s316] sm:%s309]
                  %319 = vst [vmem:[%s317] sm:%s309] %v318
                  %v320 = vld [vmem:[%s316 + $0x4] sm:%s309]
                  %321 = vst [vmem:[%s317 + $0x4] sm:%s309] %v320
                  %v322 = vld [vmem:[%s316 + $0x8] sm:%s309]
                  %323 = vst [vmem:[%s317 + $0x8] sm:%s309] %v322
                  %v324 = vld [vmem:[%s316 + $0xc] sm:%s309]
                  %325 = vst [vmem:[%s317 + $0xc] sm:%s309] %v324
                  %v326 = vld [vmem:[%s316 + $0x10] sm:%s309]
                  %327 = vst [vmem:[%s317 + $0x10] sm:%s309] %v326
                  %v328 = vld [vmem:[%s316 + $0x14] sm:%s309]
                  %329 = vst [vmem:[%s317 + $0x14] sm:%s309] %v328
                  %v330 = vld [vmem:[%s316 + $0x18] sm:%s309]
                  %331 = vst [vmem:[%s317 + $0x18] sm:%s309] %v330
                  %v332 = vld [vmem:[%s316 + $0x1c] sm:%s309]
                  %333 = vst [vmem:[%s317 + $0x1c] sm:%s309] %v332
                  %v334 = vld [vmem:[%s316 + $0x40] sm:%s309]
                  %335 = vst [vmem:[%s317 + $0x20] sm:%s309] %v334
                  %v336 = vld [vmem:[%s316 + $0x44] sm:%s309]
                  %337 = vst [vmem:[%s317 + $0x24] sm:%s309] %v336
                  %v338 = vld [vmem:[%s316 + $0x48] sm:%s309]
                  %339 = vst [vmem:[%s317 + $0x28] sm:%s309] %v338
                  %v340 = vld [vmem:[%s316 + $0x4c] sm:%s309]
                  %341 = vst [vmem:[%s317 + $0x2c] sm:%s309] %v340
                  %v342 = vld [vmem:[%s316 + $0x50] sm:%s309]
                  %343 = vst [vmem:[%s317 + $0x30] sm:%s309] %v342
                  %v344 = vld [vmem:[%s316 + $0x54] sm:%s309]
                  %345 = vst [vmem:[%s317 + $0x34] sm:%s309] %v344
                  %v346 = vld [vmem:[%s316 + $0x58] sm:%s309]
                  %347 = vst [vmem:[%s317 + $0x38] sm:%s309] %v346
                  %v348 = vld [vmem:[%s316 + $0x5c] sm:%s309]
                  %349 = vst [vmem:[%s317 + $0x3c] sm:%s309] %v348
                  %v350 = vld [vmem:[%s316 + $0x80] sm:%s309]
                  %351 = vst [vmem:[%s317 + $0x40] sm:%s309] %v350
                  %v352 = vld [vmem:[%s316 + $0x84] sm:%s309]
                  %353 = vst [vmem:[%s317 + $0x44] sm:%s309] %v352
                  %v354 = vld [vmem:[%s316 + $0x88] sm:%s309]
                  %355 = vst [vmem:[%s317 + $0x48] sm:%s309] %v354
                  %v356 = vld [vmem:[%s316 + $0x8c] sm:%s309]
                  %357 = vst [vmem:[%s317 + $0x4c] sm:%s309] %v356
                  %v358 = vld [vmem:[%s316 + $0x90] sm:%s309]
                  %359 = vst [vmem:[%s317 + $0x50] sm:%s309] %v358
                  %v360 = vld [vmem:[%s316 + $0x94] sm:%s309]
                  %361 = vst [vmem:[%s317 + $0x54] sm:%s309] %v360
                  %v362 = vld [vmem:[%s316 + $0x98] sm:%s309]
                  %363 = vst [vmem:[%s317 + $0x58] sm:%s309] %v362
                  %v364 = vld [vmem:[%s316 + $0x9c] sm:%s309]
                  %365 = vst [vmem:[%s317 + $0x5c] sm:%s309] %v364
                  %v366 = vld [vmem:[%s316 + $0xc0] sm:%s309]
                  %367 = vst [vmem:[%s317 + $0x60] sm:%s309] %v366
                  %v368 = vld [vmem:[%s316 + $0xc4] sm:%s309]
                  %369 = vst [vmem:[%s317 + $0x64] sm:%s309] %v368
                  %v370 = vld [vmem:[%s316 + $0xc8] sm:%s309]
                  %371 = vst [vmem:[%s317 + $0x68] sm:%s309] %v370
                  %v372 = vld [vmem:[%s316 + $0xcc] sm:%s309]
                  %373 = vst [vmem:[%s317 + $0x6c] sm:%s309] %v372
                  %v374 = vld [vmem:[%s316 + $0xd0] sm:%s309]
                  %375 = vst [vmem:[%s317 + $0x70] sm:%s309] %v374
                  %v376 = vld [vmem:[%s316 + $0xd4] sm:%s309]
                  %377 = vst [vmem:[%s317 + $0x74] sm:%s309] %v376
                  %v378 = vld [vmem:[%s316 + $0xd8] sm:%s309]
                  %379 = vst [vmem:[%s317 + $0x78] sm:%s309] %v378
                  %v380 = vld [vmem:[%s316 + $0xdc] sm:%s309]
                  %381 = vst [vmem:[%s317 + $0x7c] sm:%s309] %v380
                  %v382 = vld [vmem:[%s316 + $0x100] sm:%s309]
                  %383 = vst [vmem:[%s317 + $0x80] sm:%s309] %v382
                  %v384 = vld [vmem:[%s316 + $0x104] sm:%s309]
                  %385 = vst [vmem:[%s317 + $0x84] sm:%s309] %v384
                  %v386 = vld [vmem:[%s316 + $0x108] sm:%s309]
                  %387 = vst [vmem:[%s317 + $0x88] sm:%s309] %v386
                  %v388 = vld [vmem:[%s316 + $0x10c] sm:%s309]
                  %389 = vst [vmem:[%s317 + $0x8c] sm:%s309] %v388
                  %v390 = vld [vmem:[%s316 + $0x110] sm:%s309]
                  %391 = vst [vmem:[%s317 + $0x90] sm:%s309] %v390
                  %v392 = vld [vmem:[%s316 + $0x114] sm:%s309]
                  %393 = vst [vmem:[%s317 + $0x94] sm:%s309] %v392
                  %v394 = vld [vmem:[%s316 + $0x118] sm:%s309]
                  %395 = vst [vmem:[%s317 + $0x98] sm:%s309] %v394
                  %v396 = vld [vmem:[%s316 + $0x11c] sm:%s309]
                  %397 = vst [vmem:[%s317 + $0x9c] sm:%s309] %v396
                  %v398 = vld [vmem:[%s316 + $0x140] sm:%s309]
                  %399 = vst [vmem:[%s317 + $0xa0] sm:%s309] %v398
                  %v400 = vld [vmem:[%s316 + $0x144] sm:%s309]
                  %401 = vst [vmem:[%s317 + $0xa4] sm:%s309] %v400
                  %v402 = vld [vmem:[%s316 + $0x148] sm:%s309]
                  %403 = vst [vmem:[%s317 + $0xa8] sm:%s309] %v402
                  %v404 = vld [vmem:[%s316 + $0x14c] sm:%s309]
                  %405 = vst [vmem:[%s317 + $0xac] sm:%s309] %v404
                  %v406 = vld [vmem:[%s316 + $0x150] sm:%s309]
                  %407 = vst [vmem:[%s317 + $0xb0] sm:%s309] %v406
                  %v408 = vld [vmem:[%s316 + $0x154] sm:%s309]
                  %409 = vst [vmem:[%s317 + $0xb4] sm:%s309] %v408
                  %v410 = vld [vmem:[%s316 + $0x158] sm:%s309]
                  %411 = vst [vmem:[%s317 + $0xb8] sm:%s309] %v410
                  %v412 = vld [vmem:[%s316 + $0x15c] sm:%s309]
                  %413 = vst [vmem:[%s317 + $0xbc] sm:%s309] %v412
                  %v414 = vld [vmem:[%s316 + $0x180] sm:%s309]
                  %415 = vst [vmem:[%s317 + $0xc0] sm:%s309] %v414
                  %v416 = vld [vmem:[%s316 + $0x184] sm:%s309]
                  %417 = vst [vmem:[%s317 + $0xc4] sm:%s309] %v416
                  %v418 = vld [vmem:[%s316 + $0x188] sm:%s309]
                  %419 = vst [vmem:[%s317 + $0xc8] sm:%s309] %v418
                  %v420 = vld [vmem:[%s316 + $0x18c] sm:%s309]
                  %421 = vst [vmem:[%s317 + $0xcc] sm:%s309] %v420
                  %v422 = vld [vmem:[%s316 + $0x190] sm:%s309]
                  %423 = vst [vmem:[%s317 + $0xd0] sm:%s309] %v422
                  %v424 = vld [vmem:[%s316 + $0x194] sm:%s309]
                  %425 = vst [vmem:[%s317 + $0xd4] sm:%s309] %v424
                  %v426 = vld [vmem:[%s316 + $0x198] sm:%s309]
                  %427 = vst [vmem:[%s317 + $0xd8] sm:%s309] %v426
                  %v428 = vld [vmem:[%s316 + $0x19c] sm:%s309]
                  %429 = vst [vmem:[%s317 + $0xdc] sm:%s309] %v428
                  %v430 = vld [vmem:[%s316 + $0x1c0] sm:%s309]
                  %431 = vst [vmem:[%s317 + $0xe0] sm:%s309] %v430
                  %v432 = vld [vmem:[%s316 + $0x1c4] sm:%s309]
                  %433 = vst [vmem:[%s317 + $0xe4] sm:%s309] %v432
                  %v434 = vld [vmem:[%s316 + $0x1c8] sm:%s309]
                  %435 = vst [vmem:[%s317 + $0xe8] sm:%s309] %v434
                  %v436 = vld [vmem:[%s316 + $0x1cc] sm:%s309]
                  %437 = vst [vmem:[%s317 + $0xec] sm:%s309] %v436
                  %v438 = vld [vmem:[%s316 + $0x1d0] sm:%s309]
                  %439 = vst [vmem:[%s317 + $0xf0] sm:%s309] %v438
                  %v440 = vld [vmem:[%s316 + $0x1d4] sm:%s309]
                  %441 = vst [vmem:[%s317 + $0xf4] sm:%s309] %v440
                  %v442 = vld [vmem:[%s316 + $0x1d8] sm:%s309]
                  %443 = vst [vmem:[%s317 + $0xf8] sm:%s309] %v442
                  %v444 = vld [vmem:[%s316 + $0x1dc] sm:%s309]
                  %445 = vst [vmem:[%s317 + $0xfc] sm:%s309] %v444
                  %v446 = vld [vmem:[%s316 + $0x200] sm:%s309]
                  %447 = vst [vmem:[%s317 + $0x100] sm:%s309] %v446
                  %v448 = vld [vmem:[%s316 + $0x204] sm:%s309]
                  %449 = vst [vmem:[%s317 + $0x104] sm:%s309] %v448
                  %v450 = vld [vmem:[%s316 + $0x208] sm:%s309]
                  %451 = vst [vmem:[%s317 + $0x108] sm:%s309] %v450
                  %v452 = vld [vmem:[%s316 + $0x20c] sm:%s309]
                  %453 = vst [vmem:[%s317 + $0x10c] sm:%s309] %v452
                  %v454 = vld [vmem:[%s316 + $0x210] sm:%s309]
                  %455 = vst [vmem:[%s317 + $0x110] sm:%s309] %v454
                  %v456 = vld [vmem:[%s316 + $0x214] sm:%s309]
                  %457 = vst [vmem:[%s317 + $0x114] sm:%s309] %v456
                  %v458 = vld [vmem:[%s316 + $0x218] sm:%s309]
                  %459 = vst [vmem:[%s317 + $0x118] sm:%s309] %v458
                  %v460 = vld [vmem:[%s316 + $0x21c] sm:%s309]
                  %461 = vst [vmem:[%s317 + $0x11c] sm:%s309] %v460
                $region63: #{unet_forward.8} parent=50 // loop_footer
                  %s315 = sadd.s32 1, %s311
                $region64: #{unet_forward.8} parent=50 // loop_footer_branch
                  %310 = sbr.rel target = $region60
                $region65: #{unet_forward.8} parent=50 // loop_exit
                  _
              $region51: #{unet_forward.8} parent=35 // pred_fallthru
                _
            $region36: #{unet_forward.8} parent=31 // pred_fallthru
              _
            // Predicated region
            $region37: #{unet_forward.8} parent=31 // pred_check
              _
            $region38: #{unet_forward.8} parent=31 // pred_check_branch
              %143 = sbr.rel (0) target = $region40
            $region39: #{unet_forward.8} parent=31 // pred_region
              %s145 = ssub.s32 16, 1
              loop: start=0, step=1, limit=1
              $region41: #{unet_forward.8} parent=39 // loop_pre_header
                _
              $region42: #{unet_forward.8} parent=39 // loop_header
                %s147 = sphi 0, %s151
                %p148 = scmp.ge.s32.totalorder %s147, 1
                %s152 = sphi %s137, %s137
                %s153 = sphi %s134, %s134
              $region43: #{unet_forward.8} parent=39 // loop_header_branch
                %150 = sbr.rel (%p148) target = $region47
              $region44: #{unet_forward.8} parent=39 // loop_body
                %v154 = vld [vmem:[%s152] sm:%s145]
                %155 = vst [vmem:[%s153] sm:%s145] %v154
                %v156 = vld [vmem:[%s152 + $0x4] sm:%s145]
                %157 = vst [vmem:[%s153 + $0x4] sm:%s145] %v156
                %v158 = vld [vmem:[%s152 + $0x8] sm:%s145]
                %159 = vst [vmem:[%s153 + $0x8] sm:%s145] %v158
                %v160 = vld [vmem:[%s152 + $0xc] sm:%s145]
                %161 = vst [vmem:[%s153 + $0xc] sm:%s145] %v160
                %v162 = vld [vmem:[%s152 + $0x10] sm:%s145]
                %163 = vst [vmem:[%s153 + $0x10] sm:%s145] %v162
                %v164 = vld [vmem:[%s152 + $0x14] sm:%s145]
                %165 = vst [vmem:[%s153 + $0x14] sm:%s145] %v164
                %v166 = vld [vmem:[%s152 + $0x18] sm:%s145]
                %167 = vst [vmem:[%s153 + $0x18] sm:%s145] %v166
                %v168 = vld [vmem:[%s152 + $0x1c] sm:%s145]
                %169 = vst [vmem:[%s153 + $0x1c] sm:%s145] %v168
                %v170 = vld [vmem:[%s152 + $0x40] sm:%s145]
                %171 = vst [vmem:[%s153 + $0x20] sm:%s145] %v170
                %v172 = vld [vmem:[%s152 + $0x44] sm:%s145]
                %173 = vst [vmem:[%s153 + $0x24] sm:%s145] %v172
                %v174 = vld [vmem:[%s152 + $0x48] sm:%s145]
                %175 = vst [vmem:[%s153 + $0x28] sm:%s145] %v174
                %v176 = vld [vmem:[%s152 + $0x4c] sm:%s145]
                %177 = vst [vmem:[%s153 + $0x2c] sm:%s145] %v176
                %v178 = vld [vmem:[%s152 + $0x50] sm:%s145]
                %179 = vst [vmem:[%s153 + $0x30] sm:%s145] %v178
                %v180 = vld [vmem:[%s152 + $0x54] sm:%s145]
                %181 = vst [vmem:[%s153 + $0x34] sm:%s145] %v180
                %v182 = vld [vmem:[%s152 + $0x58] sm:%s145]
                %183 = vst [vmem:[%s153 + $0x38] sm:%s145] %v182
                %v184 = vld [vmem:[%s152 + $0x5c] sm:%s145]
                %185 = vst [vmem:[%s153 + $0x3c] sm:%s145] %v184
                %v186 = vld [vmem:[%s152 + $0x80] sm:%s145]
                %187 = vst [vmem:[%s153 + $0x40] sm:%s145] %v186
                %v188 = vld [vmem:[%s152 + $0x84] sm:%s145]
                %189 = vst [vmem:[%s153 + $0x44] sm:%s145] %v188
                %v190 = vld [vmem:[%s152 + $0x88] sm:%s145]
                %191 = vst [vmem:[%s153 + $0x48] sm:%s145] %v190
                %v192 = vld [vmem:[%s152 + $0x8c] sm:%s145]
                %193 = vst [vmem:[%s153 + $0x4c] sm:%s145] %v192
                %v194 = vld [vmem:[%s152 + $0x90] sm:%s145]
                %195 = vst [vmem:[%s153 + $0x50] sm:%s145] %v194
                %v196 = vld [vmem:[%s152 + $0x94] sm:%s145]
                %197 = vst [vmem:[%s153 + $0x54] sm:%s145] %v196
                %v198 = vld [vmem:[%s152 + $0x98] sm:%s145]
                %199 = vst [vmem:[%s153 + $0x58] sm:%s145] %v198
                %v200 = vld [vmem:[%s152 + $0x9c] sm:%s145]
                %201 = vst [vmem:[%s153 + $0x5c] sm:%s145] %v200
                %v202 = vld [vmem:[%s152 + $0xc0] sm:%s145]
                %203 = vst [vmem:[%s153 + $0x60] sm:%s145] %v202
                %v204 = vld [vmem:[%s152 + $0xc4] sm:%s145]
                %205 = vst [vmem:[%s153 + $0x64] sm:%s145] %v204
                %v206 = vld [vmem:[%s152 + $0xc8] sm:%s145]
                %207 = vst [vmem:[%s153 + $0x68] sm:%s145] %v206
                %v208 = vld [vmem:[%s152 + $0xcc] sm:%s145]
                %209 = vst [vmem:[%s153 + $0x6c] sm:%s145] %v208
                %v210 = vld [vmem:[%s152 + $0xd0] sm:%s145]
                %211 = vst [vmem:[%s153 + $0x70] sm:%s145] %v210
                %v212 = vld [vmem:[%s152 + $0xd4] sm:%s145]
                %213 = vst [vmem:[%s153 + $0x74] sm:%s145] %v212
                %v214 = vld [vmem:[%s152 + $0xd8] sm:%s145]
                %215 = vst [vmem:[%s153 + $0x78] sm:%s145] %v214
                %v216 = vld [vmem:[%s152 + $0xdc] sm:%s145]
                %217 = vst [vmem:[%s153 + $0x7c] sm:%s145] %v216
                %v218 = vld [vmem:[%s152 + $0x100] sm:%s145]
                %219 = vst [vmem:[%s153 + $0x80] sm:%s145] %v218
                %v220 = vld [vmem:[%s152 + $0x104] sm:%s145]
                %221 = vst [vmem:[%s153 + $0x84] sm:%s145] %v220
                %v222 = vld [vmem:[%s152 + $0x108] sm:%s145]
                %223 = vst [vmem:[%s153 + $0x88] sm:%s145] %v222
                %v224 = vld [vmem:[%s152 + $0x10c] sm:%s145]
                %225 = vst [vmem:[%s153 + $0x8c] sm:%s145] %v224
                %v226 = vld [vmem:[%s152 + $0x110] sm:%s145]
                %227 = vst [vmem:[%s153 + $0x90] sm:%s145] %v226
                %v228 = vld [vmem:[%s152 + $0x114] sm:%s145]
                %229 = vst [vmem:[%s153 + $0x94] sm:%s145] %v228
                %v230 = vld [vmem:[%s152 + $0x118] sm:%s145]
                %231 = vst [vmem:[%s153 + $0x98] sm:%s145] %v230
                %v232 = vld [vmem:[%s152 + $0x11c] sm:%s145]
                %233 = vst [vmem:[%s153 + $0x9c] sm:%s145] %v232
                %v234 = vld [vmem:[%s152 + $0x140] sm:%s145]
                %235 = vst [vmem:[%s153 + $0xa0] sm:%s145] %v234
                %v236 = vld [vmem:[%s152 + $0x144] sm:%s145]
                %237 = vst [vmem:[%s153 + $0xa4] sm:%s145] %v236
                %v238 = vld [vmem:[%s152 + $0x148] sm:%s145]
                %239 = vst [vmem:[%s153 + $0xa8] sm:%s145] %v238
                %v240 = vld [vmem:[%s152 + $0x14c] sm:%s145]
                %241 = vst [vmem:[%s153 + $0xac] sm:%s145] %v240
                %v242 = vld [vmem:[%s152 + $0x150] sm:%s145]
                %243 = vst [vmem:[%s153 + $0xb0] sm:%s145] %v242
                %v244 = vld [vmem:[%s152 + $0x154] sm:%s145]
                %245 = vst [vmem:[%s153 + $0xb4] sm:%s145] %v244
                %v246 = vld [vmem:[%s152 + $0x158] sm:%s145]
                %247 = vst [vmem:[%s153 + $0xb8] sm:%s145] %v246
                %v248 = vld [vmem:[%s152 + $0x15c] sm:%s145]
                %249 = vst [vmem:[%s153 + $0xbc] sm:%s145] %v248
                %v250 = vld [vmem:[%s152 + $0x180] sm:%s145]
                %251 = vst [vmem:[%s153 + $0xc0] sm:%s145] %v250
                %v252 = vld [vmem:[%s152 + $0x184] sm:%s145]
                %253 = vst [vmem:[%s153 + $0xc4] sm:%s145] %v252
                %v254 = vld [vmem:[%s152 + $0x188] sm:%s145]
                %255 = vst [vmem:[%s153 + $0xc8] sm:%s145] %v254
                %v256 = vld [vmem:[%s152 + $0x18c] sm:%s145]
                %257 = vst [vmem:[%s153 + $0xcc] sm:%s145] %v256
                %v258 = vld [vmem:[%s152 + $0x190] sm:%s145]
                %259 = vst [vmem:[%s153 + $0xd0] sm:%s145] %v258
                %v260 = vld [vmem:[%s152 + $0x194] sm:%s145]
                %261 = vst [vmem:[%s153 + $0xd4] sm:%s145] %v260
                %v262 = vld [vmem:[%s152 + $0x198] sm:%s145]
                %263 = vst [vmem:[%s153 + $0xd8] sm:%s145] %v262
                %v264 = vld [vmem:[%s152 + $0x19c] sm:%s145]
                %265 = vst [vmem:[%s153 + $0xdc] sm:%s145] %v264
                %v266 = vld [vmem:[%s152 + $0x1c0] sm:%s145]
                %267 = vst [vmem:[%s153 + $0xe0] sm:%s145] %v266
                %v268 = vld [vmem:[%s152 + $0x1c4] sm:%s145]
                %269 = vst [vmem:[%s153 + $0xe4] sm:%s145] %v268
                %v270 = vld [vmem:[%s152 + $0x1c8] sm:%s145]
                %271 = vst [vmem:[%s153 + $0xe8] sm:%s145] %v270
                %v272 = vld [vmem:[%s152 + $0x1cc] sm:%s145]
                %273 = vst [vmem:[%s153 + $0xec] sm:%s145] %v272
                %v274 = vld [vmem:[%s152 + $0x1d0] sm:%s145]
                %275 = vst [vmem:[%s153 + $0xf0] sm:%s145] %v274
                %v276 = vld [vmem:[%s152 + $0x1d4] sm:%s145]
                %277 = vst [vmem:[%s153 + $0xf4] sm:%s145] %v276
                %v278 = vld [vmem:[%s152 + $0x1d8] sm:%s145]
                %279 = vst [vmem:[%s153 + $0xf8] sm:%s145] %v278
                %v280 = vld [vmem:[%s152 + $0x1dc] sm:%s145]
                %281 = vst [vmem:[%s153 + $0xfc] sm:%s145] %v280
                %v282 = vld [vmem:[%s152 + $0x200] sm:%s145]
                %283 = vst [vmem:[%s153 + $0x100] sm:%s145] %v282
                %v284 = vld [vmem:[%s152 + $0x204] sm:%s145]
                %285 = vst [vmem:[%s153 + $0x104] sm:%s145] %v284
                %v286 = vld [vmem:[%s152 + $0x208] sm:%s145]
                %287 = vst [vmem:[%s153 + $0x108] sm:%s145] %v286
                %v288 = vld [vmem:[%s152 + $0x20c] sm:%s145]
                %289 = vst [vmem:[%s153 + $0x10c] sm:%s145] %v288
                %v290 = vld [vmem:[%s152 + $0x210] sm:%s145]
                %291 = vst [vmem:[%s153 + $0x110] sm:%s145] %v290
                %v292 = vld [vmem:[%s152 + $0x214] sm:%s145]
                %293 = vst [vmem:[%s153 + $0x114] sm:%s145] %v292
                %v294 = vld [vmem:[%s152 + $0x218] sm:%s145]
                %295 = vst [vmem:[%s153 + $0x118] sm:%s145] %v294
                %v296 = vld [vmem:[%s152 + $0x21c] sm:%s145]
                %297 = vst [vmem:[%s153 + $0x11c] sm:%s145] %v296
              $region45: #{unet_forward.8} parent=39 // loop_footer
                %s151 = sadd.s32 1, %s147
              $region46: #{unet_forward.8} parent=39 // loop_footer_branch
                %146 = sbr.rel target = $region42
              $region47: #{unet_forward.8} parent=39 // loop_exit
                _
            $region40: #{unet_forward.8} parent=31 // pred_fallthru
              _
          $region32: #{unet_forward.8} parent=27 // pred_fallthru
            _
          %462 = vnop
        $region28: #{unet_forward.8} parent=23 // pred_fallthru
          _
      $region24: #{unet_forward.8} parent=5 // pred_fallthru
        _
      %p463 = scmp.le.s32.totalorder 1, %s9
      %p464 = scmp.lt.s32.totalorder %s9, 3
      %p465 = pnand %p463, %p464
      %p466 = pneg %p465
      // Predicated region
      $region66: #{unet_forward.8} parent=5 // pred_check
        _
      $region67: #{unet_forward.8} parent=5 // pred_check_branch
        %468 = sbr.rel (%p465) target = $region69
      $region68: #{unet_forward.8} parent=5 // pred_region
        %s469 = ssub.s32 %s9, 1
        %s470 = sand.u32 %s22, 1
        %s471 = sand.u32 %s22, 1
        %s472 = smul.addr %s471, 288
        %s473 = scalar_lea.vmem [#allocation2], %s472
        // Predicated region
        $region70: #{unet_forward.8} parent=68 // pred_check
          %p474 = pneg %p35
        $region71: #{unet_forward.8} parent=68 // pred_check_branch
          %476 = sbr.rel (%p474) target = $region73
        $region72: #{unet_forward.8} parent=68 // pred_region
          _
        $region73: #{unet_forward.8} parent=68 // pred_fallthru
          _
        %s477 = sand.u32 %s22, 1
        %s478 = sand.u32 %s22, 1
        %s479 = smul.addr %s478, 288
        %s480 = scalar_lea.vmem [#allocation2], %s479
        %p481 = pneg %p35
        %p482 = pneg %p32
        %p483 = pneg %p56
        %p484 = pneg %p53
        %p485 = pneg %p77
        %p486 = pneg %p74
        %p487 = pneg %p103
        %p488 = pneg %p100
        %p489 = scmp.lt.s32.totalorder %s14, 1
        %s490 = scalar_select %p489, %s14, 1
        %s491 = smul.addr %s490, 8
        %s492 = smul.addr %s491, 4
        %s493 = scalar_lea.vmem %s3, %s492
        %p494 = scmp.lt.s32.totalorder %s14, 1
        %s495 = scalar_select %p494, %s14, 1
        %s496 = smul.addr %s495, 8
        %s497 = smul.addr %s496, 4
        %s498 = scalar_lea.vmem %s3, %s497
        %v499 = vld [vmem:[%s473] sm:$0xf]
        %v500 = vld [vmem:[%s473 + $0x4] sm:$0xf]
        %v501 = vld [vmem:[%s473 + $0x8] sm:$0xf]
        %v502 = vld [vmem:[%s473 + $0xc] sm:$0xf]
        %v503 = vld [vmem:[%s473 + $0x10] sm:$0xf]
        %v504 = vld [vmem:[%s473 + $0x14] sm:$0xf]
        %v505 = vld [vmem:[%s473 + $0x18] sm:$0xf]
        %v506 = vld [vmem:[%s473 + $0x1c] sm:$0xf]
        %v507 = vld [vmem:[%s1] sm:$0xf]
        %v508 = vld [vmem:[%s1 + $0x4] sm:$0xf]
        %v509 = vld [vmem:[%s1 + $0x8] sm:$0xf]
        %v510 = vld [vmem:[%s1 + $0xc] sm:$0xf]
        %v511 = vld [vmem:[%s1 + $0x10] sm:$0xf]
        %v512 = vld [vmem:[%s1 + $0x14] sm:$0xf]
        %v513 = vld [vmem:[%s1 + $0x18] sm:$0xf]
        %v514 = vld [vmem:[%s1 + $0x1c] sm:$0xf]
        %v515 = vld [vmem:[%s1 + $0x20] sm:$0xf]
        %v516 = vld [vmem:[%s1 + $0x24] sm:$0xf]
        %v517 = vld [vmem:[%s1 + $0x28] sm:$0xf]
        %v518 = vld [vmem:[%s1 + $0x2c] sm:$0xf]
        %v519 = vld [vmem:[%s1 + $0x30] sm:$0xf]
        %v520 = vld [vmem:[%s1 + $0x34] sm:$0xf]
        %v521 = vld [vmem:[%s1 + $0x38] sm:$0xf]
        %v522 = vld [vmem:[%s1 + $0x3c] sm:$0xf]
        %s523 = scalar_lea.vmem %s473, 32 [#allocation2]
        %v524 = vld [vmem:[%s523] sm:$0xf]
        %v525 = vld [vmem:[%s523 + $0x4] sm:$0xf]
        %v526 = vld [vmem:[%s523 + $0x8] sm:$0xf]
        %v527 = vld [vmem:[%s523 + $0xc] sm:$0xf]
        %v528 = vld [vmem:[%s523 + $0x10] sm:$0xf]
        %v529 = vld [vmem:[%s523 + $0x14] sm:$0xf]
        %v530 = vld [vmem:[%s523 + $0x18] sm:$0xf]
        %v531 = vld [vmem:[%s523 + $0x1c] sm:$0xf]
        %s532 = scalar_lea.vmem %s1, 64
        %v533 = vld [vmem:[%s532] sm:$0xf]
        %v534 = vld [vmem:[%s532 + $0x4] sm:$0xf]
        %v535 = vld [vmem:[%s532 + $0x8] sm:$0xf]
        %v536 = vld [vmem:[%s532 + $0xc] sm:$0xf]
        %v537 = vld [vmem:[%s532 + $0x10] sm:$0xf]
        %v538 = vld [vmem:[%s532 + $0x14] sm:$0xf]
        %v539 = vld [vmem:[%s532 + $0x18] sm:$0xf]
        %v540 = vld [vmem:[%s532 + $0x1c] sm:$0xf]
        %v541 = vld [vmem:[%s532 + $0x20] sm:$0xf]
        %v542 = vld [vmem:[%s532 + $0x24] sm:$0xf]
        %v543 = vld [vmem:[%s532 + $0x28] sm:$0xf]
        %v544 = vld [vmem:[%s532 + $0x2c] sm:$0xf]
        %v545 = vld [vmem:[%s532 + $0x30] sm:$0xf]
        %v546 = vld [vmem:[%s532 + $0x34] sm:$0xf]
        %v547 = vld [vmem:[%s532 + $0x38] sm:$0xf]
        %v548 = vld [vmem:[%s532 + $0x3c] sm:$0xf]
        %v557 = vunpack.c.l.b16 %v524
        %v558 = vunpack.c.l.b16 %v525
        %v559 = vunpack.c.l.b16 %v526
        %v560 = vunpack.c.l.b16 %v527
        %v561 = vunpack.c.l.b16 %v528
        %v562 = vunpack.c.l.b16 %v529
        %v563 = vunpack.c.l.b16 %v530
        %v564 = vunpack.c.l.b16 %v531
        %v565 = vpack.c.b16 %v558, %v557
        %v566 = vpack.c.b16 %v560, %v559
        %v567 = vpack.c.b16 %v562, %v561
        %v568 = vpack.c.b16 %v564, %v563
        %v589 = vunpack.c.l.b16 %v533
        %v590 = vunpack.c.l.b16 %v534
        %v591 = vunpack.c.l.b16 %v535
        %v592 = vunpack.c.l.b16 %v536
        %v593 = vunpack.c.l.b16 %v537
        %v594 = vunpack.c.l.b16 %v538
        %v595 = vunpack.c.l.b16 %v539
        %v596 = vunpack.c.l.b16 %v540
        %v597 = vunpack.c.l.b16 %v541
        %v598 = vunpack.c.l.b16 %v542
        %v599 = vunpack.c.l.b16 %v543
        %v600 = vunpack.c.l.b16 %v544
        %v601 = vunpack.c.l.b16 %v545
        %v602 = vunpack.c.l.b16 %v546
        %v603 = vunpack.c.l.b16 %v547
        %v604 = vunpack.c.l.b16 %v548
        %v605 = vpack.c.b16 %v590, %v589
        %v606 = vpack.c.b16 %v592, %v591
        %v607 = vpack.c.b16 %v594, %v593
        %v608 = vpack.c.b16 %v596, %v595
        %v609 = vpack.c.b16 %v598, %v597
        %v610 = vpack.c.b16 %v600, %v599
        %v611 = vpack.c.b16 %v602, %v601
        %v612 = vpack.c.b16 %v604, %v603
        %621 = vmatpush.bf16.msra.mxu0 %v612
        %622 = vmatpush.bf16.msra.mxu0 %v611
        %623 = vmatpush.bf16.msra.mxu0 %v610
        %624 = vmatpush.bf16.msra.mxu0 %v609
        %625 = vmatpush.bf16.msra.mxu0 %v608
        %626 = vmatpush.bf16.msra.mxu0 %v607
        %627 = vmatpush.bf16.msra.mxu0 %v606
        %628 = vmatpush.bf16.msra.mxu0 %v605
        %629 = vmatmul.bf16.gmra.mxu0 %v565
        %v630 = vpop.f32.mrf.mxu0
        %v631 = vadd.f32 0.0, %v630
        %v632 = vpop.f32.mrf.mxu0
        %v633 = vadd.f32 0.0, %v632
        %634 = vmatmul.bf16.gmra.mxu0 %v566
        %v635 = vpop.f32.mrf.mxu0
        %v636 = vadd.f32 0.0, %v635
        %v637 = vpop.f32.mrf.mxu0
        %v638 = vadd.f32 0.0, %v637
        %639 = vmatmul.bf16.gmra.mxu0 %v567
        %v640 = vpop.f32.mrf.mxu0
        %v641 = vadd.f32 0.0, %v640
        %v642 = vpop.f32.mrf.mxu0
        %v643 = vadd.f32 0.0, %v642
        %644 = vmatmul.bf16.gmra.mxu0 %v568
        %v645 = vpop.f32.mrf.mxu0
        %v646 = vadd.f32 0.0, %v645
        %v647 = vpop.f32.mrf.mxu0
        %v648 = vadd.f32 0.0, %v647
        %649 = vdwg.mxu0
        %v658 = vunpack.c.l.b16 %v499
        %v659 = vunpack.c.l.b16 %v500
        %v660 = vunpack.c.l.b16 %v501
        %v661 = vunpack.c.l.b16 %v502
        %v662 = vunpack.c.l.b16 %v503
        %v663 = vunpack.c.l.b16 %v504
        %v664 = vunpack.c.l.b16 %v505
        %v665 = vunpack.c.l.b16 %v506
        %v666 = vpack.c.b16 %v659, %v658
        %v667 = vpack.c.b16 %v661, %v660
        %v668 = vpack.c.b16 %v663, %v662
        %v669 = vpack.c.b16 %v665, %v664
        %v690 = vunpack.c.l.b16 %v507
        %v691 = vunpack.c.l.b16 %v508
        %v692 = vunpack.c.l.b16 %v509
        %v693 = vunpack.c.l.b16 %v510
        %v694 = vunpack.c.l.b16 %v511
        %v695 = vunpack.c.l.b16 %v512
        %v696 = vunpack.c.l.b16 %v513
        %v697 = vunpack.c.l.b16 %v514
        %v698 = vunpack.c.l.b16 %v515
        %v699 = vunpack.c.l.b16 %v516
        %v700 = vunpack.c.l.b16 %v517
        %v701 = vunpack.c.l.b16 %v518
        %v702 = vunpack.c.l.b16 %v519
        %v703 = vunpack.c.l.b16 %v520
        %v704 = vunpack.c.l.b16 %v521
        %v705 = vunpack.c.l.b16 %v522
        %v706 = vpack.c.b16 %v691, %v690
        %v707 = vpack.c.b16 %v693, %v692
        %v708 = vpack.c.b16 %v695, %v694
        %v709 = vpack.c.b16 %v697, %v696
        %v710 = vpack.c.b16 %v699, %v698
        %v711 = vpack.c.b16 %v701, %v700
        %v712 = vpack.c.b16 %v703, %v702
        %v713 = vpack.c.b16 %v705, %v704
        %722 = vmatpush.bf16.msra.mxu0 %v713
        %723 = vmatpush.bf16.msra.mxu0 %v712
        %724 = vmatpush.bf16.msra.mxu0 %v711
        %725 = vmatpush.bf16.msra.mxu0 %v710
        %726 = vmatpush.bf16.msra.mxu0 %v709
        %727 = vmatpush.bf16.msra.mxu0 %v708
        %728 = vmatpush.bf16.msra.mxu0 %v707
        %729 = vmatpush.bf16.msra.mxu0 %v706
        %730 = vmatmul.bf16.gmra.mxu0 %v666
        %v731 = vpop.f32.mrf.mxu0
        %v732 = vadd.f32 %v631, %v731
        %v733 = vpop.f32.mrf.mxu0
        %v734 = vadd.f32 %v633, %v733
        %735 = vmatmul.bf16.gmra.mxu0 %v667
        %v736 = vpop.f32.mrf.mxu0
        %v737 = vadd.f32 %v636, %v736
        %v738 = vpop.f32.mrf.mxu0
        %v739 = vadd.f32 %v638, %v738
        %740 = vmatmul.bf16.gmra.mxu0 %v668
        %v741 = vpop.f32.mrf.mxu0
        %v742 = vadd.f32 %v641, %v741
        %v743 = vpop.f32.mrf.mxu0
        %v744 = vadd.f32 %v643, %v743
        %745 = vmatmul.bf16.gmra.mxu0 %v669
        %v746 = vpop.f32.mrf.mxu0
        %v747 = vadd.f32 %v646, %v746
        %v748 = vpop.f32.mrf.mxu0
        %v749 = vadd.f32 %v648, %v748
        %750 = vdwg.mxu0
        %s751 = scalar_lea.vmem %s473, 64 [#allocation2]
        %v752 = vld [vmem:[%s751] sm:$0xf]
        %v753 = vld [vmem:[%s751 + $0x4] sm:$0xf]
        %v754 = vld [vmem:[%s751 + $0x8] sm:$0xf]
        %v755 = vld [vmem:[%s751 + $0xc] sm:$0xf]
        %v756 = vld [vmem:[%s751 + $0x10] sm:$0xf]
        %v757 = vld [vmem:[%s751 + $0x14] sm:$0xf]
        %v758 = vld [vmem:[%s751 + $0x18] sm:$0xf]
        %v759 = vld [vmem:[%s751 + $0x1c] sm:$0xf]
        %s760 = scalar_lea.vmem %s1, 128
        %v761 = vld [vmem:[%s760] sm:$0xf]
        %v762 = vld [vmem:[%s760 + $0x4] sm:$0xf]
        %v763 = vld [vmem:[%s760 + $0x8] sm:$0xf]
        %v764 = vld [vmem:[%s760 + $0xc] sm:$0xf]
        %v765 = vld [vmem:[%s760 + $0x10] sm:$0xf]
        %v766 = vld [vmem:[%s760 + $0x14] sm:$0xf]
        %v767 = vld [vmem:[%s760 + $0x18] sm:$0xf]
        %v768 = vld [vmem:[%s760 + $0x1c] sm:$0xf]
        %v769 = vld [vmem:[%s760 + $0x20] sm:$0xf]
        %v770 = vld [vmem:[%s760 + $0x24] sm:$0xf]
        %v771 = vld [vmem:[%s760 + $0x28] sm:$0xf]
        %v772 = vld [vmem:[%s760 + $0x2c] sm:$0xf]
        %v773 = vld [vmem:[%s760 + $0x30] sm:$0xf]
        %v774 = vld [vmem:[%s760 + $0x34] sm:$0xf]
        %v775 = vld [vmem:[%s760 + $0x38] sm:$0xf]
        %v776 = vld [vmem:[%s760 + $0x3c] sm:$0xf]
        %v785 = vunpack.c.l.b16 %v752
        %v786 = vunpack.c.l.b16 %v753
        %v787 = vunpack.c.l.b16 %v754
        %v788 = vunpack.c.l.b16 %v755
        %v789 = vunpack.c.l.b16 %v756
        %v790 = vunpack.c.l.b16 %v757
        %v791 = vunpack.c.l.b16 %v758
        %v792 = vunpack.c.l.b16 %v759
        %v793 = vpack.c.b16 %v786, %v785
        %v794 = vpack.c.b16 %v788, %v787
        %v795 = vpack.c.b16 %v790, %v789
        %v796 = vpack.c.b16 %v792, %v791
        %v817 = vunpack.c.l.b16 %v761
        %v818 = vunpack.c.l.b16 %v762
        %v819 = vunpack.c.l.b16 %v763
        %v820 = vunpack.c.l.b16 %v764
        %v821 = vunpack.c.l.b16 %v765
        %v822 = vunpack.c.l.b16 %v766
        %v823 = vunpack.c.l.b16 %v767
        %v824 = vunpack.c.l.b16 %v768
        %v825 = vunpack.c.l.b16 %v769
        %v826 = vunpack.c.l.b16 %v770
        %v827 = vunpack.c.l.b16 %v771
        %v828 = vunpack.c.l.b16 %v772
        %v829 = vunpack.c.l.b16 %v773
        %v830 = vunpack.c.l.b16 %v774
        %v831 = vunpack.c.l.b16 %v775
        %v832 = vunpack.c.l.b16 %v776
        %v833 = vpack.c.b16 %v818, %v817
        %v834 = vpack.c.b16 %v820, %v819
        %v835 = vpack.c.b16 %v822, %v821
        %v836 = vpack.c.b16 %v824, %v823
        %v837 = vpack.c.b16 %v826, %v825
        %v838 = vpack.c.b16 %v828, %v827
        %v839 = vpack.c.b16 %v830, %v829
        %v840 = vpack.c.b16 %v832, %v831
        %849 = vmatpush.bf16.msra.mxu0 %v840
        %850 = vmatpush.bf16.msra.mxu0 %v839
        %851 = vmatpush.bf16.msra.mxu0 %v838
        %852 = vmatpush.bf16.msra.mxu0 %v837
        %853 = vmatpush.bf16.msra.mxu0 %v836
        %854 = vmatpush.bf16.msra.mxu0 %v835
        %855 = vmatpush.bf16.msra.mxu0 %v834
        %856 = vmatpush.bf16.msra.mxu0 %v833
        %857 = vmatmul.bf16.gmra.mxu0 %v793
        %v858 = vpop.f32.mrf.mxu0
        %v859 = vadd.f32 0.0, %v858
        %v860 = vpop.f32.mrf.mxu0
        %v861 = vadd.f32 0.0, %v860
        %862 = vmatmul.bf16.gmra.mxu0 %v794
        %v863 = vpop.f32.mrf.mxu0
        %v864 = vadd.f32 0.0, %v863
        %v865 = vpop.f32.mrf.mxu0
        %v866 = vadd.f32 0.0, %v865
        %867 = vmatmul.bf16.gmra.mxu0 %v795
        %v868 = vpop.f32.mrf.mxu0
        %v869 = vadd.f32 0.0, %v868
        %v870 = vpop.f32.mrf.mxu0
        %v871 = vadd.f32 0.0, %v870
        %872 = vmatmul.bf16.gmra.mxu0 %v796
        %v873 = vpop.f32.mrf.mxu0
        %v874 = vadd.f32 0.0, %v873
        %v875 = vpop.f32.mrf.mxu0
        %v876 = vadd.f32 0.0, %v875
        %877 = vdwg.mxu0
        %v878 = vadd.f32 %v732, %v859
        %v879 = vadd.f32 %v734, %v861
        %v880 = vadd.f32 %v737, %v864
        %v881 = vadd.f32 %v739, %v866
        %v882 = vadd.f32 %v742, %v869
        %v883 = vadd.f32 %v744, %v871
        %v884 = vadd.f32 %v747, %v874
        %v885 = vadd.f32 %v749, %v876
        %s886 = scalar_lea.vmem %s473, 96 [#allocation2]
        %v887 = vld [vmem:[%s886] sm:$0xf]
        %v888 = vld [vmem:[%s886 + $0x4] sm:$0xf]
        %v889 = vld [vmem:[%s886 + $0x8] sm:$0xf]
        %v890 = vld [vmem:[%s886 + $0xc] sm:$0xf]
        %v891 = vld [vmem:[%s886 + $0x10] sm:$0xf]
        %v892 = vld [vmem:[%s886 + $0x14] sm:$0xf]
        %v893 = vld [vmem:[%s886 + $0x18] sm:$0xf]
        %v894 = vld [vmem:[%s886 + $0x1c] sm:$0xf]
        %s895 = scalar_lea.vmem %s1, 192
        %v896 = vld [vmem:[%s895] sm:$0xf]
        %v897 = vld [vmem:[%s895 + $0x4] sm:$0xf]
        %v898 = vld [vmem:[%s895 + $0x8] sm:$0xf]
        %v899 = vld [vmem:[%s895 + $0xc] sm:$0xf]
        %v900 = vld [vmem:[%s895 + $0x10] sm:$0xf]
        %v901 = vld [vmem:[%s895 + $0x14] sm:$0xf]
        %v902 = vld [vmem:[%s895 + $0x18] sm:$0xf]
        %v903 = vld [vmem:[%s895 + $0x1c] sm:$0xf]
        %v904 = vld [vmem:[%s895 + $0x20] sm:$0xf]
        %v905 = vld [vmem:[%s895 + $0x24] sm:$0xf]
        %v906 = vld [vmem:[%s895 + $0x28] sm:$0xf]
        %v907 = vld [vmem:[%s895 + $0x2c] sm:$0xf]
        %v908 = vld [vmem:[%s895 + $0x30] sm:$0xf]
        %v909 = vld [vmem:[%s895 + $0x34] sm:$0xf]
        %v910 = vld [vmem:[%s895 + $0x38] sm:$0xf]
        %v911 = vld [vmem:[%s895 + $0x3c] sm:$0xf]
        %v920 = vunpack.c.l.b16 %v887
        %v921 = vunpack.c.l.b16 %v888
        %v922 = vunpack.c.l.b16 %v889
        %v923 = vunpack.c.l.b16 %v890
        %v924 = vunpack.c.l.b16 %v891
        %v925 = vunpack.c.l.b16 %v892
        %v926 = vunpack.c.l.b16 %v893
        %v927 = vunpack.c.l.b16 %v894
        %v928 = vpack.c.b16 %v921, %v920
        %v929 = vpack.c.b16 %v923, %v922
        %v930 = vpack.c.b16 %v925, %v924
        %v931 = vpack.c.b16 %v927, %v926
        %v952 = vunpack.c.l.b16 %v896
        %v953 = vunpack.c.l.b16 %v897
        %v954 = vunpack.c.l.b16 %v898
        %v955 = vunpack.c.l.b16 %v899
        %v956 = vunpack.c.l.b16 %v900
        %v957 = vunpack.c.l.b16 %v901
        %v958 = vunpack.c.l.b16 %v902
        %v959 = vunpack.c.l.b16 %v903
        %v960 = vunpack.c.l.b16 %v904
        %v961 = vunpack.c.l.b16 %v905
        %v962 = vunpack.c.l.b16 %v906
        %v963 = vunpack.c.l.b16 %v907
        %v964 = vunpack.c.l.b16 %v908
        %v965 = vunpack.c.l.b16 %v909
        %v966 = vunpack.c.l.b16 %v910
        %v967 = vunpack.c.l.b16 %v911
        %v968 = vpack.c.b16 %v953, %v952
        %v969 = vpack.c.b16 %v955, %v954
        %v970 = vpack.c.b16 %v957, %v956
        %v971 = vpack.c.b16 %v959, %v958
        %v972 = vpack.c.b16 %v961, %v960
        %v973 = vpack.c.b16 %v963, %v962
        %v974 = vpack.c.b16 %v965, %v964
        %v975 = vpack.c.b16 %v967, %v966
        %984 = vmatpush.bf16.msra.mxu0 %v975
        %985 = vmatpush.bf16.msra.mxu0 %v974
        %986 = vmatpush.bf16.msra.mxu0 %v973
        %987 = vmatpush.bf16.msra.mxu0 %v972
        %988 = vmatpush.bf16.msra.mxu0 %v971
        %989 = vmatpush.bf16.msra.mxu0 %v970
        %990 = vmatpush.bf16.msra.mxu0 %v969
        %991 = vmatpush.bf16.msra.mxu0 %v968
        %992 = vmatmul.bf16.gmra.mxu0 %v928
        %v993 = vpop.f32.mrf.mxu0
        %v994 = vadd.f32 0.0, %v993
        %v995 = vpop.f32.mrf.mxu0
        %v996 = vadd.f32 0.0, %v995
        %997 = vmatmul.bf16.gmra.mxu0 %v929
        %v998 = vpop.f32.mrf.mxu0
        %v999 = vadd.f32 0.0, %v998
        %v1000 = vpop.f32.mrf.mxu0
        %v1001 = vadd.f32 0.0, %v1000
        %1002 = vmatmul.bf16.gmra.mxu0 %v930
        %v1003 = vpop.f32.mrf.mxu0
        %v1004 = vadd.f32 0.0, %v1003
        %v1005 = vpop.f32.mrf.mxu0
        %v1006 = vadd.f32 0.0, %v1005
        %1007 = vmatmul.bf16.gmra.mxu0 %v931
        %v1008 = vpop.f32.mrf.mxu0
        %v1009 = vadd.f32 0.0, %v1008
        %v1010 = vpop.f32.mrf.mxu0
        %v1011 = vadd.f32 0.0, %v1010
        %1012 = vdwg.mxu0
        %v1013 = vadd.f32 %v878, %v994
        %v1014 = vadd.f32 %v879, %v996
        %v1015 = vadd.f32 %v880, %v999
        %v1016 = vadd.f32 %v881, %v1001
        %v1017 = vadd.f32 %v882, %v1004
        %v1018 = vadd.f32 %v883, %v1006
        %v1019 = vadd.f32 %v884, %v1009
        %v1020 = vadd.f32 %v885, %v1011
        %s1021 = scalar_lea.vmem %s473, 128 [#allocation2]
        %v1022 = vld [vmem:[%s1021] sm:$0xf]
        %v1023 = vld [vmem:[%s1021 + $0x4] sm:$0xf]
        %v1024 = vld [vmem:[%s1021 + $0x8] sm:$0xf]
        %v1025 = vld [vmem:[%s1021 + $0xc] sm:$0xf]
        %v1026 = vld [vmem:[%s1021 + $0x10] sm:$0xf]
        %v1027 = vld [vmem:[%s1021 + $0x14] sm:$0xf]
        %v1028 = vld [vmem:[%s1021 + $0x18] sm:$0xf]
        %v1029 = vld [vmem:[%s1021 + $0x1c] sm:$0xf]
        %s1030 = scalar_lea.vmem %s1, 256
        %v1031 = vld [vmem:[%s1030] sm:$0xf]
        %v1032 = vld [vmem:[%s1030 + $0x4] sm:$0xf]
        %v1033 = vld [vmem:[%s1030 + $0x8] sm:$0xf]
        %v1034 = vld [vmem:[%s1030 + $0xc] sm:$0xf]
        %v1035 = vld [vmem:[%s1030 + $0x10] sm:$0xf]
        %v1036 = vld [vmem:[%s1030 + $0x14] sm:$0xf]
        %v1037 = vld [vmem:[%s1030 + $0x18] sm:$0xf]
        %v1038 = vld [vmem:[%s1030 + $0x1c] sm:$0xf]
        %v1039 = vld [vmem:[%s1030 + $0x20] sm:$0xf]
        %v1040 = vld [vmem:[%s1030 + $0x24] sm:$0xf]
        %v1041 = vld [vmem:[%s1030 + $0x28] sm:$0xf]
        %v1042 = vld [vmem:[%s1030 + $0x2c] sm:$0xf]
        %v1043 = vld [vmem:[%s1030 + $0x30] sm:$0xf]
        %v1044 = vld [vmem:[%s1030 + $0x34] sm:$0xf]
        %v1045 = vld [vmem:[%s1030 + $0x38] sm:$0xf]
        %v1046 = vld [vmem:[%s1030 + $0x3c] sm:$0xf]
        %v1055 = vunpack.c.l.b16 %v1022
        %v1056 = vunpack.c.l.b16 %v1023
        %v1057 = vunpack.c.l.b16 %v1024
        %v1058 = vunpack.c.l.b16 %v1025
        %v1059 = vunpack.c.l.b16 %v1026
        %v1060 = vunpack.c.l.b16 %v1027
        %v1061 = vunpack.c.l.b16 %v1028
        %v1062 = vunpack.c.l.b16 %v1029
        %v1063 = vpack.c.b16 %v1056, %v1055
        %v1064 = vpack.c.b16 %v1058, %v1057
        %v1065 = vpack.c.b16 %v1060, %v1059
        %v1066 = vpack.c.b16 %v1062, %v1061
        %v1087 = vunpack.c.l.b16 %v1031
        %v1088 = vunpack.c.l.b16 %v1032
        %v1089 = vunpack.c.l.b16 %v1033
        %v1090 = vunpack.c.l.b16 %v1034
        %v1091 = vunpack.c.l.b16 %v1035
        %v1092 = vunpack.c.l.b16 %v1036
        %v1093 = vunpack.c.l.b16 %v1037
        %v1094 = vunpack.c.l.b16 %v1038
        %v1095 = vunpack.c.l.b16 %v1039
        %v1096 = vunpack.c.l.b16 %v1040
        %v1097 = vunpack.c.l.b16 %v1041
        %v1098 = vunpack.c.l.b16 %v1042
        %v1099 = vunpack.c.l.b16 %v1043
        %v1100 = vunpack.c.l.b16 %v1044
        %v1101 = vunpack.c.l.b16 %v1045
        %v1102 = vunpack.c.l.b16 %v1046
        %v1103 = vpack.c.b16 %v1088, %v1087
        %v1104 = vpack.c.b16 %v1090, %v1089
        %v1105 = vpack.c.b16 %v1092, %v1091
        %v1106 = vpack.c.b16 %v1094, %v1093
        %v1107 = vpack.c.b16 %v1096, %v1095
        %v1108 = vpack.c.b16 %v1098, %v1097
        %v1109 = vpack.c.b16 %v1100, %v1099
        %v1110 = vpack.c.b16 %v1102, %v1101
        %1119 = vmatpush.bf16.msra.mxu0 %v1110
        %1120 = vmatpush.bf16.msra.mxu0 %v1109
        %1121 = vmatpush.bf16.msra.mxu0 %v1108
        %1122 = vmatpush.bf16.msra.mxu0 %v1107
        %1123 = vmatpush.bf16.msra.mxu0 %v1106
        %1124 = vmatpush.bf16.msra.mxu0 %v1105
        %1125 = vmatpush.bf16.msra.mxu0 %v1104
        %1126 = vmatpush.bf16.msra.mxu0 %v1103
        %1127 = vmatmul.bf16.gmra.mxu0 %v1063
        %v1128 = vpop.f32.mrf.mxu0
        %v1129 = vadd.f32 0.0, %v1128
        %v1130 = vpop.f32.mrf.mxu0
        %v1131 = vadd.f32 0.0, %v1130
        %1132 = vmatmul.bf16.gmra.mxu0 %v1064
        %v1133 = vpop.f32.mrf.mxu0
        %v1134 = vadd.f32 0.0, %v1133
        %v1135 = vpop.f32.mrf.mxu0
        %v1136 = vadd.f32 0.0, %v1135
        %1137 = vmatmul.bf16.gmra.mxu0 %v1065
        %v1138 = vpop.f32.mrf.mxu0
        %v1139 = vadd.f32 0.0, %v1138
        %v1140 = vpop.f32.mrf.mxu0
        %v1141 = vadd.f32 0.0, %v1140
        %1142 = vmatmul.bf16.gmra.mxu0 %v1066
        %v1143 = vpop.f32.mrf.mxu0
        %v1144 = vadd.f32 0.0, %v1143
        %v1145 = vpop.f32.mrf.mxu0
        %v1146 = vadd.f32 0.0, %v1145
        %1147 = vdwg.mxu0
        %v1148 = vadd.f32 %v1013, %v1129
        %v1149 = vadd.f32 %v1014, %v1131
        %v1150 = vadd.f32 %v1015, %v1134
        %v1151 = vadd.f32 %v1016, %v1136
        %v1152 = vadd.f32 %v1017, %v1139
        %v1153 = vadd.f32 %v1018, %v1141
        %v1154 = vadd.f32 %v1019, %v1144
        %v1155 = vadd.f32 %v1020, %v1146
        %s1156 = scalar_lea.vmem %s473, 160 [#allocation2]
        %v1157 = vld [vmem:[%s1156] sm:$0xf]
        %v1158 = vld [vmem:[%s1156 + $0x4] sm:$0xf]
        %v1159 = vld [vmem:[%s1156 + $0x8] sm:$0xf]
        %v1160 = vld [vmem:[%s1156 + $0xc] sm:$0xf]
        %v1161 = vld [vmem:[%s1156 + $0x10] sm:$0xf]
        %v1162 = vld [vmem:[%s1156 + $0x14] sm:$0xf]
        %v1163 = vld [vmem:[%s1156 + $0x18] sm:$0xf]
        %v1164 = vld [vmem:[%s1156 + $0x1c] sm:$0xf]
        %s1165 = scalar_lea.vmem %s1, 320
        %v1166 = vld [vmem:[%s1165] sm:$0xf]
        %v1167 = vld [vmem:[%s1165 + $0x4] sm:$0xf]
        %v1168 = vld [vmem:[%s1165 + $0x8] sm:$0xf]
        %v1169 = vld [vmem:[%s1165 + $0xc] sm:$0xf]
        %v1170 = vld [vmem:[%s1165 + $0x10] sm:$0xf]
        %v1171 = vld [vmem:[%s1165 + $0x14] sm:$0xf]
        %v1172 = vld [vmem:[%s1165 + $0x18] sm:$0xf]
        %v1173 = vld [vmem:[%s1165 + $0x1c] sm:$0xf]
        %v1174 = vld [vmem:[%s1165 + $0x20] sm:$0xf]
        %v1175 = vld [vmem:[%s1165 + $0x24] sm:$0xf]
        %v1176 = vld [vmem:[%s1165 + $0x28] sm:$0xf]
        %v1177 = vld [vmem:[%s1165 + $0x2c] sm:$0xf]
        %v1178 = vld [vmem:[%s1165 + $0x30] sm:$0xf]
        %v1179 = vld [vmem:[%s1165 + $0x34] sm:$0xf]
        %v1180 = vld [vmem:[%s1165 + $0x38] sm:$0xf]
        %v1181 = vld [vmem:[%s1165 + $0x3c] sm:$0xf]
        %v1190 = vunpack.c.l.b16 %v1157
        %v1191 = vunpack.c.l.b16 %v1158
        %v1192 = vunpack.c.l.b16 %v1159
        %v1193 = vunpack.c.l.b16 %v1160
        %v1194 = vunpack.c.l.b16 %v1161
        %v1195 = vunpack.c.l.b16 %v1162
        %v1196 = vunpack.c.l.b16 %v1163
        %v1197 = vunpack.c.l.b16 %v1164
        %v1198 = vpack.c.b16 %v1191, %v1190
        %v1199 = vpack.c.b16 %v1193, %v1192
        %v1200 = vpack.c.b16 %v1195, %v1194
        %v1201 = vpack.c.b16 %v1197, %v1196
        %v1222 = vunpack.c.l.b16 %v1166
        %v1223 = vunpack.c.l.b16 %v1167
        %v1224 = vunpack.c.l.b16 %v1168
        %v1225 = vunpack.c.l.b16 %v1169
        %v1226 = vunpack.c.l.b16 %v1170
        %v1227 = vunpack.c.l.b16 %v1171
        %v1228 = vunpack.c.l.b16 %v1172
        %v1229 = vunpack.c.l.b16 %v1173
        %v1230 = vunpack.c.l.b16 %v1174
        %v1231 = vunpack.c.l.b16 %v1175
        %v1232 = vunpack.c.l.b16 %v1176
        %v1233 = vunpack.c.l.b16 %v1177
        %v1234 = vunpack.c.l.b16 %v1178
        %v1235 = vunpack.c.l.b16 %v1179
        %v1236 = vunpack.c.l.b16 %v1180
        %v1237 = vunpack.c.l.b16 %v1181
        %v1238 = vpack.c.b16 %v1223, %v1222
        %v1239 = vpack.c.b16 %v1225, %v1224
        %v1240 = vpack.c.b16 %v1227, %v1226
        %v1241 = vpack.c.b16 %v1229, %v1228
        %v1242 = vpack.c.b16 %v1231, %v1230
        %v1243 = vpack.c.b16 %v1233, %v1232
        %v1244 = vpack.c.b16 %v1235, %v1234
        %v1245 = vpack.c.b16 %v1237, %v1236
        %1254 = vmatpush.bf16.msra.mxu0 %v1245
        %1255 = vmatpush.bf16.msra.mxu0 %v1244
        %1256 = vmatpush.bf16.msra.mxu0 %v1243
        %1257 = vmatpush.bf16.msra.mxu0 %v1242
        %1258 = vmatpush.bf16.msra.mxu0 %v1241
        %1259 = vmatpush.bf16.msra.mxu0 %v1240
        %1260 = vmatpush.bf16.msra.mxu0 %v1239
        %1261 = vmatpush.bf16.msra.mxu0 %v1238
        %1262 = vmatmul.bf16.gmra.mxu0 %v1198
        %v1263 = vpop.f32.mrf.mxu0
        %v1264 = vadd.f32 0.0, %v1263
        %v1265 = vpop.f32.mrf.mxu0
        %v1266 = vadd.f32 0.0, %v1265
        %1267 = vmatmul.bf16.gmra.mxu0 %v1199
        %v1268 = vpop.f32.mrf.mxu0
        %v1269 = vadd.f32 0.0, %v1268
        %v1270 = vpop.f32.mrf.mxu0
        %v1271 = vadd.f32 0.0, %v1270
        %1272 = vmatmul.bf16.gmra.mxu0 %v1200
        %v1273 = vpop.f32.mrf.mxu0
        %v1274 = vadd.f32 0.0, %v1273
        %v1275 = vpop.f32.mrf.mxu0
        %v1276 = vadd.f32 0.0, %v1275
        %1277 = vmatmul.bf16.gmra.mxu0 %v1201
        %v1278 = vpop.f32.mrf.mxu0
        %v1279 = vadd.f32 0.0, %v1278
        %v1280 = vpop.f32.mrf.mxu0
        %v1281 = vadd.f32 0.0, %v1280
        %1282 = vdwg.mxu0
        %v1283 = vadd.f32 %v1148, %v1264
        %v1284 = vadd.f32 %v1149, %v1266
        %v1285 = vadd.f32 %v1150, %v1269
        %v1286 = vadd.f32 %v1151, %v1271
        %v1287 = vadd.f32 %v1152, %v1274
        %v1288 = vadd.f32 %v1153, %v1276
        %v1289 = vadd.f32 %v1154, %v1279
        %v1290 = vadd.f32 %v1155, %v1281
        %s1291 = scalar_lea.vmem %s473, 192 [#allocation2]
        %v1292 = vld [vmem:[%s1291] sm:$0xf]
        %v1293 = vld [vmem:[%s1291 + $0x4] sm:$0xf]
        %v1294 = vld [vmem:[%s1291 + $0x8] sm:$0xf]
        %v1295 = vld [vmem:[%s1291 + $0xc] sm:$0xf]
        %v1296 = vld [vmem:[%s1291 + $0x10] sm:$0xf]
        %v1297 = vld [vmem:[%s1291 + $0x14] sm:$0xf]
        %v1298 = vld [vmem:[%s1291 + $0x18] sm:$0xf]
        %v1299 = vld [vmem:[%s1291 + $0x1c] sm:$0xf]
        %s1300 = scalar_lea.vmem %s1, 384
        %v1301 = vld [vmem:[%s1300] sm:$0xf]
        %v1302 = vld [vmem:[%s1300 + $0x4] sm:$0xf]
        %v1303 = vld [vmem:[%s1300 + $0x8] sm:$0xf]
        %v1304 = vld [vmem:[%s1300 + $0xc] sm:$0xf]
        %v1305 = vld [vmem:[%s1300 + $0x10] sm:$0xf]
        %v1306 = vld [vmem:[%s1300 + $0x14] sm:$0xf]
        %v1307 = vld [vmem:[%s1300 + $0x18] sm:$0xf]
        %v1308 = vld [vmem:[%s1300 + $0x1c] sm:$0xf]
        %v1309 = vld [vmem:[%s1300 + $0x20] sm:$0xf]
        %v1310 = vld [vmem:[%s1300 + $0x24] sm:$0xf]
        %v1311 = vld [vmem:[%s1300 + $0x28] sm:$0xf]
        %v1312 = vld [vmem:[%s1300 + $0x2c] sm:$0xf]
        %v1313 = vld [vmem:[%s1300 + $0x30] sm:$0xf]
        %v1314 = vld [vmem:[%s1300 + $0x34] sm:$0xf]
        %v1315 = vld [vmem:[%s1300 + $0x38] sm:$0xf]
        %v1316 = vld [vmem:[%s1300 + $0x3c] sm:$0xf]
        %v1325 = vunpack.c.l.b16 %v1292
        %v1326 = vunpack.c.l.b16 %v1293
        %v1327 = vunpack.c.l.b16 %v1294
        %v1328 = vunpack.c.l.b16 %v1295
        %v1329 = vunpack.c.l.b16 %v1296
        %v1330 = vunpack.c.l.b16 %v1297
        %v1331 = vunpack.c.l.b16 %v1298
        %v1332 = vunpack.c.l.b16 %v1299
        %v1333 = vpack.c.b16 %v1326, %v1325
        %v1334 = vpack.c.b16 %v1328, %v1327
        %v1335 = vpack.c.b16 %v1330, %v1329
        %v1336 = vpack.c.b16 %v1332, %v1331
        %v1357 = vunpack.c.l.b16 %v1301
        %v1358 = vunpack.c.l.b16 %v1302
        %v1359 = vunpack.c.l.b16 %v1303
        %v1360 = vunpack.c.l.b16 %v1304
        %v1361 = vunpack.c.l.b16 %v1305
        %v1362 = vunpack.c.l.b16 %v1306
        %v1363 = vunpack.c.l.b16 %v1307
        %v1364 = vunpack.c.l.b16 %v1308
        %v1365 = vunpack.c.l.b16 %v1309
        %v1366 = vunpack.c.l.b16 %v1310
        %v1367 = vunpack.c.l.b16 %v1311
        %v1368 = vunpack.c.l.b16 %v1312
        %v1369 = vunpack.c.l.b16 %v1313
        %v1370 = vunpack.c.l.b16 %v1314
        %v1371 = vunpack.c.l.b16 %v1315
        %v1372 = vunpack.c.l.b16 %v1316
        %v1373 = vpack.c.b16 %v1358, %v1357
        %v1374 = vpack.c.b16 %v1360, %v1359
        %v1375 = vpack.c.b16 %v1362, %v1361
        %v1376 = vpack.c.b16 %v1364, %v1363
        %v1377 = vpack.c.b16 %v1366, %v1365
        %v1378 = vpack.c.b16 %v1368, %v1367
        %v1379 = vpack.c.b16 %v1370, %v1369
        %v1380 = vpack.c.b16 %v1372, %v1371
        %1389 = vmatpush.bf16.msra.mxu0 %v1380
        %1390 = vmatpush.bf16.msra.mxu0 %v1379
        %1391 = vmatpush.bf16.msra.mxu0 %v1378
        %1392 = vmatpush.bf16.msra.mxu0 %v1377
        %1393 = vmatpush.bf16.msra.mxu0 %v1376
        %1394 = vmatpush.bf16.msra.mxu0 %v1375
        %1395 = vmatpush.bf16.msra.mxu0 %v1374
        %1396 = vmatpush.bf16.msra.mxu0 %v1373
        %1397 = vmatmul.bf16.gmra.mxu0 %v1333
        %v1398 = vpop.f32.mrf.mxu0
        %v1399 = vadd.f32 0.0, %v1398
        %v1400 = vpop.f32.mrf.mxu0
        %v1401 = vadd.f32 0.0, %v1400
        %1402 = vmatmul.bf16.gmra.mxu0 %v1334
        %v1403 = vpop.f32.mrf.mxu0
        %v1404 = vadd.f32 0.0, %v1403
        %v1405 = vpop.f32.mrf.mxu0
        %v1406 = vadd.f32 0.0, %v1405
        %1407 = vmatmul.bf16.gmra.mxu0 %v1335
        %v1408 = vpop.f32.mrf.mxu0
        %v1409 = vadd.f32 0.0, %v1408
        %v1410 = vpop.f32.mrf.mxu0
        %v1411 = vadd.f32 0.0, %v1410
        %1412 = vmatmul.bf16.gmra.mxu0 %v1336
        %v1413 = vpop.f32.mrf.mxu0
        %v1414 = vadd.f32 0.0, %v1413
        %v1415 = vpop.f32.mrf.mxu0
        %v1416 = vadd.f32 0.0, %v1415
        %1417 = vdwg.mxu0
        %v1418 = vadd.f32 %v1283, %v1399
        %v1419 = vadd.f32 %v1284, %v1401
        %v1420 = vadd.f32 %v1285, %v1404
        %v1421 = vadd.f32 %v1286, %v1406
        %v1422 = vadd.f32 %v1287, %v1409
        %v1423 = vadd.f32 %v1288, %v1411
        %v1424 = vadd.f32 %v1289, %v1414
        %v1425 = vadd.f32 %v1290, %v1416
        %s1426 = scalar_lea.vmem %s473, 224 [#allocation2]
        %v1427 = vld [vmem:[%s1426] sm:$0xf]
        %v1428 = vld [vmem:[%s1426 + $0x4] sm:$0xf]
        %v1429 = vld [vmem:[%s1426 + $0x8] sm:$0xf]
        %v1430 = vld [vmem:[%s1426 + $0xc] sm:$0xf]
        %v1431 = vld [vmem:[%s1426 + $0x10] sm:$0xf]
        %v1432 = vld [vmem:[%s1426 + $0x14] sm:$0xf]
        %v1433 = vld [vmem:[%s1426 + $0x18] sm:$0xf]
        %v1434 = vld [vmem:[%s1426 + $0x1c] sm:$0xf]
        %s1435 = scalar_lea.vmem %s1, 448
        %v1436 = vld [vmem:[%s1435] sm:$0xf]
        %v1437 = vld [vmem:[%s1435 + $0x4] sm:$0xf]
        %v1438 = vld [vmem:[%s1435 + $0x8] sm:$0xf]
        %v1439 = vld [vmem:[%s1435 + $0xc] sm:$0xf]
        %v1440 = vld [vmem:[%s1435 + $0x10] sm:$0xf]
        %v1441 = vld [vmem:[%s1435 + $0x14] sm:$0xf]
        %v1442 = vld [vmem:[%s1435 + $0x18] sm:$0xf]
        %v1443 = vld [vmem:[%s1435 + $0x1c] sm:$0xf]
        %v1444 = vld [vmem:[%s1435 + $0x20] sm:$0xf]
        %v1445 = vld [vmem:[%s1435 + $0x24] sm:$0xf]
        %v1446 = vld [vmem:[%s1435 + $0x28] sm:$0xf]
        %v1447 = vld [vmem:[%s1435 + $0x2c] sm:$0xf]
        %v1448 = vld [vmem:[%s1435 + $0x30] sm:$0xf]
        %v1449 = vld [vmem:[%s1435 + $0x34] sm:$0xf]
        %v1450 = vld [vmem:[%s1435 + $0x38] sm:$0xf]
        %v1451 = vld [vmem:[%s1435 + $0x3c] sm:$0xf]
        %v1460 = vunpack.c.l.b16 %v1427
        %v1461 = vunpack.c.l.b16 %v1428
        %v1462 = vunpack.c.l.b16 %v1429
        %v1463 = vunpack.c.l.b16 %v1430
        %v1464 = vunpack.c.l.b16 %v1431
        %v1465 = vunpack.c.l.b16 %v1432
        %v1466 = vunpack.c.l.b16 %v1433
        %v1467 = vunpack.c.l.b16 %v1434
        %v1468 = vpack.c.b16 %v1461, %v1460
        %v1469 = vpack.c.b16 %v1463, %v1462
        %v1470 = vpack.c.b16 %v1465, %v1464
        %v1471 = vpack.c.b16 %v1467, %v1466
        %v1492 = vunpack.c.l.b16 %v1436
        %v1493 = vunpack.c.l.b16 %v1437
        %v1494 = vunpack.c.l.b16 %v1438
        %v1495 = vunpack.c.l.b16 %v1439
        %v1496 = vunpack.c.l.b16 %v1440
        %v1497 = vunpack.c.l.b16 %v1441
        %v1498 = vunpack.c.l.b16 %v1442
        %v1499 = vunpack.c.l.b16 %v1443
        %v1500 = vunpack.c.l.b16 %v1444
        %v1501 = vunpack.c.l.b16 %v1445
        %v1502 = vunpack.c.l.b16 %v1446
        %v1503 = vunpack.c.l.b16 %v1447
        %v1504 = vunpack.c.l.b16 %v1448
        %v1505 = vunpack.c.l.b16 %v1449
        %v1506 = vunpack.c.l.b16 %v1450
        %v1507 = vunpack.c.l.b16 %v1451
        %v1508 = vpack.c.b16 %v1493, %v1492
        %v1509 = vpack.c.b16 %v1495, %v1494
        %v1510 = vpack.c.b16 %v1497, %v1496
        %v1511 = vpack.c.b16 %v1499, %v1498
        %v1512 = vpack.c.b16 %v1501, %v1500
        %v1513 = vpack.c.b16 %v1503, %v1502
        %v1514 = vpack.c.b16 %v1505, %v1504
        %v1515 = vpack.c.b16 %v1507, %v1506
        %1524 = vmatpush.bf16.msra.mxu0 %v1515
        %1525 = vmatpush.bf16.msra.mxu0 %v1514
        %1526 = vmatpush.bf16.msra.mxu0 %v1513
        %1527 = vmatpush.bf16.msra.mxu0 %v1512
        %1528 = vmatpush.bf16.msra.mxu0 %v1511
        %1529 = vmatpush.bf16.msra.mxu0 %v1510
        %1530 = vmatpush.bf16.msra.mxu0 %v1509
        %1531 = vmatpush.bf16.msra.mxu0 %v1508
        %1532 = vmatmul.bf16.gmra.mxu0 %v1468
        %v1533 = vpop.f32.mrf.mxu0
        %v1534 = vadd.f32 0.0, %v1533
        %v1535 = vpop.f32.mrf.mxu0
        %v1536 = vadd.f32 0.0, %v1535
        %1537 = vmatmul.bf16.gmra.mxu0 %v1469
        %v1538 = vpop.f32.mrf.mxu0
        %v1539 = vadd.f32 0.0, %v1538
        %v1540 = vpop.f32.mrf.mxu0
        %v1541 = vadd.f32 0.0, %v1540
        %1542 = vmatmul.bf16.gmra.mxu0 %v1470
        %v1543 = vpop.f32.mrf.mxu0
        %v1544 = vadd.f32 0.0, %v1543
        %v1545 = vpop.f32.mrf.mxu0
        %v1546 = vadd.f32 0.0, %v1545
        %1547 = vmatmul.bf16.gmra.mxu0 %v1471
        %v1548 = vpop.f32.mrf.mxu0
        %v1549 = vadd.f32 0.0, %v1548
        %v1550 = vpop.f32.mrf.mxu0
        %v1551 = vadd.f32 0.0, %v1550
        %1552 = vdwg.mxu0
        %v1553 = vadd.f32 %v1418, %v1534
        %v1554 = vadd.f32 %v1419, %v1536
        %v1555 = vadd.f32 %v1420, %v1539
        %v1556 = vadd.f32 %v1421, %v1541
        %v1557 = vadd.f32 %v1422, %v1544
        %v1558 = vadd.f32 %v1423, %v1546
        %v1559 = vadd.f32 %v1424, %v1549
        %v1560 = vadd.f32 %v1425, %v1551
        %s1561 = scalar_lea.vmem %s473, 256 [#allocation2]
        %v1562 = vld [vmem:[%s1561] sm:$0xf]
        %v1563 = vld [vmem:[%s1561 + $0x4] sm:$0xf]
        %v1564 = vld [vmem:[%s1561 + $0x8] sm:$0xf]
        %v1565 = vld [vmem:[%s1561 + $0xc] sm:$0xf]
        %v1566 = vld [vmem:[%s1561 + $0x10] sm:$0xf]
        %v1567 = vld [vmem:[%s1561 + $0x14] sm:$0xf]
        %v1568 = vld [vmem:[%s1561 + $0x18] sm:$0xf]
        %v1569 = vld [vmem:[%s1561 + $0x1c] sm:$0xf]
        %s1570 = scalar_lea.vmem %s1, 512
        %v1571 = vld [vmem:[%s1570] sm:$0xf]
        %v1572 = vld [vmem:[%s1570 + $0x4] sm:$0xf]
        %v1573 = vld [vmem:[%s1570 + $0x8] sm:$0xf]
        %v1574 = vld [vmem:[%s1570 + $0xc] sm:$0xf]
        %v1575 = vld [vmem:[%s1570 + $0x10] sm:$0xf]
        %v1576 = vld [vmem:[%s1570 + $0x14] sm:$0xf]
        %v1577 = vld [vmem:[%s1570 + $0x18] sm:$0xf]
        %v1578 = vld [vmem:[%s1570 + $0x1c] sm:$0xf]
        %v1579 = vld [vmem:[%s1570 + $0x20] sm:$0xf]
        %v1580 = vld [vmem:[%s1570 + $0x24] sm:$0xf]
        %v1581 = vld [vmem:[%s1570 + $0x28] sm:$0xf]
        %v1582 = vld [vmem:[%s1570 + $0x2c] sm:$0xf]
        %v1583 = vld [vmem:[%s1570 + $0x30] sm:$0xf]
        %v1584 = vld [vmem:[%s1570 + $0x34] sm:$0xf]
        %v1585 = vld [vmem:[%s1570 + $0x38] sm:$0xf]
        %v1586 = vld [vmem:[%s1570 + $0x3c] sm:$0xf]
        %v1595 = vunpack.c.l.b16 %v1562
        %v1596 = vunpack.c.l.b16 %v1563
        %v1597 = vunpack.c.l.b16 %v1564
        %v1598 = vunpack.c.l.b16 %v1565
        %v1599 = vunpack.c.l.b16 %v1566
        %v1600 = vunpack.c.l.b16 %v1567
        %v1601 = vunpack.c.l.b16 %v1568
        %v1602 = vunpack.c.l.b16 %v1569
        %v1603 = vpack.c.b16 %v1596, %v1595
        %v1604 = vpack.c.b16 %v1598, %v1597
        %v1605 = vpack.c.b16 %v1600, %v1599
        %v1606 = vpack.c.b16 %v1602, %v1601
        %v1627 = vunpack.c.l.b16 %v1571
        %v1628 = vunpack.c.l.b16 %v1572
        %v1629 = vunpack.c.l.b16 %v1573
        %v1630 = vunpack.c.l.b16 %v1574
        %v1631 = vunpack.c.l.b16 %v1575
        %v1632 = vunpack.c.l.b16 %v1576
        %v1633 = vunpack.c.l.b16 %v1577
        %v1634 = vunpack.c.l.b16 %v1578
        %v1635 = vunpack.c.l.b16 %v1579
        %v1636 = vunpack.c.l.b16 %v1580
        %v1637 = vunpack.c.l.b16 %v1581
        %v1638 = vunpack.c.l.b16 %v1582
        %v1639 = vunpack.c.l.b16 %v1583
        %v1640 = vunpack.c.l.b16 %v1584
        %v1641 = vunpack.c.l.b16 %v1585
        %v1642 = vunpack.c.l.b16 %v1586
        %v1643 = vpack.c.b16 %v1628, %v1627
        %v1644 = vpack.c.b16 %v1630, %v1629
        %v1645 = vpack.c.b16 %v1632, %v1631
        %v1646 = vpack.c.b16 %v1634, %v1633
        %v1647 = vpack.c.b16 %v1636, %v1635
        %v1648 = vpack.c.b16 %v1638, %v1637
        %v1649 = vpack.c.b16 %v1640, %v1639
        %v1650 = vpack.c.b16 %v1642, %v1641
        %1659 = vmatpush.bf16.msra.mxu0 %v1650
        %1660 = vmatpush.bf16.msra.mxu0 %v1649
        %1661 = vmatpush.bf16.msra.mxu0 %v1648
        %1662 = vmatpush.bf16.msra.mxu0 %v1647
        %1663 = vmatpush.bf16.msra.mxu0 %v1646
        %1664 = vmatpush.bf16.msra.mxu0 %v1645
        %1665 = vmatpush.bf16.msra.mxu0 %v1644
        %1666 = vmatpush.bf16.msra.mxu0 %v1643
        %1667 = vmatmul.bf16.gmra.mxu0 %v1603
        %v1668 = vpop.f32.mrf.mxu0
        %v1669 = vadd.f32 0.0, %v1668
        %v1670 = vpop.f32.mrf.mxu0
        %v1671 = vadd.f32 0.0, %v1670
        %1672 = vmatmul.bf16.gmra.mxu0 %v1604
        %v1673 = vpop.f32.mrf.mxu0
        %v1674 = vadd.f32 0.0, %v1673
        %v1675 = vpop.f32.mrf.mxu0
        %v1676 = vadd.f32 0.0, %v1675
        %1677 = vmatmul.bf16.gmra.mxu0 %v1605
        %v1678 = vpop.f32.mrf.mxu0
        %v1679 = vadd.f32 0.0, %v1678
        %v1680 = vpop.f32.mrf.mxu0
        %v1681 = vadd.f32 0.0, %v1680
        %1682 = vmatmul.bf16.gmra.mxu0 %v1606
        %v1683 = vpop.f32.mrf.mxu0
        %v1684 = vadd.f32 0.0, %v1683
        %v1685 = vpop.f32.mrf.mxu0
        %v1686 = vadd.f32 0.0, %v1685
        %1687 = vdwg.mxu0
        %v1688 = vadd.f32 %v1553, %v1669
        %v1689 = vadd.f32 %v1554, %v1671
        %v1690 = vadd.f32 %v1555, %v1674
        %v1691 = vadd.f32 %v1556, %v1676
        %v1692 = vadd.f32 %v1557, %v1679
        %v1693 = vadd.f32 %v1558, %v1681
        %v1694 = vadd.f32 %v1559, %v1684
        %v1695 = vadd.f32 %v1560, %v1686
        %v1696 = vld [vmem:[%s2] sm:$0x1]
        %v1698 = vperm.slane %v1696, 0
        %v1700 = vadd.f32 %v1688, %v1698
        %v1701 = vadd.f32 %v1689, %v1698
        %v1702 = vadd.f32 %v1690, %v1698
        %v1703 = vadd.f32 %v1691, %v1698
        %v1704 = vadd.f32 %v1692, %v1698
        %v1705 = vadd.f32 %v1693, %v1698
        %v1706 = vadd.f32 %v1694, %v1698
        %v1707 = vadd.f32 %v1695, %v1698
        %v1708 = vpack.c.bf16 %v1700, %v1700
        %v1709 = vpack.c.bf16 %v1701, %v1701
        %v1710 = vpack.c.bf16 %v1702, %v1702
        %v1711 = vpack.c.bf16 %v1703, %v1703
        %v1712 = vpack.c.bf16 %v1704, %v1704
        %v1713 = vpack.c.bf16 %v1705, %v1705
        %v1714 = vpack.c.bf16 %v1706, %v1706
        %v1715 = vpack.c.bf16 %v1707, %v1707
        %1716 = vst [vmem:[%s498] sm:$0xf] %v1708
        %1717 = vst [vmem:[%s498 + $0x4] sm:$0xf] %v1709
        %1718 = vst [vmem:[%s498 + $0x8] sm:$0xf] %v1710
        %1719 = vst [vmem:[%s498 + $0xc] sm:$0xf] %v1711
        %1720 = vst [vmem:[%s498 + $0x10] sm:$0xf] %v1712
        %1721 = vst [vmem:[%s498 + $0x14] sm:$0xf] %v1713
        %1722 = vst [vmem:[%s498 + $0x18] sm:$0xf] %v1714
        %1723 = vst [vmem:[%s498 + $0x1c] sm:$0xf] %v1715
        %p1724 = scmp.lt.s32.totalorder %s14, 1
        %s1725 = scalar_select %p1724, %s14, 1
        %s1726 = smul.addr %s1725, 8
        %s1727 = smul.addr %s1726, 4
        %s1728 = scalar_lea.vmem %s3, %s1727
        // Predicated region
        $region74: #{unet_forward.8} parent=68 // pred_check
          %p1729 = pneg %p100
        $region75: #{unet_forward.8} parent=68 // pred_check_branch
          %1731 = sbr.rel (%p1729) target = $region77
        $region76: #{unet_forward.8} parent=68 // pred_region
          _
        $region77: #{unet_forward.8} parent=68 // pred_fallthru
          _
      $region69: #{unet_forward.8} parent=5 // pred_fallthru
        _
      %p1732 = scmp.le.s32.totalorder 2, %s9
      // Predicated region
      $region78: #{unet_forward.8} parent=5 // pred_check
        %p1733 = pneg %p1732
      $region79: #{unet_forward.8} parent=5 // pred_check_branch
        %1735 = sbr.rel (%p1733) target = $region81
      $region80: #{unet_forward.8} parent=5 // pred_region
        %s1736 = ssub.s32 %s9, 2
        // Predicated region
        $region82: #{unet_forward.8} parent=80 // pred_check
          %p1737 = pneg %p106
        $region83: #{unet_forward.8} parent=80 // pred_check_branch
          %1739 = sbr.rel (%p1737) target = $region85
        $region84: #{unet_forward.8} parent=80 // pred_region
          %p1740 = scmp.lt.s32.totalorder %s15, 1
          %s1741 = scalar_select %p1740, %s15, 1
          %s1742 = smul.addr %s1741, 8
          %s1743 = smul.addr %s1742, 4
          %s1744 = scalar_lea.vmem %s3, %s1743
        $region85: #{unet_forward.8} parent=80 // pred_fallthru
          _
      $region81: #{unet_forward.8} parent=5 // pred_fallthru
        _
    $region6: #{unet_forward.8} parent=1 // loop_footer
      %s13 = sadd.s32 1, %s9
    $region7: #{unet_forward.8} parent=1 // loop_footer_branch
      %8 = sbr.rel target = $region3
    $region8: #{unet_forward.8} parent=1 // loop_exit
      _

// kernel: unet_forward.13
$region0: #{unet_forward.13}
  #allocation0 [shape = 'u32[]', space=smem, size = 0x4, offset = 0x4, fixed_abs, tag = 'smem constant byte address 0x4 - core index']
  #allocation1 [shape = 'u32[72,128]{1,0:T(1,128)}', space=vmem, size = 0x9000, scoped, tag = 'internal scratch']
  #allocation2 [shape = 'bf16[10,10,128]{2,1,0:T(8,128)(2,1)}', space=vmem, size = 0xa000, scoped, tag = 'scratch operand']
  #allocation3 [shape = 'bf16[10,10,128]{2,1,0:T(8,128)(2,1)}', space=vmem, size = 0xa000, scoped, tag = 'scratch operand']
  #allocation4 [shape = 'f32[1,1]{1,0:T(1,128)S(6)}', space=smem, size = 0x200, scoped, tag = 'scoped memory for unet_forward.13']
  %s0 = inlined_call_operand.vmem [shape: bf16[2,8,8,128], index: 0, kind: input, shape index: {}]
  %s1 = inlined_call_operand.vmem [shape: bf16[9,128,128], index: 1, kind: input, shape index: {}]
  %s2 = inlined_call_operand.vmem [shape: f32[1,128], index: 2, kind: input, shape index: {}]
  %s3 = inlined_call_operand.vmem [shape: bf16[9,128,128], index: 3, kind: input, shape index: {}]
  %s4 = inlined_call_operand.vmem [shape: f32[1,128], index: 4, kind: input, shape index: {}]
  %s5 = inlined_call_operand.<no memory space> [shape: f32[1,1], index: 5, kind: input, shape index: {}]
  %s6 = inlined_call_operand.vmem [shape: bf16[1,128,128], index: 6, kind: input, shape index: {}]
  %s7 = inlined_call_operand.vmem [shape: f32[1,128], index: 7, kind: input, shape index: {}]
  %s8 = inlined_call_operand.vmem [shape: bf16[2,8,8,128], index: 8, kind: output, shape index: {}]
  %s9 = sld [smem:[#allocation0]]
  $region65: #{unet_forward.13} parent=0
    _
  %s11 = ssub.s32 1, %s9
  %s12 = scalar_select 0, %s11, %s9
  %13 = sst [smem:[#allocation4]] %s5
  loop: start=0, step=1, limit=4
  $region2: #{unet_forward.13} parent=0 // loop_pre_header
    _
  $region3: #{unet_forward.13} parent=0 // loop_header
    %s15 = sphi 0, %s19
    %p16 = scmp.ge.s32.totalorder %s15, 4
    %s25 = sphi 0, %s27
    %s28 = sphi 0, %s25
    %s29 = sphi 0, %s28
    %s45 = sphi 0, %s29
    %s49 = sphi 0, %s49
    %s51 = sphi 0, %s49
    %s52 = sphi 0, %s51
    %s66 = sphi 0, %s52
    %s70 = sphi 0, %s70
    %s72 = sphi 0, %s70
    %s73 = sphi 0, %s72
    %s87 = sphi 0, %s73
    %s91 = sphi 0, %s91
    %s93 = sphi 0, %s91
    %s94 = sphi 0, %s93
    %s108 = sphi 0, %s94
    %s112 = sphi 0, %s112
    %s114 = sphi 0, %s112
    %s115 = sphi 0, %s114
    %s129 = sphi 0, %s115
    %s133 = sphi 0, %s133
    %s135 = sphi 0, %s133
    %s136 = sphi 0, %s135
    %s150 = sphi 0, %s136
    %s154 = sphi 0, %s154
    %s156 = sphi 0, %s154
    %s157 = sphi 0, %s156
    %s171 = sphi 0, %s157
    %s175 = sphi 0, %s175
    %s177 = sphi 0, %s175
    %s178 = sphi 0, %s177
    %s192 = sphi 0, %s178
    %s198 = sphi 0, %s200
    %s201 = sphi 0, %s198
    %s202 = sphi 0, %s201
    %s218 = sphi 0, %s202
  $region4: #{unet_forward.13} parent=0 // loop_header_branch
    %18 = sbr.rel (%p16) target = $region8
  $region5: #{unet_forward.13} parent=0 // loop_body
    %s20 = ssub.s32 %s15, 1
    %s21 = ssub.s32 %s15, 2
    %s22 = sadd.s32 %s15, 1
    %s23 = ssub.s32 %s15, %s22
    %p24 = scmp.eq.s32.totalorder %s23, 0
    %s26 = sadd.s32 %s25, 1
    %s27 = scalar_select %p24, %s25, %s26
    %p30 = pneg %p24
    %p31 = scmp.eq.s32.totalorder %s15, 1
    %p32 = por %p30, %p31
    %p33 = scmp.ne.s32.totalorder %s25, %s28
    %p34 = scmp.eq.s32.totalorder %s15, 0
    %p35 = por %p33, %p34
    %p36 = scmp.ne.s32.totalorder %s25, %s28
    %p37 = scmp.eq.s32.totalorder %s20, 1
    %p38 = por %p36, %p37
    %p39 = scmp.ne.s32.totalorder %s28, %s29
    %p40 = scmp.eq.s32.totalorder %s20, 0
    %p41 = por %p39, %p40
    %p42 = scmp.ne.s32.totalorder %s28, %s29
    %p43 = scmp.eq.s32.totalorder %s21, 1
    %p44 = por %p42, %p43
    %p46 = scmp.ne.s32.totalorder %s29, %s45
    %p47 = scmp.eq.s32.totalorder %s21, 0
    %p48 = por %p46, %p47
    %s50 = sadd.s32 %s49, 1
    %p53 = scmp.eq.s32.totalorder %s15, 1
    %p54 = scmp.ne.s32.totalorder %s49, %s51
    %p55 = scmp.eq.s32.totalorder %s15, 0
    %p56 = por %p54, %p55
    %p57 = scmp.ne.s32.totalorder %s49, %s51
    %p58 = scmp.eq.s32.totalorder %s20, 1
    %p59 = por %p57, %p58
    %p60 = scmp.ne.s32.totalorder %s51, %s52
    %p61 = scmp.eq.s32.totalorder %s20, 0
    %p62 = por %p60, %p61
    %p63 = scmp.ne.s32.totalorder %s51, %s52
    %p64 = scmp.eq.s32.totalorder %s21, 1
    %p65 = por %p63, %p64
    %p67 = scmp.ne.s32.totalorder %s52, %s66
    %p68 = scmp.eq.s32.totalorder %s21, 0
    %p69 = por %p67, %p68
    %s71 = sadd.s32 %s70, 1
    %p74 = scmp.eq.s32.totalorder %s15, 1
    %p75 = scmp.ne.s32.totalorder %s70, %s72
    %p76 = scmp.eq.s32.totalorder %s15, 0
    %p77 = por %p75, %p76
    %p78 = scmp.ne.s32.totalorder %s70, %s72
    %p79 = scmp.eq.s32.totalorder %s20, 1
    %p80 = por %p78, %p79
    %p81 = scmp.ne.s32.totalorder %s72, %s73
    %p82 = scmp.eq.s32.totalorder %s20, 0
    %p83 = por %p81, %p82
    %p84 = scmp.ne.s32.totalorder %s72, %s73
    %p85 = scmp.eq.s32.totalorder %s21, 1
    %p86 = por %p84, %p85
    %p88 = scmp.ne.s32.totalorder %s73, %s87
    %p89 = scmp.eq.s32.totalorder %s21, 0
    %p90 = por %p88, %p89
    %s92 = sadd.s32 %s91, 1
    %p95 = scmp.eq.s32.totalorder %s15, 1
    %p96 = scmp.ne.s32.totalorder %s91, %s93
    %p97 = scmp.eq.s32.totalorder %s15, 0
    %p98 = por %p96, %p97
    %p99 = scmp.ne.s32.totalorder %s91, %s93
    %p100 = scmp.eq.s32.totalorder %s20, 1
    %p101 = por %p99, %p100
    %p102 = scmp.ne.s32.totalorder %s93, %s94
    %p103 = scmp.eq.s32.totalorder %s20, 0
    %p104 = por %p102, %p103
    %p105 = scmp.ne.s32.totalorder %s93, %s94
    %p106 = scmp.eq.s32.totalorder %s21, 1
    %p107 = por %p105, %p106
    %p109 = scmp.ne.s32.totalorder %s94, %s108
    %p110 = scmp.eq.s32.totalorder %s21, 0
    %p111 = por %p109, %p110
    %s113 = sadd.s32 %s112, 1
    %p116 = scmp.eq.s32.totalorder %s15, 1
    %p117 = scmp.ne.s32.totalorder %s112, %s114
    %p118 = scmp.eq.s32.totalorder %s15, 0
    %p119 = por %p117, %p118
    %p120 = scmp.ne.s32.totalorder %s112, %s114
    %p121 = scmp.eq.s32.totalorder %s20, 1
    %p122 = por %p120, %p121
    %p123 = scmp.ne.s32.totalorder %s114, %s115
    %p124 = scmp.eq.s32.totalorder %s20, 0
    %p125 = por %p123, %p124
    %p126 = scmp.ne.s32.totalorder %s114, %s115
    %p127 = scmp.eq.s32.totalorder %s21, 1
    %p128 = por %p126, %p127
    %p130 = scmp.ne.s32.totalorder %s115, %s129
    %p131 = scmp.eq.s32.totalorder %s21, 0
    %p132 = por %p130, %p131
    %s134 = sadd.s32 %s133, 1
    %p137 = scmp.eq.s32.totalorder %s15, 1
    %p138 = scmp.ne.s32.totalorder %s133, %s135
    %p139 = scmp.eq.s32.totalorder %s15, 0
    %p140 = por %p138, %p139
    %p141 = scmp.ne.s32.totalorder %s133, %s135
    %p142 = scmp.eq.s32.totalorder %s20, 1
    %p143 = por %p141, %p142
    %p144 = scmp.ne.s32.totalorder %s135, %s136
    %p145 = scmp.eq.s32.totalorder %s20, 0
    %p146 = por %p144, %p145
    %p147 = scmp.ne.s32.totalorder %s135, %s136
    %p148 = scmp.eq.s32.totalorder %s21, 1
    %p149 = por %p147, %p148
    %p151 = scmp.ne.s32.totalorder %s136, %s150
    %p152 = scmp.eq.s32.totalorder %s21, 0
    %p153 = por %p151, %p152
    %s155 = sadd.s32 %s154, 1
    %p158 = scmp.eq.s32.totalorder %s15, 1
    %p159 = scmp.ne.s32.totalorder %s154, %s156
    %p160 = scmp.eq.s32.totalorder %s15, 0
    %p161 = por %p159, %p160
    %p162 = scmp.ne.s32.totalorder %s154, %s156
    %p163 = scmp.eq.s32.totalorder %s20, 1
    %p164 = por %p162, %p163
    %p165 = scmp.ne.s32.totalorder %s156, %s157
    %p166 = scmp.eq.s32.totalorder %s20, 0
    %p167 = por %p165, %p166
    %p168 = scmp.ne.s32.totalorder %s156, %s157
    %p169 = scmp.eq.s32.totalorder %s21, 1
    %p170 = por %p168, %p169
    %p172 = scmp.ne.s32.totalorder %s157, %s171
    %p173 = scmp.eq.s32.totalorder %s21, 0
    %p174 = por %p172, %p173
    %s176 = sadd.s32 %s175, 1
    %p179 = scmp.eq.s32.totalorder %s15, 1
    %p180 = scmp.ne.s32.totalorder %s175, %s177
    %p181 = scmp.eq.s32.totalorder %s15, 0
    %p182 = por %p180, %p181
    %p183 = scmp.ne.s32.totalorder %s175, %s177
    %p184 = scmp.eq.s32.totalorder %s20, 1
    %p185 = por %p183, %p184
    %p186 = scmp.ne.s32.totalorder %s177, %s178
    %p187 = scmp.eq.s32.totalorder %s20, 0
    %p188 = por %p186, %p187
    %p189 = scmp.ne.s32.totalorder %s177, %s178
    %p190 = scmp.eq.s32.totalorder %s21, 1
    %p191 = por %p189, %p190
    %p193 = scmp.ne.s32.totalorder %s178, %s192
    %p194 = scmp.eq.s32.totalorder %s21, 0
    %p195 = por %p193, %p194
    %s196 = ssub.s32 %s15, %s22
    %p197 = scmp.eq.s32.totalorder %s196, 0
    %s199 = sadd.s32 %s198, 1
    %s200 = scalar_select %p197, %s198, %s199
    %p203 = pneg %p197
    %p204 = scmp.eq.s32.totalorder %s15, 1
    %p205 = por %p203, %p204
    %p206 = scmp.ne.s32.totalorder %s198, %s201
    %p207 = scmp.eq.s32.totalorder %s15, 0
    %p208 = por %p206, %p207
    %p209 = scmp.ne.s32.totalorder %s198, %s201
    %p210 = scmp.eq.s32.totalorder %s20, 1
    %p211 = por %p209, %p210
    %p212 = scmp.ne.s32.totalorder %s201, %s202
    %p213 = scmp.eq.s32.totalorder %s20, 0
    %p214 = por %p212, %p213
    %p215 = scmp.ne.s32.totalorder %s201, %s202
    %p216 = scmp.eq.s32.totalorder %s21, 1
    %p217 = por %p215, %p216
    %p219 = scmp.ne.s32.totalorder %s202, %s218
    %p220 = scmp.eq.s32.totalorder %s21, 0
    %p221 = por %p219, %p220
    %p222 = scmp.le.s32.totalorder 1, %s15
    %p223 = scmp.lt.s32.totalorder %s15, 3
    %p224 = pnand %p222, %p223
    %p225 = pneg %p224
    // Predicated region
    $region9: #{unet_forward.13} parent=5 // pred_check
      _
    $region10: #{unet_forward.13} parent=5 // pred_check_branch
      %227 = sbr.rel (%p224) target = $region12
    $region11: #{unet_forward.13} parent=5 // pred_region
      %s228 = ssub.s32 %s15, 1
      // Predicated region
      $region13: #{unet_forward.13} parent=11 // pred_check
        %p229 = pneg %p62
      $region14: #{unet_forward.13} parent=11 // pred_check_branch
        %231 = sbr.rel (%p229) target = $region16
      $region15: #{unet_forward.13} parent=11 // pred_region
        _
      $region16: #{unet_forward.13} parent=11 // pred_fallthru
        _
      // Predicated region
      $region17: #{unet_forward.13} parent=11 // pred_check
        %p232 = pneg %p83
      $region18: #{unet_forward.13} parent=11 // pred_check_branch
        %234 = sbr.rel (%p232) target = $region20
      $region19: #{unet_forward.13} parent=11 // pred_region
        _
      $region20: #{unet_forward.13} parent=11 // pred_fallthru
        _
      // Predicated region
      $region21: #{unet_forward.13} parent=11 // pred_check
        %p235 = pneg %p104
      $region22: #{unet_forward.13} parent=11 // pred_check_branch
        %237 = sbr.rel (%p235) target = $region24
      $region23: #{unet_forward.13} parent=11 // pred_region
        _
      $region24: #{unet_forward.13} parent=11 // pred_fallthru
        _
      // Predicated region
      $region25: #{unet_forward.13} parent=11 // pred_check
        %p238 = pneg %p125
      $region26: #{unet_forward.13} parent=11 // pred_check_branch
        %240 = sbr.rel (%p238) target = $region28
      $region27: #{unet_forward.13} parent=11 // pred_region
        _
      $region28: #{unet_forward.13} parent=11 // pred_fallthru
        _
      // Predicated region
      $region29: #{unet_forward.13} parent=11 // pred_check
        %p241 = pneg %p146
      $region30: #{unet_forward.13} parent=11 // pred_check_branch
        %243 = sbr.rel (%p241) target = $region32
      $region31: #{unet_forward.13} parent=11 // pred_region
        _
      $region32: #{unet_forward.13} parent=11 // pred_fallthru
        _
      // Predicated region
      $region33: #{unet_forward.13} parent=11 // pred_check
        %p244 = pneg %p167
      $region34: #{unet_forward.13} parent=11 // pred_check_branch
        %246 = sbr.rel (%p244) target = $region36
      $region35: #{unet_forward.13} parent=11 // pred_region
        _
      $region36: #{unet_forward.13} parent=11 // pred_fallthru
        _
      // Predicated region
      $region37: #{unet_forward.13} parent=11 // pred_check
        %p247 = pneg %p188
      $region38: #{unet_forward.13} parent=11 // pred_check_branch
        %249 = sbr.rel (%p247) target = $region40
      $region39: #{unet_forward.13} parent=11 // pred_region
        _
      $region40: #{unet_forward.13} parent=11 // pred_fallthru
        _
    $region12: #{unet_forward.13} parent=5 // pred_fallthru
      _
    %p250 = scmp.lt.s32.totalorder %s15, 2
    // Predicated region
    $region41: #{unet_forward.13} parent=5 // pred_check
      %p251 = pneg %p250
    $region42: #{unet_forward.13} parent=5 // pred_check_branch
      %253 = sbr.rel (%p251) target = $region44
    $region43: #{unet_forward.13} parent=5 // pred_region
      // Predicated region
      $region45: #{unet_forward.13} parent=43 // pred_check
        %p254 = pneg %p35
      $region46: #{unet_forward.13} parent=43 // pred_check_branch
        %256 = sbr.rel (%p254) target = $region48
      $region47: #{unet_forward.13} parent=43 // pred_region
        %p257 = scmp.lt.s32.totalorder %s15, 1
        %s258 = scalar_select %p257, %s15, 1
        %s259 = smul.addr %s258, 8
        %s260 = smul.addr %s259, 4
        %s261 = scalar_lea.vmem %s0, %s260
      $region48: #{unet_forward.13} parent=43 // pred_fallthru
        _
    $region44: #{unet_forward.13} parent=5 // pred_fallthru
      _
    %p262 = scmp.le.s32.totalorder 1, %s15
    %p263 = scmp.lt.s32.totalorder %s15, 3
    %p264 = pnand %p262, %p263
    %p265 = pneg %p264
    // Predicated region
    $region49: #{unet_forward.13} parent=5 // pred_check
      _
    $region50: #{unet_forward.13} parent=5 // pred_check_branch
      %267 = sbr.rel (%p264) target = $region52
    $region51: #{unet_forward.13} parent=5 // pred_region
      %s268 = ssub.s32 %s15, 1
      %p269 = scmp.lt.s32.totalorder %s20, 1
      %s270 = scalar_select %p269, %s20, 1
      %s271 = smul.addr %s270, 8
      %s272 = smul.addr %s271, 4
      %s273 = scalar_lea.vmem %s0, %s272
      %p274 = pneg %p41
      %p275 = pneg %p38
      %p276 = pneg %p62
      %p277 = pneg %p59
      %p278 = pneg %p83
      %p279 = pneg %p80
      %p280 = pneg %p104
      %p281 = pneg %p101
      %p282 = pneg %p125
      %p283 = pneg %p122
      %p284 = pneg %p146
      %p285 = pneg %p143
      %p286 = pneg %p167
      %p287 = pneg %p164
      %p288 = pneg %p188
      %p289 = pneg %p185
      %p290 = pneg %p214
      %p291 = pneg %p211
      %p292 = scmp.lt.s32.totalorder %s20, 1
      %s293 = scalar_select %p292, %s20, 1
      %s294 = smul.addr %s293, 8
      %s295 = smul.addr %s294, 4
      %s296 = scalar_lea.vmem %s8, %s295
      %p297 = scmp.lt.s32.totalorder %s20, 1
      %s298 = scalar_select %p297, %s20, 1
      %s299 = smul.addr %s298, 8
      %s300 = smul.addr %s299, 4
      %s301 = scalar_lea.vmem %s0, %s300
      %p302 = scmp.lt.s32.totalorder %s20, 1
      %s303 = scalar_select %p302, %s20, 1
      %s304 = smul.addr %s303, 8
      %s305 = smul.addr %s304, 4
      %s306 = scalar_lea.vmem %s8, %s305
      %308 = vst [vmem:[#allocation2] sm:$0xf] 0
      %309 = vst [vmem:[#allocation2 + $0x4] sm:$0x1] 0
      %310 = vst [vmem:[#allocation2 + $0x8] sm:$0xf] 0
      %311 = vst [vmem:[#allocation2 + $0xc] sm:$0x1] 0
      %312 = vst [vmem:[#allocation2 + $0x10] sm:$0xf] 0
      %313 = vst [vmem:[#allocation2 + $0x14] sm:$0x1] 0
      %314 = vst [vmem:[#allocation2 + $0x18] sm:$0xf] 0
      %315 = vst [vmem:[#allocation2 + $0x1c] sm:$0x1] 0
      %316 = vst [vmem:[#allocation2 + $0x20] sm:$0xf] 0
      %317 = vst [vmem:[#allocation2 + $0x24] sm:$0x1] 0
      %318 = vst [vmem:[#allocation2 + $0x28] sm:$0xf] 0
      %319 = vst [vmem:[#allocation2 + $0x2c] sm:$0x1] 0
      %320 = vst [vmem:[#allocation2 + $0x30] sm:$0xf] 0
      %321 = vst [vmem:[#allocation2 + $0x34] sm:$0x1] 0
      %322 = vst [vmem:[#allocation2 + $0x38] sm:$0xf] 0
      %323 = vst [vmem:[#allocation2 + $0x3c] sm:$0x1] 0
      %324 = vst [vmem:[#allocation2 + $0x40] sm:$0xf] 0
      %325 = vst [vmem:[#allocation2 + $0x44] sm:$0x1] 0
      %326 = vst [vmem:[#allocation2 + $0x48] sm:$0xf] 0
      %327 = vst [vmem:[#allocation2 + $0x4c] sm:$0x1] 0
      %v328 = vld [vmem:[%s301] sm:$0xf]
      %v329 = vld [vmem:[%s301 + $0x4] sm:$0xf]
      %v330 = vld [vmem:[%s301 + $0x8] sm:$0xf]
      %v331 = vld [vmem:[%s301 + $0xc] sm:$0xf]
      %v332 = vld [vmem:[%s301 + $0x10] sm:$0xf]
      %v333 = vld [vmem:[%s301 + $0x14] sm:$0xf]
      %v334 = vld [vmem:[%s301 + $0x18] sm:$0xf]
      %v335 = vld [vmem:[%s301 + $0x1c] sm:$0xf]
      %v337 = vshrl.u32 %v328, 16
      %v339 = vrot.slane %v337, 7
      %v340 = vshll.u32 %v328, 16
      %v342 = vor.u32 %v339, %v340
      %v343 = vrot.slane %v339, 4
      %v345 = vshrl.u32 %v329, 16
      %v347 = vrot.slane %v345, 7
      %v348 = vshll.u32 %v329, 16
      %v350 = vor.u32 %v347, %v348
      %v351 = vrot.slane %v347, 4
      %v353 = vshrl.u32 %v330, 16
      %v355 = vrot.slane %v353, 7
      %v356 = vshll.u32 %v330, 16
      %v358 = vor.u32 %v355, %v356
      %v359 = vrot.slane %v355, 4
      %v361 = vshrl.u32 %v331, 16
      %v363 = vrot.slane %v361, 7
      %v364 = vshll.u32 %v331, 16
      %v366 = vor.u32 %v363, %v364
      %v367 = vrot.slane %v363, 4
      %v369 = vshrl.u32 %v332, 16
      %v371 = vrot.slane %v369, 7
      %v372 = vshll.u32 %v332, 16
      %v374 = vor.u32 %v371, %v372
      %v375 = vrot.slane %v371, 4
      %v377 = vshrl.u32 %v333, 16
      %v379 = vrot.slane %v377, 7
      %v380 = vshll.u32 %v333, 16
      %v382 = vor.u32 %v379, %v380
      %v383 = vrot.slane %v379, 4
      %v385 = vshrl.u32 %v334, 16
      %v387 = vrot.slane %v385, 7
      %v388 = vshll.u32 %v334, 16
      %v390 = vor.u32 %v387, %v388
      %v391 = vrot.slane %v387, 4
      %v393 = vshrl.u32 %v335, 16
      %v395 = vrot.slane %v393, 7
      %v396 = vshll.u32 %v335, 16
      %v398 = vor.u32 %v395, %v396
      %v399 = vrot.slane %v395, 4
      %s416 = scalar_lea.vmem [#allocation2], 8
      %vm417 = vcmask 1043456
      %vm418 = vsmask.f32 7938
      %vm419 = vmand %vm417, %vm418
      %v420 = vld [vmem:[%s416] sm:$0xf]
      %v421 = vsel %vm419, %v342, %v420
      %422 = vst [vmem:[%s416] sm:$0xf] %v421
      %vm423 = vcmask 1040384
      %vm424 = vsmask.f32 256
      %vm425 = vmand %vm423, %vm424
      %v426 = vld [vmem:[%s416 + $0x4] sm:$0x1]
      %v427 = vsel %vm425, %v343, %v426
      %428 = vst [vmem:[%s416 + $0x4] sm:$0x1] %v427
      %v429 = vld [vmem:[%s416 + $0x8] sm:$0xf]
      %v430 = vsel %vm419, %v350, %v429
      %431 = vst [vmem:[%s416 + $0x8] sm:$0xf] %v430
      %v432 = vld [vmem:[%s416 + $0xc] sm:$0x1]
      %v433 = vsel %vm425, %v351, %v432
      %434 = vst [vmem:[%s416 + $0xc] sm:$0x1] %v433
      %v435 = vld [vmem:[%s416 + $0x10] sm:$0xf]
      %v436 = vsel %vm419, %v358, %v435
      %437 = vst [vmem:[%s416 + $0x10] sm:$0xf] %v436
      %v438 = vld [vmem:[%s416 + $0x14] sm:$0x1]
      %v439 = vsel %vm425, %v359, %v438
      %440 = vst [vmem:[%s416 + $0x14] sm:$0x1] %v439
      %v441 = vld [vmem:[%s416 + $0x18] sm:$0xf]
      %v442 = vsel %vm419, %v366, %v441
      %443 = vst [vmem:[%s416 + $0x18] sm:$0xf] %v442
      %v444 = vld [vmem:[%s416 + $0x1c] sm:$0x1]
      %v445 = vsel %vm425, %v367, %v444
      %446 = vst [vmem:[%s416 + $0x1c] sm:$0x1] %v445
      %v447 = vld [vmem:[%s416 + $0x20] sm:$0xf]
      %v448 = vsel %vm419, %v374, %v447
      %449 = vst [vmem:[%s416 + $0x20] sm:$0xf] %v448
      %v450 = vld [vmem:[%s416 + $0x24] sm:$0x1]
      %v451 = vsel %vm425, %v375, %v450
      %452 = vst [vmem:[%s416 + $0x24] sm:$0x1] %v451
      %v453 = vld [vmem:[%s416 + $0x28] sm:$0xf]
      %v454 = vsel %vm419, %v382, %v453
      %455 = vst [vmem:[%s416 + $0x28] sm:$0xf] %v454
      %v456 = vld [vmem:[%s416 + $0x2c] sm:$0x1]
      %v457 = vsel %vm425, %v383, %v456
      %458 = vst [vmem:[%s416 + $0x2c] sm:$0x1] %v457
      %v459 = vld [vmem:[%s416 + $0x30] sm:$0xf]
      %v460 = vsel %vm419, %v390, %v459
      %461 = vst [vmem:[%s416 + $0x30] sm:$0xf] %v460
      %v462 = vld [vmem:[%s416 + $0x34] sm:$0x1]
      %v463 = vsel %vm425, %v391, %v462
      %464 = vst [vmem:[%s416 + $0x34] sm:$0x1] %v463
      %v465 = vld [vmem:[%s416 + $0x38] sm:$0xf]
      %v466 = vsel %vm419, %v398, %v465
      %467 = vst [vmem:[%s416 + $0x38] sm:$0xf] %v466
      %v468 = vld [vmem:[%s416 + $0x3c] sm:$0x1]
      %v469 = vsel %vm425, %v399, %v468
      %470 = vst [vmem:[%s416 + $0x3c] sm:$0x1] %v469
      %v471 = vld [vmem:[#allocation2] sm:$0xf]
      %v472 = vld [vmem:[#allocation2 + $0x8] sm:$0xf]
      %v473 = vld [vmem:[#allocation2 + $0x10] sm:$0xf]
      %v474 = vld [vmem:[#allocation2 + $0x18] sm:$0xf]
      %v475 = vld [vmem:[#allocation2 + $0x20] sm:$0xf]
      %v476 = vld [vmem:[#allocation2 + $0x28] sm:$0xf]
      %v477 = vld [vmem:[#allocation2 + $0x30] sm:$0xf]
      %v478 = vld [vmem:[#allocation2 + $0x38] sm:$0xf]
      %v479 = vld [vmem:[%s1] sm:$0xf]
      %v480 = vld [vmem:[%s1 + $0x4] sm:$0xf]
      %v481 = vld [vmem:[%s1 + $0x8] sm:$0xf]
      %v482 = vld [vmem:[%s1 + $0xc] sm:$0xf]
      %v483 = vld [vmem:[%s1 + $0x10] sm:$0xf]
      %v484 = vld [vmem:[%s1 + $0x14] sm:$0xf]
      %v485 = vld [vmem:[%s1 + $0x18] sm:$0xf]
      %v486 = vld [vmem:[%s1 + $0x1c] sm:$0xf]
      %v487 = vld [vmem:[%s1 + $0x20] sm:$0xf]
      %v488 = vld [vmem:[%s1 + $0x24] sm:$0xf]
      %v489 = vld [vmem:[%s1 + $0x28] sm:$0xf]
      %v490 = vld [vmem:[%s1 + $0x2c] sm:$0xf]
      %v491 = vld [vmem:[%s1 + $0x30] sm:$0xf]
      %v492 = vld [vmem:[%s1 + $0x34] sm:$0xf]
      %v493 = vld [vmem:[%s1 + $0x38] sm:$0xf]
      %v494 = vld [vmem:[%s1 + $0x3c] sm:$0xf]
      %v495 = vld [vmem:[#allocation2 + $0x4] sm:$0x1]
      %v496 = vld [vmem:[#allocation2 + $0xc] sm:$0x1]
      %v497 = vld [vmem:[#allocation2 + $0x14] sm:$0x1]
      %v498 = vld [vmem:[#allocation2 + $0x1c] sm:$0x1]
      %v499 = vld [vmem:[#allocation2 + $0x24] sm:$0x1]
      %v500 = vld [vmem:[#allocation2 + $0x2c] sm:$0x1]
      %v501 = vld [vmem:[#allocation2 + $0x34] sm:$0x1]
      %v502 = vld [vmem:[#allocation2 + $0x3c] sm:$0x1]
      %vm503 = vsmask.f32 3328
      %vm504 = vsmask.f32 7440
      %vm505 = vmor %vm503, %vm504
      %v507 = vshrl.u32 %v471, 16
      %v509 = vrot.slane %v507, 4
      %v510 = vshll.u32 %v471, 16
      %v512 = vrot.slane %v510, 5
      %v513 = vor.u32 %v509, %v512
      %v514 = vrot.slane %v513, 4
      %v516 = vshll.u32 %v495, 16
      %v518 = vrot.slane %v516, 5
      %v519 = vsel %vm505, %v514, %v518
      %v521 = vshrl.u32 %v472, 16
      %v523 = vrot.slane %v521, 4
      %v524 = vshll.u32 %v472, 16
      %v526 = vrot.slane %v524, 5
      %v527 = vor.u32 %v523, %v526
      %v528 = vrot.slane %v527, 4
      %v530 = vshll.u32 %v496, 16
      %v532 = vrot.slane %v530, 5
      %v533 = vsel %vm505, %v528, %v532
      %v535 = vshrl.u32 %v473, 16
      %v537 = vrot.slane %v535, 4
      %v538 = vshll.u32 %v473, 16
      %v540 = vrot.slane %v538, 5
      %v541 = vor.u32 %v537, %v540
      %v542 = vrot.slane %v541, 4
      %v544 = vshll.u32 %v497, 16
      %v546 = vrot.slane %v544, 5
      %v547 = vsel %vm505, %v542, %v546
      %v549 = vshrl.u32 %v474, 16
      %v551 = vrot.slane %v549, 4
      %v552 = vshll.u32 %v474, 16
      %v554 = vrot.slane %v552, 5
      %v555 = vor.u32 %v551, %v554
      %v556 = vrot.slane %v555, 4
      %v558 = vshll.u32 %v498, 16
      %v560 = vrot.slane %v558, 5
      %v561 = vsel %vm505, %v556, %v560
      %v563 = vshrl.u32 %v475, 16
      %v565 = vrot.slane %v563, 4
      %v566 = vshll.u32 %v475, 16
      %v568 = vrot.slane %v566, 5
      %v569 = vor.u32 %v565, %v568
      %v570 = vrot.slane %v569, 4
      %v572 = vshll.u32 %v499, 16
      %v574 = vrot.slane %v572, 5
      %v575 = vsel %vm505, %v570, %v574
      %v577 = vshrl.u32 %v476, 16
      %v579 = vrot.slane %v577, 4
      %v580 = vshll.u32 %v476, 16
      %v582 = vrot.slane %v580, 5
      %v583 = vor.u32 %v579, %v582
      %v584 = vrot.slane %v583, 4
      %v586 = vshll.u32 %v500, 16
      %v588 = vrot.slane %v586, 5
      %v589 = vsel %vm505, %v584, %v588
      %v591 = vshrl.u32 %v477, 16
      %v593 = vrot.slane %v591, 4
      %v594 = vshll.u32 %v477, 16
      %v596 = vrot.slane %v594, 5
      %v597 = vor.u32 %v593, %v596
      %v598 = vrot.slane %v597, 4
      %v600 = vshll.u32 %v501, 16
      %v602 = vrot.slane %v600, 5
      %v603 = vsel %vm505, %v598, %v602
      %v605 = vshrl.u32 %v478, 16
      %v607 = vrot.slane %v605, 4
      %v608 = vshll.u32 %v478, 16
      %v610 = vrot.slane %v608, 5
      %v611 = vor.u32 %v607, %v610
      %v612 = vrot.slane %v611, 4
      %v614 = vshll.u32 %v502, 16
      %v616 = vrot.slane %v614, 5
      %v617 = vsel %vm505, %v612, %v616
      %s618 = scalar_lea.vmem %s1, 64
      %v619 = vld [vmem:[%s618] sm:$0xf]
      %v620 = vld [vmem:[%s618 + $0x4] sm:$0xf]
      %v621 = vld [vmem:[%s618 + $0x8] sm:$0xf]
      %v622 = vld [vmem:[%s618 + $0xc] sm:$0xf]
      %v623 = vld [vmem:[%s618 + $0x10] sm:$0xf]
      %v624 = vld [vmem:[%s618 + $0x14] sm:$0xf]
      %v625 = vld [vmem:[%s618 + $0x18] sm:$0xf]
      %v626 = vld [vmem:[%s618 + $0x1c] sm:$0xf]
      %v627 = vld [vmem:[%s618 + $0x20] sm:$0xf]
      %v628 = vld [vmem:[%s618 + $0x24] sm:$0xf]
      %v629 = vld [vmem:[%s618 + $0x28] sm:$0xf]
      %v630 = vld [vmem:[%s618 + $0x2c] sm:$0xf]
      %v631 = vld [vmem:[%s618 + $0x30] sm:$0xf]
      %v632 = vld [vmem:[%s618 + $0x34] sm:$0xf]
      %v633 = vld [vmem:[%s618 + $0x38] sm:$0xf]
      %v634 = vld [vmem:[%s618 + $0x3c] sm:$0xf]
      %v635 = vunpack.c.l.b16 %v519
      %v636 = vunpack.c.l.b16 %v533
      %v637 = vunpack.c.l.b16 %v547
      %v638 = vunpack.c.l.b16 %v561
      %v639 = vunpack.c.l.b16 %v575
      %v640 = vunpack.c.l.b16 %v589
      %v641 = vunpack.c.l.b16 %v603
      %v642 = vunpack.c.l.b16 %v617
      %v643 = vpack.c.b16 %v636, %v635
      %v644 = vpack.c.b16 %v638, %v637
      %v645 = vpack.c.b16 %v640, %v639
      %v646 = vpack.c.b16 %v642, %v641
      %v667 = vunpack.c.l.b16 %v619
      %v668 = vunpack.c.l.b16 %v620
      %v669 = vunpack.c.l.b16 %v621
      %v670 = vunpack.c.l.b16 %v622
      %v671 = vunpack.c.l.b16 %v623
      %v672 = vunpack.c.l.b16 %v624
      %v673 = vunpack.c.l.b16 %v625
      %v674 = vunpack.c.l.b16 %v626
      %v675 = vunpack.c.l.b16 %v627
      %v676 = vunpack.c.l.b16 %v628
      %v677 = vunpack.c.l.b16 %v629
      %v678 = vunpack.c.l.b16 %v630
      %v679 = vunpack.c.l.b16 %v631
      %v680 = vunpack.c.l.b16 %v632
      %v681 = vunpack.c.l.b16 %v633
      %v682 = vunpack.c.l.b16 %v634
      %v683 = vpack.c.b16 %v668, %v667
      %v684 = vpack.c.b16 %v670, %v669
      %v685 = vpack.c.b16 %v672, %v671
      %v686 = vpack.c.b16 %v674, %v673
      %v687 = vpack.c.b16 %v676, %v675
      %v688 = vpack.c.b16 %v678, %v677
      %v689 = vpack.c.b16 %v680, %v679
      %v690 = vpack.c.b16 %v682, %v681
      %699 = vmatpush.bf16.msra.mxu0 %v690
      %700 = vmatpush.bf16.msra.mxu0 %v689
      %701 = vmatpush.bf16.msra.mxu0 %v688
      %702 = vmatpush.bf16.msra.mxu0 %v687
      %703 = vmatpush.bf16.msra.mxu0 %v686
      %704 = vmatpush.bf16.msra.mxu0 %v685
      %705 = vmatpush.bf16.msra.mxu0 %v684
      %706 = vmatpush.bf16.msra.mxu0 %v683
      %707 = vmatmul.bf16.gmra.mxu0 %v643
      %v708 = vpop.f32.mrf.mxu0
      %v709 = vadd.f32 0.0, %v708
      %v710 = vpop.f32.mrf.mxu0
      %v711 = vadd.f32 0.0, %v710
      %712 = vmatmul.bf16.gmra.mxu0 %v644
      %v713 = vpop.f32.mrf.mxu0
      %v714 = vadd.f32 0.0, %v713
      %v715 = vpop.f32.mrf.mxu0
      %v716 = vadd.f32 0.0, %v715
      %717 = vmatmul.bf16.gmra.mxu0 %v645
      %v718 = vpop.f32.mrf.mxu0
      %v719 = vadd.f32 0.0, %v718
      %v720 = vpop.f32.mrf.mxu0
      %v721 = vadd.f32 0.0, %v720
      %722 = vmatmul.bf16.gmra.mxu0 %v646
      %v723 = vpop.f32.mrf.mxu0
      %v724 = vadd.f32 0.0, %v723
      %v725 = vpop.f32.mrf.mxu0
      %v726 = vadd.f32 0.0, %v725
      %727 = vdwg.mxu0
      %v736 = vunpack.c.l.b16 %v471
      %v737 = vunpack.c.l.b16 %v472
      %v738 = vunpack.c.l.b16 %v473
      %v739 = vunpack.c.l.b16 %v474
      %v740 = vunpack.c.l.b16 %v475
      %v741 = vunpack.c.l.b16 %v476
      %v742 = vunpack.c.l.b16 %v477
      %v743 = vunpack.c.l.b16 %v478
      %v744 = vpack.c.b16 %v737, %v736
      %v745 = vpack.c.b16 %v739, %v738
      %v746 = vpack.c.b16 %v741, %v740
      %v747 = vpack.c.b16 %v743, %v742
      %v768 = vunpack.c.l.b16 %v479
      %v769 = vunpack.c.l.b16 %v480
      %v770 = vunpack.c.l.b16 %v481
      %v771 = vunpack.c.l.b16 %v482
      %v772 = vunpack.c.l.b16 %v483
      %v773 = vunpack.c.l.b16 %v484
      %v774 = vunpack.c.l.b16 %v485
      %v775 = vunpack.c.l.b16 %v486
      %v776 = vunpack.c.l.b16 %v487
      %v777 = vunpack.c.l.b16 %v488
      %v778 = vunpack.c.l.b16 %v489
      %v779 = vunpack.c.l.b16 %v490
      %v780 = vunpack.c.l.b16 %v491
      %v781 = vunpack.c.l.b16 %v492
      %v782 = vunpack.c.l.b16 %v493
      %v783 = vunpack.c.l.b16 %v494
      %v784 = vpack.c.b16 %v769, %v768
      %v785 = vpack.c.b16 %v771, %v770
      %v786 = vpack.c.b16 %v773, %v772
      %v787 = vpack.c.b16 %v775, %v774
      %v788 = vpack.c.b16 %v777, %v776
      %v789 = vpack.c.b16 %v779, %v778
      %v790 = vpack.c.b16 %v781, %v780
      %v791 = vpack.c.b16 %v783, %v782
      %800 = vmatpush.bf16.msra.mxu0 %v791
      %801 = vmatpush.bf16.msra.mxu0 %v790
      %802 = vmatpush.bf16.msra.mxu0 %v789
      %803 = vmatpush.bf16.msra.mxu0 %v788
      %804 = vmatpush.bf16.msra.mxu0 %v787
      %805 = vmatpush.bf16.msra.mxu0 %v786
      %806 = vmatpush.bf16.msra.mxu0 %v785
      %807 = vmatpush.bf16.msra.mxu0 %v784
      %808 = vmatmul.bf16.gmra.mxu0 %v744
      %v809 = vpop.f32.mrf.mxu0
      %v810 = vadd.f32 %v709, %v809
      %v811 = vpop.f32.mrf.mxu0
      %v812 = vadd.f32 %v711, %v811
      %813 = vmatmul.bf16.gmra.mxu0 %v745
      %v814 = vpop.f32.mrf.mxu0
      %v815 = vadd.f32 %v714, %v814
      %v816 = vpop.f32.mrf.mxu0
      %v817 = vadd.f32 %v716, %v816
      %818 = vmatmul.bf16.gmra.mxu0 %v746
      %v819 = vpop.f32.mrf.mxu0
      %v820 = vadd.f32 %v719, %v819
      %v821 = vpop.f32.mrf.mxu0
      %v822 = vadd.f32 %v721, %v821
      %823 = vmatmul.bf16.gmra.mxu0 %v747
      %v824 = vpop.f32.mrf.mxu0
      %v825 = vadd.f32 %v724, %v824
      %v826 = vpop.f32.mrf.mxu0
      %v827 = vadd.f32 %v726, %v826
      %828 = vdwg.mxu0
      %v829 = vld [vmem:[#allocation2] sm:$0xe]
      %v830 = vld [vmem:[#allocation2 + $0x8] sm:$0xe]
      %v831 = vld [vmem:[#allocation2 + $0x10] sm:$0xe]
      %v832 = vld [vmem:[#allocation2 + $0x18] sm:$0xe]
      %v833 = vld [vmem:[#allocation2 + $0x20] sm:$0xe]
      %v834 = vld [vmem:[#allocation2 + $0x28] sm:$0xe]
      %v835 = vld [vmem:[#allocation2 + $0x30] sm:$0xe]
      %v836 = vld [vmem:[#allocation2 + $0x38] sm:$0xe]
      %vm853 = vcmask 1042432
      %vm854 = vcmask 1046532
      %vm855 = vmor %vm853, %vm854
      %v856 = vrot.slane %v829, 5
      %v857 = vrot.slane %v856, 4
      %v858 = vrot.slane %v495, 5
      %v859 = vsel %vm855, %v857, %v858
      %v860 = vrot.slane %v830, 5
      %v861 = vrot.slane %v860, 4
      %v862 = vrot.slane %v496, 5
      %v863 = vsel %vm855, %v861, %v862
      %v864 = vrot.slane %v831, 5
      %v865 = vrot.slane %v864, 4
      %v866 = vrot.slane %v497, 5
      %v867 = vsel %vm855, %v865, %v866
      %v868 = vrot.slane %v832, 5
      %v869 = vrot.slane %v868, 4
      %v870 = vrot.slane %v498, 5
      %v871 = vsel %vm855, %v869, %v870
      %v872 = vrot.slane %v833, 5
      %v873 = vrot.slane %v872, 4
      %v874 = vrot.slane %v499, 5
      %v875 = vsel %vm855, %v873, %v874
      %v876 = vrot.slane %v834, 5
      %v877 = vrot.slane %v876, 4
      %v878 = vrot.slane %v500, 5
      %v879 = vsel %vm855, %v877, %v878
      %v880 = vrot.slane %v835, 5
      %v881 = vrot.slane %v880, 4
      %v882 = vrot.slane %v501, 5
      %v883 = vsel %vm855, %v881, %v882
      %v884 = vrot.slane %v836, 5
      %v885 = vrot.slane %v884, 4
      %v886 = vrot.slane %v502, 5
      %v887 = vsel %vm855, %v885, %v886
      %s888 = scalar_lea.vmem %s1, 128
      %v889 = vld [vmem:[%s888] sm:$0xf]
      %v890 = vld [vmem:[%s888 + $0x4] sm:$0xf]
      %v891 = vld [vmem:[%s888 + $0x8] sm:$0xf]
      %v892 = vld [vmem:[%s888 + $0xc] sm:$0xf]
      %v893 = vld [vmem:[%s888 + $0x10] sm:$0xf]
      %v894 = vld [vmem:[%s888 + $0x14] sm:$0xf]
      %v895 = vld [vmem:[%s888 + $0x18] sm:$0xf]
      %v896 = vld [vmem:[%s888 + $0x1c] sm:$0xf]
      %v897 = vld [vmem:[%s888 + $0x20] sm:$0xf]
      %v898 = vld [vmem:[%s888 + $0x24] sm:$0xf]
      %v899 = vld [vmem:[%s888 + $0x28] sm:$0xf]
      %v900 = vld [vmem:[%s888 + $0x2c] sm:$0xf]
      %v901 = vld [vmem:[%s888 + $0x30] sm:$0xf]
      %v902 = vld [vmem:[%s888 + $0x34] sm:$0xf]
      %v903 = vld [vmem:[%s888 + $0x38] sm:$0xf]
      %v904 = vld [vmem:[%s888 + $0x3c] sm:$0xf]
      %v905 = vunpack.c.l.b16 %v859
      %v906 = vunpack.c.l.b16 %v863
      %v907 = vunpack.c.l.b16 %v867
      %v908 = vunpack.c.l.b16 %v871
      %v909 = vunpack.c.l.b16 %v875
      %v910 = vunpack.c.l.b16 %v879
      %v911 = vunpack.c.l.b16 %v883
      %v912 = vunpack.c.l.b16 %v887
      %v913 = vpack.c.b16 %v906, %v905
      %v914 = vpack.c.b16 %v908, %v907
      %v915 = vpack.c.b16 %v910, %v909
      %v916 = vpack.c.b16 %v912, %v911
      %v937 = vunpack.c.l.b16 %v889
      %v938 = vunpack.c.l.b16 %v890
      %v939 = vunpack.c.l.b16 %v891
      %v940 = vunpack.c.l.b16 %v892
      %v941 = vunpack.c.l.b16 %v893
      %v942 = vunpack.c.l.b16 %v894
      %v943 = vunpack.c.l.b16 %v895
      %v944 = vunpack.c.l.b16 %v896
      %v945 = vunpack.c.l.b16 %v897
      %v946 = vunpack.c.l.b16 %v898
      %v947 = vunpack.c.l.b16 %v899
      %v948 = vunpack.c.l.b16 %v900
      %v949 = vunpack.c.l.b16 %v901
      %v950 = vunpack.c.l.b16 %v902
      %v951 = vunpack.c.l.b16 %v903
      %v952 = vunpack.c.l.b16 %v904
      %v953 = vpack.c.b16 %v938, %v937
      %v954 = vpack.c.b16 %v940, %v939
      %v955 = vpack.c.b16 %v942, %v941
      %v956 = vpack.c.b16 %v944, %v943
      %v957 = vpack.c.b16 %v946, %v945
      %v958 = vpack.c.b16 %v948, %v947
      %v959 = vpack.c.b16 %v950, %v949
      %v960 = vpack.c.b16 %v952, %v951
      %969 = vmatpush.bf16.msra.mxu0 %v960
      %970 = vmatpush.bf16.msra.mxu0 %v959
      %971 = vmatpush.bf16.msra.mxu0 %v958
      %972 = vmatpush.bf16.msra.mxu0 %v957
      %973 = vmatpush.bf16.msra.mxu0 %v956
      %974 = vmatpush.bf16.msra.mxu0 %v955
      %975 = vmatpush.bf16.msra.mxu0 %v954
      %976 = vmatpush.bf16.msra.mxu0 %v953
      %977 = vmatmul.bf16.gmra.mxu0 %v913
      %v978 = vpop.f32.mrf.mxu0
      %v979 = vadd.f32 0.0, %v978
      %v980 = vpop.f32.mrf.mxu0
      %v981 = vadd.f32 0.0, %v980
      %982 = vmatmul.bf16.gmra.mxu0 %v914
      %v983 = vpop.f32.mrf.mxu0
      %v984 = vadd.f32 0.0, %v983
      %v985 = vpop.f32.mrf.mxu0
      %v986 = vadd.f32 0.0, %v985
      %987 = vmatmul.bf16.gmra.mxu0 %v915
      %v988 = vpop.f32.mrf.mxu0
      %v989 = vadd.f32 0.0, %v988
      %v990 = vpop.f32.mrf.mxu0
      %v991 = vadd.f32 0.0, %v990
      %992 = vmatmul.bf16.gmra.mxu0 %v916
      %v993 = vpop.f32.mrf.mxu0
      %v994 = vadd.f32 0.0, %v993
      %v995 = vpop.f32.mrf.mxu0
      %v996 = vadd.f32 0.0, %v995
      %997 = vdwg.mxu0
      %v998 = vadd.f32 %v810, %v979
      %v999 = vadd.f32 %v812, %v981
      %v1000 = vadd.f32 %v815, %v984
      %v1001 = vadd.f32 %v817, %v986
      %v1002 = vadd.f32 %v820, %v989
      %v1003 = vadd.f32 %v822, %v991
      %v1004 = vadd.f32 %v825, %v994
      %v1005 = vadd.f32 %v827, %v996
      %v1006 = vld [vmem:[%s416] sm:$0xf]
      %v1007 = vld [vmem:[%s416 + $0x8] sm:$0xf]
      %v1008 = vld [vmem:[%s416 + $0x10] sm:$0xf]
      %v1009 = vld [vmem:[%s416 + $0x18] sm:$0xf]
      %v1010 = vld [vmem:[%s416 + $0x20] sm:$0xf]
      %v1011 = vld [vmem:[%s416 + $0x28] sm:$0xf]
      %v1012 = vld [vmem:[%s416 + $0x30] sm:$0xf]
      %v1013 = vld [vmem:[%s416 + $0x38] sm:$0xf]
      %s1014 = scalar_lea.vmem %s1, 192
      %v1015 = vld [vmem:[%s1014] sm:$0xf]
      %v1016 = vld [vmem:[%s1014 + $0x4] sm:$0xf]
      %v1017 = vld [vmem:[%s1014 + $0x8] sm:$0xf]
      %v1018 = vld [vmem:[%s1014 + $0xc] sm:$0xf]
      %v1019 = vld [vmem:[%s1014 + $0x10] sm:$0xf]
      %v1020 = vld [vmem:[%s1014 + $0x14] sm:$0xf]
      %v1021 = vld [vmem:[%s1014 + $0x18] sm:$0xf]
      %v1022 = vld [vmem:[%s1014 + $0x1c] sm:$0xf]
      %v1023 = vld [vmem:[%s1014 + $0x20] sm:$0xf]
      %v1024 = vld [vmem:[%s1014 + $0x24] sm:$0xf]
      %v1025 = vld [vmem:[%s1014 + $0x28] sm:$0xf]
      %v1026 = vld [vmem:[%s1014 + $0x2c] sm:$0xf]
      %v1027 = vld [vmem:[%s1014 + $0x30] sm:$0xf]
      %v1028 = vld [vmem:[%s1014 + $0x34] sm:$0xf]
      %v1029 = vld [vmem:[%s1014 + $0x38] sm:$0xf]
      %v1030 = vld [vmem:[%s1014 + $0x3c] sm:$0xf]
      %v1039 = vunpack.c.l.b16 %v1006
      %v1040 = vunpack.c.l.b16 %v1007
      %v1041 = vunpack.c.l.b16 %v1008
      %v1042 = vunpack.c.l.b16 %v1009
      %v1043 = vunpack.c.l.b16 %v1010
      %v1044 = vunpack.c.l.b16 %v1011
      %v1045 = vunpack.c.l.b16 %v1012
      %v1046 = vunpack.c.l.b16 %v1013
      %v1047 = vpack.c.b16 %v1040, %v1039
      %v1048 = vpack.c.b16 %v1042, %v1041
      %v1049 = vpack.c.b16 %v1044, %v1043
      %v1050 = vpack.c.b16 %v1046, %v1045
      %v1071 = vunpack.c.l.b16 %v1015
      %v1072 = vunpack.c.l.b16 %v1016
      %v1073 = vunpack.c.l.b16 %v1017
      %v1074 = vunpack.c.l.b16 %v1018
      %v1075 = vunpack.c.l.b16 %v1019
      %v1076 = vunpack.c.l.b16 %v1020
      %v1077 = vunpack.c.l.b16 %v1021
      %v1078 = vunpack.c.l.b16 %v1022
      %v1079 = vunpack.c.l.b16 %v1023
      %v1080 = vunpack.c.l.b16 %v1024
      %v1081 = vunpack.c.l.b16 %v1025
      %v1082 = vunpack.c.l.b16 %v1026
      %v1083 = vunpack.c.l.b16 %v1027
      %v1084 = vunpack.c.l.b16 %v1028
      %v1085 = vunpack.c.l.b16 %v1029
      %v1086 = vunpack.c.l.b16 %v1030
      %v1087 = vpack.c.b16 %v1072, %v1071
      %v1088 = vpack.c.b16 %v1074, %v1073
      %v1089 = vpack.c.b16 %v1076, %v1075
      %v1090 = vpack.c.b16 %v1078, %v1077
      %v1091 = vpack.c.b16 %v1080, %v1079
      %v1092 = vpack.c.b16 %v1082, %v1081
      %v1093 = vpack.c.b16 %v1084, %v1083
      %v1094 = vpack.c.b16 %v1086, %v1085
      %1103 = vmatpush.bf16.msra.mxu0 %v1094
      %1104 = vmatpush.bf16.msra.mxu0 %v1093
      %1105 = vmatpush.bf16.msra.mxu0 %v1092
      %1106 = vmatpush.bf16.msra.mxu0 %v1091
      %1107 = vmatpush.bf16.msra.mxu0 %v1090
      %1108 = vmatpush.bf16.msra.mxu0 %v1089
      %1109 = vmatpush.bf16.msra.mxu0 %v1088
      %1110 = vmatpush.bf16.msra.mxu0 %v1087
      %1111 = vmatmul.bf16.gmra.mxu0 %v1047
      %v1112 = vpop.f32.mrf.mxu0
      %v1113 = vadd.f32 0.0, %v1112
      %v1114 = vpop.f32.mrf.mxu0
      %v1115 = vadd.f32 0.0, %v1114
      %1116 = vmatmul.bf16.gmra.mxu0 %v1048
      %v1117 = vpop.f32.mrf.mxu0
      %v1118 = vadd.f32 0.0, %v1117
      %v1119 = vpop.f32.mrf.mxu0
      %v1120 = vadd.f32 0.0, %v1119
      %1121 = vmatmul.bf16.gmra.mxu0 %v1049
      %v1122 = vpop.f32.mrf.mxu0
      %v1123 = vadd.f32 0.0, %v1122
      %v1124 = vpop.f32.mrf.mxu0
      %v1125 = vadd.f32 0.0, %v1124
      %1126 = vmatmul.bf16.gmra.mxu0 %v1050
      %v1127 = vpop.f32.mrf.mxu0
      %v1128 = vadd.f32 0.0, %v1127
      %v1129 = vpop.f32.mrf.mxu0
      %v1130 = vadd.f32 0.0, %v1129
      %1131 = vdwg.mxu0
      %v1132 = vadd.f32 %v998, %v1113
      %v1133 = vadd.f32 %v999, %v1115
      %v1134 = vadd.f32 %v1000, %v1118
      %v1135 = vadd.f32 %v1001, %v1120
      %v1136 = vadd.f32 %v1002, %v1123
      %v1137 = vadd.f32 %v1003, %v1125
      %v1138 = vadd.f32 %v1004, %v1128
      %v1139 = vadd.f32 %v1005, %v1130
      %v1140 = vld [vmem:[%s416] sm:$0xf]
      %v1141 = vld [vmem:[%s416 + $0x4] sm:$0x1]
      %v1142 = vld [vmem:[%s416 + $0x8] sm:$0xf]
      %v1143 = vld [vmem:[%s416 + $0xc] sm:$0x1]
      %v1144 = vld [vmem:[%s416 + $0x10] sm:$0xf]
      %v1145 = vld [vmem:[%s416 + $0x14] sm:$0x1]
      %v1146 = vld [vmem:[%s416 + $0x18] sm:$0xf]
      %v1147 = vld [vmem:[%s416 + $0x1c] sm:$0x1]
      %v1148 = vld [vmem:[%s416 + $0x20] sm:$0xf]
      %v1149 = vld [vmem:[%s416 + $0x24] sm:$0x1]
      %v1150 = vld [vmem:[%s416 + $0x28] sm:$0xf]
      %v1151 = vld [vmem:[%s416 + $0x2c] sm:$0x1]
      %v1152 = vld [vmem:[%s416 + $0x30] sm:$0xf]
      %v1153 = vld [vmem:[%s416 + $0x34] sm:$0x1]
      %v1154 = vld [vmem:[%s416 + $0x38] sm:$0xf]
      %v1155 = vld [vmem:[%s416 + $0x3c] sm:$0x1]
      %v1157 = vshrl.u32 %v1140, 16
      %v1159 = vrot.slane %v1157, 4
      %v1160 = vshll.u32 %v1140, 16
      %v1162 = vrot.slane %v1160, 5
      %v1163 = vor.u32 %v1159, %v1162
      %v1164 = vrot.slane %v1163, 4
      %v1166 = vshll.u32 %v1141, 16
      %v1168 = vrot.slane %v1166, 5
      %v1169 = vsel %vm505, %v1164, %v1168
      %v1171 = vshrl.u32 %v1142, 16
      %v1173 = vrot.slane %v1171, 4
      %v1174 = vshll.u32 %v1142, 16
      %v1176 = vrot.slane %v1174, 5
      %v1177 = vor.u32 %v1173, %v1176
      %v1178 = vrot.slane %v1177, 4
      %v1180 = vshll.u32 %v1143, 16
      %v1182 = vrot.slane %v1180, 5
      %v1183 = vsel %vm505, %v1178, %v1182
      %v1185 = vshrl.u32 %v1144, 16
      %v1187 = vrot.slane %v1185, 4
      %v1188 = vshll.u32 %v1144, 16
      %v1190 = vrot.slane %v1188, 5
      %v1191 = vor.u32 %v1187, %v1190
      %v1192 = vrot.slane %v1191, 4
      %v1194 = vshll.u32 %v1145, 16
      %v1196 = vrot.slane %v1194, 5
      %v1197 = vsel %vm505, %v1192, %v1196
      %v1199 = vshrl.u32 %v1146, 16
      %v1201 = vrot.slane %v1199, 4
      %v1202 = vshll.u32 %v1146, 16
      %v1204 = vrot.slane %v1202, 5
      %v1205 = vor.u32 %v1201, %v1204
      %v1206 = vrot.slane %v1205, 4
      %v1208 = vshll.u32 %v1147, 16
      %v1210 = vrot.slane %v1208, 5
      %v1211 = vsel %vm505, %v1206, %v1210
      %v1213 = vshrl.u32 %v1148, 16
      %v1215 = vrot.slane %v1213, 4
      %v1216 = vshll.u32 %v1148, 16
      %v1218 = vrot.slane %v1216, 5
      %v1219 = vor.u32 %v1215, %v1218
      %v1220 = vrot.slane %v1219, 4
      %v1222 = vshll.u32 %v1149, 16
      %v1224 = vrot.slane %v1222, 5
      %v1225 = vsel %vm505, %v1220, %v1224
      %v1227 = vshrl.u32 %v1150, 16
      %v1229 = vrot.slane %v1227, 4
      %v1230 = vshll.u32 %v1150, 16
      %v1232 = vrot.slane %v1230, 5
      %v1233 = vor.u32 %v1229, %v1232
      %v1234 = vrot.slane %v1233, 4
      %v1236 = vshll.u32 %v1151, 16
      %v1238 = vrot.slane %v1236, 5
      %v1239 = vsel %vm505, %v1234, %v1238
      %v1241 = vshrl.u32 %v1152, 16
      %v1243 = vrot.slane %v1241, 4
      %v1244 = vshll.u32 %v1152, 16
      %v1246 = vrot.slane %v1244, 5
      %v1247 = vor.u32 %v1243, %v1246
      %v1248 = vrot.slane %v1247, 4
      %v1250 = vshll.u32 %v1153, 16
      %v1252 = vrot.slane %v1250, 5
      %v1253 = vsel %vm505, %v1248, %v1252
      %v1255 = vshrl.u32 %v1154, 16
      %v1257 = vrot.slane %v1255, 4
      %v1258 = vshll.u32 %v1154, 16
      %v1260 = vrot.slane %v1258, 5
      %v1261 = vor.u32 %v1257, %v1260
      %v1262 = vrot.slane %v1261, 4
      %v1264 = vshll.u32 %v1155, 16
      %v1266 = vrot.slane %v1264, 5
      %v1267 = vsel %vm505, %v1262, %v1266
      %s1268 = scalar_lea.vmem %s1, 256
      %v1269 = vld [vmem:[%s1268] sm:$0xf]
      %v1270 = vld [vmem:[%s1268 + $0x4] sm:$0xf]
      %v1271 = vld [vmem:[%s1268 + $0x8] sm:$0xf]
      %v1272 = vld [vmem:[%s1268 + $0xc] sm:$0xf]
      %v1273 = vld [vmem:[%s1268 + $0x10] sm:$0xf]
      %v1274 = vld [vmem:[%s1268 + $0x14] sm:$0xf]
      %v1275 = vld [vmem:[%s1268 + $0x18] sm:$0xf]
      %v1276 = vld [vmem:[%s1268 + $0x1c] sm:$0xf]
      %v1277 = vld [vmem:[%s1268 + $0x20] sm:$0xf]
      %v1278 = vld [vmem:[%s1268 + $0x24] sm:$0xf]
      %v1279 = vld [vmem:[%s1268 + $0x28] sm:$0xf]
      %v1280 = vld [vmem:[%s1268 + $0x2c] sm:$0xf]
      %v1281 = vld [vmem:[%s1268 + $0x30] sm:$0xf]
      %v1282 = vld [vmem:[%s1268 + $0x34] sm:$0xf]
      %v1283 = vld [vmem:[%s1268 + $0x38] sm:$0xf]
      %v1284 = vld [vmem:[%s1268 + $0x3c] sm:$0xf]
      %v1285 = vunpack.c.l.b16 %v1169
      %v1286 = vunpack.c.l.b16 %v1183
      %v1287 = vunpack.c.l.b16 %v1197
      %v1288 = vunpack.c.l.b16 %v1211
      %v1289 = vunpack.c.l.b16 %v1225
      %v1290 = vunpack.c.l.b16 %v1239
      %v1291 = vunpack.c.l.b16 %v1253
      %v1292 = vunpack.c.l.b16 %v1267
      %v1293 = vpack.c.b16 %v1286, %v1285
      %v1294 = vpack.c.b16 %v1288, %v1287
      %v1295 = vpack.c.b16 %v1290, %v1289
      %v1296 = vpack.c.b16 %v1292, %v1291
      %v1317 = vunpack.c.l.b16 %v1269
      %v1318 = vunpack.c.l.b16 %v1270
      %v1319 = vunpack.c.l.b16 %v1271
      %v1320 = vunpack.c.l.b16 %v1272
      %v1321 = vunpack.c.l.b16 %v1273
      %v1322 = vunpack.c.l.b16 %v1274
      %v1323 = vunpack.c.l.b16 %v1275
      %v1324 = vunpack.c.l.b16 %v1276
      %v1325 = vunpack.c.l.b16 %v1277
      %v1326 = vunpack.c.l.b16 %v1278
      %v1327 = vunpack.c.l.b16 %v1279
      %v1328 = vunpack.c.l.b16 %v1280
      %v1329 = vunpack.c.l.b16 %v1281
      %v1330 = vunpack.c.l.b16 %v1282
      %v1331 = vunpack.c.l.b16 %v1283
      %v1332 = vunpack.c.l.b16 %v1284
      %v1333 = vpack.c.b16 %v1318, %v1317
      %v1334 = vpack.c.b16 %v1320, %v1319
      %v1335 = vpack.c.b16 %v1322, %v1321
      %v1336 = vpack.c.b16 %v1324, %v1323
      %v1337 = vpack.c.b16 %v1326, %v1325
      %v1338 = vpack.c.b16 %v1328, %v1327
      %v1339 = vpack.c.b16 %v1330, %v1329
      %v1340 = vpack.c.b16 %v1332, %v1331
      %1349 = vmatpush.bf16.msra.mxu0 %v1340
      %1350 = vmatpush.bf16.msra.mxu0 %v1339
      %1351 = vmatpush.bf16.msra.mxu0 %v1338
      %1352 = vmatpush.bf16.msra.mxu0 %v1337
      %1353 = vmatpush.bf16.msra.mxu0 %v1336
      %1354 = vmatpush.bf16.msra.mxu0 %v1335
      %1355 = vmatpush.bf16.msra.mxu0 %v1334
      %1356 = vmatpush.bf16.msra.mxu0 %v1333
      %1357 = vmatmul.bf16.gmra.mxu0 %v1293
      %v1358 = vpop.f32.mrf.mxu0
      %v1359 = vadd.f32 0.0, %v1358
      %v1360 = vpop.f32.mrf.mxu0
      %v1361 = vadd.f32 0.0, %v1360
      %1362 = vmatmul.bf16.gmra.mxu0 %v1294
      %v1363 = vpop.f32.mrf.mxu0
      %v1364 = vadd.f32 0.0, %v1363
      %v1365 = vpop.f32.mrf.mxu0
      %v1366 = vadd.f32 0.0, %v1365
      %1367 = vmatmul.bf16.gmra.mxu0 %v1295
      %v1368 = vpop.f32.mrf.mxu0
      %v1369 = vadd.f32 0.0, %v1368
      %v1370 = vpop.f32.mrf.mxu0
      %v1371 = vadd.f32 0.0, %v1370
      %1372 = vmatmul.bf16.gmra.mxu0 %v1296
      %v1373 = vpop.f32.mrf.mxu0
      %v1374 = vadd.f32 0.0, %v1373
      %v1375 = vpop.f32.mrf.mxu0
      %v1376 = vadd.f32 0.0, %v1375
      %1377 = vdwg.mxu0
      %v1378 = vadd.f32 %v1132, %v1359
      %v1379 = vadd.f32 %v1133, %v1361
      %v1380 = vadd.f32 %v1134, %v1364
      %v1381 = vadd.f32 %v1135, %v1366
      %v1382 = vadd.f32 %v1136, %v1369
      %v1383 = vadd.f32 %v1137, %v1371
      %v1384 = vadd.f32 %v1138, %v1374
      %v1385 = vadd.f32 %v1139, %v1376
      %v1386 = vld [vmem:[%s416] sm:$0xe]
      %v1387 = vld [vmem:[%s416 + $0x8] sm:$0xe]
      %v1388 = vld [vmem:[%s416 + $0x10] sm:$0xe]
      %v1389 = vld [vmem:[%s416 + $0x18] sm:$0xe]
      %v1390 = vld [vmem:[%s416 + $0x20] sm:$0xe]
      %v1391 = vld [vmem:[%s416 + $0x28] sm:$0xe]
      %v1392 = vld [vmem:[%s416 + $0x30] sm:$0xe]
      %v1393 = vld [vmem:[%s416 + $0x38] sm:$0xe]
      %v1410 = vrot.slane %v1386, 5
      %v1411 = vrot.slane %v1410, 4
      %v1412 = vrot.slane %v1141, 5
      %v1413 = vsel %vm855, %v1411, %v1412
      %v1414 = vrot.slane %v1387, 5
      %v1415 = vrot.slane %v1414, 4
      %v1416 = vrot.slane %v1143, 5
      %v1417 = vsel %vm855, %v1415, %v1416
      %v1418 = vrot.slane %v1388, 5
      %v1419 = vrot.slane %v1418, 4
      %v1420 = vrot.slane %v1145, 5
      %v1421 = vsel %vm855, %v1419, %v1420
      %v1422 = vrot.slane %v1389, 5
      %v1423 = vrot.slane %v1422, 4
      %v1424 = vrot.slane %v1147, 5
      %v1425 = vsel %vm855, %v1423, %v1424
      %v1426 = vrot.slane %v1390, 5
      %v1427 = vrot.slane %v1426, 4
      %v1428 = vrot.slane %v1149, 5
      %v1429 = vsel %vm855, %v1427, %v1428
      %v1430 = vrot.slane %v1391, 5
      %v1431 = vrot.slane %v1430, 4
      %v1432 = vrot.slane %v1151, 5
      %v1433 = vsel %vm855, %v1431, %v1432
      %v1434 = vrot.slane %v1392, 5
      %v1435 = vrot.slane %v1434, 4
      %v1436 = vrot.slane %v1153, 5
      %v1437 = vsel %vm855, %v1435, %v1436
      %v1438 = vrot.slane %v1393, 5
      %v1439 = vrot.slane %v1438, 4
      %v1440 = vrot.slane %v1155, 5
      %v1441 = vsel %vm855, %v1439, %v1440
      %s1442 = scalar_lea.vmem %s1, 320
      %v1443 = vld [vmem:[%s1442] sm:$0xf]
      %v1444 = vld [vmem:[%s1442 + $0x4] sm:$0xf]
      %v1445 = vld [vmem:[%s1442 + $0x8] sm:$0xf]
      %v1446 = vld [vmem:[%s1442 + $0xc] sm:$0xf]
      %v1447 = vld [vmem:[%s1442 + $0x10] sm:$0xf]
      %v1448 = vld [vmem:[%s1442 + $0x14] sm:$0xf]
      %v1449 = vld [vmem:[%s1442 + $0x18] sm:$0xf]
      %v1450 = vld [vmem:[%s1442 + $0x1c] sm:$0xf]
      %v1451 = vld [vmem:[%s1442 + $0x20] sm:$0xf]
      %v1452 = vld [vmem:[%s1442 + $0x24] sm:$0xf]
      %v1453 = vld [vmem:[%s1442 + $0x28] sm:$0xf]
      %v1454 = vld [vmem:[%s1442 + $0x2c] sm:$0xf]
      %v1455 = vld [vmem:[%s1442 + $0x30] sm:$0xf]
      %v1456 = vld [vmem:[%s1442 + $0x34] sm:$0xf]
      %v1457 = vld [vmem:[%s1442 + $0x38] sm:$0xf]
      %v1458 = vld [vmem:[%s1442 + $0x3c] sm:$0xf]
      %v1459 = vunpack.c.l.b16 %v1413
      %v1460 = vunpack.c.l.b16 %v1417
      %v1461 = vunpack.c.l.b16 %v1421
      %v1462 = vunpack.c.l.b16 %v1425
      %v1463 = vunpack.c.l.b16 %v1429
      %v1464 = vunpack.c.l.b16 %v1433
      %v1465 = vunpack.c.l.b16 %v1437
      %v1466 = vunpack.c.l.b16 %v1441
      %v1467 = vpack.c.b16 %v1460, %v1459
      %v1468 = vpack.c.b16 %v1462, %v1461
      %v1469 = vpack.c.b16 %v1464, %v1463
      %v1470 = vpack.c.b16 %v1466, %v1465
      %v1491 = vunpack.c.l.b16 %v1443
      %v1492 = vunpack.c.l.b16 %v1444
      %v1493 = vunpack.c.l.b16 %v1445
      %v1494 = vunpack.c.l.b16 %v1446
      %v1495 = vunpack.c.l.b16 %v1447
      %v1496 = vunpack.c.l.b16 %v1448
      %v1497 = vunpack.c.l.b16 %v1449
      %v1498 = vunpack.c.l.b16 %v1450
      %v1499 = vunpack.c.l.b16 %v1451
      %v1500 = vunpack.c.l.b16 %v1452
      %v1501 = vunpack.c.l.b16 %v1453
      %v1502 = vunpack.c.l.b16 %v1454
      %v1503 = vunpack.c.l.b16 %v1455
      %v1504 = vunpack.c.l.b16 %v1456
      %v1505 = vunpack.c.l.b16 %v1457
      %v1506 = vunpack.c.l.b16 %v1458
      %v1507 = vpack.c.b16 %v1492, %v1491
      %v1508 = vpack.c.b16 %v1494, %v1493
      %v1509 = vpack.c.b16 %v1496, %v1495
      %v1510 = vpack.c.b16 %v1498, %v1497
      %v1511 = vpack.c.b16 %v1500, %v1499
      %v1512 = vpack.c.b16 %v1502, %v1501
      %v1513 = vpack.c.b16 %v1504, %v1503
      %v1514 = vpack.c.b16 %v1506, %v1505
      %1523 = vmatpush.bf16.msra.mxu0 %v1514
      %1524 = vmatpush.bf16.msra.mxu0 %v1513
      %1525 = vmatpush.bf16.msra.mxu0 %v1512
      %1526 = vmatpush.bf16.msra.mxu0 %v1511
      %1527 = vmatpush.bf16.msra.mxu0 %v1510
      %1528 = vmatpush.bf16.msra.mxu0 %v1509
      %1529 = vmatpush.bf16.msra.mxu0 %v1508
      %1530 = vmatpush.bf16.msra.mxu0 %v1507
      %1531 = vmatmul.bf16.gmra.mxu0 %v1467
      %v1532 = vpop.f32.mrf.mxu0
      %v1533 = vadd.f32 0.0, %v1532
      %v1534 = vpop.f32.mrf.mxu0
      %v1535 = vadd.f32 0.0, %v1534
      %1536 = vmatmul.bf16.gmra.mxu0 %v1468
      %v1537 = vpop.f32.mrf.mxu0
      %v1538 = vadd.f32 0.0, %v1537
      %v1539 = vpop.f32.mrf.mxu0
      %v1540 = vadd.f32 0.0, %v1539
      %1541 = vmatmul.bf16.gmra.mxu0 %v1469
      %v1542 = vpop.f32.mrf.mxu0
      %v1543 = vadd.f32 0.0, %v1542
      %v1544 = vpop.f32.mrf.mxu0
      %v1545 = vadd.f32 0.0, %v1544
      %1546 = vmatmul.bf16.gmra.mxu0 %v1470
      %v1547 = vpop.f32.mrf.mxu0
      %v1548 = vadd.f32 0.0, %v1547
      %v1549 = vpop.f32.mrf.mxu0
      %v1550 = vadd.f32 0.0, %v1549
      %1551 = vdwg.mxu0
      %v1552 = vadd.f32 %v1378, %v1533
      %v1553 = vadd.f32 %v1379, %v1535
      %v1554 = vadd.f32 %v1380, %v1538
      %v1555 = vadd.f32 %v1381, %v1540
      %v1556 = vadd.f32 %v1382, %v1543
      %v1557 = vadd.f32 %v1383, %v1545
      %v1558 = vadd.f32 %v1384, %v1548
      %v1559 = vadd.f32 %v1385, %v1550
      %s1560 = scalar_lea.vmem [#allocation2], 16
      %v1561 = vld [vmem:[%s1560] sm:$0xf]
      %v1562 = vld [vmem:[%s1560 + $0x8] sm:$0xf]
      %v1563 = vld [vmem:[%s1560 + $0x10] sm:$0xf]
      %v1564 = vld [vmem:[%s1560 + $0x18] sm:$0xf]
      %v1565 = vld [vmem:[%s1560 + $0x20] sm:$0xf]
      %v1566 = vld [vmem:[%s1560 + $0x28] sm:$0xf]
      %v1567 = vld [vmem:[%s1560 + $0x30] sm:$0xf]
      %v1568 = vld [vmem:[%s1560 + $0x38] sm:$0xf]
      %s1569 = scalar_lea.vmem %s1, 384
      %v1570 = vld [vmem:[%s1569] sm:$0xf]
      %v1571 = vld [vmem:[%s1569 + $0x4] sm:$0xf]
      %v1572 = vld [vmem:[%s1569 + $0x8] sm:$0xf]
      %v1573 = vld [vmem:[%s1569 + $0xc] sm:$0xf]
      %v1574 = vld [vmem:[%s1569 + $0x10] sm:$0xf]
      %v1575 = vld [vmem:[%s1569 + $0x14] sm:$0xf]
      %v1576 = vld [vmem:[%s1569 + $0x18] sm:$0xf]
      %v1577 = vld [vmem:[%s1569 + $0x1c] sm:$0xf]
      %v1578 = vld [vmem:[%s1569 + $0x20] sm:$0xf]
      %v1579 = vld [vmem:[%s1569 + $0x24] sm:$0xf]
      %v1580 = vld [vmem:[%s1569 + $0x28] sm:$0xf]
      %v1581 = vld [vmem:[%s1569 + $0x2c] sm:$0xf]
      %v1582 = vld [vmem:[%s1569 + $0x30] sm:$0xf]
      %v1583 = vld [vmem:[%s1569 + $0x34] sm:$0xf]
      %v1584 = vld [vmem:[%s1569 + $0x38] sm:$0xf]
      %v1585 = vld [vmem:[%s1569 + $0x3c] sm:$0xf]
      %v1594 = vunpack.c.l.b16 %v1561
      %v1595 = vunpack.c.l.b16 %v1562
      %v1596 = vunpack.c.l.b16 %v1563
      %v1597 = vunpack.c.l.b16 %v1564
      %v1598 = vunpack.c.l.b16 %v1565
      %v1599 = vunpack.c.l.b16 %v1566
      %v1600 = vunpack.c.l.b16 %v1567
      %v1601 = vunpack.c.l.b16 %v1568
      %v1602 = vpack.c.b16 %v1595, %v1594
      %v1603 = vpack.c.b16 %v1597, %v1596
      %v1604 = vpack.c.b16 %v1599, %v1598
      %v1605 = vpack.c.b16 %v1601, %v1600
      %v1626 = vunpack.c.l.b16 %v1570
      %v1627 = vunpack.c.l.b16 %v1571
      %v1628 = vunpack.c.l.b16 %v1572
      %v1629 = vunpack.c.l.b16 %v1573
      %v1630 = vunpack.c.l.b16 %v1574
      %v1631 = vunpack.c.l.b16 %v1575
      %v1632 = vunpack.c.l.b16 %v1576
      %v1633 = vunpack.c.l.b16 %v1577
      %v1634 = vunpack.c.l.b16 %v1578
      %v1635 = vunpack.c.l.b16 %v1579
      %v1636 = vunpack.c.l.b16 %v1580
      %v1637 = vunpack.c.l.b16 %v1581
      %v1638 = vunpack.c.l.b16 %v1582
      %v1639 = vunpack.c.l.b16 %v1583
      %v1640 = vunpack.c.l.b16 %v1584
      %v1641 = vunpack.c.l.b16 %v1585
      %v1642 = vpack.c.b16 %v1627, %v1626
      %v1643 = vpack.c.b16 %v1629, %v1628
      %v1644 = vpack.c.b16 %v1631, %v1630
      %v1645 = vpack.c.b16 %v1633, %v1632
      %v1646 = vpack.c.b16 %v1635, %v1634
      %v1647 = vpack.c.b16 %v1637, %v1636
      %v1648 = vpack.c.b16 %v1639, %v1638
      %v1649 = vpack.c.b16 %v1641, %v1640
      %1658 = vmatpush.bf16.msra.mxu0 %v1649
      %1659 = vmatpush.bf16.msra.mxu0 %v1648
      %1660 = vmatpush.bf16.msra.mxu0 %v1647
      %1661 = vmatpush.bf16.msra.mxu0 %v1646
      %1662 = vmatpush.bf16.msra.mxu0 %v1645
      %1663 = vmatpush.bf16.msra.mxu0 %v1644
      %1664 = vmatpush.bf16.msra.mxu0 %v1643
      %1665 = vmatpush.bf16.msra.mxu0 %v1642
      %1666 = vmatmul.bf16.gmra.mxu0 %v1602
      %v1667 = vpop.f32.mrf.mxu0
      %v1668 = vadd.f32 0.0, %v1667
      %v1669 = vpop.f32.mrf.mxu0
      %v1670 = vadd.f32 0.0, %v1669
      %1671 = vmatmul.bf16.gmra.mxu0 %v1603
      %v1672 = vpop.f32.mrf.mxu0
      %v1673 = vadd.f32 0.0, %v1672
      %v1674 = vpop.f32.mrf.mxu0
      %v1675 = vadd.f32 0.0, %v1674
      %1676 = vmatmul.bf16.gmra.mxu0 %v1604
      %v1677 = vpop.f32.mrf.mxu0
      %v1678 = vadd.f32 0.0, %v1677
      %v1679 = vpop.f32.mrf.mxu0
      %v1680 = vadd.f32 0.0, %v1679
      %1681 = vmatmul.bf16.gmra.mxu0 %v1605
      %v1682 = vpop.f32.mrf.mxu0
      %v1683 = vadd.f32 0.0, %v1682
      %v1684 = vpop.f32.mrf.mxu0
      %v1685 = vadd.f32 0.0, %v1684
      %1686 = vdwg.mxu0
      %v1687 = vadd.f32 %v1552, %v1668
      %v1688 = vadd.f32 %v1553, %v1670
      %v1689 = vadd.f32 %v1554, %v1673
      %v1690 = vadd.f32 %v1555, %v1675
      %v1691 = vadd.f32 %v1556, %v1678
      %v1692 = vadd.f32 %v1557, %v1680
      %v1693 = vadd.f32 %v1558, %v1683
      %v1694 = vadd.f32 %v1559, %v1685
      %v1695 = vld [vmem:[%s1560] sm:$0xf]
      %v1696 = vld [vmem:[%s1560 + $0x4] sm:$0x1]
      %v1697 = vld [vmem:[%s1560 + $0x8] sm:$0xf]
      %v1698 = vld [vmem:[%s1560 + $0xc] sm:$0x1]
      %v1699 = vld [vmem:[%s1560 + $0x10] sm:$0xf]
      %v1700 = vld [vmem:[%s1560 + $0x14] sm:$0x1]
      %v1701 = vld [vmem:[%s1560 + $0x18] sm:$0xf]
      %v1702 = vld [vmem:[%s1560 + $0x1c] sm:$0x1]
      %v1703 = vld [vmem:[%s1560 + $0x20] sm:$0xf]
      %v1704 = vld [vmem:[%s1560 + $0x24] sm:$0x1]
      %v1705 = vld [vmem:[%s1560 + $0x28] sm:$0xf]
      %v1706 = vld [vmem:[%s1560 + $0x2c] sm:$0x1]
      %v1707 = vld [vmem:[%s1560 + $0x30] sm:$0xf]
      %v1708 = vld [vmem:[%s1560 + $0x34] sm:$0x1]
      %v1709 = vld [vmem:[%s1560 + $0x38] sm:$0xf]
      %v1710 = vld [vmem:[%s1560 + $0x3c] sm:$0x1]
      %v1712 = vshrl.u32 %v1695, 16
      %v1714 = vrot.slane %v1712, 4
      %v1715 = vshll.u32 %v1695, 16
      %v1717 = vrot.slane %v1715, 5
      %v1718 = vor.u32 %v1714, %v1717
      %v1719 = vrot.slane %v1718, 4
      %v1721 = vshll.u32 %v1696, 16
      %v1723 = vrot.slane %v1721, 5
      %v1724 = vsel %vm505, %v1719, %v1723
      %v1726 = vshrl.u32 %v1697, 16
      %v1728 = vrot.slane %v1726, 4
      %v1729 = vshll.u32 %v1697, 16
      %v1731 = vrot.slane %v1729, 5
      %v1732 = vor.u32 %v1728, %v1731
      %v1733 = vrot.slane %v1732, 4
      %v1735 = vshll.u32 %v1698, 16
      %v1737 = vrot.slane %v1735, 5
      %v1738 = vsel %vm505, %v1733, %v1737
      %v1740 = vshrl.u32 %v1699, 16
      %v1742 = vrot.slane %v1740, 4
      %v1743 = vshll.u32 %v1699, 16
      %v1745 = vrot.slane %v1743, 5
      %v1746 = vor.u32 %v1742, %v1745
      %v1747 = vrot.slane %v1746, 4
      %v1749 = vshll.u32 %v1700, 16
      %v1751 = vrot.slane %v1749, 5
      %v1752 = vsel %vm505, %v1747, %v1751
      %v1754 = vshrl.u32 %v1701, 16
      %v1756 = vrot.slane %v1754, 4
      %v1757 = vshll.u32 %v1701, 16
      %v1759 = vrot.slane %v1757, 5
      %v1760 = vor.u32 %v1756, %v1759
      %v1761 = vrot.slane %v1760, 4
      %v1763 = vshll.u32 %v1702, 16
      %v1765 = vrot.slane %v1763, 5
      %v1766 = vsel %vm505, %v1761, %v1765
      %v1768 = vshrl.u32 %v1703, 16
      %v1770 = vrot.slane %v1768, 4
      %v1771 = vshll.u32 %v1703, 16
      %v1773 = vrot.slane %v1771, 5
      %v1774 = vor.u32 %v1770, %v1773
      %v1775 = vrot.slane %v1774, 4
      %v1777 = vshll.u32 %v1704, 16
      %v1779 = vrot.slane %v1777, 5
      %v1780 = vsel %vm505, %v1775, %v1779
      %v1782 = vshrl.u32 %v1705, 16
      %v1784 = vrot.slane %v1782, 4
      %v1785 = vshll.u32 %v1705, 16
      %v1787 = vrot.slane %v1785, 5
      %v1788 = vor.u32 %v1784, %v1787
      %v1789 = vrot.slane %v1788, 4
      %v1791 = vshll.u32 %v1706, 16
      %v1793 = vrot.slane %v1791, 5
      %v1794 = vsel %vm505, %v1789, %v1793
      %v1796 = vshrl.u32 %v1707, 16
      %v1798 = vrot.slane %v1796, 4
      %v1799 = vshll.u32 %v1707, 16
      %v1801 = vrot.slane %v1799, 5
      %v1802 = vor.u32 %v1798, %v1801
      %v1803 = vrot.slane %v1802, 4
      %v1805 = vshll.u32 %v1708, 16
      %v1807 = vrot.slane %v1805, 5
      %v1808 = vsel %vm505, %v1803, %v1807
      %v1810 = vshrl.u32 %v1709, 16
      %v1812 = vrot.slane %v1810, 4
      %v1813 = vshll.u32 %v1709, 16
      %v1815 = vrot.slane %v1813, 5
      %v1816 = vor.u32 %v1812, %v1815
      %v1817 = vrot.slane %v1816, 4
      %v1819 = vshll.u32 %v1710, 16
      %v1821 = vrot.slane %v1819, 5
      %v1822 = vsel %vm505, %v1817, %v1821
      %s1823 = scalar_lea.vmem %s1, 448
      %v1824 = vld [vmem:[%s1823] sm:$0xf]
      %v1825 = vld [vmem:[%s1823 + $0x4] sm:$0xf]
      %v1826 = vld [vmem:[%s1823 + $0x8] sm:$0xf]
      %v1827 = vld [vmem:[%s1823 + $0xc] sm:$0xf]
      %v1828 = vld [vmem:[%s1823 + $0x10] sm:$0xf]
      %v1829 = vld [vmem:[%s1823 + $0x14] sm:$0xf]
      %v1830 = vld [vmem:[%s1823 + $0x18] sm:$0xf]
      %v1831 = vld [vmem:[%s1823 + $0x1c] sm:$0xf]
      %v1832 = vld [vmem:[%s1823 + $0x20] sm:$0xf]
      %v1833 = vld [vmem:[%s1823 + $0x24] sm:$0xf]
      %v1834 = vld [vmem:[%s1823 + $0x28] sm:$0xf]
      %v1835 = vld [vmem:[%s1823 + $0x2c] sm:$0xf]
      %v1836 = vld [vmem:[%s1823 + $0x30] sm:$0xf]
      %v1837 = vld [vmem:[%s1823 + $0x34] sm:$0xf]
      %v1838 = vld [vmem:[%s1823 + $0x38] sm:$0xf]
      %v1839 = vld [vmem:[%s1823 + $0x3c] sm:$0xf]
      %v1840 = vunpack.c.l.b16 %v1724
      %v1841 = vunpack.c.l.b16 %v1738
      %v1842 = vunpack.c.l.b16 %v1752
      %v1843 = vunpack.c.l.b16 %v1766
      %v1844 = vunpack.c.l.b16 %v1780
      %v1845 = vunpack.c.l.b16 %v1794
      %v1846 = vunpack.c.l.b16 %v1808
      %v1847 = vunpack.c.l.b16 %v1822
      %v1848 = vpack.c.b16 %v1841, %v1840
      %v1849 = vpack.c.b16 %v1843, %v1842
      %v1850 = vpack.c.b16 %v1845, %v1844
      %v1851 = vpack.c.b16 %v1847, %v1846
      %v1872 = vunpack.c.l.b16 %v1824
      %v1873 = vunpack.c.l.b16 %v1825
      %v1874 = vunpack.c.l.b16 %v1826
      %v1875 = vunpack.c.l.b16 %v1827
      %v1876 = vunpack.c.l.b16 %v1828
      %v1877 = vunpack.c.l.b16 %v1829
      %v1878 = vunpack.c.l.b16 %v1830
      %v1879 = vunpack.c.l.b16 %v1831
      %v1880 = vunpack.c.l.b16 %v1832
      %v1881 = vunpack.c.l.b16 %v1833
      %v1882 = vunpack.c.l.b16 %v1834
      %v1883 = vunpack.c.l.b16 %v1835
      %v1884 = vunpack.c.l.b16 %v1836
      %v1885 = vunpack.c.l.b16 %v1837
      %v1886 = vunpack.c.l.b16 %v1838
      %v1887 = vunpack.c.l.b16 %v1839
      %v1888 = vpack.c.b16 %v1873, %v1872
      %v1889 = vpack.c.b16 %v1875, %v1874
      %v1890 = vpack.c.b16 %v1877, %v1876
      %v1891 = vpack.c.b16 %v1879, %v1878
      %v1892 = vpack.c.b16 %v1881, %v1880
      %v1893 = vpack.c.b16 %v1883, %v1882
      %v1894 = vpack.c.b16 %v1885, %v1884
      %v1895 = vpack.c.b16 %v1887, %v1886
      %1904 = vmatpush.bf16.msra.mxu0 %v1895
      %1905 = vmatpush.bf16.msra.mxu0 %v1894
      %1906 = vmatpush.bf16.msra.mxu0 %v1893
      %1907 = vmatpush.bf16.msra.mxu0 %v1892
      %1908 = vmatpush.bf16.msra.mxu0 %v1891
      %1909 = vmatpush.bf16.msra.mxu0 %v1890
      %1910 = vmatpush.bf16.msra.mxu0 %v1889
      %1911 = vmatpush.bf16.msra.mxu0 %v1888
      %1912 = vmatmul.bf16.gmra.mxu0 %v1848
      %v1913 = vpop.f32.mrf.mxu0
      %v1914 = vadd.f32 0.0, %v1913
      %v1915 = vpop.f32.mrf.mxu0
      %v1916 = vadd.f32 0.0, %v1915
      %1917 = vmatmul.bf16.gmra.mxu0 %v1849
      %v1918 = vpop.f32.mrf.mxu0
      %v1919 = vadd.f32 0.0, %v1918
      %v1920 = vpop.f32.mrf.mxu0
      %v1921 = vadd.f32 0.0, %v1920
      %1922 = vmatmul.bf16.gmra.mxu0 %v1850
      %v1923 = vpop.f32.mrf.mxu0
      %v1924 = vadd.f32 0.0, %v1923
      %v1925 = vpop.f32.mrf.mxu0
      %v1926 = vadd.f32 0.0, %v1925
      %1927 = vmatmul.bf16.gmra.mxu0 %v1851
      %v1928 = vpop.f32.mrf.mxu0
      %v1929 = vadd.f32 0.0, %v1928
      %v1930 = vpop.f32.mrf.mxu0
      %v1931 = vadd.f32 0.0, %v1930
      %1932 = vdwg.mxu0
      %v1933 = vadd.f32 %v1687, %v1914
      %v1934 = vadd.f32 %v1688, %v1916
      %v1935 = vadd.f32 %v1689, %v1919
      %v1936 = vadd.f32 %v1690, %v1921
      %v1937 = vadd.f32 %v1691, %v1924
      %v1938 = vadd.f32 %v1692, %v1926
      %v1939 = vadd.f32 %v1693, %v1929
      %v1940 = vadd.f32 %v1694, %v1931
      %v1941 = vld [vmem:[%s1560] sm:$0xe]
      %v1942 = vld [vmem:[%s1560 + $0x8] sm:$0xe]
      %v1943 = vld [vmem:[%s1560 + $0x10] sm:$0xe]
      %v1944 = vld [vmem:[%s1560 + $0x18] sm:$0xe]
      %v1945 = vld [vmem:[%s1560 + $0x20] sm:$0xe]
      %v1946 = vld [vmem:[%s1560 + $0x28] sm:$0xe]
      %v1947 = vld [vmem:[%s1560 + $0x30] sm:$0xe]
      %v1948 = vld [vmem:[%s1560 + $0x38] sm:$0xe]
      %v1965 = vrot.slane %v1941, 5
      %v1966 = vrot.slane %v1965, 4
      %v1967 = vrot.slane %v1696, 5
      %v1968 = vsel %vm855, %v1966, %v1967
      %v1969 = vrot.slane %v1942, 5
      %v1970 = vrot.slane %v1969, 4
      %v1971 = vrot.slane %v1698, 5
      %v1972 = vsel %vm855, %v1970, %v1971
      %v1973 = vrot.slane %v1943, 5
      %v1974 = vrot.slane %v1973, 4
      %v1975 = vrot.slane %v1700, 5
      %v1976 = vsel %vm855, %v1974, %v1975
      %v1977 = vrot.slane %v1944, 5
      %v1978 = vrot.slane %v1977, 4
      %v1979 = vrot.slane %v1702, 5
      %v1980 = vsel %vm855, %v1978, %v1979
      %v1981 = vrot.slane %v1945, 5
      %v1982 = vrot.slane %v1981, 4
      %v1983 = vrot.slane %v1704, 5
      %v1984 = vsel %vm855, %v1982, %v1983
      %v1985 = vrot.slane %v1946, 5
      %v1986 = vrot.slane %v1985, 4
      %v1987 = vrot.slane %v1706, 5
      %v1988 = vsel %vm855, %v1986, %v1987
      %v1989 = vrot.slane %v1947, 5
      %v1990 = vrot.slane %v1989, 4
      %v1991 = vrot.slane %v1708, 5
      %v1992 = vsel %vm855, %v1990, %v1991
      %v1993 = vrot.slane %v1948, 5
      %v1994 = vrot.slane %v1993, 4
      %v1995 = vrot.slane %v1710, 5
      %v1996 = vsel %vm855, %v1994, %v1995
      %s1997 = scalar_lea.vmem %s1, 512
      %v1998 = vld [vmem:[%s1997] sm:$0xf]
      %v1999 = vld [vmem:[%s1997 + $0x4] sm:$0xf]
      %v2000 = vld [vmem:[%s1997 + $0x8] sm:$0xf]
      %v2001 = vld [vmem:[%s1997 + $0xc] sm:$0xf]
      %v2002 = vld [vmem:[%s1997 + $0x10] sm:$0xf]
      %v2003 = vld [vmem:[%s1997 + $0x14] sm:$0xf]
      %v2004 = vld [vmem:[%s1997 + $0x18] sm:$0xf]
      %v2005 = vld [vmem:[%s1997 + $0x1c] sm:$0xf]
      %v2006 = vld [vmem:[%s1997 + $0x20] sm:$0xf]
      %v2007 = vld [vmem:[%s1997 + $0x24] sm:$0xf]
      %v2008 = vld [vmem:[%s1997 + $0x28] sm:$0xf]
      %v2009 = vld [vmem:[%s1997 + $0x2c] sm:$0xf]
      %v2010 = vld [vmem:[%s1997 + $0x30] sm:$0xf]
      %v2011 = vld [vmem:[%s1997 + $0x34] sm:$0xf]
      %v2012 = vld [vmem:[%s1997 + $0x38] sm:$0xf]
      %v2013 = vld [vmem:[%s1997 + $0x3c] sm:$0xf]
      %v2014 = vunpack.c.l.b16 %v1968
      %v2015 = vunpack.c.l.b16 %v1972
      %v2016 = vunpack.c.l.b16 %v1976
      %v2017 = vunpack.c.l.b16 %v1980
      %v2018 = vunpack.c.l.b16 %v1984
      %v2019 = vunpack.c.l.b16 %v1988
      %v2020 = vunpack.c.l.b16 %v1992
      %v2021 = vunpack.c.l.b16 %v1996
      %v2022 = vpack.c.b16 %v2015, %v2014
      %v2023 = vpack.c.b16 %v2017, %v2016
      %v2024 = vpack.c.b16 %v2019, %v2018
      %v2025 = vpack.c.b16 %v2021, %v2020
      %v2046 = vunpack.c.l.b16 %v1998
      %v2047 = vunpack.c.l.b16 %v1999
      %v2048 = vunpack.c.l.b16 %v2000
      %v2049 = vunpack.c.l.b16 %v2001
      %v2050 = vunpack.c.l.b16 %v2002
      %v2051 = vunpack.c.l.b16 %v2003
      %v2052 = vunpack.c.l.b16 %v2004
      %v2053 = vunpack.c.l.b16 %v2005
      %v2054 = vunpack.c.l.b16 %v2006
      %v2055 = vunpack.c.l.b16 %v2007
      %v2056 = vunpack.c.l.b16 %v2008
      %v2057 = vunpack.c.l.b16 %v2009
      %v2058 = vunpack.c.l.b16 %v2010
      %v2059 = vunpack.c.l.b16 %v2011
      %v2060 = vunpack.c.l.b16 %v2012
      %v2061 = vunpack.c.l.b16 %v2013
      %v2062 = vpack.c.b16 %v2047, %v2046
      %v2063 = vpack.c.b16 %v2049, %v2048
      %v2064 = vpack.c.b16 %v2051, %v2050
      %v2065 = vpack.c.b16 %v2053, %v2052
      %v2066 = vpack.c.b16 %v2055, %v2054
      %v2067 = vpack.c.b16 %v2057, %v2056
      %v2068 = vpack.c.b16 %v2059, %v2058
      %v2069 = vpack.c.b16 %v2061, %v2060
      %2078 = vmatpush.bf16.msra.mxu0 %v2069
      %2079 = vmatpush.bf16.msra.mxu0 %v2068
      %2080 = vmatpush.bf16.msra.mxu0 %v2067
      %2081 = vmatpush.bf16.msra.mxu0 %v2066
      %2082 = vmatpush.bf16.msra.mxu0 %v2065
      %2083 = vmatpush.bf16.msra.mxu0 %v2064
      %2084 = vmatpush.bf16.msra.mxu0 %v2063
      %2085 = vmatpush.bf16.msra.mxu0 %v2062
      %2086 = vmatmul.bf16.gmra.mxu0 %v2022
      %v2087 = vpop.f32.mrf.mxu0
      %v2088 = vadd.f32 0.0, %v2087
      %v2089 = vpop.f32.mrf.mxu0
      %v2090 = vadd.f32 0.0, %v2089
      %2091 = vmatmul.bf16.gmra.mxu0 %v2023
      %v2092 = vpop.f32.mrf.mxu0
      %v2093 = vadd.f32 0.0, %v2092
      %v2094 = vpop.f32.mrf.mxu0
      %v2095 = vadd.f32 0.0, %v2094
      %2096 = vmatmul.bf16.gmra.mxu0 %v2024
      %v2097 = vpop.f32.mrf.mxu0
      %v2098 = vadd.f32 0.0, %v2097
      %v2099 = vpop.f32.mrf.mxu0
      %v2100 = vadd.f32 0.0, %v2099
      %2101 = vmatmul.bf16.gmra.mxu0 %v2025
      %v2102 = vpop.f32.mrf.mxu0
      %v2103 = vadd.f32 0.0, %v2102
      %v2104 = vpop.f32.mrf.mxu0
      %v2105 = vadd.f32 0.0, %v2104
      %2106 = vdwg.mxu0
      %v2107 = vadd.f32 %v1933, %v2088
      %v2108 = vadd.f32 %v1934, %v2090
      %v2109 = vadd.f32 %v1935, %v2093
      %v2110 = vadd.f32 %v1936, %v2095
      %v2111 = vadd.f32 %v1937, %v2098
      %v2112 = vadd.f32 %v1938, %v2100
      %v2113 = vadd.f32 %v1939, %v2103
      %v2114 = vadd.f32 %v1940, %v2105
      %v2115 = vld [vmem:[%s2] sm:$0x1]
      %v2117 = vperm.slane %v2115, 0
      %v2119 = vadd.f32 %v2107, %v2117
      %v2120 = vadd.f32 %v2108, %v2117
      %v2121 = vadd.f32 %v2109, %v2117
      %v2122 = vadd.f32 %v2110, %v2117
      %v2123 = vadd.f32 %v2111, %v2117
      %v2124 = vadd.f32 %v2112, %v2117
      %v2125 = vadd.f32 %v2113, %v2117
      %v2126 = vadd.f32 %v2114, %v2117
      %vm2127 = vcmp.ge.f32.partialorder %v2119, 0.0
      %vm2128 = vcmp.ge.f32.partialorder %v2120, 0.0
      %vm2129 = vcmp.ge.f32.partialorder %v2121, 0.0
      %vm2130 = vcmp.ge.f32.partialorder %v2122, 0.0
      %vm2131 = vcmp.ge.f32.partialorder %v2123, 0.0
      %vm2132 = vcmp.ge.f32.partialorder %v2124, 0.0
      %vm2133 = vcmp.ge.f32.partialorder %v2125, 0.0
      %vm2134 = vcmp.ge.f32.partialorder %v2126, 0.0
      %v2135 = vmul.f32 %v2119, 0.01
      %v2136 = vmul.f32 %v2120, 0.01
      %v2137 = vmul.f32 %v2121, 0.01
      %v2138 = vmul.f32 %v2122, 0.01
      %v2139 = vmul.f32 %v2123, 0.01
      %v2140 = vmul.f32 %v2124, 0.01
      %v2141 = vmul.f32 %v2125, 0.01
      %v2142 = vmul.f32 %v2126, 0.01
      %v2143 = vsel %vm2127, %v2119, %v2135
      %v2144 = vsel %vm2128, %v2120, %v2136
      %v2145 = vsel %vm2129, %v2121, %v2137
      %v2146 = vsel %vm2130, %v2122, %v2138
      %v2147 = vsel %vm2131, %v2123, %v2139
      %v2148 = vsel %vm2132, %v2124, %v2140
      %v2149 = vsel %vm2133, %v2125, %v2141
      %v2150 = vsel %vm2134, %v2126, %v2142
      %2151 = vst [vmem:[#allocation3] sm:$0xf] 0
      %2152 = vst [vmem:[#allocation3 + $0x4] sm:$0x1] 0
      %2153 = vst [vmem:[#allocation3 + $0x8] sm:$0xf] 0
      %2154 = vst [vmem:[#allocation3 + $0xc] sm:$0x1] 0
      %2155 = vst [vmem:[#allocation3 + $0x10] sm:$0xf] 0
      %2156 = vst [vmem:[#allocation3 + $0x14] sm:$0x1] 0
      %2157 = vst [vmem:[#allocation3 + $0x18] sm:$0xf] 0
      %2158 = vst [vmem:[#allocation3 + $0x1c] sm:$0x1] 0
      %2159 = vst [vmem:[#allocation3 + $0x20] sm:$0xf] 0
      %2160 = vst [vmem:[#allocation3 + $0x24] sm:$0x1] 0
      %2161 = vst [vmem:[#allocation3 + $0x28] sm:$0xf] 0
      %2162 = vst [vmem:[#allocation3 + $0x2c] sm:$0x1] 0
      %2163 = vst [vmem:[#allocation3 + $0x30] sm:$0xf] 0
      %2164 = vst [vmem:[#allocation3 + $0x34] sm:$0x1] 0
      %2165 = vst [vmem:[#allocation3 + $0x38] sm:$0xf] 0
      %2166 = vst [vmem:[#allocation3 + $0x3c] sm:$0x1] 0
      %2167 = vst [vmem:[#allocation3 + $0x40] sm:$0xf] 0
      %2168 = vst [vmem:[#allocation3 + $0x44] sm:$0x1] 0
      %2169 = vst [vmem:[#allocation3 + $0x48] sm:$0xf] 0
      %2170 = vst [vmem:[#allocation3 + $0x4c] sm:$0x1] 0
      %v2171 = vpack.c.bf16 %v2143, %v2143
      %v2172 = vpack.c.bf16 %v2144, %v2144
      %v2173 = vpack.c.bf16 %v2145, %v2145
      %v2174 = vpack.c.bf16 %v2146, %v2146
      %v2175 = vpack.c.bf16 %v2147, %v2147
      %v2176 = vpack.c.bf16 %v2148, %v2148
      %v2177 = vpack.c.bf16 %v2149, %v2149
      %v2178 = vpack.c.bf16 %v2150, %v2150
      %v2180 = vshrl.u32 %v2171, 16
      %v2182 = vrot.slane %v2180, 7
      %v2183 = vshll.u32 %v2171, 16
      %v2185 = vor.u32 %v2182, %v2183
      %v2186 = vrot.slane %v2182, 4
      %v2188 = vshrl.u32 %v2172, 16
      %v2190 = vrot.slane %v2188, 7
      %v2191 = vshll.u32 %v2172, 16
      %v2193 = vor.u32 %v2190, %v2191
      %v2194 = vrot.slane %v2190, 4
      %v2196 = vshrl.u32 %v2173, 16
      %v2198 = vrot.slane %v2196, 7
      %v2199 = vshll.u32 %v2173, 16
      %v2201 = vor.u32 %v2198, %v2199
      %v2202 = vrot.slane %v2198, 4
      %v2204 = vshrl.u32 %v2174, 16
      %v2206 = vrot.slane %v2204, 7
      %v2207 = vshll.u32 %v2174, 16
      %v2209 = vor.u32 %v2206, %v2207
      %v2210 = vrot.slane %v2206, 4
      %v2212 = vshrl.u32 %v2175, 16
      %v2214 = vrot.slane %v2212, 7
      %v2215 = vshll.u32 %v2175, 16
      %v2217 = vor.u32 %v2214, %v2215
      %v2218 = vrot.slane %v2214, 4
      %v2220 = vshrl.u32 %v2176, 16
      %v2222 = vrot.slane %v2220, 7
      %v2223 = vshll.u32 %v2176, 16
      %v2225 = vor.u32 %v2222, %v2223
      %v2226 = vrot.slane %v2222, 4
      %v2228 = vshrl.u32 %v2177, 16
      %v2230 = vrot.slane %v2228, 7
      %v2231 = vshll.u32 %v2177, 16
      %v2233 = vor.u32 %v2230, %v2231
      %v2234 = vrot.slane %v2230, 4
      %v2236 = vshrl.u32 %v2178, 16
      %v2238 = vrot.slane %v2236, 7
      %v2239 = vshll.u32 %v2178, 16
      %v2241 = vor.u32 %v2238, %v2239
      %v2242 = vrot.slane %v2238, 4
      %s2259 = scalar_lea.vmem [#allocation3], 8
      %v2260 = vld [vmem:[%s2259] sm:$0xf]
      %v2261 = vsel %vm419, %v2185, %v2260
      %2262 = vst [vmem:[%s2259] sm:$0xf] %v2261
      %v2263 = vld [vmem:[%s2259 + $0x4] sm:$0x1]
      %v2264 = vsel %vm425, %v2186, %v2263
      %2265 = vst [vmem:[%s2259 + $0x4] sm:$0x1] %v2264
      %v2266 = vld [vmem:[%s2259 + $0x8] sm:$0xf]
      %v2267 = vsel %vm419, %v2193, %v2266
      %2268 = vst [vmem:[%s2259 + $0x8] sm:$0xf] %v2267
      %v2269 = vld [vmem:[%s2259 + $0xc] sm:$0x1]
      %v2270 = vsel %vm425, %v2194, %v2269
      %2271 = vst [vmem:[%s2259 + $0xc] sm:$0x1] %v2270
      %v2272 = vld [vmem:[%s2259 + $0x10] sm:$0xf]
      %v2273 = vsel %vm419, %v2201, %v2272
      %2274 = vst [vmem:[%s2259 + $0x10] sm:$0xf] %v2273
      %v2275 = vld [vmem:[%s2259 + $0x14] sm:$0x1]
      %v2276 = vsel %vm425, %v2202, %v2275
      %2277 = vst [vmem:[%s2259 + $0x14] sm:$0x1] %v2276
      %v2278 = vld [vmem:[%s2259 + $0x18] sm:$0xf]
      %v2279 = vsel %vm419, %v2209, %v2278
      %2280 = vst [vmem:[%s2259 + $0x18] sm:$0xf] %v2279
      %v2281 = vld [vmem:[%s2259 + $0x1c] sm:$0x1]
      %v2282 = vsel %vm425, %v2210, %v2281
      %2283 = vst [vmem:[%s2259 + $0x1c] sm:$0x1] %v2282
      %v2284 = vld [vmem:[%s2259 + $0x20] sm:$0xf]
      %v2285 = vsel %vm419, %v2217, %v2284
      %2286 = vst [vmem:[%s2259 + $0x20] sm:$0xf] %v2285
      %v2287 = vld [vmem:[%s2259 + $0x24] sm:$0x1]
      %v2288 = vsel %vm425, %v2218, %v2287
      %2289 = vst [vmem:[%s2259 + $0x24] sm:$0x1] %v2288
      %v2290 = vld [vmem:[%s2259 + $0x28] sm:$0xf]
      %v2291 = vsel %vm419, %v2225, %v2290
      %2292 = vst [vmem:[%s2259 + $0x28] sm:$0xf] %v2291
      %v2293 = vld [vmem:[%s2259 + $0x2c] sm:$0x1]
      %v2294 = vsel %vm425, %v2226, %v2293
      %2295 = vst [vmem:[%s2259 + $0x2c] sm:$0x1] %v2294
      %v2296 = vld [vmem:[%s2259 + $0x30] sm:$0xf]
      %v2297 = vsel %vm419, %v2233, %v2296
      %2298 = vst [vmem:[%s2259 + $0x30] sm:$0xf] %v2297
      %v2299 = vld [vmem:[%s2259 + $0x34] sm:$0x1]
      %v2300 = vsel %vm425, %v2234, %v2299
      %2301 = vst [vmem:[%s2259 + $0x34] sm:$0x1] %v2300
      %v2302 = vld [vmem:[%s2259 + $0x38] sm:$0xf]
      %v2303 = vsel %vm419, %v2241, %v2302
      %2304 = vst [vmem:[%s2259 + $0x38] sm:$0xf] %v2303
      %v2305 = vld [vmem:[%s2259 + $0x3c] sm:$0x1]
      %v2306 = vsel %vm425, %v2242, %v2305
      %2307 = vst [vmem:[%s2259 + $0x3c] sm:$0x1] %v2306
      %v2308 = vld [vmem:[#allocation3] sm:$0xf]
      %v2309 = vld [vmem:[#allocation3 + $0x8] sm:$0xf]
      %v2310 = vld [vmem:[#allocation3 + $0x10] sm:$0xf]
      %v2311 = vld [vmem:[#allocation3 + $0x18] sm:$0xf]
      %v2312 = vld [vmem:[#allocation3 + $0x20] sm:$0xf]
      %v2313 = vld [vmem:[#allocation3 + $0x28] sm:$0xf]
      %v2314 = vld [vmem:[#allocation3 + $0x30] sm:$0xf]
      %v2315 = vld [vmem:[#allocation3 + $0x38] sm:$0xf]
      %v2316 = vld [vmem:[%s3] sm:$0xf]
      %v2317 = vld [vmem:[%s3 + $0x4] sm:$0xf]
      %v2318 = vld [vmem:[%s3 + $0x8] sm:$0xf]
      %v2319 = vld [vmem:[%s3 + $0xc] sm:$0xf]
      %v2320 = vld [vmem:[%s3 + $0x10] sm:$0xf]
      %v2321 = vld [vmem:[%s3 + $0x14] sm:$0xf]
      %v2322 = vld [vmem:[%s3 + $0x18] sm:$0xf]
      %v2323 = vld [vmem:[%s3 + $0x1c] sm:$0xf]
      %v2324 = vld [vmem:[%s3 + $0x20] sm:$0xf]
      %v2325 = vld [vmem:[%s3 + $0x24] sm:$0xf]
      %v2326 = vld [vmem:[%s3 + $0x28] sm:$0xf]
      %v2327 = vld [vmem:[%s3 + $0x2c] sm:$0xf]
      %v2328 = vld [vmem:[%s3 + $0x30] sm:$0xf]
      %v2329 = vld [vmem:[%s3 + $0x34] sm:$0xf]
      %v2330 = vld [vmem:[%s3 + $0x38] sm:$0xf]
      %v2331 = vld [vmem:[%s3 + $0x3c] sm:$0xf]
      %v2332 = vld [vmem:[#allocation3 + $0x4] sm:$0x1]
      %v2333 = vld [vmem:[#allocation3 + $0xc] sm:$0x1]
      %v2334 = vld [vmem:[#allocation3 + $0x14] sm:$0x1]
      %v2335 = vld [vmem:[#allocation3 + $0x1c] sm:$0x1]
      %v2336 = vld [vmem:[#allocation3 + $0x24] sm:$0x1]
      %v2337 = vld [vmem:[#allocation3 + $0x2c] sm:$0x1]
      %v2338 = vld [vmem:[#allocation3 + $0x34] sm:$0x1]
      %v2339 = vld [vmem:[#allocation3 + $0x3c] sm:$0x1]
      %v2341 = vshrl.u32 %v2308, 16
      %v2343 = vrot.slane %v2341, 4
      %v2344 = vshll.u32 %v2308, 16
      %v2346 = vrot.slane %v2344, 5
      %v2347 = vor.u32 %v2343, %v2346
      %v2348 = vrot.slane %v2347, 4
      %v2350 = vshll.u32 %v2332, 16
      %v2352 = vrot.slane %v2350, 5
      %v2353 = vsel %vm505, %v2348, %v2352
      %v2355 = vshrl.u32 %v2309, 16
      %v2357 = vrot.slane %v2355, 4
      %v2358 = vshll.u32 %v2309, 16
      %v2360 = vrot.slane %v2358, 5
      %v2361 = vor.u32 %v2357, %v2360
      %v2362 = vrot.slane %v2361, 4
      %v2364 = vshll.u32 %v2333, 16
      %v2366 = vrot.slane %v2364, 5
      %v2367 = vsel %vm505, %v2362, %v2366
      %v2369 = vshrl.u32 %v2310, 16
      %v2371 = vrot.slane %v2369, 4
      %v2372 = vshll.u32 %v2310, 16
      %v2374 = vrot.slane %v2372, 5
      %v2375 = vor.u32 %v2371, %v2374
      %v2376 = vrot.slane %v2375, 4
      %v2378 = vshll.u32 %v2334, 16
      %v2380 = vrot.slane %v2378, 5
      %v2381 = vsel %vm505, %v2376, %v2380
      %v2383 = vshrl.u32 %v2311, 16
      %v2385 = vrot.slane %v2383, 4
      %v2386 = vshll.u32 %v2311, 16
      %v2388 = vrot.slane %v2386, 5
      %v2389 = vor.u32 %v2385, %v2388
      %v2390 = vrot.slane %v2389, 4
      %v2392 = vshll.u32 %v2335, 16
      %v2394 = vrot.slane %v2392, 5
      %v2395 = vsel %vm505, %v2390, %v2394
      %v2397 = vshrl.u32 %v2312, 16
      %v2399 = vrot.slane %v2397, 4
      %v2400 = vshll.u32 %v2312, 16
      %v2402 = vrot.slane %v2400, 5
      %v2403 = vor.u32 %v2399, %v2402
      %v2404 = vrot.slane %v2403, 4
      %v2406 = vshll.u32 %v2336, 16
      %v2408 = vrot.slane %v2406, 5
      %v2409 = vsel %vm505, %v2404, %v2408
      %v2411 = vshrl.u32 %v2313, 16
      %v2413 = vrot.slane %v2411, 4
      %v2414 = vshll.u32 %v2313, 16
      %v2416 = vrot.slane %v2414, 5
      %v2417 = vor.u32 %v2413, %v2416
      %v2418 = vrot.slane %v2417, 4
      %v2420 = vshll.u32 %v2337, 16
      %v2422 = vrot.slane %v2420, 5
      %v2423 = vsel %vm505, %v2418, %v2422
      %v2425 = vshrl.u32 %v2314, 16
      %v2427 = vrot.slane %v2425, 4
      %v2428 = vshll.u32 %v2314, 16
      %v2430 = vrot.slane %v2428, 5
      %v2431 = vor.u32 %v2427, %v2430
      %v2432 = vrot.slane %v2431, 4
      %v2434 = vshll.u32 %v2338, 16
      %v2436 = vrot.slane %v2434, 5
      %v2437 = vsel %vm505, %v2432, %v2436
      %v2439 = vshrl.u32 %v2315, 16
      %v2441 = vrot.slane %v2439, 4
      %v2442 = vshll.u32 %v2315, 16
      %v2444 = vrot.slane %v2442, 5
      %v2445 = vor.u32 %v2441, %v2444
      %v2446 = vrot.slane %v2445, 4
      %v2448 = vshll.u32 %v2339, 16
      %v2450 = vrot.slane %v2448, 5
      %v2451 = vsel %vm505, %v2446, %v2450
      %s2452 = scalar_lea.vmem %s3, 64
      %v2453 = vld [vmem:[%s2452] sm:$0xf]
      %v2454 = vld [vmem:[%s2452 + $0x4] sm:$0xf]
      %v2455 = vld [vmem:[%s2452 + $0x8] sm:$0xf]
      %v2456 = vld [vmem:[%s2452 + $0xc] sm:$0xf]
      %v2457 = vld [vmem:[%s2452 + $0x10] sm:$0xf]
      %v2458 = vld [vmem:[%s2452 + $0x14] sm:$0xf]
      %v2459 = vld [vmem:[%s2452 + $0x18] sm:$0xf]
      %v2460 = vld [vmem:[%s2452 + $0x1c] sm:$0xf]
      %v2461 = vld [vmem:[%s2452 + $0x20] sm:$0xf]
      %v2462 = vld [vmem:[%s2452 + $0x24] sm:$0xf]
      %v2463 = vld [vmem:[%s2452 + $0x28] sm:$0xf]
      %v2464 = vld [vmem:[%s2452 + $0x2c] sm:$0xf]
      %v2465 = vld [vmem:[%s2452 + $0x30] sm:$0xf]
      %v2466 = vld [vmem:[%s2452 + $0x34] sm:$0xf]
      %v2467 = vld [vmem:[%s2452 + $0x38] sm:$0xf]
      %v2468 = vld [vmem:[%s2452 + $0x3c] sm:$0xf]
      %v2469 = vunpack.c.l.b16 %v2353
      %v2470 = vunpack.c.l.b16 %v2367
      %v2471 = vunpack.c.l.b16 %v2381
      %v2472 = vunpack.c.l.b16 %v2395
      %v2473 = vunpack.c.l.b16 %v2409
      %v2474 = vunpack.c.l.b16 %v2423
      %v2475 = vunpack.c.l.b16 %v2437
      %v2476 = vunpack.c.l.b16 %v2451
      %v2477 = vpack.c.b16 %v2470, %v2469
      %v2478 = vpack.c.b16 %v2472, %v2471
      %v2479 = vpack.c.b16 %v2474, %v2473
      %v2480 = vpack.c.b16 %v2476, %v2475
      %v2501 = vunpack.c.l.b16 %v2453
      %v2502 = vunpack.c.l.b16 %v2454
      %v2503 = vunpack.c.l.b16 %v2455
      %v2504 = vunpack.c.l.b16 %v2456
      %v2505 = vunpack.c.l.b16 %v2457
      %v2506 = vunpack.c.l.b16 %v2458
      %v2507 = vunpack.c.l.b16 %v2459
      %v2508 = vunpack.c.l.b16 %v2460
      %v2509 = vunpack.c.l.b16 %v2461
      %v2510 = vunpack.c.l.b16 %v2462
      %v2511 = vunpack.c.l.b16 %v2463
      %v2512 = vunpack.c.l.b16 %v2464
      %v2513 = vunpack.c.l.b16 %v2465
      %v2514 = vunpack.c.l.b16 %v2466
      %v2515 = vunpack.c.l.b16 %v2467
      %v2516 = vunpack.c.l.b16 %v2468
      %v2517 = vpack.c.b16 %v2502, %v2501
      %v2518 = vpack.c.b16 %v2504, %v2503
      %v2519 = vpack.c.b16 %v2506, %v2505
      %v2520 = vpack.c.b16 %v2508, %v2507
      %v2521 = vpack.c.b16 %v2510, %v2509
      %v2522 = vpack.c.b16 %v2512, %v2511
      %v2523 = vpack.c.b16 %v2514, %v2513
      %v2524 = vpack.c.b16 %v2516, %v2515
      %2533 = vmatpush.bf16.msra.mxu0 %v2524
      %2534 = vmatpush.bf16.msra.mxu0 %v2523
      %2535 = vmatpush.bf16.msra.mxu0 %v2522
      %2536 = vmatpush.bf16.msra.mxu0 %v2521
      %2537 = vmatpush.bf16.msra.mxu0 %v2520
      %2538 = vmatpush.bf16.msra.mxu0 %v2519
      %2539 = vmatpush.bf16.msra.mxu0 %v2518
      %2540 = vmatpush.bf16.msra.mxu0 %v2517
      %2541 = vmatmul.bf16.gmra.mxu0 %v2477
      %v2542 = vpop.f32.mrf.mxu0
      %v2543 = vadd.f32 0.0, %v2542
      %v2544 = vpop.f32.mrf.mxu0
      %v2545 = vadd.f32 0.0, %v2544
      %2546 = vmatmul.bf16.gmra.mxu0 %v2478
      %v2547 = vpop.f32.mrf.mxu0
      %v2548 = vadd.f32 0.0, %v2547
      %v2549 = vpop.f32.mrf.mxu0
      %v2550 = vadd.f32 0.0, %v2549
      %2551 = vmatmul.bf16.gmra.mxu0 %v2479
      %v2552 = vpop.f32.mrf.mxu0
      %v2553 = vadd.f32 0.0, %v2552
      %v2554 = vpop.f32.mrf.mxu0
      %v2555 = vadd.f32 0.0, %v2554
      %2556 = vmatmul.bf16.gmra.mxu0 %v2480
      %v2557 = vpop.f32.mrf.mxu0
      %v2558 = vadd.f32 0.0, %v2557
      %v2559 = vpop.f32.mrf.mxu0
      %v2560 = vadd.f32 0.0, %v2559
      %2561 = vdwg.mxu0
      %v2570 = vunpack.c.l.b16 %v2308
      %v2571 = vunpack.c.l.b16 %v2309
      %v2572 = vunpack.c.l.b16 %v2310
      %v2573 = vunpack.c.l.b16 %v2311
      %v2574 = vunpack.c.l.b16 %v2312
      %v2575 = vunpack.c.l.b16 %v2313
      %v2576 = vunpack.c.l.b16 %v2314
      %v2577 = vunpack.c.l.b16 %v2315
      %v2578 = vpack.c.b16 %v2571, %v2570
      %v2579 = vpack.c.b16 %v2573, %v2572
      %v2580 = vpack.c.b16 %v2575, %v2574
      %v2581 = vpack.c.b16 %v2577, %v2576
      %v2602 = vunpack.c.l.b16 %v2316
      %v2603 = vunpack.c.l.b16 %v2317
      %v2604 = vunpack.c.l.b16 %v2318
      %v2605 = vunpack.c.l.b16 %v2319
      %v2606 = vunpack.c.l.b16 %v2320
      %v2607 = vunpack.c.l.b16 %v2321
      %v2608 = vunpack.c.l.b16 %v2322
      %v2609 = vunpack.c.l.b16 %v2323
      %v2610 = vunpack.c.l.b16 %v2324
      %v2611 = vunpack.c.l.b16 %v2325
      %v2612 = vunpack.c.l.b16 %v2326
      %v2613 = vunpack.c.l.b16 %v2327
      %v2614 = vunpack.c.l.b16 %v2328
      %v2615 = vunpack.c.l.b16 %v2329
      %v2616 = vunpack.c.l.b16 %v2330
      %v2617 = vunpack.c.l.b16 %v2331
      %v2618 = vpack.c.b16 %v2603, %v2602
      %v2619 = vpack.c.b16 %v2605, %v2604
      %v2620 = vpack.c.b16 %v2607, %v2606
      %v2621 = vpack.c.b16 %v2609, %v2608
      %v2622 = vpack.c.b16 %v2611, %v2610
      %v2623 = vpack.c.b16 %v2613, %v2612
      %v2624 = vpack.c.b16 %v2615, %v2614
      %v2625 = vpack.c.b16 %v2617, %v2616
      %2634 = vmatpush.bf16.msra.mxu0 %v2625
      %2635 = vmatpush.bf16.msra.mxu0 %v2624
      %2636 = vmatpush.bf16.msra.mxu0 %v2623
      %2637 = vmatpush.bf16.msra.mxu0 %v2622
      %2638 = vmatpush.bf16.msra.mxu0 %v2621
      %2639 = vmatpush.bf16.msra.mxu0 %v2620
      %2640 = vmatpush.bf16.msra.mxu0 %v2619
      %2641 = vmatpush.bf16.msra.mxu0 %v2618
      %2642 = vmatmul.bf16.gmra.mxu0 %v2578
      %v2643 = vpop.f32.mrf.mxu0
      %v2644 = vadd.f32 %v2543, %v2643
      %v2645 = vpop.f32.mrf.mxu0
      %v2646 = vadd.f32 %v2545, %v2645
      %2647 = vmatmul.bf16.gmra.mxu0 %v2579
      %v2648 = vpop.f32.mrf.mxu0
      %v2649 = vadd.f32 %v2548, %v2648
      %v2650 = vpop.f32.mrf.mxu0
      %v2651 = vadd.f32 %v2550, %v2650
      %2652 = vmatmul.bf16.gmra.mxu0 %v2580
      %v2653 = vpop.f32.mrf.mxu0
      %v2654 = vadd.f32 %v2553, %v2653
      %v2655 = vpop.f32.mrf.mxu0
      %v2656 = vadd.f32 %v2555, %v2655
      %2657 = vmatmul.bf16.gmra.mxu0 %v2581
      %v2658 = vpop.f32.mrf.mxu0
      %v2659 = vadd.f32 %v2558, %v2658
      %v2660 = vpop.f32.mrf.mxu0
      %v2661 = vadd.f32 %v2560, %v2660
      %2662 = vdwg.mxu0
      %v2663 = vld [vmem:[#allocation3] sm:$0xe]
      %v2664 = vld [vmem:[#allocation3 + $0x8] sm:$0xe]
      %v2665 = vld [vmem:[#allocation3 + $0x10] sm:$0xe]
      %v2666 = vld [vmem:[#allocation3 + $0x18] sm:$0xe]
      %v2667 = vld [vmem:[#allocation3 + $0x20] sm:$0xe]
      %v2668 = vld [vmem:[#allocation3 + $0x28] sm:$0xe]
      %v2669 = vld [vmem:[#allocation3 + $0x30] sm:$0xe]
      %v2670 = vld [vmem:[#allocation3 + $0x38] sm:$0xe]
      %v2687 = vrot.slane %v2663, 5
      %v2688 = vrot.slane %v2687, 4
      %v2689 = vrot.slane %v2332, 5
      %v2690 = vsel %vm855, %v2688, %v2689
      %v2691 = vrot.slane %v2664, 5
      %v2692 = vrot.slane %v2691, 4
      %v2693 = vrot.slane %v2333, 5
      %v2694 = vsel %vm855, %v2692, %v2693
      %v2695 = vrot.slane %v2665, 5
      %v2696 = vrot.slane %v2695, 4
      %v2697 = vrot.slane %v2334, 5
      %v2698 = vsel %vm855, %v2696, %v2697
      %v2699 = vrot.slane %v2666, 5
      %v2700 = vrot.slane %v2699, 4
      %v2701 = vrot.slane %v2335, 5
      %v2702 = vsel %vm855, %v2700, %v2701
      %v2703 = vrot.slane %v2667, 5
      %v2704 = vrot.slane %v2703, 4
      %v2705 = vrot.slane %v2336, 5
      %v2706 = vsel %vm855, %v2704, %v2705
      %v2707 = vrot.slane %v2668, 5
      %v2708 = vrot.slane %v2707, 4
      %v2709 = vrot.slane %v2337, 5
      %v2710 = vsel %vm855, %v2708, %v2709
      %v2711 = vrot.slane %v2669, 5
      %v2712 = vrot.slane %v2711, 4
      %v2713 = vrot.slane %v2338, 5
      %v2714 = vsel %vm855, %v2712, %v2713
      %v2715 = vrot.slane %v2670, 5
      %v2716 = vrot.slane %v2715, 4
      %v2717 = vrot.slane %v2339, 5
      %v2718 = vsel %vm855, %v2716, %v2717
      %s2719 = scalar_lea.vmem %s3, 128
      %v2720 = vld [vmem:[%s2719] sm:$0xf]
      %v2721 = vld [vmem:[%s2719 + $0x4] sm:$0xf]
      %v2722 = vld [vmem:[%s2719 + $0x8] sm:$0xf]
      %v2723 = vld [vmem:[%s2719 + $0xc] sm:$0xf]
      %v2724 = vld [vmem:[%s2719 + $0x10] sm:$0xf]
      %v2725 = vld [vmem:[%s2719 + $0x14] sm:$0xf]
      %v2726 = vld [vmem:[%s2719 + $0x18] sm:$0xf]
      %v2727 = vld [vmem:[%s2719 + $0x1c] sm:$0xf]
      %v2728 = vld [vmem:[%s2719 + $0x20] sm:$0xf]
      %v2729 = vld [vmem:[%s2719 + $0x24] sm:$0xf]
      %v2730 = vld [vmem:[%s2719 + $0x28] sm:$0xf]
      %v2731 = vld [vmem:[%s2719 + $0x2c] sm:$0xf]
      %v2732 = vld [vmem:[%s2719 + $0x30] sm:$0xf]
      %v2733 = vld [vmem:[%s2719 + $0x34] sm:$0xf]
      %v2734 = vld [vmem:[%s2719 + $0x38] sm:$0xf]
      %v2735 = vld [vmem:[%s2719 + $0x3c] sm:$0xf]
      %v2736 = vunpack.c.l.b16 %v2690
      %v2737 = vunpack.c.l.b16 %v2694
      %v2738 = vunpack.c.l.b16 %v2698
      %v2739 = vunpack.c.l.b16 %v2702
      %v2740 = vunpack.c.l.b16 %v2706
      %v2741 = vunpack.c.l.b16 %v2710
      %v2742 = vunpack.c.l.b16 %v2714
      %v2743 = vunpack.c.l.b16 %v2718
      %v2744 = vpack.c.b16 %v2737, %v2736
      %v2745 = vpack.c.b16 %v2739, %v2738
      %v2746 = vpack.c.b16 %v2741, %v2740
      %v2747 = vpack.c.b16 %v2743, %v2742
      %v2768 = vunpack.c.l.b16 %v2720
      %v2769 = vunpack.c.l.b16 %v2721
      %v2770 = vunpack.c.l.b16 %v2722
      %v2771 = vunpack.c.l.b16 %v2723
      %v2772 = vunpack.c.l.b16 %v2724
      %v2773 = vunpack.c.l.b16 %v2725
      %v2774 = vunpack.c.l.b16 %v2726
      %v2775 = vunpack.c.l.b16 %v2727
      %v2776 = vunpack.c.l.b16 %v2728
      %v2777 = vunpack.c.l.b16 %v2729
      %v2778 = vunpack.c.l.b16 %v2730
      %v2779 = vunpack.c.l.b16 %v2731
      %v2780 = vunpack.c.l.b16 %v2732
      %v2781 = vunpack.c.l.b16 %v2733
      %v2782 = vunpack.c.l.b16 %v2734
      %v2783 = vunpack.c.l.b16 %v2735
      %v2784 = vpack.c.b16 %v2769, %v2768
      %v2785 = vpack.c.b16 %v2771, %v2770
      %v2786 = vpack.c.b16 %v2773, %v2772
      %v2787 = vpack.c.b16 %v2775, %v2774
      %v2788 = vpack.c.b16 %v2777, %v2776
      %v2789 = vpack.c.b16 %v2779, %v2778
      %v2790 = vpack.c.b16 %v2781, %v2780
      %v2791 = vpack.c.b16 %v2783, %v2782
      %2800 = vmatpush.bf16.msra.mxu0 %v2791
      %2801 = vmatpush.bf16.msra.mxu0 %v2790
      %2802 = vmatpush.bf16.msra.mxu0 %v2789
      %2803 = vmatpush.bf16.msra.mxu0 %v2788
      %2804 = vmatpush.bf16.msra.mxu0 %v2787
      %2805 = vmatpush.bf16.msra.mxu0 %v2786
      %2806 = vmatpush.bf16.msra.mxu0 %v2785
      %2807 = vmatpush.bf16.msra.mxu0 %v2784
      %2808 = vmatmul.bf16.gmra.mxu0 %v2744
      %v2809 = vpop.f32.mrf.mxu0
      %v2810 = vadd.f32 0.0, %v2809
      %v2811 = vpop.f32.mrf.mxu0
      %v2812 = vadd.f32 0.0, %v2811
      %2813 = vmatmul.bf16.gmra.mxu0 %v2745
      %v2814 = vpop.f32.mrf.mxu0
      %v2815 = vadd.f32 0.0, %v2814
      %v2816 = vpop.f32.mrf.mxu0
      %v2817 = vadd.f32 0.0, %v2816
      %2818 = vmatmul.bf16.gmra.mxu0 %v2746
      %v2819 = vpop.f32.mrf.mxu0
      %v2820 = vadd.f32 0.0, %v2819
      %v2821 = vpop.f32.mrf.mxu0
      %v2822 = vadd.f32 0.0, %v2821
      %2823 = vmatmul.bf16.gmra.mxu0 %v2747
      %v2824 = vpop.f32.mrf.mxu0
      %v2825 = vadd.f32 0.0, %v2824
      %v2826 = vpop.f32.mrf.mxu0
      %v2827 = vadd.f32 0.0, %v2826
      %2828 = vdwg.mxu0
      %v2829 = vadd.f32 %v2644, %v2810
      %v2830 = vadd.f32 %v2646, %v2812
      %v2831 = vadd.f32 %v2649, %v2815
      %v2832 = vadd.f32 %v2651, %v2817
      %v2833 = vadd.f32 %v2654, %v2820
      %v2834 = vadd.f32 %v2656, %v2822
      %v2835 = vadd.f32 %v2659, %v2825
      %v2836 = vadd.f32 %v2661, %v2827
      %v2837 = vld [vmem:[%s2259] sm:$0xf]
      %v2838 = vld [vmem:[%s2259 + $0x8] sm:$0xf]
      %v2839 = vld [vmem:[%s2259 + $0x10] sm:$0xf]
      %v2840 = vld [vmem:[%s2259 + $0x18] sm:$0xf]
      %v2841 = vld [vmem:[%s2259 + $0x20] sm:$0xf]
      %v2842 = vld [vmem:[%s2259 + $0x28] sm:$0xf]
      %v2843 = vld [vmem:[%s2259 + $0x30] sm:$0xf]
      %v2844 = vld [vmem:[%s2259 + $0x38] sm:$0xf]
      %s2845 = scalar_lea.vmem %s3, 192
      %v2846 = vld [vmem:[%s2845] sm:$0xf]
      %v2847 = vld [vmem:[%s2845 + $0x4] sm:$0xf]
      %v2848 = vld [vmem:[%s2845 + $0x8] sm:$0xf]
      %v2849 = vld [vmem:[%s2845 + $0xc] sm:$0xf]
      %v2850 = vld [vmem:[%s2845 + $0x10] sm:$0xf]
      %v2851 = vld [vmem:[%s2845 + $0x14] sm:$0xf]
      %v2852 = vld [vmem:[%s2845 + $0x18] sm:$0xf]
      %v2853 = vld [vmem:[%s2845 + $0x1c] sm:$0xf]
      %v2854 = vld [vmem:[%s2845 + $0x20] sm:$0xf]
      %v2855 = vld [vmem:[%s2845 + $0x24] sm:$0xf]
      %v2856 = vld [vmem:[%s2845 + $0x28] sm:$0xf]
      %v2857 = vld [vmem:[%s2845 + $0x2c] sm:$0xf]
      %v2858 = vld [vmem:[%s2845 + $0x30] sm:$0xf]
      %v2859 = vld [vmem:[%s2845 + $0x34] sm:$0xf]
      %v2860 = vld [vmem:[%s2845 + $0x38] sm:$0xf]
      %v2861 = vld [vmem:[%s2845 + $0x3c] sm:$0xf]
      %v2870 = vunpack.c.l.b16 %v2837
      %v2871 = vunpack.c.l.b16 %v2838
      %v2872 = vunpack.c.l.b16 %v2839
      %v2873 = vunpack.c.l.b16 %v2840
      %v2874 = vunpack.c.l.b16 %v2841
      %v2875 = vunpack.c.l.b16 %v2842
      %v2876 = vunpack.c.l.b16 %v2843
      %v2877 = vunpack.c.l.b16 %v2844
      %v2878 = vpack.c.b16 %v2871, %v2870
      %v2879 = vpack.c.b16 %v2873, %v2872
      %v2880 = vpack.c.b16 %v2875, %v2874
      %v2881 = vpack.c.b16 %v2877, %v2876
      %v2902 = vunpack.c.l.b16 %v2846
      %v2903 = vunpack.c.l.b16 %v2847
      %v2904 = vunpack.c.l.b16 %v2848
      %v2905 = vunpack.c.l.b16 %v2849
      %v2906 = vunpack.c.l.b16 %v2850
      %v2907 = vunpack.c.l.b16 %v2851
      %v2908 = vunpack.c.l.b16 %v2852
      %v2909 = vunpack.c.l.b16 %v2853
      %v2910 = vunpack.c.l.b16 %v2854
      %v2911 = vunpack.c.l.b16 %v2855
      %v2912 = vunpack.c.l.b16 %v2856
      %v2913 = vunpack.c.l.b16 %v2857
      %v2914 = vunpack.c.l.b16 %v2858
      %v2915 = vunpack.c.l.b16 %v2859
      %v2916 = vunpack.c.l.b16 %v2860
      %v2917 = vunpack.c.l.b16 %v2861
      %v2918 = vpack.c.b16 %v2903, %v2902
      %v2919 = vpack.c.b16 %v2905, %v2904
      %v2920 = vpack.c.b16 %v2907, %v2906
      %v2921 = vpack.c.b16 %v2909, %v2908
      %v2922 = vpack.c.b16 %v2911, %v2910
      %v2923 = vpack.c.b16 %v2913, %v2912
      %v2924 = vpack.c.b16 %v2915, %v2914
      %v2925 = vpack.c.b16 %v2917, %v2916
      %2934 = vmatpush.bf16.msra.mxu0 %v2925
      %2935 = vmatpush.bf16.msra.mxu0 %v2924
      %2936 = vmatpush.bf16.msra.mxu0 %v2923
      %2937 = vmatpush.bf16.msra.mxu0 %v2922
      %2938 = vmatpush.bf16.msra.mxu0 %v2921
      %2939 = vmatpush.bf16.msra.mxu0 %v2920
      %2940 = vmatpush.bf16.msra.mxu0 %v2919
      %2941 = vmatpush.bf16.msra.mxu0 %v2918
      %2942 = vmatmul.bf16.gmra.mxu0 %v2878
      %v2943 = vpop.f32.mrf.mxu0
      %v2944 = vadd.f32 0.0, %v2943
      %v2945 = vpop.f32.mrf.mxu0
      %v2946 = vadd.f32 0.0, %v2945
      %2947 = vmatmul.bf16.gmra.mxu0 %v2879
      %v2948 = vpop.f32.mrf.mxu0
      %v2949 = vadd.f32 0.0, %v2948
      %v2950 = vpop.f32.mrf.mxu0
      %v2951 = vadd.f32 0.0, %v2950
      %2952 = vmatmul.bf16.gmra.mxu0 %v2880
      %v2953 = vpop.f32.mrf.mxu0
      %v2954 = vadd.f32 0.0, %v2953
      %v2955 = vpop.f32.mrf.mxu0
      %v2956 = vadd.f32 0.0, %v2955
      %2957 = vmatmul.bf16.gmra.mxu0 %v2881
      %v2958 = vpop.f32.mrf.mxu0
      %v2959 = vadd.f32 0.0, %v2958
      %v2960 = vpop.f32.mrf.mxu0
      %v2961 = vadd.f32 0.0, %v2960
      %2962 = vdwg.mxu0
      %v2963 = vadd.f32 %v2829, %v2944
      %v2964 = vadd.f32 %v2830, %v2946
      %v2965 = vadd.f32 %v2831, %v2949
      %v2966 = vadd.f32 %v2832, %v2951
      %v2967 = vadd.f32 %v2833, %v2954
      %v2968 = vadd.f32 %v2834, %v2956
      %v2969 = vadd.f32 %v2835, %v2959
      %v2970 = vadd.f32 %v2836, %v2961
      %v2971 = vld [vmem:[%s2259] sm:$0xf]
      %v2972 = vld [vmem:[%s2259 + $0x4] sm:$0x1]
      %v2973 = vld [vmem:[%s2259 + $0x8] sm:$0xf]
      %v2974 = vld [vmem:[%s2259 + $0xc] sm:$0x1]
      %v2975 = vld [vmem:[%s2259 + $0x10] sm:$0xf]
      %v2976 = vld [vmem:[%s2259 + $0x14] sm:$0x1]
      %v2977 = vld [vmem:[%s2259 + $0x18] sm:$0xf]
      %v2978 = vld [vmem:[%s2259 + $0x1c] sm:$0x1]
      %v2979 = vld [vmem:[%s2259 + $0x20] sm:$0xf]
      %v2980 = vld [vmem:[%s2259 + $0x24] sm:$0x1]
      %v2981 = vld [vmem:[%s2259 + $0x28] sm:$0xf]
      %v2982 = vld [vmem:[%s2259 + $0x2c] sm:$0x1]
      %v2983 = vld [vmem:[%s2259 + $0x30] sm:$0xf]
      %v2984 = vld [vmem:[%s2259 + $0x34] sm:$0x1]
      %v2985 = vld [vmem:[%s2259 + $0x38] sm:$0xf]
      %v2986 = vld [vmem:[%s2259 + $0x3c] sm:$0x1]
      %v2988 = vshrl.u32 %v2971, 16
      %v2990 = vrot.slane %v2988, 4
      %v2991 = vshll.u32 %v2971, 16
      %v2993 = vrot.slane %v2991, 5
      %v2994 = vor.u32 %v2990, %v2993
      %v2995 = vrot.slane %v2994, 4
      %v2997 = vshll.u32 %v2972, 16
      %v2999 = vrot.slane %v2997, 5
      %v3000 = vsel %vm505, %v2995, %v2999
      %v3002 = vshrl.u32 %v2973, 16
      %v3004 = vrot.slane %v3002, 4
      %v3005 = vshll.u32 %v2973, 16
      %v3007 = vrot.slane %v3005, 5
      %v3008 = vor.u32 %v3004, %v3007
      %v3009 = vrot.slane %v3008, 4
      %v3011 = vshll.u32 %v2974, 16
      %v3013 = vrot.slane %v3011, 5
      %v3014 = vsel %vm505, %v3009, %v3013
      %v3016 = vshrl.u32 %v2975, 16
      %v3018 = vrot.slane %v3016, 4
      %v3019 = vshll.u32 %v2975, 16
      %v3021 = vrot.slane %v3019, 5
      %v3022 = vor.u32 %v3018, %v3021
      %v3023 = vrot.slane %v3022, 4
      %v3025 = vshll.u32 %v2976, 16
      %v3027 = vrot.slane %v3025, 5
      %v3028 = vsel %vm505, %v3023, %v3027
      %v3030 = vshrl.u32 %v2977, 16
      %v3032 = vrot.slane %v3030, 4
      %v3033 = vshll.u32 %v2977, 16
      %v3035 = vrot.slane %v3033, 5
      %v3036 = vor.u32 %v3032, %v3035
      %v3037 = vrot.slane %v3036, 4
      %v3039 = vshll.u32 %v2978, 16
      %v3041 = vrot.slane %v3039, 5
      %v3042 = vsel %vm505, %v3037, %v3041
      %v3044 = vshrl.u32 %v2979, 16
      %v3046 = vrot.slane %v3044, 4
      %v3047 = vshll.u32 %v2979, 16
      %v3049 = vrot.slane %v3047, 5
      %v3050 = vor.u32 %v3046, %v3049
      %v3051 = vrot.slane %v3050, 4
      %v3053 = vshll.u32 %v2980, 16
      %v3055 = vrot.slane %v3053, 5
      %v3056 = vsel %vm505, %v3051, %v3055
      %v3058 = vshrl.u32 %v2981, 16
      %v3060 = vrot.slane %v3058, 4
      %v3061 = vshll.u32 %v2981, 16
      %v3063 = vrot.slane %v3061, 5
      %v3064 = vor.u32 %v3060, %v3063
      %v3065 = vrot.slane %v3064, 4
      %v3067 = vshll.u32 %v2982, 16
      %v3069 = vrot.slane %v3067, 5
      %v3070 = vsel %vm505, %v3065, %v3069
      %v3072 = vshrl.u32 %v2983, 16
      %v3074 = vrot.slane %v3072, 4
      %v3075 = vshll.u32 %v2983, 16
      %v3077 = vrot.slane %v3075, 5
      %v3078 = vor.u32 %v3074, %v3077
      %v3079 = vrot.slane %v3078, 4
      %v3081 = vshll.u32 %v2984, 16
      %v3083 = vrot.slane %v3081, 5
      %v3084 = vsel %vm505, %v3079, %v3083
      %v3086 = vshrl.u32 %v2985, 16
      %v3088 = vrot.slane %v3086, 4
      %v3089 = vshll.u32 %v2985, 16
      %v3091 = vrot.slane %v3089, 5
      %v3092 = vor.u32 %v3088, %v3091
      %v3093 = vrot.slane %v3092, 4
      %v3095 = vshll.u32 %v2986, 16
      %v3097 = vrot.slane %v3095, 5
      %v3098 = vsel %vm505, %v3093, %v3097
      %s3099 = scalar_lea.vmem %s3, 256
      %v3100 = vld [vmem:[%s3099] sm:$0xf]
      %v3101 = vld [vmem:[%s3099 + $0x4] sm:$0xf]
      %v3102 = vld [vmem:[%s3099 + $0x8] sm:$0xf]
      %v3103 = vld [vmem:[%s3099 + $0xc] sm:$0xf]
      %v3104 = vld [vmem:[%s3099 + $0x10] sm:$0xf]
      %v3105 = vld [vmem:[%s3099 + $0x14] sm:$0xf]
      %v3106 = vld [vmem:[%s3099 + $0x18] sm:$0xf]
      %v3107 = vld [vmem:[%s3099 + $0x1c] sm:$0xf]
      %v3108 = vld [vmem:[%s3099 + $0x20] sm:$0xf]
      %v3109 = vld [vmem:[%s3099 + $0x24] sm:$0xf]
      %v3110 = vld [vmem:[%s3099 + $0x28] sm:$0xf]
      %v3111 = vld [vmem:[%s3099 + $0x2c] sm:$0xf]
      %v3112 = vld [vmem:[%s3099 + $0x30] sm:$0xf]
      %v3113 = vld [vmem:[%s3099 + $0x34] sm:$0xf]
      %v3114 = vld [vmem:[%s3099 + $0x38] sm:$0xf]
      %v3115 = vld [vmem:[%s3099 + $0x3c] sm:$0xf]
      %v3116 = vunpack.c.l.b16 %v3000
      %v3117 = vunpack.c.l.b16 %v3014
      %v3118 = vunpack.c.l.b16 %v3028
      %v3119 = vunpack.c.l.b16 %v3042
      %v3120 = vunpack.c.l.b16 %v3056
      %v3121 = vunpack.c.l.b16 %v3070
      %v3122 = vunpack.c.l.b16 %v3084
      %v3123 = vunpack.c.l.b16 %v3098
      %v3124 = vpack.c.b16 %v3117, %v3116
      %v3125 = vpack.c.b16 %v3119, %v3118
      %v3126 = vpack.c.b16 %v3121, %v3120
      %v3127 = vpack.c.b16 %v3123, %v3122
      %v3148 = vunpack.c.l.b16 %v3100
      %v3149 = vunpack.c.l.b16 %v3101
      %v3150 = vunpack.c.l.b16 %v3102
      %v3151 = vunpack.c.l.b16 %v3103
      %v3152 = vunpack.c.l.b16 %v3104
      %v3153 = vunpack.c.l.b16 %v3105
      %v3154 = vunpack.c.l.b16 %v3106
      %v3155 = vunpack.c.l.b16 %v3107
      %v3156 = vunpack.c.l.b16 %v3108
      %v3157 = vunpack.c.l.b16 %v3109
      %v3158 = vunpack.c.l.b16 %v3110
      %v3159 = vunpack.c.l.b16 %v3111
      %v3160 = vunpack.c.l.b16 %v3112
      %v3161 = vunpack.c.l.b16 %v3113
      %v3162 = vunpack.c.l.b16 %v3114
      %v3163 = vunpack.c.l.b16 %v3115
      %v3164 = vpack.c.b16 %v3149, %v3148
      %v3165 = vpack.c.b16 %v3151, %v3150
      %v3166 = vpack.c.b16 %v3153, %v3152
      %v3167 = vpack.c.b16 %v3155, %v3154
      %v3168 = vpack.c.b16 %v3157, %v3156
      %v3169 = vpack.c.b16 %v3159, %v3158
      %v3170 = vpack.c.b16 %v3161, %v3160
      %v3171 = vpack.c.b16 %v3163, %v3162
      %3180 = vmatpush.bf16.msra.mxu0 %v3171
      %3181 = vmatpush.bf16.msra.mxu0 %v3170
      %3182 = vmatpush.bf16.msra.mxu0 %v3169
      %3183 = vmatpush.bf16.msra.mxu0 %v3168
      %3184 = vmatpush.bf16.msra.mxu0 %v3167
      %3185 = vmatpush.bf16.msra.mxu0 %v3166
      %3186 = vmatpush.bf16.msra.mxu0 %v3165
      %3187 = vmatpush.bf16.msra.mxu0 %v3164
      %3188 = vmatmul.bf16.gmra.mxu0 %v3124
      %v3189 = vpop.f32.mrf.mxu0
      %v3190 = vadd.f32 0.0, %v3189
      %v3191 = vpop.f32.mrf.mxu0
      %v3192 = vadd.f32 0.0, %v3191
      %3193 = vmatmul.bf16.gmra.mxu0 %v3125
      %v3194 = vpop.f32.mrf.mxu0
      %v3195 = vadd.f32 0.0, %v3194
      %v3196 = vpop.f32.mrf.mxu0
      %v3197 = vadd.f32 0.0, %v3196
      %3198 = vmatmul.bf16.gmra.mxu0 %v3126
      %v3199 = vpop.f32.mrf.mxu0
      %v3200 = vadd.f32 0.0, %v3199
      %v3201 = vpop.f32.mrf.mxu0
      %v3202 = vadd.f32 0.0, %v3201
      %3203 = vmatmul.bf16.gmra.mxu0 %v3127
      %v3204 = vpop.f32.mrf.mxu0
      %v3205 = vadd.f32 0.0, %v3204
      %v3206 = vpop.f32.mrf.mxu0
      %v3207 = vadd.f32 0.0, %v3206
      %3208 = vdwg.mxu0
      %v3209 = vadd.f32 %v2963, %v3190
      %v3210 = vadd.f32 %v2964, %v3192
      %v3211 = vadd.f32 %v2965, %v3195
      %v3212 = vadd.f32 %v2966, %v3197
      %v3213 = vadd.f32 %v2967, %v3200
      %v3214 = vadd.f32 %v2968, %v3202
      %v3215 = vadd.f32 %v2969, %v3205
      %v3216 = vadd.f32 %v2970, %v3207
      %v3217 = vld [vmem:[%s2259] sm:$0xe]
      %v3218 = vld [vmem:[%s2259 + $0x8] sm:$0xe]
      %v3219 = vld [vmem:[%s2259 + $0x10] sm:$0xe]
      %v3220 = vld [vmem:[%s2259 + $0x18] sm:$0xe]
      %v3221 = vld [vmem:[%s2259 + $0x20] sm:$0xe]
      %v3222 = vld [vmem:[%s2259 + $0x28] sm:$0xe]
      %v3223 = vld [vmem:[%s2259 + $0x30] sm:$0xe]
      %v3224 = vld [vmem:[%s2259 + $0x38] sm:$0xe]
      %v3241 = vrot.slane %v3217, 5
      %v3242 = vrot.slane %v3241, 4
      %v3243 = vrot.slane %v2972, 5
      %v3244 = vsel %vm855, %v3242, %v3243
      %v3245 = vrot.slane %v3218, 5
      %v3246 = vrot.slane %v3245, 4
      %v3247 = vrot.slane %v2974, 5
      %v3248 = vsel %vm855, %v3246, %v3247
      %v3249 = vrot.slane %v3219, 5
      %v3250 = vrot.slane %v3249, 4
      %v3251 = vrot.slane %v2976, 5
      %v3252 = vsel %vm855, %v3250, %v3251
      %v3253 = vrot.slane %v3220, 5
      %v3254 = vrot.slane %v3253, 4
      %v3255 = vrot.slane %v2978, 5
      %v3256 = vsel %vm855, %v3254, %v3255
      %v3257 = vrot.slane %v3221, 5
      %v3258 = vrot.slane %v3257, 4
      %v3259 = vrot.slane %v2980, 5
      %v3260 = vsel %vm855, %v3258, %v3259
      %v3261 = vrot.slane %v3222, 5
      %v3262 = vrot.slane %v3261, 4
      %v3263 = vrot.slane %v2982, 5
      %v3264 = vsel %vm855, %v3262, %v3263
      %v3265 = vrot.slane %v3223, 5
      %v3266 = vrot.slane %v3265, 4
      %v3267 = vrot.slane %v2984, 5
      %v3268 = vsel %vm855, %v3266, %v3267
      %v3269 = vrot.slane %v3224, 5
      %v3270 = vrot.slane %v3269, 4
      %v3271 = vrot.slane %v2986, 5
      %v3272 = vsel %vm855, %v3270, %v3271
      %s3273 = scalar_lea.vmem %s3, 320
      %v3274 = vld [vmem:[%s3273] sm:$0xf]
      %v3275 = vld [vmem:[%s3273 + $0x4] sm:$0xf]
      %v3276 = vld [vmem:[%s3273 + $0x8] sm:$0xf]
      %v3277 = vld [vmem:[%s3273 + $0xc] sm:$0xf]
      %v3278 = vld [vmem:[%s3273 + $0x10] sm:$0xf]
      %v3279 = vld [vmem:[%s3273 + $0x14] sm:$0xf]
      %v3280 = vld [vmem:[%s3273 + $0x18] sm:$0xf]
      %v3281 = vld [vmem:[%s3273 + $0x1c] sm:$0xf]
      %v3282 = vld [vmem:[%s3273 + $0x20] sm:$0xf]
      %v3283 = vld [vmem:[%s3273 + $0x24] sm:$0xf]
      %v3284 = vld [vmem:[%s3273 + $0x28] sm:$0xf]
      %v3285 = vld [vmem:[%s3273 + $0x2c] sm:$0xf]
      %v3286 = vld [vmem:[%s3273 + $0x30] sm:$0xf]
      %v3287 = vld [vmem:[%s3273 + $0x34] sm:$0xf]
      %v3288 = vld [vmem:[%s3273 + $0x38] sm:$0xf]
      %v3289 = vld [vmem:[%s3273 + $0x3c] sm:$0xf]
      %v3290 = vunpack.c.l.b16 %v3244
      %v3291 = vunpack.c.l.b16 %v3248
      %v3292 = vunpack.c.l.b16 %v3252
      %v3293 = vunpack.c.l.b16 %v3256
      %v3294 = vunpack.c.l.b16 %v3260
      %v3295 = vunpack.c.l.b16 %v3264
      %v3296 = vunpack.c.l.b16 %v3268
      %v3297 = vunpack.c.l.b16 %v3272
      %v3298 = vpack.c.b16 %v3291, %v3290
      %v3299 = vpack.c.b16 %v3293, %v3292
      %v3300 = vpack.c.b16 %v3295, %v3294
      %v3301 = vpack.c.b16 %v3297, %v3296
      %v3322 = vunpack.c.l.b16 %v3274
      %v3323 = vunpack.c.l.b16 %v3275
      %v3324 = vunpack.c.l.b16 %v3276
      %v3325 = vunpack.c.l.b16 %v3277
      %v3326 = vunpack.c.l.b16 %v3278
      %v3327 = vunpack.c.l.b16 %v3279
      %v3328 = vunpack.c.l.b16 %v3280
      %v3329 = vunpack.c.l.b16 %v3281
      %v3330 = vunpack.c.l.b16 %v3282
      %v3331 = vunpack.c.l.b16 %v3283
      %v3332 = vunpack.c.l.b16 %v3284
      %v3333 = vunpack.c.l.b16 %v3285
      %v3334 = vunpack.c.l.b16 %v3286
      %v3335 = vunpack.c.l.b16 %v3287
      %v3336 = vunpack.c.l.b16 %v3288
      %v3337 = vunpack.c.l.b16 %v3289
      %v3338 = vpack.c.b16 %v3323, %v3322
      %v3339 = vpack.c.b16 %v3325, %v3324
      %v3340 = vpack.c.b16 %v3327, %v3326
      %v3341 = vpack.c.b16 %v3329, %v3328
      %v3342 = vpack.c.b16 %v3331, %v3330
      %v3343 = vpack.c.b16 %v3333, %v3332
      %v3344 = vpack.c.b16 %v3335, %v3334
      %v3345 = vpack.c.b16 %v3337, %v3336
      %3354 = vmatpush.bf16.msra.mxu0 %v3345
      %3355 = vmatpush.bf16.msra.mxu0 %v3344
      %3356 = vmatpush.bf16.msra.mxu0 %v3343
      %3357 = vmatpush.bf16.msra.mxu0 %v3342
      %3358 = vmatpush.bf16.msra.mxu0 %v3341
      %3359 = vmatpush.bf16.msra.mxu0 %v3340
      %3360 = vmatpush.bf16.msra.mxu0 %v3339
      %3361 = vmatpush.bf16.msra.mxu0 %v3338
      %3362 = vmatmul.bf16.gmra.mxu0 %v3298
      %v3363 = vpop.f32.mrf.mxu0
      %v3364 = vadd.f32 0.0, %v3363
      %v3365 = vpop.f32.mrf.mxu0
      %v3366 = vadd.f32 0.0, %v3365
      %3367 = vmatmul.bf16.gmra.mxu0 %v3299
      %v3368 = vpop.f32.mrf.mxu0
      %v3369 = vadd.f32 0.0, %v3368
      %v3370 = vpop.f32.mrf.mxu0
      %v3371 = vadd.f32 0.0, %v3370
      %3372 = vmatmul.bf16.gmra.mxu0 %v3300
      %v3373 = vpop.f32.mrf.mxu0
      %v3374 = vadd.f32 0.0, %v3373
      %v3375 = vpop.f32.mrf.mxu0
      %v3376 = vadd.f32 0.0, %v3375
      %3377 = vmatmul.bf16.gmra.mxu0 %v3301
      %v3378 = vpop.f32.mrf.mxu0
      %v3379 = vadd.f32 0.0, %v3378
      %v3380 = vpop.f32.mrf.mxu0
      %v3381 = vadd.f32 0.0, %v3380
      %3382 = vdwg.mxu0
      %v3383 = vadd.f32 %v3209, %v3364
      %v3384 = vadd.f32 %v3210, %v3366
      %v3385 = vadd.f32 %v3211, %v3369
      %v3386 = vadd.f32 %v3212, %v3371
      %v3387 = vadd.f32 %v3213, %v3374
      %v3388 = vadd.f32 %v3214, %v3376
      %v3389 = vadd.f32 %v3215, %v3379
      %v3390 = vadd.f32 %v3216, %v3381
      %s3391 = scalar_lea.vmem [#allocation3], 16
      %v3392 = vld [vmem:[%s3391] sm:$0xf]
      %v3393 = vld [vmem:[%s3391 + $0x8] sm:$0xf]
      %v3394 = vld [vmem:[%s3391 + $0x10] sm:$0xf]
      %v3395 = vld [vmem:[%s3391 + $0x18] sm:$0xf]
      %v3396 = vld [vmem:[%s3391 + $0x20] sm:$0xf]
      %v3397 = vld [vmem:[%s3391 + $0x28] sm:$0xf]
      %v3398 = vld [vmem:[%s3391 + $0x30] sm:$0xf]
      %v3399 = vld [vmem:[%s3391 + $0x38] sm:$0xf]
      %s3400 = scalar_lea.vmem %s3, 384
      %v3401 = vld [vmem:[%s3400] sm:$0xf]
      %v3402 = vld [vmem:[%s3400 + $0x4] sm:$0xf]
      %v3403 = vld [vmem:[%s3400 + $0x8] sm:$0xf]
      %v3404 = vld [vmem:[%s3400 + $0xc] sm:$0xf]
      %v3405 = vld [vmem:[%s3400 + $0x10] sm:$0xf]
      %v3406 = vld [vmem:[%s3400 + $0x14] sm:$0xf]
      %v3407 = vld [vmem:[%s3400 + $0x18] sm:$0xf]
      %v3408 = vld [vmem:[%s3400 + $0x1c] sm:$0xf]
      %v3409 = vld [vmem:[%s3400 + $0x20] sm:$0xf]
      %v3410 = vld [vmem:[%s3400 + $0x24] sm:$0xf]
      %v3411 = vld [vmem:[%s3400 + $0x28] sm:$0xf]
      %v3412 = vld [vmem:[%s3400 + $0x2c] sm:$0xf]
      %v3413 = vld [vmem:[%s3400 + $0x30] sm:$0xf]
      %v3414 = vld [vmem:[%s3400 + $0x34] sm:$0xf]
      %v3415 = vld [vmem:[%s3400 + $0x38] sm:$0xf]
      %v3416 = vld [vmem:[%s3400 + $0x3c] sm:$0xf]
      %v3425 = vunpack.c.l.b16 %v3392
      %v3426 = vunpack.c.l.b16 %v3393
      %v3427 = vunpack.c.l.b16 %v3394
      %v3428 = vunpack.c.l.b16 %v3395
      %v3429 = vunpack.c.l.b16 %v3396
      %v3430 = vunpack.c.l.b16 %v3397
      %v3431 = vunpack.c.l.b16 %v3398
      %v3432 = vunpack.c.l.b16 %v3399
      %v3433 = vpack.c.b16 %v3426, %v3425
      %v3434 = vpack.c.b16 %v3428, %v3427
      %v3435 = vpack.c.b16 %v3430, %v3429
      %v3436 = vpack.c.b16 %v3432, %v3431
      %v3457 = vunpack.c.l.b16 %v3401
      %v3458 = vunpack.c.l.b16 %v3402
      %v3459 = vunpack.c.l.b16 %v3403
      %v3460 = vunpack.c.l.b16 %v3404
      %v3461 = vunpack.c.l.b16 %v3405
      %v3462 = vunpack.c.l.b16 %v3406
      %v3463 = vunpack.c.l.b16 %v3407
      %v3464 = vunpack.c.l.b16 %v3408
      %v3465 = vunpack.c.l.b16 %v3409
      %v3466 = vunpack.c.l.b16 %v3410
      %v3467 = vunpack.c.l.b16 %v3411
      %v3468 = vunpack.c.l.b16 %v3412
      %v3469 = vunpack.c.l.b16 %v3413
      %v3470 = vunpack.c.l.b16 %v3414
      %v3471 = vunpack.c.l.b16 %v3415
      %v3472 = vunpack.c.l.b16 %v3416
      %v3473 = vpack.c.b16 %v3458, %v3457
      %v3474 = vpack.c.b16 %v3460, %v3459
      %v3475 = vpack.c.b16 %v3462, %v3461
      %v3476 = vpack.c.b16 %v3464, %v3463
      %v3477 = vpack.c.b16 %v3466, %v3465
      %v3478 = vpack.c.b16 %v3468, %v3467
      %v3479 = vpack.c.b16 %v3470, %v3469
      %v3480 = vpack.c.b16 %v3472, %v3471
      %3489 = vmatpush.bf16.msra.mxu0 %v3480
      %3490 = vmatpush.bf16.msra.mxu0 %v3479
      %3491 = vmatpush.bf16.msra.mxu0 %v3478
      %3492 = vmatpush.bf16.msra.mxu0 %v3477
      %3493 = vmatpush.bf16.msra.mxu0 %v3476
      %3494 = vmatpush.bf16.msra.mxu0 %v3475
      %3495 = vmatpush.bf16.msra.mxu0 %v3474
      %3496 = vmatpush.bf16.msra.mxu0 %v3473
      %3497 = vmatmul.bf16.gmra.mxu0 %v3433
      %v3498 = vpop.f32.mrf.mxu0
      %v3499 = vadd.f32 0.0, %v3498
      %v3500 = vpop.f32.mrf.mxu0
      %v3501 = vadd.f32 0.0, %v3500
      %3502 = vmatmul.bf16.gmra.mxu0 %v3434
      %v3503 = vpop.f32.mrf.mxu0
      %v3504 = vadd.f32 0.0, %v3503
      %v3505 = vpop.f32.mrf.mxu0
      %v3506 = vadd.f32 0.0, %v3505
      %3507 = vmatmul.bf16.gmra.mxu0 %v3435
      %v3508 = vpop.f32.mrf.mxu0
      %v3509 = vadd.f32 0.0, %v3508
      %v3510 = vpop.f32.mrf.mxu0
      %v3511 = vadd.f32 0.0, %v3510
      %3512 = vmatmul.bf16.gmra.mxu0 %v3436
      %v3513 = vpop.f32.mrf.mxu0
      %v3514 = vadd.f32 0.0, %v3513
      %v3515 = vpop.f32.mrf.mxu0
      %v3516 = vadd.f32 0.0, %v3515
      %3517 = vdwg.mxu0
      %v3518 = vadd.f32 %v3383, %v3499
      %v3519 = vadd.f32 %v3384, %v3501
      %v3520 = vadd.f32 %v3385, %v3504
      %v3521 = vadd.f32 %v3386, %v3506
      %v3522 = vadd.f32 %v3387, %v3509
      %v3523 = vadd.f32 %v3388, %v3511
      %v3524 = vadd.f32 %v3389, %v3514
      %v3525 = vadd.f32 %v3390, %v3516
      %v3526 = vld [vmem:[%s3391] sm:$0xf]
      %v3527 = vld [vmem:[%s3391 + $0x4] sm:$0x1]
      %v3528 = vld [vmem:[%s3391 + $0x8] sm:$0xf]
      %v3529 = vld [vmem:[%s3391 + $0xc] sm:$0x1]
      %v3530 = vld [vmem:[%s3391 + $0x10] sm:$0xf]
      %v3531 = vld [vmem:[%s3391 + $0x14] sm:$0x1]
      %v3532 = vld [vmem:[%s3391 + $0x18] sm:$0xf]
      %v3533 = vld [vmem:[%s3391 + $0x1c] sm:$0x1]
      %v3534 = vld [vmem:[%s3391 + $0x20] sm:$0xf]
      %v3535 = vld [vmem:[%s3391 + $0x24] sm:$0x1]
      %v3536 = vld [vmem:[%s3391 + $0x28] sm:$0xf]
      %v3537 = vld [vmem:[%s3391 + $0x2c] sm:$0x1]
      %v3538 = vld [vmem:[%s3391 + $0x30] sm:$0xf]
      %v3539 = vld [vmem:[%s3391 + $0x34] sm:$0x1]
      %v3540 = vld [vmem:[%s3391 + $0x38] sm:$0xf]
      %v3541 = vld [vmem:[%s3391 + $0x3c] sm:$0x1]
      %v3543 = vshrl.u32 %v3526, 16
      %v3545 = vrot.slane %v3543, 4
      %v3546 = vshll.u32 %v3526, 16
      %v3548 = vrot.slane %v3546, 5
      %v3549 = vor.u32 %v3545, %v3548
      %v3550 = vrot.slane %v3549, 4
      %v3552 = vshll.u32 %v3527, 16
      %v3554 = vrot.slane %v3552, 5
      %v3555 = vsel %vm505, %v3550, %v3554
      %v3557 = vshrl.u32 %v3528, 16
      %v3559 = vrot.slane %v3557, 4
      %v3560 = vshll.u32 %v3528, 16
      %v3562 = vrot.slane %v3560, 5
      %v3563 = vor.u32 %v3559, %v3562
      %v3564 = vrot.slane %v3563, 4
      %v3566 = vshll.u32 %v3529, 16
      %v3568 = vrot.slane %v3566, 5
      %v3569 = vsel %vm505, %v3564, %v3568
      %v3571 = vshrl.u32 %v3530, 16
      %v3573 = vrot.slane %v3571, 4
      %v3574 = vshll.u32 %v3530, 16
      %v3576 = vrot.slane %v3574, 5
      %v3577 = vor.u32 %v3573, %v3576
      %v3578 = vrot.slane %v3577, 4
      %v3580 = vshll.u32 %v3531, 16
      %v3582 = vrot.slane %v3580, 5
      %v3583 = vsel %vm505, %v3578, %v3582
      %v3585 = vshrl.u32 %v3532, 16
      %v3587 = vrot.slane %v3585, 4
      %v3588 = vshll.u32 %v3532, 16
      %v3590 = vrot.slane %v3588, 5
      %v3591 = vor.u32 %v3587, %v3590
      %v3592 = vrot.slane %v3591, 4
      %v3594 = vshll.u32 %v3533, 16
      %v3596 = vrot.slane %v3594, 5
      %v3597 = vsel %vm505, %v3592, %v3596
      %v3599 = vshrl.u32 %v3534, 16
      %v3601 = vrot.slane %v3599, 4
      %v3602 = vshll.u32 %v3534, 16
      %v3604 = vrot.slane %v3602, 5
      %v3605 = vor.u32 %v3601, %v3604
      %v3606 = vrot.slane %v3605, 4
      %v3608 = vshll.u32 %v3535, 16
      %v3610 = vrot.slane %v3608, 5
      %v3611 = vsel %vm505, %v3606, %v3610
      %v3613 = vshrl.u32 %v3536, 16
      %v3615 = vrot.slane %v3613, 4
      %v3616 = vshll.u32 %v3536, 16
      %v3618 = vrot.slane %v3616, 5
      %v3619 = vor.u32 %v3615, %v3618
      %v3620 = vrot.slane %v3619, 4
      %v3622 = vshll.u32 %v3537, 16
      %v3624 = vrot.slane %v3622, 5
      %v3625 = vsel %vm505, %v3620, %v3624
      %v3627 = vshrl.u32 %v3538, 16
      %v3629 = vrot.slane %v3627, 4
      %v3630 = vshll.u32 %v3538, 16
      %v3632 = vrot.slane %v3630, 5
      %v3633 = vor.u32 %v3629, %v3632
      %v3634 = vrot.slane %v3633, 4
      %v3636 = vshll.u32 %v3539, 16
      %v3638 = vrot.slane %v3636, 5
      %v3639 = vsel %vm505, %v3634, %v3638
      %v3641 = vshrl.u32 %v3540, 16
      %v3643 = vrot.slane %v3641, 4
      %v3644 = vshll.u32 %v3540, 16
      %v3646 = vrot.slane %v3644, 5
      %v3647 = vor.u32 %v3643, %v3646
      %v3648 = vrot.slane %v3647, 4
      %v3650 = vshll.u32 %v3541, 16
      %v3652 = vrot.slane %v3650, 5
      %v3653 = vsel %vm505, %v3648, %v3652
      %s3654 = scalar_lea.vmem %s3, 448
      %v3655 = vld [vmem:[%s3654] sm:$0xf]
      %v3656 = vld [vmem:[%s3654 + $0x4] sm:$0xf]
      %v3657 = vld [vmem:[%s3654 + $0x8] sm:$0xf]
      %v3658 = vld [vmem:[%s3654 + $0xc] sm:$0xf]
      %v3659 = vld [vmem:[%s3654 + $0x10] sm:$0xf]
      %v3660 = vld [vmem:[%s3654 + $0x14] sm:$0xf]
      %v3661 = vld [vmem:[%s3654 + $0x18] sm:$0xf]
      %v3662 = vld [vmem:[%s3654 + $0x1c] sm:$0xf]
      %v3663 = vld [vmem:[%s3654 + $0x20] sm:$0xf]
      %v3664 = vld [vmem:[%s3654 + $0x24] sm:$0xf]
      %v3665 = vld [vmem:[%s3654 + $0x28] sm:$0xf]
      %v3666 = vld [vmem:[%s3654 + $0x2c] sm:$0xf]
      %v3667 = vld [vmem:[%s3654 + $0x30] sm:$0xf]
      %v3668 = vld [vmem:[%s3654 + $0x34] sm:$0xf]
      %v3669 = vld [vmem:[%s3654 + $0x38] sm:$0xf]
      %v3670 = vld [vmem:[%s3654 + $0x3c] sm:$0xf]
      %v3671 = vunpack.c.l.b16 %v3555
      %v3672 = vunpack.c.l.b16 %v3569
      %v3673 = vunpack.c.l.b16 %v3583
      %v3674 = vunpack.c.l.b16 %v3597
      %v3675 = vunpack.c.l.b16 %v3611
      %v3676 = vunpack.c.l.b16 %v3625
      %v3677 = vunpack.c.l.b16 %v3639
      %v3678 = vunpack.c.l.b16 %v3653
      %v3679 = vpack.c.b16 %v3672, %v3671
      %v3680 = vpack.c.b16 %v3674, %v3673
      %v3681 = vpack.c.b16 %v3676, %v3675
      %v3682 = vpack.c.b16 %v3678, %v3677
      %v3703 = vunpack.c.l.b16 %v3655
      %v3704 = vunpack.c.l.b16 %v3656
      %v3705 = vunpack.c.l.b16 %v3657
      %v3706 = vunpack.c.l.b16 %v3658
      %v3707 = vunpack.c.l.b16 %v3659
      %v3708 = vunpack.c.l.b16 %v3660
      %v3709 = vunpack.c.l.b16 %v3661
      %v3710 = vunpack.c.l.b16 %v3662
      %v3711 = vunpack.c.l.b16 %v3663
      %v3712 = vunpack.c.l.b16 %v3664
      %v3713 = vunpack.c.l.b16 %v3665
      %v3714 = vunpack.c.l.b16 %v3666
      %v3715 = vunpack.c.l.b16 %v3667
      %v3716 = vunpack.c.l.b16 %v3668
      %v3717 = vunpack.c.l.b16 %v3669
      %v3718 = vunpack.c.l.b16 %v3670
      %v3719 = vpack.c.b16 %v3704, %v3703
      %v3720 = vpack.c.b16 %v3706, %v3705
      %v3721 = vpack.c.b16 %v3708, %v3707
      %v3722 = vpack.c.b16 %v3710, %v3709
      %v3723 = vpack.c.b16 %v3712, %v3711
      %v3724 = vpack.c.b16 %v3714, %v3713
      %v3725 = vpack.c.b16 %v3716, %v3715
      %v3726 = vpack.c.b16 %v3718, %v3717
      %3735 = vmatpush.bf16.msra.mxu0 %v3726
      %3736 = vmatpush.bf16.msra.mxu0 %v3725
      %3737 = vmatpush.bf16.msra.mxu0 %v3724
      %3738 = vmatpush.bf16.msra.mxu0 %v3723
      %3739 = vmatpush.bf16.msra.mxu0 %v3722
      %3740 = vmatpush.bf16.msra.mxu0 %v3721
      %3741 = vmatpush.bf16.msra.mxu0 %v3720
      %3742 = vmatpush.bf16.msra.mxu0 %v3719
      %3743 = vmatmul.bf16.gmra.mxu0 %v3679
      %v3744 = vpop.f32.mrf.mxu0
      %v3745 = vadd.f32 0.0, %v3744
      %v3746 = vpop.f32.mrf.mxu0
      %v3747 = vadd.f32 0.0, %v3746
      %3748 = vmatmul.bf16.gmra.mxu0 %v3680
      %v3749 = vpop.f32.mrf.mxu0
      %v3750 = vadd.f32 0.0, %v3749
      %v3751 = vpop.f32.mrf.mxu0
      %v3752 = vadd.f32 0.0, %v3751
      %3753 = vmatmul.bf16.gmra.mxu0 %v3681
      %v3754 = vpop.f32.mrf.mxu0
      %v3755 = vadd.f32 0.0, %v3754
      %v3756 = vpop.f32.mrf.mxu0
      %v3757 = vadd.f32 0.0, %v3756
      %3758 = vmatmul.bf16.gmra.mxu0 %v3682
      %v3759 = vpop.f32.mrf.mxu0
      %v3760 = vadd.f32 0.0, %v3759
      %v3761 = vpop.f32.mrf.mxu0
      %v3762 = vadd.f32 0.0, %v3761
      %3763 = vdwg.mxu0
      %v3764 = vadd.f32 %v3518, %v3745
      %v3765 = vadd.f32 %v3519, %v3747
      %v3766 = vadd.f32 %v3520, %v3750
      %v3767 = vadd.f32 %v3521, %v3752
      %v3768 = vadd.f32 %v3522, %v3755
      %v3769 = vadd.f32 %v3523, %v3757
      %v3770 = vadd.f32 %v3524, %v3760
      %v3771 = vadd.f32 %v3525, %v3762
      %v3772 = vld [vmem:[%s3391] sm:$0xe]
      %v3773 = vld [vmem:[%s3391 + $0x8] sm:$0xe]
      %v3774 = vld [vmem:[%s3391 + $0x10] sm:$0xe]
      %v3775 = vld [vmem:[%s3391 + $0x18] sm:$0xe]
      %v3776 = vld [vmem:[%s3391 + $0x20] sm:$0xe]
      %v3777 = vld [vmem:[%s3391 + $0x28] sm:$0xe]
      %v3778 = vld [vmem:[%s3391 + $0x30] sm:$0xe]
      %v3779 = vld [vmem:[%s3391 + $0x38] sm:$0xe]
      %v3796 = vrot.slane %v3772, 5
      %v3797 = vrot.slane %v3796, 4
      %v3798 = vrot.slane %v3527, 5
      %v3799 = vsel %vm855, %v3797, %v3798
      %v3800 = vrot.slane %v3773, 5
      %v3801 = vrot.slane %v3800, 4
      %v3802 = vrot.slane %v3529, 5
      %v3803 = vsel %vm855, %v3801, %v3802
      %v3804 = vrot.slane %v3774, 5
      %v3805 = vrot.slane %v3804, 4
      %v3806 = vrot.slane %v3531, 5
      %v3807 = vsel %vm855, %v3805, %v3806
      %v3808 = vrot.slane %v3775, 5
      %v3809 = vrot.slane %v3808, 4
      %v3810 = vrot.slane %v3533, 5
      %v3811 = vsel %vm855, %v3809, %v3810
      %v3812 = vrot.slane %v3776, 5
      %v3813 = vrot.slane %v3812, 4
      %v3814 = vrot.slane %v3535, 5
      %v3815 = vsel %vm855, %v3813, %v3814
      %v3816 = vrot.slane %v3777, 5
      %v3817 = vrot.slane %v3816, 4
      %v3818 = vrot.slane %v3537, 5
      %v3819 = vsel %vm855, %v3817, %v3818
      %v3820 = vrot.slane %v3778, 5
      %v3821 = vrot.slane %v3820, 4
      %v3822 = vrot.slane %v3539, 5
      %v3823 = vsel %vm855, %v3821, %v3822
      %v3824 = vrot.slane %v3779, 5
      %v3825 = vrot.slane %v3824, 4
      %v3826 = vrot.slane %v3541, 5
      %v3827 = vsel %vm855, %v3825, %v3826
      %s3828 = scalar_lea.vmem %s3, 512
      %v3829 = vld [vmem:[%s3828] sm:$0xf]
      %v3830 = vld [vmem:[%s3828 + $0x4] sm:$0xf]
      %v3831 = vld [vmem:[%s3828 + $0x8] sm:$0xf]
      %v3832 = vld [vmem:[%s3828 + $0xc] sm:$0xf]
      %v3833 = vld [vmem:[%s3828 + $0x10] sm:$0xf]
      %v3834 = vld [vmem:[%s3828 + $0x14] sm:$0xf]
      %v3835 = vld [vmem:[%s3828 + $0x18] sm:$0xf]
      %v3836 = vld [vmem:[%s3828 + $0x1c] sm:$0xf]
      %v3837 = vld [vmem:[%s3828 + $0x20] sm:$0xf]
      %v3838 = vld [vmem:[%s3828 + $0x24] sm:$0xf]
      %v3839 = vld [vmem:[%s3828 + $0x28] sm:$0xf]
      %v3840 = vld [vmem:[%s3828 + $0x2c] sm:$0xf]
      %v3841 = vld [vmem:[%s3828 + $0x30] sm:$0xf]
      %v3842 = vld [vmem:[%s3828 + $0x34] sm:$0xf]
      %v3843 = vld [vmem:[%s3828 + $0x38] sm:$0xf]
      %v3844 = vld [vmem:[%s3828 + $0x3c] sm:$0xf]
      %v3845 = vunpack.c.l.b16 %v3799
      %v3846 = vunpack.c.l.b16 %v3803
      %v3847 = vunpack.c.l.b16 %v3807
      %v3848 = vunpack.c.l.b16 %v3811
      %v3849 = vunpack.c.l.b16 %v3815
      %v3850 = vunpack.c.l.b16 %v3819
      %v3851 = vunpack.c.l.b16 %v3823
      %v3852 = vunpack.c.l.b16 %v3827
      %v3853 = vpack.c.b16 %v3846, %v3845
      %v3854 = vpack.c.b16 %v3848, %v3847
      %v3855 = vpack.c.b16 %v3850, %v3849
      %v3856 = vpack.c.b16 %v3852, %v3851
      %v3877 = vunpack.c.l.b16 %v3829
      %v3878 = vunpack.c.l.b16 %v3830
      %v3879 = vunpack.c.l.b16 %v3831
      %v3880 = vunpack.c.l.b16 %v3832
      %v3881 = vunpack.c.l.b16 %v3833
      %v3882 = vunpack.c.l.b16 %v3834
      %v3883 = vunpack.c.l.b16 %v3835
      %v3884 = vunpack.c.l.b16 %v3836
      %v3885 = vunpack.c.l.b16 %v3837
      %v3886 = vunpack.c.l.b16 %v3838
      %v3887 = vunpack.c.l.b16 %v3839
      %v3888 = vunpack.c.l.b16 %v3840
      %v3889 = vunpack.c.l.b16 %v3841
      %v3890 = vunpack.c.l.b16 %v3842
      %v3891 = vunpack.c.l.b16 %v3843
      %v3892 = vunpack.c.l.b16 %v3844
      %v3893 = vpack.c.b16 %v3878, %v3877
      %v3894 = vpack.c.b16 %v3880, %v3879
      %v3895 = vpack.c.b16 %v3882, %v3881
      %v3896 = vpack.c.b16 %v3884, %v3883
      %v3897 = vpack.c.b16 %v3886, %v3885
      %v3898 = vpack.c.b16 %v3888, %v3887
      %v3899 = vpack.c.b16 %v3890, %v3889
      %v3900 = vpack.c.b16 %v3892, %v3891
      %3909 = vmatpush.bf16.msra.mxu0 %v3900
      %3910 = vmatpush.bf16.msra.mxu0 %v3899
      %3911 = vmatpush.bf16.msra.mxu0 %v3898
      %3912 = vmatpush.bf16.msra.mxu0 %v3897
      %3913 = vmatpush.bf16.msra.mxu0 %v3896
      %3914 = vmatpush.bf16.msra.mxu0 %v3895
      %3915 = vmatpush.bf16.msra.mxu0 %v3894
      %3916 = vmatpush.bf16.msra.mxu0 %v3893
      %3917 = vmatmul.bf16.gmra.mxu0 %v3853
      %v3918 = vpop.f32.mrf.mxu0
      %v3919 = vadd.f32 0.0, %v3918
      %v3920 = vpop.f32.mrf.mxu0
      %v3921 = vadd.f32 0.0, %v3920
      %3922 = vmatmul.bf16.gmra.mxu0 %v3854
      %v3923 = vpop.f32.mrf.mxu0
      %v3924 = vadd.f32 0.0, %v3923
      %v3925 = vpop.f32.mrf.mxu0
      %v3926 = vadd.f32 0.0, %v3925
      %3927 = vmatmul.bf16.gmra.mxu0 %v3855
      %v3928 = vpop.f32.mrf.mxu0
      %v3929 = vadd.f32 0.0, %v3928
      %v3930 = vpop.f32.mrf.mxu0
      %v3931 = vadd.f32 0.0, %v3930
      %3932 = vmatmul.bf16.gmra.mxu0 %v3856
      %v3933 = vpop.f32.mrf.mxu0
      %v3934 = vadd.f32 0.0, %v3933
      %v3935 = vpop.f32.mrf.mxu0
      %v3936 = vadd.f32 0.0, %v3935
      %3937 = vdwg.mxu0
      %v3938 = vadd.f32 %v3764, %v3919
      %v3939 = vadd.f32 %v3765, %v3921
      %v3940 = vadd.f32 %v3766, %v3924
      %v3941 = vadd.f32 %v3767, %v3926
      %v3942 = vadd.f32 %v3768, %v3929
      %v3943 = vadd.f32 %v3769, %v3931
      %v3944 = vadd.f32 %v3770, %v3934
      %v3945 = vadd.f32 %v3771, %v3936
      %v3946 = vld [vmem:[%s4] sm:$0x1]
      %v3948 = vperm.slane %v3946, 0
      %v3950 = vadd.f32 %v3938, %v3948
      %v3951 = vadd.f32 %v3939, %v3948
      %v3952 = vadd.f32 %v3940, %v3948
      %v3953 = vadd.f32 %v3941, %v3948
      %v3954 = vadd.f32 %v3942, %v3948
      %v3955 = vadd.f32 %v3943, %v3948
      %v3956 = vadd.f32 %v3944, %v3948
      %v3957 = vadd.f32 %v3945, %v3948
      %vm3958 = vcmp.ge.f32.partialorder %v3950, 0.0
      %vm3959 = vcmp.ge.f32.partialorder %v3951, 0.0
      %vm3960 = vcmp.ge.f32.partialorder %v3952, 0.0
      %vm3961 = vcmp.ge.f32.partialorder %v3953, 0.0
      %vm3962 = vcmp.ge.f32.partialorder %v3954, 0.0
      %vm3963 = vcmp.ge.f32.partialorder %v3955, 0.0
      %vm3964 = vcmp.ge.f32.partialorder %v3956, 0.0
      %vm3965 = vcmp.ge.f32.partialorder %v3957, 0.0
      %v3966 = vmul.f32 %v3950, 0.01
      %v3967 = vmul.f32 %v3951, 0.01
      %v3968 = vmul.f32 %v3952, 0.01
      %v3969 = vmul.f32 %v3953, 0.01
      %v3970 = vmul.f32 %v3954, 0.01
      %v3971 = vmul.f32 %v3955, 0.01
      %v3972 = vmul.f32 %v3956, 0.01
      %v3973 = vmul.f32 %v3957, 0.01
      %v3974 = vsel %vm3958, %v3950, %v3966
      %v3975 = vsel %vm3959, %v3951, %v3967
      %v3976 = vsel %vm3960, %v3952, %v3968
      %v3977 = vsel %vm3961, %v3953, %v3969
      %v3978 = vsel %vm3962, %v3954, %v3970
      %v3979 = vsel %vm3963, %v3955, %v3971
      %v3980 = vsel %vm3964, %v3956, %v3972
      %v3981 = vsel %vm3965, %v3957, %v3973
      %v3982 = vld [vmem:[%s301] sm:$0xf]
      %v3983 = vld [vmem:[%s301 + $0x4] sm:$0xf]
      %v3984 = vld [vmem:[%s301 + $0x8] sm:$0xf]
      %v3985 = vld [vmem:[%s301 + $0xc] sm:$0xf]
      %v3986 = vld [vmem:[%s301 + $0x10] sm:$0xf]
      %v3987 = vld [vmem:[%s301 + $0x14] sm:$0xf]
      %v3988 = vld [vmem:[%s301 + $0x18] sm:$0xf]
      %v3989 = vld [vmem:[%s301 + $0x1c] sm:$0xf]
      %v3990 = vld [vmem:[%s6] sm:$0xf]
      %v3991 = vld [vmem:[%s6 + $0x4] sm:$0xf]
      %v3992 = vld [vmem:[%s6 + $0x8] sm:$0xf]
      %v3993 = vld [vmem:[%s6 + $0xc] sm:$0xf]
      %v3994 = vld [vmem:[%s6 + $0x10] sm:$0xf]
      %v3995 = vld [vmem:[%s6 + $0x14] sm:$0xf]
      %v3996 = vld [vmem:[%s6 + $0x18] sm:$0xf]
      %v3997 = vld [vmem:[%s6 + $0x1c] sm:$0xf]
      %v3998 = vld [vmem:[%s6 + $0x20] sm:$0xf]
      %v3999 = vld [vmem:[%s6 + $0x24] sm:$0xf]
      %v4000 = vld [vmem:[%s6 + $0x28] sm:$0xf]
      %v4001 = vld [vmem:[%s6 + $0x2c] sm:$0xf]
      %v4002 = vld [vmem:[%s6 + $0x30] sm:$0xf]
      %v4003 = vld [vmem:[%s6 + $0x34] sm:$0xf]
      %v4004 = vld [vmem:[%s6 + $0x38] sm:$0xf]
      %v4005 = vld [vmem:[%s6 + $0x3c] sm:$0xf]
      %v4006 = vld [vmem:[%s7] sm:$0x1]
      %v4008 = vperm.slane %v4006, 0
      %v4018 = vunpack.c.l.b16 %v3982
      %v4019 = vunpack.c.l.b16 %v3983
      %v4020 = vunpack.c.l.b16 %v3984
      %v4021 = vunpack.c.l.b16 %v3985
      %v4022 = vunpack.c.l.b16 %v3986
      %v4023 = vunpack.c.l.b16 %v3987
      %v4024 = vunpack.c.l.b16 %v3988
      %v4025 = vunpack.c.l.b16 %v3989
      %v4026 = vpack.c.b16 %v4019, %v4018
      %v4027 = vpack.c.b16 %v4021, %v4020
      %v4028 = vpack.c.b16 %v4023, %v4022
      %v4029 = vpack.c.b16 %v4025, %v4024
      %v4050 = vunpack.c.l.b16 %v3990
      %v4051 = vunpack.c.l.b16 %v3991
      %v4052 = vunpack.c.l.b16 %v3992
      %v4053 = vunpack.c.l.b16 %v3993
      %v4054 = vunpack.c.l.b16 %v3994
      %v4055 = vunpack.c.l.b16 %v3995
      %v4056 = vunpack.c.l.b16 %v3996
      %v4057 = vunpack.c.l.b16 %v3997
      %v4058 = vunpack.c.l.b16 %v3998
      %v4059 = vunpack.c.l.b16 %v3999
      %v4060 = vunpack.c.l.b16 %v4000
      %v4061 = vunpack.c.l.b16 %v4001
      %v4062 = vunpack.c.l.b16 %v4002
      %v4063 = vunpack.c.l.b16 %v4003
      %v4064 = vunpack.c.l.b16 %v4004
      %v4065 = vunpack.c.l.b16 %v4005
      %v4066 = vpack.c.b16 %v4051, %v4050
      %v4067 = vpack.c.b16 %v4053, %v4052
      %v4068 = vpack.c.b16 %v4055, %v4054
      %v4069 = vpack.c.b16 %v4057, %v4056
      %v4070 = vpack.c.b16 %v4059, %v4058
      %v4071 = vpack.c.b16 %v4061, %v4060
      %v4072 = vpack.c.b16 %v4063, %v4062
      %v4073 = vpack.c.b16 %v4065, %v4064
      %4082 = vmatpush.bf16.msra.mxu0 %v4073
      %4083 = vmatpush.bf16.msra.mxu0 %v4072
      %4084 = vmatpush.bf16.msra.mxu0 %v4071
      %4085 = vmatpush.bf16.msra.mxu0 %v4070
      %4086 = vmatpush.bf16.msra.mxu0 %v4069
      %4087 = vmatpush.bf16.msra.mxu0 %v4068
      %4088 = vmatpush.bf16.msra.mxu0 %v4067
      %4089 = vmatpush.bf16.msra.mxu0 %v4066
      %4090 = vmatmul.bf16.gmra.mxu0 %v4026
      %v4091 = vpop.f32.mrf.mxu0
      %v4092 = vadd.f32 %v4008, %v4091
      %v4093 = vpop.f32.mrf.mxu0
      %v4094 = vadd.f32 %v4008, %v4093
      %4095 = vmatmul.bf16.gmra.mxu0 %v4027
      %v4096 = vpop.f32.mrf.mxu0
      %v4097 = vadd.f32 %v4008, %v4096
      %v4098 = vpop.f32.mrf.mxu0
      %v4099 = vadd.f32 %v4008, %v4098
      %4100 = vmatmul.bf16.gmra.mxu0 %v4028
      %v4101 = vpop.f32.mrf.mxu0
      %v4102 = vadd.f32 %v4008, %v4101
      %v4103 = vpop.f32.mrf.mxu0
      %v4104 = vadd.f32 %v4008, %v4103
      %4105 = vmatmul.bf16.gmra.mxu0 %v4029
      %v4106 = vpop.f32.mrf.mxu0
      %v4107 = vadd.f32 %v4008, %v4106
      %v4108 = vpop.f32.mrf.mxu0
      %v4109 = vadd.f32 %v4008, %v4108
      %4110 = vdwg.mxu0
      %s4111 = sld [smem:[#allocation4]]
      %v4112 = vstv %s4111
      %v4113 = vmul.f32 %v4112, %v3974
      %v4114 = vmul.f32 %v4112, %v3975
      %v4115 = vmul.f32 %v4112, %v3976
      %v4116 = vmul.f32 %v4112, %v3977
      %v4117 = vmul.f32 %v4112, %v3978
      %v4118 = vmul.f32 %v4112, %v3979
      %v4119 = vmul.f32 %v4112, %v3980
      %v4120 = vmul.f32 %v4112, %v3981
      %v4121 = vadd.f32 %v4092, %v4113
      %v4122 = vadd.f32 %v4094, %v4114
      %v4123 = vadd.f32 %v4097, %v4115
      %v4124 = vadd.f32 %v4099, %v4116
      %v4125 = vadd.f32 %v4102, %v4117
      %v4126 = vadd.f32 %v4104, %v4118
      %v4127 = vadd.f32 %v4107, %v4119
      %v4128 = vadd.f32 %v4109, %v4120
      %v4129 = vpack.c.bf16 %v4121, %v4121
      %v4130 = vpack.c.bf16 %v4122, %v4122
      %v4131 = vpack.c.bf16 %v4123, %v4123
      %v4132 = vpack.c.bf16 %v4124, %v4124
      %v4133 = vpack.c.bf16 %v4125, %v4125
      %v4134 = vpack.c.bf16 %v4126, %v4126
      %v4135 = vpack.c.bf16 %v4127, %v4127
      %v4136 = vpack.c.bf16 %v4128, %v4128
      %4137 = vst [vmem:[%s306] sm:$0xf] %v4129
      %4138 = vst [vmem:[%s306 + $0x4] sm:$0xf] %v4130
      %4139 = vst [vmem:[%s306 + $0x8] sm:$0xf] %v4131
      %4140 = vst [vmem:[%s306 + $0xc] sm:$0xf] %v4132
      %4141 = vst [vmem:[%s306 + $0x10] sm:$0xf] %v4133
      %4142 = vst [vmem:[%s306 + $0x14] sm:$0xf] %v4134
      %4143 = vst [vmem:[%s306 + $0x18] sm:$0xf] %v4135
      %4144 = vst [vmem:[%s306 + $0x1c] sm:$0xf] %v4136
      %p4145 = scmp.lt.s32.totalorder %s20, 1
      %s4146 = scalar_select %p4145, %s20, 1
      %s4147 = smul.addr %s4146, 8
      %s4148 = smul.addr %s4147, 4
      %s4149 = scalar_lea.vmem %s8, %s4148
      // Predicated region
      $region53: #{unet_forward.13} parent=51 // pred_check
        %p4150 = pneg %p211
      $region54: #{unet_forward.13} parent=51 // pred_check_branch
        %4152 = sbr.rel (%p4150) target = $region56
      $region55: #{unet_forward.13} parent=51 // pred_region
        _
      $region56: #{unet_forward.13} parent=51 // pred_fallthru
        _
    $region52: #{unet_forward.13} parent=5 // pred_fallthru
      _
    %p4153 = scmp.le.s32.totalorder 2, %s15
    // Predicated region
    $region57: #{unet_forward.13} parent=5 // pred_check
      %p4154 = pneg %p4153
    $region58: #{unet_forward.13} parent=5 // pred_check_branch
      %4156 = sbr.rel (%p4154) target = $region60
    $region59: #{unet_forward.13} parent=5 // pred_region
      %s4157 = ssub.s32 %s15, 2
      // Predicated region
      $region61: #{unet_forward.13} parent=59 // pred_check
        %p4158 = pneg %p217
      $region62: #{unet_forward.13} parent=59 // pred_check_branch
        %4160 = sbr.rel (%p4158) target = $region64
      $region63: #{unet_forward.13} parent=59 // pred_region
        %p4161 = scmp.lt.s32.totalorder %s21, 1
        %s4162 = scalar_select %p4161, %s21, 1
        %s4163 = smul.addr %s4162, 8
        %s4164 = smul.addr %s4163, 4
        %s4165 = scalar_lea.vmem %s8, %s4164
      $region64: #{unet_forward.13} parent=59 // pred_fallthru
        _
    $region60: #{unet_forward.13} parent=5 // pred_fallthru
      _
  $region6: #{unet_forward.13} parent=0 // loop_footer
    %s19 = sadd.s32 1, %s15
  $region7: #{unet_forward.13} parent=0 // loop_footer_branch
    %14 = sbr.rel target = $region3
  $region8: #{unet_forward.13} parent=0 // loop_exit
    _

// kernel: unet_forward.9
$region0: #{unet_forward.9}
  #allocation0 [shape = 'u32[]', space=smem, size = 0x4, offset = 0x4, fixed_abs, tag = 'smem constant byte address 0x4 - core index']
  #allocation1 [shape = 'u32[72,128]{1,0:T(1,128)}', space=vmem, size = 0x9000, scoped, tag = 'internal scratch']
  #allocation2 [shape = 'bf16[10,10,128]{2,1,0:T(8,128)(2,1)}', space=vmem, size = 0xa000, scoped, tag = 'scratch operand']
  #allocation3 [shape = 'bf16[10,10,128]{2,1,0:T(8,128)(2,1)}', space=vmem, size = 0xa000, scoped, tag = 'scratch operand']
  #allocation4 [shape = 'f32[1,1]{1,0:T(1,128)S(6)}', space=smem, size = 0x200, scoped, tag = 'scoped memory for unet_forward.9']
  %s0 = inlined_call_operand.vmem [shape: bf16[2,8,8,128], index: 0, kind: input, shape index: {}]
  %s1 = inlined_call_operand.vmem [shape: bf16[9,128,128], index: 1, kind: input, shape index: {}]
  %s2 = inlined_call_operand.vmem [shape: f32[1,128], index: 2, kind: input, shape index: {}]
  %s3 = inlined_call_operand.vmem [shape: bf16[9,128,128], index: 3, kind: input, shape index: {}]
  %s4 = inlined_call_operand.vmem [shape: f32[1,128], index: 4, kind: input, shape index: {}]
  %s5 = inlined_call_operand.<no memory space> [shape: f32[1,1], index: 5, kind: input, shape index: {}]
  %s6 = inlined_call_operand.vmem [shape: bf16[2,8,8,128], index: 6, kind: output, shape index: {}]
  %s7 = sld [smem:[#allocation0]]
  $region57: #{unet_forward.9} parent=0
    _
  %s9 = ssub.s32 1, %s7
  %s10 = scalar_select 0, %s9, %s7
  %11 = sst [smem:[#allocation4]] %s5
  loop: start=0, step=1, limit=4
  $region2: #{unet_forward.9} parent=0 // loop_pre_header
    _
  $region3: #{unet_forward.9} parent=0 // loop_header
    %s13 = sphi 0, %s17
    %p14 = scmp.ge.s32.totalorder %s13, 4
    %s23 = sphi 0, %s25
    %s26 = sphi 0, %s23
    %s27 = sphi 0, %s26
    %s43 = sphi 0, %s27
    %s47 = sphi 0, %s47
    %s49 = sphi 0, %s47
    %s50 = sphi 0, %s49
    %s64 = sphi 0, %s50
    %s68 = sphi 0, %s68
    %s70 = sphi 0, %s68
    %s71 = sphi 0, %s70
    %s85 = sphi 0, %s71
    %s89 = sphi 0, %s89
    %s91 = sphi 0, %s89
    %s92 = sphi 0, %s91
    %s106 = sphi 0, %s92
    %s110 = sphi 0, %s110
    %s112 = sphi 0, %s110
    %s113 = sphi 0, %s112
    %s127 = sphi 0, %s113
    %s131 = sphi 0, %s131
    %s133 = sphi 0, %s131
    %s134 = sphi 0, %s133
    %s148 = sphi 0, %s134
    %s154 = sphi 0, %s156
    %s157 = sphi 0, %s154
    %s158 = sphi 0, %s157
    %s174 = sphi 0, %s158
  $region4: #{unet_forward.9} parent=0 // loop_header_branch
    %16 = sbr.rel (%p14) target = $region8
  $region5: #{unet_forward.9} parent=0 // loop_body
    %s18 = ssub.s32 %s13, 1
    %s19 = ssub.s32 %s13, 2
    %s20 = sadd.s32 %s13, 1
    %s21 = ssub.s32 %s13, %s20
    %p22 = scmp.eq.s32.totalorder %s21, 0
    %s24 = sadd.s32 %s23, 1
    %s25 = scalar_select %p22, %s23, %s24
    %p28 = pneg %p22
    %p29 = scmp.eq.s32.totalorder %s13, 1
    %p30 = por %p28, %p29
    %p31 = scmp.ne.s32.totalorder %s23, %s26
    %p32 = scmp.eq.s32.totalorder %s13, 0
    %p33 = por %p31, %p32
    %p34 = scmp.ne.s32.totalorder %s23, %s26
    %p35 = scmp.eq.s32.totalorder %s18, 1
    %p36 = por %p34, %p35
    %p37 = scmp.ne.s32.totalorder %s26, %s27
    %p38 = scmp.eq.s32.totalorder %s18, 0
    %p39 = por %p37, %p38
    %p40 = scmp.ne.s32.totalorder %s26, %s27
    %p41 = scmp.eq.s32.totalorder %s19, 1
    %p42 = por %p40, %p41
    %p44 = scmp.ne.s32.totalorder %s27, %s43
    %p45 = scmp.eq.s32.totalorder %s19, 0
    %p46 = por %p44, %p45
    %s48 = sadd.s32 %s47, 1
    %p51 = scmp.eq.s32.totalorder %s13, 1
    %p52 = scmp.ne.s32.totalorder %s47, %s49
    %p53 = scmp.eq.s32.totalorder %s13, 0
    %p54 = por %p52, %p53
    %p55 = scmp.ne.s32.totalorder %s47, %s49
    %p56 = scmp.eq.s32.totalorder %s18, 1
    %p57 = por %p55, %p56
    %p58 = scmp.ne.s32.totalorder %s49, %s50
    %p59 = scmp.eq.s32.totalorder %s18, 0
    %p60 = por %p58, %p59
    %p61 = scmp.ne.s32.totalorder %s49, %s50
    %p62 = scmp.eq.s32.totalorder %s19, 1
    %p63 = por %p61, %p62
    %p65 = scmp.ne.s32.totalorder %s50, %s64
    %p66 = scmp.eq.s32.totalorder %s19, 0
    %p67 = por %p65, %p66
    %s69 = sadd.s32 %s68, 1
    %p72 = scmp.eq.s32.totalorder %s13, 1
    %p73 = scmp.ne.s32.totalorder %s68, %s70
    %p74 = scmp.eq.s32.totalorder %s13, 0
    %p75 = por %p73, %p74
    %p76 = scmp.ne.s32.totalorder %s68, %s70
    %p77 = scmp.eq.s32.totalorder %s18, 1
    %p78 = por %p76, %p77
    %p79 = scmp.ne.s32.totalorder %s70, %s71
    %p80 = scmp.eq.s32.totalorder %s18, 0
    %p81 = por %p79, %p80
    %p82 = scmp.ne.s32.totalorder %s70, %s71
    %p83 = scmp.eq.s32.totalorder %s19, 1
    %p84 = por %p82, %p83
    %p86 = scmp.ne.s32.totalorder %s71, %s85
    %p87 = scmp.eq.s32.totalorder %s19, 0
    %p88 = por %p86, %p87
    %s90 = sadd.s32 %s89, 1
    %p93 = scmp.eq.s32.totalorder %s13, 1
    %p94 = scmp.ne.s32.totalorder %s89, %s91
    %p95 = scmp.eq.s32.totalorder %s13, 0
    %p96 = por %p94, %p95
    %p97 = scmp.ne.s32.totalorder %s89, %s91
    %p98 = scmp.eq.s32.totalorder %s18, 1
    %p99 = por %p97, %p98
    %p100 = scmp.ne.s32.totalorder %s91, %s92
    %p101 = scmp.eq.s32.totalorder %s18, 0
    %p102 = por %p100, %p101
    %p103 = scmp.ne.s32.totalorder %s91, %s92
    %p104 = scmp.eq.s32.totalorder %s19, 1
    %p105 = por %p103, %p104
    %p107 = scmp.ne.s32.totalorder %s92, %s106
    %p108 = scmp.eq.s32.totalorder %s19, 0
    %p109 = por %p107, %p108
    %s111 = sadd.s32 %s110, 1
    %p114 = scmp.eq.s32.totalorder %s13, 1
    %p115 = scmp.ne.s32.totalorder %s110, %s112
    %p116 = scmp.eq.s32.totalorder %s13, 0
    %p117 = por %p115, %p116
    %p118 = scmp.ne.s32.totalorder %s110, %s112
    %p119 = scmp.eq.s32.totalorder %s18, 1
    %p120 = por %p118, %p119
    %p121 = scmp.ne.s32.totalorder %s112, %s113
    %p122 = scmp.eq.s32.totalorder %s18, 0
    %p123 = por %p121, %p122
    %p124 = scmp.ne.s32.totalorder %s112, %s113
    %p125 = scmp.eq.s32.totalorder %s19, 1
    %p126 = por %p124, %p125
    %p128 = scmp.ne.s32.totalorder %s113, %s127
    %p129 = scmp.eq.s32.totalorder %s19, 0
    %p130 = por %p128, %p129
    %s132 = sadd.s32 %s131, 1
    %p135 = scmp.eq.s32.totalorder %s13, 1
    %p136 = scmp.ne.s32.totalorder %s131, %s133
    %p137 = scmp.eq.s32.totalorder %s13, 0
    %p138 = por %p136, %p137
    %p139 = scmp.ne.s32.totalorder %s131, %s133
    %p140 = scmp.eq.s32.totalorder %s18, 1
    %p141 = por %p139, %p140
    %p142 = scmp.ne.s32.totalorder %s133, %s134
    %p143 = scmp.eq.s32.totalorder %s18, 0
    %p144 = por %p142, %p143
    %p145 = scmp.ne.s32.totalorder %s133, %s134
    %p146 = scmp.eq.s32.totalorder %s19, 1
    %p147 = por %p145, %p146
    %p149 = scmp.ne.s32.totalorder %s134, %s148
    %p150 = scmp.eq.s32.totalorder %s19, 0
    %p151 = por %p149, %p150
    %s152 = ssub.s32 %s13, %s20
    %p153 = scmp.eq.s32.totalorder %s152, 0
    %s155 = sadd.s32 %s154, 1
    %s156 = scalar_select %p153, %s154, %s155
    %p159 = pneg %p153
    %p160 = scmp.eq.s32.totalorder %s13, 1
    %p161 = por %p159, %p160
    %p162 = scmp.ne.s32.totalorder %s154, %s157
    %p163 = scmp.eq.s32.totalorder %s13, 0
    %p164 = por %p162, %p163
    %p165 = scmp.ne.s32.totalorder %s154, %s157
    %p166 = scmp.eq.s32.totalorder %s18, 1
    %p167 = por %p165, %p166
    %p168 = scmp.ne.s32.totalorder %s157, %s158
    %p169 = scmp.eq.s32.totalorder %s18, 0
    %p170 = por %p168, %p169
    %p171 = scmp.ne.s32.totalorder %s157, %s158
    %p172 = scmp.eq.s32.totalorder %s19, 1
    %p173 = por %p171, %p172
    %p175 = scmp.ne.s32.totalorder %s158, %s174
    %p176 = scmp.eq.s32.totalorder %s19, 0
    %p177 = por %p175, %p176
    %p178 = scmp.le.s32.totalorder 1, %s13
    %p179 = scmp.lt.s32.totalorder %s13, 3
    %p180 = pnand %p178, %p179
    %p181 = pneg %p180
    // Predicated region
    $region9: #{unet_forward.9} parent=5 // pred_check
      _
    $region10: #{unet_forward.9} parent=5 // pred_check_branch
      %183 = sbr.rel (%p180) target = $region12
    $region11: #{unet_forward.9} parent=5 // pred_region
      %s184 = ssub.s32 %s13, 1
      // Predicated region
      $region13: #{unet_forward.9} parent=11 // pred_check
        %p185 = pneg %p60
      $region14: #{unet_forward.9} parent=11 // pred_check_branch
        %187 = sbr.rel (%p185) target = $region16
      $region15: #{unet_forward.9} parent=11 // pred_region
        _
      $region16: #{unet_forward.9} parent=11 // pred_fallthru
        _
      // Predicated region
      $region17: #{unet_forward.9} parent=11 // pred_check
        %p188 = pneg %p81
      $region18: #{unet_forward.9} parent=11 // pred_check_branch
        %190 = sbr.rel (%p188) target = $region20
      $region19: #{unet_forward.9} parent=11 // pred_region
        _
      $region20: #{unet_forward.9} parent=11 // pred_fallthru
        _
      // Predicated region
      $region21: #{unet_forward.9} parent=11 // pred_check
        %p191 = pneg %p102
      $region22: #{unet_forward.9} parent=11 // pred_check_branch
        %193 = sbr.rel (%p191) target = $region24
      $region23: #{unet_forward.9} parent=11 // pred_region
        _
      $region24: #{unet_forward.9} parent=11 // pred_fallthru
        _
      // Predicated region
      $region25: #{unet_forward.9} parent=11 // pred_check
        %p194 = pneg %p123
      $region26: #{unet_forward.9} parent=11 // pred_check_branch
        %196 = sbr.rel (%p194) target = $region28
      $region27: #{unet_forward.9} parent=11 // pred_region
        _
      $region28: #{unet_forward.9} parent=11 // pred_fallthru
        _
      // Predicated region
      $region29: #{unet_forward.9} parent=11 // pred_check
        %p197 = pneg %p144
      $region30: #{unet_forward.9} parent=11 // pred_check_branch
        %199 = sbr.rel (%p197) target = $region32
      $region31: #{unet_forward.9} parent=11 // pred_region
        _
      $region32: #{unet_forward.9} parent=11 // pred_fallthru
        _
    $region12: #{unet_forward.9} parent=5 // pred_fallthru
      _
    %p200 = scmp.lt.s32.totalorder %s13, 2
    // Predicated region
    $region33: #{unet_forward.9} parent=5 // pred_check
      %p201 = pneg %p200
    $region34: #{unet_forward.9} parent=5 // pred_check_branch
      %203 = sbr.rel (%p201) target = $region36
    $region35: #{unet_forward.9} parent=5 // pred_region
      // Predicated region
      $region37: #{unet_forward.9} parent=35 // pred_check
        %p204 = pneg %p33
      $region38: #{unet_forward.9} parent=35 // pred_check_branch
        %206 = sbr.rel (%p204) target = $region40
      $region39: #{unet_forward.9} parent=35 // pred_region
        %p207 = scmp.lt.s32.totalorder %s13, 1
        %s208 = scalar_select %p207, %s13, 1
        %s209 = smul.addr %s208, 8
        %s210 = smul.addr %s209, 4
        %s211 = scalar_lea.vmem %s0, %s210
      $region40: #{unet_forward.9} parent=35 // pred_fallthru
        _
    $region36: #{unet_forward.9} parent=5 // pred_fallthru
      _
    %p212 = scmp.le.s32.totalorder 1, %s13
    %p213 = scmp.lt.s32.totalorder %s13, 3
    %p214 = pnand %p212, %p213
    %p215 = pneg %p214
    // Predicated region
    $region41: #{unet_forward.9} parent=5 // pred_check
      _
    $region42: #{unet_forward.9} parent=5 // pred_check_branch
      %217 = sbr.rel (%p214) target = $region44
    $region43: #{unet_forward.9} parent=5 // pred_region
      %s218 = ssub.s32 %s13, 1
      %p219 = scmp.lt.s32.totalorder %s18, 1
      %s220 = scalar_select %p219, %s18, 1
      %s221 = smul.addr %s220, 8
      %s222 = smul.addr %s221, 4
      %s223 = scalar_lea.vmem %s0, %s222
      %p224 = pneg %p39
      %p225 = pneg %p36
      %p226 = pneg %p60
      %p227 = pneg %p57
      %p228 = pneg %p81
      %p229 = pneg %p78
      %p230 = pneg %p102
      %p231 = pneg %p99
      %p232 = pneg %p123
      %p233 = pneg %p120
      %p234 = pneg %p144
      %p235 = pneg %p141
      %p236 = pneg %p170
      %p237 = pneg %p167
      %p238 = scmp.lt.s32.totalorder %s18, 1
      %s239 = scalar_select %p238, %s18, 1
      %s240 = smul.addr %s239, 8
      %s241 = smul.addr %s240, 4
      %s242 = scalar_lea.vmem %s6, %s241
      %p243 = scmp.lt.s32.totalorder %s18, 1
      %s244 = scalar_select %p243, %s18, 1
      %s245 = smul.addr %s244, 8
      %s246 = smul.addr %s245, 4
      %s247 = scalar_lea.vmem %s0, %s246
      %p248 = scmp.lt.s32.totalorder %s18, 1
      %s249 = scalar_select %p248, %s18, 1
      %s250 = smul.addr %s249, 8
      %s251 = smul.addr %s250, 4
      %s252 = scalar_lea.vmem %s6, %s251
      %254 = vst [vmem:[#allocation2] sm:$0xf] 0
      %255 = vst [vmem:[#allocation2 + $0x4] sm:$0x1] 0
      %256 = vst [vmem:[#allocation2 + $0x8] sm:$0xf] 0
      %257 = vst [vmem:[#allocation2 + $0xc] sm:$0x1] 0
      %258 = vst [vmem:[#allocation2 + $0x10] sm:$0xf] 0
      %259 = vst [vmem:[#allocation2 + $0x14] sm:$0x1] 0
      %260 = vst [vmem:[#allocation2 + $0x18] sm:$0xf] 0
      %261 = vst [vmem:[#allocation2 + $0x1c] sm:$0x1] 0
      %262 = vst [vmem:[#allocation2 + $0x20] sm:$0xf] 0
      %263 = vst [vmem:[#allocation2 + $0x24] sm:$0x1] 0
      %264 = vst [vmem:[#allocation2 + $0x28] sm:$0xf] 0
      %265 = vst [vmem:[#allocation2 + $0x2c] sm:$0x1] 0
      %266 = vst [vmem:[#allocation2 + $0x30] sm:$0xf] 0
      %267 = vst [vmem:[#allocation2 + $0x34] sm:$0x1] 0
      %268 = vst [vmem:[#allocation2 + $0x38] sm:$0xf] 0
      %269 = vst [vmem:[#allocation2 + $0x3c] sm:$0x1] 0
      %270 = vst [vmem:[#allocation2 + $0x40] sm:$0xf] 0
      %271 = vst [vmem:[#allocation2 + $0x44] sm:$0x1] 0
      %272 = vst [vmem:[#allocation2 + $0x48] sm:$0xf] 0
      %273 = vst [vmem:[#allocation2 + $0x4c] sm:$0x1] 0
      %v274 = vld [vmem:[%s247] sm:$0xf]
      %v275 = vld [vmem:[%s247 + $0x4] sm:$0xf]
      %v276 = vld [vmem:[%s247 + $0x8] sm:$0xf]
      %v277 = vld [vmem:[%s247 + $0xc] sm:$0xf]
      %v278 = vld [vmem:[%s247 + $0x10] sm:$0xf]
      %v279 = vld [vmem:[%s247 + $0x14] sm:$0xf]
      %v280 = vld [vmem:[%s247 + $0x18] sm:$0xf]
      %v281 = vld [vmem:[%s247 + $0x1c] sm:$0xf]
      %v283 = vshrl.u32 %v274, 16
      %v285 = vrot.slane %v283, 7
      %v286 = vshll.u32 %v274, 16
      %v288 = vor.u32 %v285, %v286
      %v289 = vrot.slane %v285, 4
      %v291 = vshrl.u32 %v275, 16
      %v293 = vrot.slane %v291, 7
      %v294 = vshll.u32 %v275, 16
      %v296 = vor.u32 %v293, %v294
      %v297 = vrot.slane %v293, 4
      %v299 = vshrl.u32 %v276, 16
      %v301 = vrot.slane %v299, 7
      %v302 = vshll.u32 %v276, 16
      %v304 = vor.u32 %v301, %v302
      %v305 = vrot.slane %v301, 4
      %v307 = vshrl.u32 %v277, 16
      %v309 = vrot.slane %v307, 7
      %v310 = vshll.u32 %v277, 16
      %v312 = vor.u32 %v309, %v310
      %v313 = vrot.slane %v309, 4
      %v315 = vshrl.u32 %v278, 16
      %v317 = vrot.slane %v315, 7
      %v318 = vshll.u32 %v278, 16
      %v320 = vor.u32 %v317, %v318
      %v321 = vrot.slane %v317, 4
      %v323 = vshrl.u32 %v279, 16
      %v325 = vrot.slane %v323, 7
      %v326 = vshll.u32 %v279, 16
      %v328 = vor.u32 %v325, %v326
      %v329 = vrot.slane %v325, 4
      %v331 = vshrl.u32 %v280, 16
      %v333 = vrot.slane %v331, 7
      %v334 = vshll.u32 %v280, 16
      %v336 = vor.u32 %v333, %v334
      %v337 = vrot.slane %v333, 4
      %v339 = vshrl.u32 %v281, 16
      %v341 = vrot.slane %v339, 7
      %v342 = vshll.u32 %v281, 16
      %v344 = vor.u32 %v341, %v342
      %v345 = vrot.slane %v341, 4
      %s362 = scalar_lea.vmem [#allocation2], 8
      %vm363 = vcmask 1043456
      %vm364 = vsmask.f32 7938
      %vm365 = vmand %vm363, %vm364
      %v366 = vld [vmem:[%s362] sm:$0xf]
      %v367 = vsel %vm365, %v288, %v366
      %368 = vst [vmem:[%s362] sm:$0xf] %v367
      %vm369 = vcmask 1040384
      %vm370 = vsmask.f32 256
      %vm371 = vmand %vm369, %vm370
      %v372 = vld [vmem:[%s362 + $0x4] sm:$0x1]
      %v373 = vsel %vm371, %v289, %v372
      %374 = vst [vmem:[%s362 + $0x4] sm:$0x1] %v373
      %v375 = vld [vmem:[%s362 + $0x8] sm:$0xf]
      %v376 = vsel %vm365, %v296, %v375
      %377 = vst [vmem:[%s362 + $0x8] sm:$0xf] %v376
      %v378 = vld [vmem:[%s362 + $0xc] sm:$0x1]
      %v379 = vsel %vm371, %v297, %v378
      %380 = vst [vmem:[%s362 + $0xc] sm:$0x1] %v379
      %v381 = vld [vmem:[%s362 + $0x10] sm:$0xf]
      %v382 = vsel %vm365, %v304, %v381
      %383 = vst [vmem:[%s362 + $0x10] sm:$0xf] %v382
      %v384 = vld [vmem:[%s362 + $0x14] sm:$0x1]
      %v385 = vsel %vm371, %v305, %v384
      %386 = vst [vmem:[%s362 + $0x14] sm:$0x1] %v385
      %v387 = vld [vmem:[%s362 + $0x18] sm:$0xf]
      %v388 = vsel %vm365, %v312, %v387
      %389 = vst [vmem:[%s362 + $0x18] sm:$0xf] %v388
      %v390 = vld [vmem:[%s362 + $0x1c] sm:$0x1]
      %v391 = vsel %vm371, %v313, %v390
      %392 = vst [vmem:[%s362 + $0x1c] sm:$0x1] %v391
      %v393 = vld [vmem:[%s362 + $0x20] sm:$0xf]
      %v394 = vsel %vm365, %v320, %v393
      %395 = vst [vmem:[%s362 + $0x20] sm:$0xf] %v394
      %v396 = vld [vmem:[%s362 + $0x24] sm:$0x1]
      %v397 = vsel %vm371, %v321, %v396
      %398 = vst [vmem:[%s362 + $0x24] sm:$0x1] %v397
      %v399 = vld [vmem:[%s362 + $0x28] sm:$0xf]
      %v400 = vsel %vm365, %v328, %v399
      %401 = vst [vmem:[%s362 + $0x28] sm:$0xf] %v400
      %v402 = vld [vmem:[%s362 + $0x2c] sm:$0x1]
      %v403 = vsel %vm371, %v329, %v402
      %404 = vst [vmem:[%s362 + $0x2c] sm:$0x1] %v403
      %v405 = vld [vmem:[%s362 + $0x30] sm:$0xf]
      %v406 = vsel %vm365, %v336, %v405
      %407 = vst [vmem:[%s362 + $0x30] sm:$0xf] %v406
      %v408 = vld [vmem:[%s362 + $0x34] sm:$0x1]
      %v409 = vsel %vm371, %v337, %v408
      %410 = vst [vmem:[%s362 + $0x34] sm:$0x1] %v409
      %v411 = vld [vmem:[%s362 + $0x38] sm:$0xf]
      %v412 = vsel %vm365, %v344, %v411
      %413 = vst [vmem:[%s362 + $0x38] sm:$0xf] %v412
      %v414 = vld [vmem:[%s362 + $0x3c] sm:$0x1]
      %v415 = vsel %vm371, %v345, %v414
      %416 = vst [vmem:[%s362 + $0x3c] sm:$0x1] %v415
      %v417 = vld [vmem:[#allocation2] sm:$0xf]
      %v418 = vld [vmem:[#allocation2 + $0x8] sm:$0xf]
      %v419 = vld [vmem:[#allocation2 + $0x10] sm:$0xf]
      %v420 = vld [vmem:[#allocation2 + $0x18] sm:$0xf]
      %v421 = vld [vmem:[#allocation2 + $0x20] sm:$0xf]
      %v422 = vld [vmem:[#allocation2 + $0x28] sm:$0xf]
      %v423 = vld [vmem:[#allocation2 + $0x30] sm:$0xf]
      %v424 = vld [vmem:[#allocation2 + $0x38] sm:$0xf]
      %v425 = vld [vmem:[%s1] sm:$0xf]
      %v426 = vld [vmem:[%s1 + $0x4] sm:$0xf]
      %v427 = vld [vmem:[%s1 + $0x8] sm:$0xf]
      %v428 = vld [vmem:[%s1 + $0xc] sm:$0xf]
      %v429 = vld [vmem:[%s1 + $0x10] sm:$0xf]
      %v430 = vld [vmem:[%s1 + $0x14] sm:$0xf]
      %v431 = vld [vmem:[%s1 + $0x18] sm:$0xf]
      %v432 = vld [vmem:[%s1 + $0x1c] sm:$0xf]
      %v433 = vld [vmem:[%s1 + $0x20] sm:$0xf]
      %v434 = vld [vmem:[%s1 + $0x24] sm:$0xf]
      %v435 = vld [vmem:[%s1 + $0x28] sm:$0xf]
      %v436 = vld [vmem:[%s1 + $0x2c] sm:$0xf]
      %v437 = vld [vmem:[%s1 + $0x30] sm:$0xf]
      %v438 = vld [vmem:[%s1 + $0x34] sm:$0xf]
      %v439 = vld [vmem:[%s1 + $0x38] sm:$0xf]
      %v440 = vld [vmem:[%s1 + $0x3c] sm:$0xf]
      %v441 = vld [vmem:[#allocation2 + $0x4] sm:$0x1]
      %v442 = vld [vmem:[#allocation2 + $0xc] sm:$0x1]
      %v443 = vld [vmem:[#allocation2 + $0x14] sm:$0x1]
      %v444 = vld [vmem:[#allocation2 + $0x1c] sm:$0x1]
      %v445 = vld [vmem:[#allocation2 + $0x24] sm:$0x1]
      %v446 = vld [vmem:[#allocation2 + $0x2c] sm:$0x1]
      %v447 = vld [vmem:[#allocation2 + $0x34] sm:$0x1]
      %v448 = vld [vmem:[#allocation2 + $0x3c] sm:$0x1]
      %vm449 = vsmask.f32 3328
      %vm450 = vsmask.f32 7440
      %vm451 = vmor %vm449, %vm450
      %v453 = vshrl.u32 %v417, 16
      %v455 = vrot.slane %v453, 4
      %v456 = vshll.u32 %v417, 16
      %v458 = vrot.slane %v456, 5
      %v459 = vor.u32 %v455, %v458
      %v460 = vrot.slane %v459, 4
      %v462 = vshll.u32 %v441, 16
      %v464 = vrot.slane %v462, 5
      %v465 = vsel %vm451, %v460, %v464
      %v467 = vshrl.u32 %v418, 16
      %v469 = vrot.slane %v467, 4
      %v470 = vshll.u32 %v418, 16
      %v472 = vrot.slane %v470, 5
      %v473 = vor.u32 %v469, %v472
      %v474 = vrot.slane %v473, 4
      %v476 = vshll.u32 %v442, 16
      %v478 = vrot.slane %v476, 5
      %v479 = vsel %vm451, %v474, %v478
      %v481 = vshrl.u32 %v419, 16
      %v483 = vrot.slane %v481, 4
      %v484 = vshll.u32 %v419, 16
      %v486 = vrot.slane %v484, 5
      %v487 = vor.u32 %v483, %v486
      %v488 = vrot.slane %v487, 4
      %v490 = vshll.u32 %v443, 16
      %v492 = vrot.slane %v490, 5
      %v493 = vsel %vm451, %v488, %v492
      %v495 = vshrl.u32 %v420, 16
      %v497 = vrot.slane %v495, 4
      %v498 = vshll.u32 %v420, 16
      %v500 = vrot.slane %v498, 5
      %v501 = vor.u32 %v497, %v500
      %v502 = vrot.slane %v501, 4
      %v504 = vshll.u32 %v444, 16
      %v506 = vrot.slane %v504, 5
      %v507 = vsel %vm451, %v502, %v506
      %v509 = vshrl.u32 %v421, 16
      %v511 = vrot.slane %v509, 4
      %v512 = vshll.u32 %v421, 16
      %v514 = vrot.slane %v512, 5
      %v515 = vor.u32 %v511, %v514
      %v516 = vrot.slane %v515, 4
      %v518 = vshll.u32 %v445, 16
      %v520 = vrot.slane %v518, 5
      %v521 = vsel %vm451, %v516, %v520
      %v523 = vshrl.u32 %v422, 16
      %v525 = vrot.slane %v523, 4
      %v526 = vshll.u32 %v422, 16
      %v528 = vrot.slane %v526, 5
      %v529 = vor.u32 %v525, %v528
      %v530 = vrot.slane %v529, 4
      %v532 = vshll.u32 %v446, 16
      %v534 = vrot.slane %v532, 5
      %v535 = vsel %vm451, %v530, %v534
      %v537 = vshrl.u32 %v423, 16
      %v539 = vrot.slane %v537, 4
      %v540 = vshll.u32 %v423, 16
      %v542 = vrot.slane %v540, 5
      %v543 = vor.u32 %v539, %v542
      %v544 = vrot.slane %v543, 4
      %v546 = vshll.u32 %v447, 16
      %v548 = vrot.slane %v546, 5
      %v549 = vsel %vm451, %v544, %v548
      %v551 = vshrl.u32 %v424, 16
      %v553 = vrot.slane %v551, 4
      %v554 = vshll.u32 %v424, 16
      %v556 = vrot.slane %v554, 5
      %v557 = vor.u32 %v553, %v556
      %v558 = vrot.slane %v557, 4
      %v560 = vshll.u32 %v448, 16
      %v562 = vrot.slane %v560, 5
      %v563 = vsel %vm451, %v558, %v562
      %s564 = scalar_lea.vmem %s1, 64
      %v565 = vld [vmem:[%s564] sm:$0xf]
      %v566 = vld [vmem:[%s564 + $0x4] sm:$0xf]
      %v567 = vld [vmem:[%s564 + $0x8] sm:$0xf]
      %v568 = vld [vmem:[%s564 + $0xc] sm:$0xf]
      %v569 = vld [vmem:[%s564 + $0x10] sm:$0xf]
      %v570 = vld [vmem:[%s564 + $0x14] sm:$0xf]
      %v571 = vld [vmem:[%s564 + $0x18] sm:$0xf]
      %v572 = vld [vmem:[%s564 + $0x1c] sm:$0xf]
      %v573 = vld [vmem:[%s564 + $0x20] sm:$0xf]
      %v574 = vld [vmem:[%s564 + $0x24] sm:$0xf]
      %v575 = vld [vmem:[%s564 + $0x28] sm:$0xf]
      %v576 = vld [vmem:[%s564 + $0x2c] sm:$0xf]
      %v577 = vld [vmem:[%s564 + $0x30] sm:$0xf]
      %v578 = vld [vmem:[%s564 + $0x34] sm:$0xf]
      %v579 = vld [vmem:[%s564 + $0x38] sm:$0xf]
      %v580 = vld [vmem:[%s564 + $0x3c] sm:$0xf]
      %v581 = vunpack.c.l.b16 %v465
      %v582 = vunpack.c.l.b16 %v479
      %v583 = vunpack.c.l.b16 %v493
      %v584 = vunpack.c.l.b16 %v507
      %v585 = vunpack.c.l.b16 %v521
      %v586 = vunpack.c.l.b16 %v535
      %v587 = vunpack.c.l.b16 %v549
      %v588 = vunpack.c.l.b16 %v563
      %v589 = vpack.c.b16 %v582, %v581
      %v590 = vpack.c.b16 %v584, %v583
      %v591 = vpack.c.b16 %v586, %v585
      %v592 = vpack.c.b16 %v588, %v587
      %v613 = vunpack.c.l.b16 %v565
      %v614 = vunpack.c.l.b16 %v566
      %v615 = vunpack.c.l.b16 %v567
      %v616 = vunpack.c.l.b16 %v568
      %v617 = vunpack.c.l.b16 %v569
      %v618 = vunpack.c.l.b16 %v570
      %v619 = vunpack.c.l.b16 %v571
      %v620 = vunpack.c.l.b16 %v572
      %v621 = vunpack.c.l.b16 %v573
      %v622 = vunpack.c.l.b16 %v574
      %v623 = vunpack.c.l.b16 %v575
      %v624 = vunpack.c.l.b16 %v576
      %v625 = vunpack.c.l.b16 %v577
      %v626 = vunpack.c.l.b16 %v578
      %v627 = vunpack.c.l.b16 %v579
      %v628 = vunpack.c.l.b16 %v580
      %v629 = vpack.c.b16 %v614, %v613
      %v630 = vpack.c.b16 %v616, %v615
      %v631 = vpack.c.b16 %v618, %v617
      %v632 = vpack.c.b16 %v620, %v619
      %v633 = vpack.c.b16 %v622, %v621
      %v634 = vpack.c.b16 %v624, %v623
      %v635 = vpack.c.b16 %v626, %v625
      %v636 = vpack.c.b16 %v628, %v627
      %645 = vmatpush.bf16.msra.mxu0 %v636
      %646 = vmatpush.bf16.msra.mxu0 %v635
      %647 = vmatpush.bf16.msra.mxu0 %v634
      %648 = vmatpush.bf16.msra.mxu0 %v633
      %649 = vmatpush.bf16.msra.mxu0 %v632
      %650 = vmatpush.bf16.msra.mxu0 %v631
      %651 = vmatpush.bf16.msra.mxu0 %v630
      %652 = vmatpush.bf16.msra.mxu0 %v629
      %653 = vmatmul.bf16.gmra.mxu0 %v589
      %v654 = vpop.f32.mrf.mxu0
      %v655 = vadd.f32 0.0, %v654
      %v656 = vpop.f32.mrf.mxu0
      %v657 = vadd.f32 0.0, %v656
      %658 = vmatmul.bf16.gmra.mxu0 %v590
      %v659 = vpop.f32.mrf.mxu0
      %v660 = vadd.f32 0.0, %v659
      %v661 = vpop.f32.mrf.mxu0
      %v662 = vadd.f32 0.0, %v661
      %663 = vmatmul.bf16.gmra.mxu0 %v591
      %v664 = vpop.f32.mrf.mxu0
      %v665 = vadd.f32 0.0, %v664
      %v666 = vpop.f32.mrf.mxu0
      %v667 = vadd.f32 0.0, %v666
      %668 = vmatmul.bf16.gmra.mxu0 %v592
      %v669 = vpop.f32.mrf.mxu0
      %v670 = vadd.f32 0.0, %v669
      %v671 = vpop.f32.mrf.mxu0
      %v672 = vadd.f32 0.0, %v671
      %673 = vdwg.mxu0
      %v682 = vunpack.c.l.b16 %v417
      %v683 = vunpack.c.l.b16 %v418
      %v684 = vunpack.c.l.b16 %v419
      %v685 = vunpack.c.l.b16 %v420
      %v686 = vunpack.c.l.b16 %v421
      %v687 = vunpack.c.l.b16 %v422
      %v688 = vunpack.c.l.b16 %v423
      %v689 = vunpack.c.l.b16 %v424
      %v690 = vpack.c.b16 %v683, %v682
      %v691 = vpack.c.b16 %v685, %v684
      %v692 = vpack.c.b16 %v687, %v686
      %v693 = vpack.c.b16 %v689, %v688
      %v714 = vunpack.c.l.b16 %v425
      %v715 = vunpack.c.l.b16 %v426
      %v716 = vunpack.c.l.b16 %v427
      %v717 = vunpack.c.l.b16 %v428
      %v718 = vunpack.c.l.b16 %v429
      %v719 = vunpack.c.l.b16 %v430
      %v720 = vunpack.c.l.b16 %v431
      %v721 = vunpack.c.l.b16 %v432
      %v722 = vunpack.c.l.b16 %v433
      %v723 = vunpack.c.l.b16 %v434
      %v724 = vunpack.c.l.b16 %v435
      %v725 = vunpack.c.l.b16 %v436
      %v726 = vunpack.c.l.b16 %v437
      %v727 = vunpack.c.l.b16 %v438
      %v728 = vunpack.c.l.b16 %v439
      %v729 = vunpack.c.l.b16 %v440
      %v730 = vpack.c.b16 %v715, %v714
      %v731 = vpack.c.b16 %v717, %v716
      %v732 = vpack.c.b16 %v719, %v718
      %v733 = vpack.c.b16 %v721, %v720
      %v734 = vpack.c.b16 %v723, %v722
      %v735 = vpack.c.b16 %v725, %v724
      %v736 = vpack.c.b16 %v727, %v726
      %v737 = vpack.c.b16 %v729, %v728
      %746 = vmatpush.bf16.msra.mxu0 %v737
      %747 = vmatpush.bf16.msra.mxu0 %v736
      %748 = vmatpush.bf16.msra.mxu0 %v735
      %749 = vmatpush.bf16.msra.mxu0 %v734
      %750 = vmatpush.bf16.msra.mxu0 %v733
      %751 = vmatpush.bf16.msra.mxu0 %v732
      %752 = vmatpush.bf16.msra.mxu0 %v731
      %753 = vmatpush.bf16.msra.mxu0 %v730
      %754 = vmatmul.bf16.gmra.mxu0 %v690
      %v755 = vpop.f32.mrf.mxu0
      %v756 = vadd.f32 %v655, %v755
      %v757 = vpop.f32.mrf.mxu0
      %v758 = vadd.f32 %v657, %v757
      %759 = vmatmul.bf16.gmra.mxu0 %v691
      %v760 = vpop.f32.mrf.mxu0
      %v761 = vadd.f32 %v660, %v760
      %v762 = vpop.f32.mrf.mxu0
      %v763 = vadd.f32 %v662, %v762
      %764 = vmatmul.bf16.gmra.mxu0 %v692
      %v765 = vpop.f32.mrf.mxu0
      %v766 = vadd.f32 %v665, %v765
      %v767 = vpop.f32.mrf.mxu0
      %v768 = vadd.f32 %v667, %v767
      %769 = vmatmul.bf16.gmra.mxu0 %v693
      %v770 = vpop.f32.mrf.mxu0
      %v771 = vadd.f32 %v670, %v770
      %v772 = vpop.f32.mrf.mxu0
      %v773 = vadd.f32 %v672, %v772
      %774 = vdwg.mxu0
      %v775 = vld [vmem:[#allocation2] sm:$0xe]
      %v776 = vld [vmem:[#allocation2 + $0x8] sm:$0xe]
      %v777 = vld [vmem:[#allocation2 + $0x10] sm:$0xe]
      %v778 = vld [vmem:[#allocation2 + $0x18] sm:$0xe]
      %v779 = vld [vmem:[#allocation2 + $0x20] sm:$0xe]
      %v780 = vld [vmem:[#allocation2 + $0x28] sm:$0xe]
      %v781 = vld [vmem:[#allocation2 + $0x30] sm:$0xe]
      %v782 = vld [vmem:[#allocation2 + $0x38] sm:$0xe]
      %vm799 = vcmask 1042432
      %vm800 = vcmask 1046532
      %vm801 = vmor %vm799, %vm800
      %v802 = vrot.slane %v775, 5
      %v803 = vrot.slane %v802, 4
      %v804 = vrot.slane %v441, 5
      %v805 = vsel %vm801, %v803, %v804
      %v806 = vrot.slane %v776, 5
      %v807 = vrot.slane %v806, 4
      %v808 = vrot.slane %v442, 5
      %v809 = vsel %vm801, %v807, %v808
      %v810 = vrot.slane %v777, 5
      %v811 = vrot.slane %v810, 4
      %v812 = vrot.slane %v443, 5
      %v813 = vsel %vm801, %v811, %v812
      %v814 = vrot.slane %v778, 5
      %v815 = vrot.slane %v814, 4
      %v816 = vrot.slane %v444, 5
      %v817 = vsel %vm801, %v815, %v816
      %v818 = vrot.slane %v779, 5
      %v819 = vrot.slane %v818, 4
      %v820 = vrot.slane %v445, 5
      %v821 = vsel %vm801, %v819, %v820
      %v822 = vrot.slane %v780, 5
      %v823 = vrot.slane %v822, 4
      %v824 = vrot.slane %v446, 5
      %v825 = vsel %vm801, %v823, %v824
      %v826 = vrot.slane %v781, 5
      %v827 = vrot.slane %v826, 4
      %v828 = vrot.slane %v447, 5
      %v829 = vsel %vm801, %v827, %v828
      %v830 = vrot.slane %v782, 5
      %v831 = vrot.slane %v830, 4
      %v832 = vrot.slane %v448, 5
      %v833 = vsel %vm801, %v831, %v832
      %s834 = scalar_lea.vmem %s1, 128
      %v835 = vld [vmem:[%s834] sm:$0xf]
      %v836 = vld [vmem:[%s834 + $0x4] sm:$0xf]
      %v837 = vld [vmem:[%s834 + $0x8] sm:$0xf]
      %v838 = vld [vmem:[%s834 + $0xc] sm:$0xf]
      %v839 = vld [vmem:[%s834 + $0x10] sm:$0xf]
      %v840 = vld [vmem:[%s834 + $0x14] sm:$0xf]
      %v841 = vld [vmem:[%s834 + $0x18] sm:$0xf]
      %v842 = vld [vmem:[%s834 + $0x1c] sm:$0xf]
      %v843 = vld [vmem:[%s834 + $0x20] sm:$0xf]
      %v844 = vld [vmem:[%s834 + $0x24] sm:$0xf]
      %v845 = vld [vmem:[%s834 + $0x28] sm:$0xf]
      %v846 = vld [vmem:[%s834 + $0x2c] sm:$0xf]
      %v847 = vld [vmem:[%s834 + $0x30] sm:$0xf]
      %v848 = vld [vmem:[%s834 + $0x34] sm:$0xf]
      %v849 = vld [vmem:[%s834 + $0x38] sm:$0xf]
      %v850 = vld [vmem:[%s834 + $0x3c] sm:$0xf]
      %v851 = vunpack.c.l.b16 %v805
      %v852 = vunpack.c.l.b16 %v809
      %v853 = vunpack.c.l.b16 %v813
      %v854 = vunpack.c.l.b16 %v817
      %v855 = vunpack.c.l.b16 %v821
      %v856 = vunpack.c.l.b16 %v825
      %v857 = vunpack.c.l.b16 %v829
      %v858 = vunpack.c.l.b16 %v833
      %v859 = vpack.c.b16 %v852, %v851
      %v860 = vpack.c.b16 %v854, %v853
      %v861 = vpack.c.b16 %v856, %v855
      %v862 = vpack.c.b16 %v858, %v857
      %v883 = vunpack.c.l.b16 %v835
      %v884 = vunpack.c.l.b16 %v836
      %v885 = vunpack.c.l.b16 %v837
      %v886 = vunpack.c.l.b16 %v838
      %v887 = vunpack.c.l.b16 %v839
      %v888 = vunpack.c.l.b16 %v840
      %v889 = vunpack.c.l.b16 %v841
      %v890 = vunpack.c.l.b16 %v842
      %v891 = vunpack.c.l.b16 %v843
      %v892 = vunpack.c.l.b16 %v844
      %v893 = vunpack.c.l.b16 %v845
      %v894 = vunpack.c.l.b16 %v846
      %v895 = vunpack.c.l.b16 %v847
      %v896 = vunpack.c.l.b16 %v848
      %v897 = vunpack.c.l.b16 %v849
      %v898 = vunpack.c.l.b16 %v850
      %v899 = vpack.c.b16 %v884, %v883
      %v900 = vpack.c.b16 %v886, %v885
      %v901 = vpack.c.b16 %v888, %v887
      %v902 = vpack.c.b16 %v890, %v889
      %v903 = vpack.c.b16 %v892, %v891
      %v904 = vpack.c.b16 %v894, %v893
      %v905 = vpack.c.b16 %v896, %v895
      %v906 = vpack.c.b16 %v898, %v897
      %915 = vmatpush.bf16.msra.mxu0 %v906
      %916 = vmatpush.bf16.msra.mxu0 %v905
      %917 = vmatpush.bf16.msra.mxu0 %v904
      %918 = vmatpush.bf16.msra.mxu0 %v903
      %919 = vmatpush.bf16.msra.mxu0 %v902
      %920 = vmatpush.bf16.msra.mxu0 %v901
      %921 = vmatpush.bf16.msra.mxu0 %v900
      %922 = vmatpush.bf16.msra.mxu0 %v899
      %923 = vmatmul.bf16.gmra.mxu0 %v859
      %v924 = vpop.f32.mrf.mxu0
      %v925 = vadd.f32 0.0, %v924
      %v926 = vpop.f32.mrf.mxu0
      %v927 = vadd.f32 0.0, %v926
      %928 = vmatmul.bf16.gmra.mxu0 %v860
      %v929 = vpop.f32.mrf.mxu0
      %v930 = vadd.f32 0.0, %v929
      %v931 = vpop.f32.mrf.mxu0
      %v932 = vadd.f32 0.0, %v931
      %933 = vmatmul.bf16.gmra.mxu0 %v861
      %v934 = vpop.f32.mrf.mxu0
      %v935 = vadd.f32 0.0, %v934
      %v936 = vpop.f32.mrf.mxu0
      %v937 = vadd.f32 0.0, %v936
      %938 = vmatmul.bf16.gmra.mxu0 %v862
      %v939 = vpop.f32.mrf.mxu0
      %v940 = vadd.f32 0.0, %v939
      %v941 = vpop.f32.mrf.mxu0
      %v942 = vadd.f32 0.0, %v941
      %943 = vdwg.mxu0
      %v944 = vadd.f32 %v756, %v925
      %v945 = vadd.f32 %v758, %v927
      %v946 = vadd.f32 %v761, %v930
      %v947 = vadd.f32 %v763, %v932
      %v948 = vadd.f32 %v766, %v935
      %v949 = vadd.f32 %v768, %v937
      %v950 = vadd.f32 %v771, %v940
      %v951 = vadd.f32 %v773, %v942
      %v952 = vld [vmem:[%s362] sm:$0xf]
      %v953 = vld [vmem:[%s362 + $0x8] sm:$0xf]
      %v954 = vld [vmem:[%s362 + $0x10] sm:$0xf]
      %v955 = vld [vmem:[%s362 + $0x18] sm:$0xf]
      %v956 = vld [vmem:[%s362 + $0x20] sm:$0xf]
      %v957 = vld [vmem:[%s362 + $0x28] sm:$0xf]
      %v958 = vld [vmem:[%s362 + $0x30] sm:$0xf]
      %v959 = vld [vmem:[%s362 + $0x38] sm:$0xf]
      %s960 = scalar_lea.vmem %s1, 192
      %v961 = vld [vmem:[%s960] sm:$0xf]
      %v962 = vld [vmem:[%s960 + $0x4] sm:$0xf]
      %v963 = vld [vmem:[%s960 + $0x8] sm:$0xf]
      %v964 = vld [vmem:[%s960 + $0xc] sm:$0xf]
      %v965 = vld [vmem:[%s960 + $0x10] sm:$0xf]
      %v966 = vld [vmem:[%s960 + $0x14] sm:$0xf]
      %v967 = vld [vmem:[%s960 + $0x18] sm:$0xf]
      %v968 = vld [vmem:[%s960 + $0x1c] sm:$0xf]
      %v969 = vld [vmem:[%s960 + $0x20] sm:$0xf]
      %v970 = vld [vmem:[%s960 + $0x24] sm:$0xf]
      %v971 = vld [vmem:[%s960 + $0x28] sm:$0xf]
      %v972 = vld [vmem:[%s960 + $0x2c] sm:$0xf]
      %v973 = vld [vmem:[%s960 + $0x30] sm:$0xf]
      %v974 = vld [vmem:[%s960 + $0x34] sm:$0xf]
      %v975 = vld [vmem:[%s960 + $0x38] sm:$0xf]
      %v976 = vld [vmem:[%s960 + $0x3c] sm:$0xf]
      %v985 = vunpack.c.l.b16 %v952
      %v986 = vunpack.c.l.b16 %v953
      %v987 = vunpack.c.l.b16 %v954
      %v988 = vunpack.c.l.b16 %v955
      %v989 = vunpack.c.l.b16 %v956
      %v990 = vunpack.c.l.b16 %v957
      %v991 = vunpack.c.l.b16 %v958
      %v992 = vunpack.c.l.b16 %v959
      %v993 = vpack.c.b16 %v986, %v985
      %v994 = vpack.c.b16 %v988, %v987
      %v995 = vpack.c.b16 %v990, %v989
      %v996 = vpack.c.b16 %v992, %v991
      %v1017 = vunpack.c.l.b16 %v961
      %v1018 = vunpack.c.l.b16 %v962
      %v1019 = vunpack.c.l.b16 %v963
      %v1020 = vunpack.c.l.b16 %v964
      %v1021 = vunpack.c.l.b16 %v965
      %v1022 = vunpack.c.l.b16 %v966
      %v1023 = vunpack.c.l.b16 %v967
      %v1024 = vunpack.c.l.b16 %v968
      %v1025 = vunpack.c.l.b16 %v969
      %v1026 = vunpack.c.l.b16 %v970
      %v1027 = vunpack.c.l.b16 %v971
      %v1028 = vunpack.c.l.b16 %v972
      %v1029 = vunpack.c.l.b16 %v973
      %v1030 = vunpack.c.l.b16 %v974
      %v1031 = vunpack.c.l.b16 %v975
      %v1032 = vunpack.c.l.b16 %v976
      %v1033 = vpack.c.b16 %v1018, %v1017
      %v1034 = vpack.c.b16 %v1020, %v1019
      %v1035 = vpack.c.b16 %v1022, %v1021
      %v1036 = vpack.c.b16 %v1024, %v1023
      %v1037 = vpack.c.b16 %v1026, %v1025
      %v1038 = vpack.c.b16 %v1028, %v1027
      %v1039 = vpack.c.b16 %v1030, %v1029
      %v1040 = vpack.c.b16 %v1032, %v1031
      %1049 = vmatpush.bf16.msra.mxu0 %v1040
      %1050 = vmatpush.bf16.msra.mxu0 %v1039
      %1051 = vmatpush.bf16.msra.mxu0 %v1038
      %1052 = vmatpush.bf16.msra.mxu0 %v1037
      %1053 = vmatpush.bf16.msra.mxu0 %v1036
      %1054 = vmatpush.bf16.msra.mxu0 %v1035
      %1055 = vmatpush.bf16.msra.mxu0 %v1034
      %1056 = vmatpush.bf16.msra.mxu0 %v1033
      %1057 = vmatmul.bf16.gmra.mxu0 %v993
      %v1058 = vpop.f32.mrf.mxu0
      %v1059 = vadd.f32 0.0, %v1058
      %v1060 = vpop.f32.mrf.mxu0
      %v1061 = vadd.f32 0.0, %v1060
      %1062 = vmatmul.bf16.gmra.mxu0 %v994
      %v1063 = vpop.f32.mrf.mxu0
      %v1064 = vadd.f32 0.0, %v1063
      %v1065 = vpop.f32.mrf.mxu0
      %v1066 = vadd.f32 0.0, %v1065
      %1067 = vmatmul.bf16.gmra.mxu0 %v995
      %v1068 = vpop.f32.mrf.mxu0
      %v1069 = vadd.f32 0.0, %v1068
      %v1070 = vpop.f32.mrf.mxu0
      %v1071 = vadd.f32 0.0, %v1070
      %1072 = vmatmul.bf16.gmra.mxu0 %v996
      %v1073 = vpop.f32.mrf.mxu0
      %v1074 = vadd.f32 0.0, %v1073
      %v1075 = vpop.f32.mrf.mxu0
      %v1076 = vadd.f32 0.0, %v1075
      %1077 = vdwg.mxu0
      %v1078 = vadd.f32 %v944, %v1059
      %v1079 = vadd.f32 %v945, %v1061
      %v1080 = vadd.f32 %v946, %v1064
      %v1081 = vadd.f32 %v947, %v1066
      %v1082 = vadd.f32 %v948, %v1069
      %v1083 = vadd.f32 %v949, %v1071
      %v1084 = vadd.f32 %v950, %v1074
      %v1085 = vadd.f32 %v951, %v1076
      %v1086 = vld [vmem:[%s362] sm:$0xf]
      %v1087 = vld [vmem:[%s362 + $0x4] sm:$0x1]
      %v1088 = vld [vmem:[%s362 + $0x8] sm:$0xf]
      %v1089 = vld [vmem:[%s362 + $0xc] sm:$0x1]
      %v1090 = vld [vmem:[%s362 + $0x10] sm:$0xf]
      %v1091 = vld [vmem:[%s362 + $0x14] sm:$0x1]
      %v1092 = vld [vmem:[%s362 + $0x18] sm:$0xf]
      %v1093 = vld [vmem:[%s362 + $0x1c] sm:$0x1]
      %v1094 = vld [vmem:[%s362 + $0x20] sm:$0xf]
      %v1095 = vld [vmem:[%s362 + $0x24] sm:$0x1]
      %v1096 = vld [vmem:[%s362 + $0x28] sm:$0xf]
      %v1097 = vld [vmem:[%s362 + $0x2c] sm:$0x1]
      %v1098 = vld [vmem:[%s362 + $0x30] sm:$0xf]
      %v1099 = vld [vmem:[%s362 + $0x34] sm:$0x1]
      %v1100 = vld [vmem:[%s362 + $0x38] sm:$0xf]
      %v1101 = vld [vmem:[%s362 + $0x3c] sm:$0x1]
      %v1103 = vshrl.u32 %v1086, 16
      %v1105 = vrot.slane %v1103, 4
      %v1106 = vshll.u32 %v1086, 16
      %v1108 = vrot.slane %v1106, 5
      %v1109 = vor.u32 %v1105, %v1108
      %v1110 = vrot.slane %v1109, 4
      %v1112 = vshll.u32 %v1087, 16
      %v1114 = vrot.slane %v1112, 5
      %v1115 = vsel %vm451, %v1110, %v1114
      %v1117 = vshrl.u32 %v1088, 16
      %v1119 = vrot.slane %v1117, 4
      %v1120 = vshll.u32 %v1088, 16
      %v1122 = vrot.slane %v1120, 5
      %v1123 = vor.u32 %v1119, %v1122
      %v1124 = vrot.slane %v1123, 4
      %v1126 = vshll.u32 %v1089, 16
      %v1128 = vrot.slane %v1126, 5
      %v1129 = vsel %vm451, %v1124, %v1128
      %v1131 = vshrl.u32 %v1090, 16
      %v1133 = vrot.slane %v1131, 4
      %v1134 = vshll.u32 %v1090, 16
      %v1136 = vrot.slane %v1134, 5
      %v1137 = vor.u32 %v1133, %v1136
      %v1138 = vrot.slane %v1137, 4
      %v1140 = vshll.u32 %v1091, 16
      %v1142 = vrot.slane %v1140, 5
      %v1143 = vsel %vm451, %v1138, %v1142
      %v1145 = vshrl.u32 %v1092, 16
      %v1147 = vrot.slane %v1145, 4
      %v1148 = vshll.u32 %v1092, 16
      %v1150 = vrot.slane %v1148, 5
      %v1151 = vor.u32 %v1147, %v1150
      %v1152 = vrot.slane %v1151, 4
      %v1154 = vshll.u32 %v1093, 16
      %v1156 = vrot.slane %v1154, 5
      %v1157 = vsel %vm451, %v1152, %v1156
      %v1159 = vshrl.u32 %v1094, 16
      %v1161 = vrot.slane %v1159, 4
      %v1162 = vshll.u32 %v1094, 16
      %v1164 = vrot.slane %v1162, 5
      %v1165 = vor.u32 %v1161, %v1164
      %v1166 = vrot.slane %v1165, 4
      %v1168 = vshll.u32 %v1095, 16
      %v1170 = vrot.slane %v1168, 5
      %v1171 = vsel %vm451, %v1166, %v1170
      %v1173 = vshrl.u32 %v1096, 16
      %v1175 = vrot.slane %v1173, 4
      %v1176 = vshll.u32 %v1096, 16
      %v1178 = vrot.slane %v1176, 5
      %v1179 = vor.u32 %v1175, %v1178
      %v1180 = vrot.slane %v1179, 4
      %v1182 = vshll.u32 %v1097, 16
      %v1184 = vrot.slane %v1182, 5
      %v1185 = vsel %vm451, %v1180, %v1184
      %v1187 = vshrl.u32 %v1098, 16
      %v1189 = vrot.slane %v1187, 4
      %v1190 = vshll.u32 %v1098, 16
      %v1192 = vrot.slane %v1190, 5
      %v1193 = vor.u32 %v1189, %v1192
      %v1194 = vrot.slane %v1193, 4
      %v1196 = vshll.u32 %v1099, 16
      %v1198 = vrot.slane %v1196, 5
      %v1199 = vsel %vm451, %v1194, %v1198
      %v1201 = vshrl.u32 %v1100, 16
      %v1203 = vrot.slane %v1201, 4
      %v1204 = vshll.u32 %v1100, 16
      %v1206 = vrot.slane %v1204, 5
      %v1207 = vor.u32 %v1203, %v1206
      %v1208 = vrot.slane %v1207, 4
      %v1210 = vshll.u32 %v1101, 16
      %v1212 = vrot.slane %v1210, 5
      %v1213 = vsel %vm451, %v1208, %v1212
      %s1214 = scalar_lea.vmem %s1, 256
      %v1215 = vld [vmem:[%s1214] sm:$0xf]
      %v1216 = vld [vmem:[%s1214 + $0x4] sm:$0xf]
      %v1217 = vld [vmem:[%s1214 + $0x8] sm:$0xf]
      %v1218 = vld [vmem:[%s1214 + $0xc] sm:$0xf]
      %v1219 = vld [vmem:[%s1214 + $0x10] sm:$0xf]
      %v1220 = vld [vmem:[%s1214 + $0x14] sm:$0xf]
      %v1221 = vld [vmem:[%s1214 + $0x18] sm:$0xf]
      %v1222 = vld [vmem:[%s1214 + $0x1c] sm:$0xf]
      %v1223 = vld [vmem:[%s1214 + $0x20] sm:$0xf]
      %v1224 = vld [vmem:[%s1214 + $0x24] sm:$0xf]
      %v1225 = vld [vmem:[%s1214 + $0x28] sm:$0xf]
      %v1226 = vld [vmem:[%s1214 + $0x2c] sm:$0xf]
      %v1227 = vld [vmem:[%s1214 + $0x30] sm:$0xf]
      %v1228 = vld [vmem:[%s1214 + $0x34] sm:$0xf]
      %v1229 = vld [vmem:[%s1214 + $0x38] sm:$0xf]
      %v1230 = vld [vmem:[%s1214 + $0x3c] sm:$0xf]
      %v1231 = vunpack.c.l.b16 %v1115
      %v1232 = vunpack.c.l.b16 %v1129
      %v1233 = vunpack.c.l.b16 %v1143
      %v1234 = vunpack.c.l.b16 %v1157
      %v1235 = vunpack.c.l.b16 %v1171
      %v1236 = vunpack.c.l.b16 %v1185
      %v1237 = vunpack.c.l.b16 %v1199
      %v1238 = vunpack.c.l.b16 %v1213
      %v1239 = vpack.c.b16 %v1232, %v1231
      %v1240 = vpack.c.b16 %v1234, %v1233
      %v1241 = vpack.c.b16 %v1236, %v1235
      %v1242 = vpack.c.b16 %v1238, %v1237
      %v1263 = vunpack.c.l.b16 %v1215
      %v1264 = vunpack.c.l.b16 %v1216
      %v1265 = vunpack.c.l.b16 %v1217
      %v1266 = vunpack.c.l.b16 %v1218
      %v1267 = vunpack.c.l.b16 %v1219
      %v1268 = vunpack.c.l.b16 %v1220
      %v1269 = vunpack.c.l.b16 %v1221
      %v1270 = vunpack.c.l.b16 %v1222
      %v1271 = vunpack.c.l.b16 %v1223
      %v1272 = vunpack.c.l.b16 %v1224
      %v1273 = vunpack.c.l.b16 %v1225
      %v1274 = vunpack.c.l.b16 %v1226
      %v1275 = vunpack.c.l.b16 %v1227
      %v1276 = vunpack.c.l.b16 %v1228
      %v1277 = vunpack.c.l.b16 %v1229
      %v1278 = vunpack.c.l.b16 %v1230
      %v1279 = vpack.c.b16 %v1264, %v1263
      %v1280 = vpack.c.b16 %v1266, %v1265
      %v1281 = vpack.c.b16 %v1268, %v1267
      %v1282 = vpack.c.b16 %v1270, %v1269
      %v1283 = vpack.c.b16 %v1272, %v1271
      %v1284 = vpack.c.b16 %v1274, %v1273
      %v1285 = vpack.c.b16 %v1276, %v1275
      %v1286 = vpack.c.b16 %v1278, %v1277
      %1295 = vmatpush.bf16.msra.mxu0 %v1286
      %1296 = vmatpush.bf16.msra.mxu0 %v1285
      %1297 = vmatpush.bf16.msra.mxu0 %v1284
      %1298 = vmatpush.bf16.msra.mxu0 %v1283
      %1299 = vmatpush.bf16.msra.mxu0 %v1282
      %1300 = vmatpush.bf16.msra.mxu0 %v1281
      %1301 = vmatpush.bf16.msra.mxu0 %v1280
      %1302 = vmatpush.bf16.msra.mxu0 %v1279
      %1303 = vmatmul.bf16.gmra.mxu0 %v1239
      %v1304 = vpop.f32.mrf.mxu0
      %v1305 = vadd.f32 0.0, %v1304
      %v1306 = vpop.f32.mrf.mxu0
      %v1307 = vadd.f32 0.0, %v1306
      %1308 = vmatmul.bf16.gmra.mxu0 %v1240
      %v1309 = vpop.f32.mrf.mxu0
      %v1310 = vadd.f32 0.0, %v1309
      %v1311 = vpop.f32.mrf.mxu0
      %v1312 = vadd.f32 0.0, %v1311
      %1313 = vmatmul.bf16.gmra.mxu0 %v1241
      %v1314 = vpop.f32.mrf.mxu0
      %v1315 = vadd.f32 0.0, %v1314
      %v1316 = vpop.f32.mrf.mxu0
      %v1317 = vadd.f32 0.0, %v1316
      %1318 = vmatmul.bf16.gmra.mxu0 %v1242
      %v1319 = vpop.f32.mrf.mxu0
      %v1320 = vadd.f32 0.0, %v1319
      %v1321 = vpop.f32.mrf.mxu0
      %v1322 = vadd.f32 0.0, %v1321
      %1323 = vdwg.mxu0
      %v1324 = vadd.f32 %v1078, %v1305
      %v1325 = vadd.f32 %v1079, %v1307
      %v1326 = vadd.f32 %v1080, %v1310
      %v1327 = vadd.f32 %v1081, %v1312
      %v1328 = vadd.f32 %v1082, %v1315
      %v1329 = vadd.f32 %v1083, %v1317
      %v1330 = vadd.f32 %v1084, %v1320
      %v1331 = vadd.f32 %v1085, %v1322
      %v1332 = vld [vmem:[%s362] sm:$0xe]
      %v1333 = vld [vmem:[%s362 + $0x8] sm:$0xe]
      %v1334 = vld [vmem:[%s362 + $0x10] sm:$0xe]
      %v1335 = vld [vmem:[%s362 + $0x18] sm:$0xe]
      %v1336 = vld [vmem:[%s362 + $0x20] sm:$0xe]
      %v1337 = vld [vmem:[%s362 + $0x28] sm:$0xe]
      %v1338 = vld [vmem:[%s362 + $0x30] sm:$0xe]
      %v1339 = vld [vmem:[%s362 + $0x38] sm:$0xe]
      %v1356 = vrot.slane %v1332, 5
      %v1357 = vrot.slane %v1356, 4
      %v1358 = vrot.slane %v1087, 5
      %v1359 = vsel %vm801, %v1357, %v1358
      %v1360 = vrot.slane %v1333, 5
      %v1361 = vrot.slane %v1360, 4
      %v1362 = vrot.slane %v1089, 5
      %v1363 = vsel %vm801, %v1361, %v1362
      %v1364 = vrot.slane %v1334, 5
      %v1365 = vrot.slane %v1364, 4
      %v1366 = vrot.slane %v1091, 5
      %v1367 = vsel %vm801, %v1365, %v1366
      %v1368 = vrot.slane %v1335, 5
      %v1369 = vrot.slane %v1368, 4
      %v1370 = vrot.slane %v1093, 5
      %v1371 = vsel %vm801, %v1369, %v1370
      %v1372 = vrot.slane %v1336, 5
      %v1373 = vrot.slane %v1372, 4
      %v1374 = vrot.slane %v1095, 5
      %v1375 = vsel %vm801, %v1373, %v1374
      %v1376 = vrot.slane %v1337, 5
      %v1377 = vrot.slane %v1376, 4
      %v1378 = vrot.slane %v1097, 5
      %v1379 = vsel %vm801, %v1377, %v1378
      %v1380 = vrot.slane %v1338, 5
      %v1381 = vrot.slane %v1380, 4
      %v1382 = vrot.slane %v1099, 5
      %v1383 = vsel %vm801, %v1381, %v1382
      %v1384 = vrot.slane %v1339, 5
      %v1385 = vrot.slane %v1384, 4
      %v1386 = vrot.slane %v1101, 5
      %v1387 = vsel %vm801, %v1385, %v1386
      %s1388 = scalar_lea.vmem %s1, 320
      %v1389 = vld [vmem:[%s1388] sm:$0xf]
      %v1390 = vld [vmem:[%s1388 + $0x4] sm:$0xf]
      %v1391 = vld [vmem:[%s1388 + $0x8] sm:$0xf]
      %v1392 = vld [vmem:[%s1388 + $0xc] sm:$0xf]
      %v1393 = vld [vmem:[%s1388 + $0x10] sm:$0xf]
      %v1394 = vld [vmem:[%s1388 + $0x14] sm:$0xf]
      %v1395 = vld [vmem:[%s1388 + $0x18] sm:$0xf]
      %v1396 = vld [vmem:[%s1388 + $0x1c] sm:$0xf]
      %v1397 = vld [vmem:[%s1388 + $0x20] sm:$0xf]
      %v1398 = vld [vmem:[%s1388 + $0x24] sm:$0xf]
      %v1399 = vld [vmem:[%s1388 + $0x28] sm:$0xf]
      %v1400 = vld [vmem:[%s1388 + $0x2c] sm:$0xf]
      %v1401 = vld [vmem:[%s1388 + $0x30] sm:$0xf]
      %v1402 = vld [vmem:[%s1388 + $0x34] sm:$0xf]
      %v1403 = vld [vmem:[%s1388 + $0x38] sm:$0xf]
      %v1404 = vld [vmem:[%s1388 + $0x3c] sm:$0xf]
      %v1405 = vunpack.c.l.b16 %v1359
      %v1406 = vunpack.c.l.b16 %v1363
      %v1407 = vunpack.c.l.b16 %v1367
      %v1408 = vunpack.c.l.b16 %v1371
      %v1409 = vunpack.c.l.b16 %v1375
      %v1410 = vunpack.c.l.b16 %v1379
      %v1411 = vunpack.c.l.b16 %v1383
      %v1412 = vunpack.c.l.b16 %v1387
      %v1413 = vpack.c.b16 %v1406, %v1405
      %v1414 = vpack.c.b16 %v1408, %v1407
      %v1415 = vpack.c.b16 %v1410, %v1409
      %v1416 = vpack.c.b16 %v1412, %v1411
      %v1437 = vunpack.c.l.b16 %v1389
      %v1438 = vunpack.c.l.b16 %v1390
      %v1439 = vunpack.c.l.b16 %v1391
      %v1440 = vunpack.c.l.b16 %v1392
      %v1441 = vunpack.c.l.b16 %v1393
      %v1442 = vunpack.c.l.b16 %v1394
      %v1443 = vunpack.c.l.b16 %v1395
      %v1444 = vunpack.c.l.b16 %v1396
      %v1445 = vunpack.c.l.b16 %v1397
      %v1446 = vunpack.c.l.b16 %v1398
      %v1447 = vunpack.c.l.b16 %v1399
      %v1448 = vunpack.c.l.b16 %v1400
      %v1449 = vunpack.c.l.b16 %v1401
      %v1450 = vunpack.c.l.b16 %v1402
      %v1451 = vunpack.c.l.b16 %v1403
      %v1452 = vunpack.c.l.b16 %v1404
      %v1453 = vpack.c.b16 %v1438, %v1437
      %v1454 = vpack.c.b16 %v1440, %v1439
      %v1455 = vpack.c.b16 %v1442, %v1441
      %v1456 = vpack.c.b16 %v1444, %v1443
      %v1457 = vpack.c.b16 %v1446, %v1445
      %v1458 = vpack.c.b16 %v1448, %v1447
      %v1459 = vpack.c.b16 %v1450, %v1449
      %v1460 = vpack.c.b16 %v1452, %v1451
      %1469 = vmatpush.bf16.msra.mxu0 %v1460
      %1470 = vmatpush.bf16.msra.mxu0 %v1459
      %1471 = vmatpush.bf16.msra.mxu0 %v1458
      %1472 = vmatpush.bf16.msra.mxu0 %v1457
      %1473 = vmatpush.bf16.msra.mxu0 %v1456
      %1474 = vmatpush.bf16.msra.mxu0 %v1455
      %1475 = vmatpush.bf16.msra.mxu0 %v1454
      %1476 = vmatpush.bf16.msra.mxu0 %v1453
      %1477 = vmatmul.bf16.gmra.mxu0 %v1413
      %v1478 = vpop.f32.mrf.mxu0
      %v1479 = vadd.f32 0.0, %v1478
      %v1480 = vpop.f32.mrf.mxu0
      %v1481 = vadd.f32 0.0, %v1480
      %1482 = vmatmul.bf16.gmra.mxu0 %v1414
      %v1483 = vpop.f32.mrf.mxu0
      %v1484 = vadd.f32 0.0, %v1483
      %v1485 = vpop.f32.mrf.mxu0
      %v1486 = vadd.f32 0.0, %v1485
      %1487 = vmatmul.bf16.gmra.mxu0 %v1415
      %v1488 = vpop.f32.mrf.mxu0
      %v1489 = vadd.f32 0.0, %v1488
      %v1490 = vpop.f32.mrf.mxu0
      %v1491 = vadd.f32 0.0, %v1490
      %1492 = vmatmul.bf16.gmra.mxu0 %v1416
      %v1493 = vpop.f32.mrf.mxu0
      %v1494 = vadd.f32 0.0, %v1493
      %v1495 = vpop.f32.mrf.mxu0
      %v1496 = vadd.f32 0.0, %v1495
      %1497 = vdwg.mxu0
      %v1498 = vadd.f32 %v1324, %v1479
      %v1499 = vadd.f32 %v1325, %v1481
      %v1500 = vadd.f32 %v1326, %v1484
      %v1501 = vadd.f32 %v1327, %v1486
      %v1502 = vadd.f32 %v1328, %v1489
      %v1503 = vadd.f32 %v1329, %v1491
      %v1504 = vadd.f32 %v1330, %v1494
      %v1505 = vadd.f32 %v1331, %v1496
      %s1506 = scalar_lea.vmem [#allocation2], 16
      %v1507 = vld [vmem:[%s1506] sm:$0xf]
      %v1508 = vld [vmem:[%s1506 + $0x8] sm:$0xf]
      %v1509 = vld [vmem:[%s1506 + $0x10] sm:$0xf]
      %v1510 = vld [vmem:[%s1506 + $0x18] sm:$0xf]
      %v1511 = vld [vmem:[%s1506 + $0x20] sm:$0xf]
      %v1512 = vld [vmem:[%s1506 + $0x28] sm:$0xf]
      %v1513 = vld [vmem:[%s1506 + $0x30] sm:$0xf]
      %v1514 = vld [vmem:[%s1506 + $0x38] sm:$0xf]
      %s1515 = scalar_lea.vmem %s1, 384
      %v1516 = vld [vmem:[%s1515] sm:$0xf]
      %v1517 = vld [vmem:[%s1515 + $0x4] sm:$0xf]
      %v1518 = vld [vmem:[%s1515 + $0x8] sm:$0xf]
      %v1519 = vld [vmem:[%s1515 + $0xc] sm:$0xf]
      %v1520 = vld [vmem:[%s1515 + $0x10] sm:$0xf]
      %v1521 = vld [vmem:[%s1515 + $0x14] sm:$0xf]
      %v1522 = vld [vmem:[%s1515 + $0x18] sm:$0xf]
      %v1523 = vld [vmem:[%s1515 + $0x1c] sm:$0xf]
      %v1524 = vld [vmem:[%s1515 + $0x20] sm:$0xf]
      %v1525 = vld [vmem:[%s1515 + $0x24] sm:$0xf]
      %v1526 = vld [vmem:[%s1515 + $0x28] sm:$0xf]
      %v1527 = vld [vmem:[%s1515 + $0x2c] sm:$0xf]
      %v1528 = vld [vmem:[%s1515 + $0x30] sm:$0xf]
      %v1529 = vld [vmem:[%s1515 + $0x34] sm:$0xf]
      %v1530 = vld [vmem:[%s1515 + $0x38] sm:$0xf]
      %v1531 = vld [vmem:[%s1515 + $0x3c] sm:$0xf]
      %v1540 = vunpack.c.l.b16 %v1507
      %v1541 = vunpack.c.l.b16 %v1508
      %v1542 = vunpack.c.l.b16 %v1509
      %v1543 = vunpack.c.l.b16 %v1510
      %v1544 = vunpack.c.l.b16 %v1511
      %v1545 = vunpack.c.l.b16 %v1512
      %v1546 = vunpack.c.l.b16 %v1513
      %v1547 = vunpack.c.l.b16 %v1514
      %v1548 = vpack.c.b16 %v1541, %v1540
      %v1549 = vpack.c.b16 %v1543, %v1542
      %v1550 = vpack.c.b16 %v1545, %v1544
      %v1551 = vpack.c.b16 %v1547, %v1546
      %v1572 = vunpack.c.l.b16 %v1516
      %v1573 = vunpack.c.l.b16 %v1517
      %v1574 = vunpack.c.l.b16 %v1518
      %v1575 = vunpack.c.l.b16 %v1519
      %v1576 = vunpack.c.l.b16 %v1520
      %v1577 = vunpack.c.l.b16 %v1521
      %v1578 = vunpack.c.l.b16 %v1522
      %v1579 = vunpack.c.l.b16 %v1523
      %v1580 = vunpack.c.l.b16 %v1524
      %v1581 = vunpack.c.l.b16 %v1525
      %v1582 = vunpack.c.l.b16 %v1526
      %v1583 = vunpack.c.l.b16 %v1527
      %v1584 = vunpack.c.l.b16 %v1528
      %v1585 = vunpack.c.l.b16 %v1529
      %v1586 = vunpack.c.l.b16 %v1530
      %v1587 = vunpack.c.l.b16 %v1531
      %v1588 = vpack.c.b16 %v1573, %v1572
      %v1589 = vpack.c.b16 %v1575, %v1574
      %v1590 = vpack.c.b16 %v1577, %v1576
      %v1591 = vpack.c.b16 %v1579, %v1578
      %v1592 = vpack.c.b16 %v1581, %v1580
      %v1593 = vpack.c.b16 %v1583, %v1582
      %v1594 = vpack.c.b16 %v1585, %v1584
      %v1595 = vpack.c.b16 %v1587, %v1586
      %1604 = vmatpush.bf16.msra.mxu0 %v1595
      %1605 = vmatpush.bf16.msra.mxu0 %v1594
      %1606 = vmatpush.bf16.msra.mxu0 %v1593
      %1607 = vmatpush.bf16.msra.mxu0 %v1592
      %1608 = vmatpush.bf16.msra.mxu0 %v1591
      %1609 = vmatpush.bf16.msra.mxu0 %v1590
      %1610 = vmatpush.bf16.msra.mxu0 %v1589
      %1611 = vmatpush.bf16.msra.mxu0 %v1588
      %1612 = vmatmul.bf16.gmra.mxu0 %v1548
      %v1613 = vpop.f32.mrf.mxu0
      %v1614 = vadd.f32 0.0, %v1613
      %v1615 = vpop.f32.mrf.mxu0
      %v1616 = vadd.f32 0.0, %v1615
      %1617 = vmatmul.bf16.gmra.mxu0 %v1549
      %v1618 = vpop.f32.mrf.mxu0
      %v1619 = vadd.f32 0.0, %v1618
      %v1620 = vpop.f32.mrf.mxu0
      %v1621 = vadd.f32 0.0, %v1620
      %1622 = vmatmul.bf16.gmra.mxu0 %v1550
      %v1623 = vpop.f32.mrf.mxu0
      %v1624 = vadd.f32 0.0, %v1623
      %v1625 = vpop.f32.mrf.mxu0
      %v1626 = vadd.f32 0.0, %v1625
      %1627 = vmatmul.bf16.gmra.mxu0 %v1551
      %v1628 = vpop.f32.mrf.mxu0
      %v1629 = vadd.f32 0.0, %v1628
      %v1630 = vpop.f32.mrf.mxu0
      %v1631 = vadd.f32 0.0, %v1630
      %1632 = vdwg.mxu0
      %v1633 = vadd.f32 %v1498, %v1614
      %v1634 = vadd.f32 %v1499, %v1616
      %v1635 = vadd.f32 %v1500, %v1619
      %v1636 = vadd.f32 %v1501, %v1621
      %v1637 = vadd.f32 %v1502, %v1624
      %v1638 = vadd.f32 %v1503, %v1626
      %v1639 = vadd.f32 %v1504, %v1629
      %v1640 = vadd.f32 %v1505, %v1631
      %v1641 = vld [vmem:[%s1506] sm:$0xf]
      %v1642 = vld [vmem:[%s1506 + $0x4] sm:$0x1]
      %v1643 = vld [vmem:[%s1506 + $0x8] sm:$0xf]
      %v1644 = vld [vmem:[%s1506 + $0xc] sm:$0x1]
      %v1645 = vld [vmem:[%s1506 + $0x10] sm:$0xf]
      %v1646 = vld [vmem:[%s1506 + $0x14] sm:$0x1]
      %v1647 = vld [vmem:[%s1506 + $0x18] sm:$0xf]
      %v1648 = vld [vmem:[%s1506 + $0x1c] sm:$0x1]
      %v1649 = vld [vmem:[%s1506 + $0x20] sm:$0xf]
      %v1650 = vld [vmem:[%s1506 + $0x24] sm:$0x1]
      %v1651 = vld [vmem:[%s1506 + $0x28] sm:$0xf]
      %v1652 = vld [vmem:[%s1506 + $0x2c] sm:$0x1]
      %v1653 = vld [vmem:[%s1506 + $0x30] sm:$0xf]
      %v1654 = vld [vmem:[%s1506 + $0x34] sm:$0x1]
      %v1655 = vld [vmem:[%s1506 + $0x38] sm:$0xf]
      %v1656 = vld [vmem:[%s1506 + $0x3c] sm:$0x1]
      %v1658 = vshrl.u32 %v1641, 16
      %v1660 = vrot.slane %v1658, 4
      %v1661 = vshll.u32 %v1641, 16
      %v1663 = vrot.slane %v1661, 5
      %v1664 = vor.u32 %v1660, %v1663
      %v1665 = vrot.slane %v1664, 4
      %v1667 = vshll.u32 %v1642, 16
      %v1669 = vrot.slane %v1667, 5
      %v1670 = vsel %vm451, %v1665, %v1669
      %v1672 = vshrl.u32 %v1643, 16
      %v1674 = vrot.slane %v1672, 4
      %v1675 = vshll.u32 %v1643, 16
      %v1677 = vrot.slane %v1675, 5
      %v1678 = vor.u32 %v1674, %v1677
      %v1679 = vrot.slane %v1678, 4
      %v1681 = vshll.u32 %v1644, 16
      %v1683 = vrot.slane %v1681, 5
      %v1684 = vsel %vm451, %v1679, %v1683
      %v1686 = vshrl.u32 %v1645, 16
      %v1688 = vrot.slane %v1686, 4
      %v1689 = vshll.u32 %v1645, 16
      %v1691 = vrot.slane %v1689, 5
      %v1692 = vor.u32 %v1688, %v1691
      %v1693 = vrot.slane %v1692, 4
      %v1695 = vshll.u32 %v1646, 16
      %v1697 = vrot.slane %v1695, 5
      %v1698 = vsel %vm451, %v1693, %v1697
      %v1700 = vshrl.u32 %v1647, 16
      %v1702 = vrot.slane %v1700, 4
      %v1703 = vshll.u32 %v1647, 16
      %v1705 = vrot.slane %v1703, 5
      %v1706 = vor.u32 %v1702, %v1705
      %v1707 = vrot.slane %v1706, 4
      %v1709 = vshll.u32 %v1648, 16
      %v1711 = vrot.slane %v1709, 5
      %v1712 = vsel %vm451, %v1707, %v1711
      %v1714 = vshrl.u32 %v1649, 16
      %v1716 = vrot.slane %v1714, 4
      %v1717 = vshll.u32 %v1649, 16
      %v1719 = vrot.slane %v1717, 5
      %v1720 = vor.u32 %v1716, %v1719
      %v1721 = vrot.slane %v1720, 4
      %v1723 = vshll.u32 %v1650, 16
      %v1725 = vrot.slane %v1723, 5
      %v1726 = vsel %vm451, %v1721, %v1725
      %v1728 = vshrl.u32 %v1651, 16
      %v1730 = vrot.slane %v1728, 4
      %v1731 = vshll.u32 %v1651, 16
      %v1733 = vrot.slane %v1731, 5
      %v1734 = vor.u32 %v1730, %v1733
      %v1735 = vrot.slane %v1734, 4
      %v1737 = vshll.u32 %v1652, 16
      %v1739 = vrot.slane %v1737, 5
      %v1740 = vsel %vm451, %v1735, %v1739
      %v1742 = vshrl.u32 %v1653, 16
      %v1744 = vrot.slane %v1742, 4
      %v1745 = vshll.u32 %v1653, 16
      %v1747 = vrot.slane %v1745, 5
      %v1748 = vor.u32 %v1744, %v1747
      %v1749 = vrot.slane %v1748, 4
      %v1751 = vshll.u32 %v1654, 16
      %v1753 = vrot.slane %v1751, 5
      %v1754 = vsel %vm451, %v1749, %v1753
      %v1756 = vshrl.u32 %v1655, 16
      %v1758 = vrot.slane %v1756, 4
      %v1759 = vshll.u32 %v1655, 16
      %v1761 = vrot.slane %v1759, 5
      %v1762 = vor.u32 %v1758, %v1761
      %v1763 = vrot.slane %v1762, 4
      %v1765 = vshll.u32 %v1656, 16
      %v1767 = vrot.slane %v1765, 5
      %v1768 = vsel %vm451, %v1763, %v1767
      %s1769 = scalar_lea.vmem %s1, 448
      %v1770 = vld [vmem:[%s1769] sm:$0xf]
      %v1771 = vld [vmem:[%s1769 + $0x4] sm:$0xf]
      %v1772 = vld [vmem:[%s1769 + $0x8] sm:$0xf]
      %v1773 = vld [vmem:[%s1769 + $0xc] sm:$0xf]
      %v1774 = vld [vmem:[%s1769 + $0x10] sm:$0xf]
      %v1775 = vld [vmem:[%s1769 + $0x14] sm:$0xf]
      %v1776 = vld [vmem:[%s1769 + $0x18] sm:$0xf]
      %v1777 = vld [vmem:[%s1769 + $0x1c] sm:$0xf]
      %v1778 = vld [vmem:[%s1769 + $0x20] sm:$0xf]
      %v1779 = vld [vmem:[%s1769 + $0x24] sm:$0xf]
      %v1780 = vld [vmem:[%s1769 + $0x28] sm:$0xf]
      %v1781 = vld [vmem:[%s1769 + $0x2c] sm:$0xf]
      %v1782 = vld [vmem:[%s1769 + $0x30] sm:$0xf]
      %v1783 = vld [vmem:[%s1769 + $0x34] sm:$0xf]
      %v1784 = vld [vmem:[%s1769 + $0x38] sm:$0xf]
      %v1785 = vld [vmem:[%s1769 + $0x3c] sm:$0xf]
      %v1786 = vunpack.c.l.b16 %v1670
      %v1787 = vunpack.c.l.b16 %v1684
      %v1788 = vunpack.c.l.b16 %v1698
      %v1789 = vunpack.c.l.b16 %v1712
      %v1790 = vunpack.c.l.b16 %v1726
      %v1791 = vunpack.c.l.b16 %v1740
      %v1792 = vunpack.c.l.b16 %v1754
      %v1793 = vunpack.c.l.b16 %v1768
      %v1794 = vpack.c.b16 %v1787, %v1786
      %v1795 = vpack.c.b16 %v1789, %v1788
      %v1796 = vpack.c.b16 %v1791, %v1790
      %v1797 = vpack.c.b16 %v1793, %v1792
      %v1818 = vunpack.c.l.b16 %v1770
      %v1819 = vunpack.c.l.b16 %v1771
      %v1820 = vunpack.c.l.b16 %v1772
      %v1821 = vunpack.c.l.b16 %v1773
      %v1822 = vunpack.c.l.b16 %v1774
      %v1823 = vunpack.c.l.b16 %v1775
      %v1824 = vunpack.c.l.b16 %v1776
      %v1825 = vunpack.c.l.b16 %v1777
      %v1826 = vunpack.c.l.b16 %v1778
      %v1827 = vunpack.c.l.b16 %v1779
      %v1828 = vunpack.c.l.b16 %v1780
      %v1829 = vunpack.c.l.b16 %v1781
      %v1830 = vunpack.c.l.b16 %v1782
      %v1831 = vunpack.c.l.b16 %v1783
      %v1832 = vunpack.c.l.b16 %v1784
      %v1833 = vunpack.c.l.b16 %v1785
      %v1834 = vpack.c.b16 %v1819, %v1818
      %v1835 = vpack.c.b16 %v1821, %v1820
      %v1836 = vpack.c.b16 %v1823, %v1822
      %v1837 = vpack.c.b16 %v1825, %v1824
      %v1838 = vpack.c.b16 %v1827, %v1826
      %v1839 = vpack.c.b16 %v1829, %v1828
      %v1840 = vpack.c.b16 %v1831, %v1830
      %v1841 = vpack.c.b16 %v1833, %v1832
      %1850 = vmatpush.bf16.msra.mxu0 %v1841
      %1851 = vmatpush.bf16.msra.mxu0 %v1840
      %1852 = vmatpush.bf16.msra.mxu0 %v1839
      %1853 = vmatpush.bf16.msra.mxu0 %v1838
      %1854 = vmatpush.bf16.msra.mxu0 %v1837
      %1855 = vmatpush.bf16.msra.mxu0 %v1836
      %1856 = vmatpush.bf16.msra.mxu0 %v1835
      %1857 = vmatpush.bf16.msra.mxu0 %v1834
      %1858 = vmatmul.bf16.gmra.mxu0 %v1794
      %v1859 = vpop.f32.mrf.mxu0
      %v1860 = vadd.f32 0.0, %v1859
      %v1861 = vpop.f32.mrf.mxu0
      %v1862 = vadd.f32 0.0, %v1861
      %1863 = vmatmul.bf16.gmra.mxu0 %v1795
      %v1864 = vpop.f32.mrf.mxu0
      %v1865 = vadd.f32 0.0, %v1864
      %v1866 = vpop.f32.mrf.mxu0
      %v1867 = vadd.f32 0.0, %v1866
      %1868 = vmatmul.bf16.gmra.mxu0 %v1796
      %v1869 = vpop.f32.mrf.mxu0
      %v1870 = vadd.f32 0.0, %v1869
      %v1871 = vpop.f32.mrf.mxu0
      %v1872 = vadd.f32 0.0, %v1871
      %1873 = vmatmul.bf16.gmra.mxu0 %v1797
      %v1874 = vpop.f32.mrf.mxu0
      %v1875 = vadd.f32 0.0, %v1874
      %v1876 = vpop.f32.mrf.mxu0
      %v1877 = vadd.f32 0.0, %v1876
      %1878 = vdwg.mxu0
      %v1879 = vadd.f32 %v1633, %v1860
      %v1880 = vadd.f32 %v1634, %v1862
      %v1881 = vadd.f32 %v1635, %v1865
      %v1882 = vadd.f32 %v1636, %v1867
      %v1883 = vadd.f32 %v1637, %v1870
      %v1884 = vadd.f32 %v1638, %v1872
      %v1885 = vadd.f32 %v1639, %v1875
      %v1886 = vadd.f32 %v1640, %v1877
      %v1887 = vld [vmem:[%s1506] sm:$0xe]
      %v1888 = vld [vmem:[%s1506 + $0x8] sm:$0xe]
      %v1889 = vld [vmem:[%s1506 + $0x10] sm:$0xe]
      %v1890 = vld [vmem:[%s1506 + $0x18] sm:$0xe]
      %v1891 = vld [vmem:[%s1506 + $0x20] sm:$0xe]
      %v1892 = vld [vmem:[%s1506 + $0x28] sm:$0xe]
      %v1893 = vld [vmem:[%s1506 + $0x30] sm:$0xe]
      %v1894 = vld [vmem:[%s1506 + $0x38] sm:$0xe]
      %v1911 = vrot.slane %v1887, 5
      %v1912 = vrot.slane %v1911, 4
      %v1913 = vrot.slane %v1642, 5
      %v1914 = vsel %vm801, %v1912, %v1913
      %v1915 = vrot.slane %v1888, 5
      %v1916 = vrot.slane %v1915, 4
      %v1917 = vrot.slane %v1644, 5
      %v1918 = vsel %vm801, %v1916, %v1917
      %v1919 = vrot.slane %v1889, 5
      %v1920 = vrot.slane %v1919, 4
      %v1921 = vrot.slane %v1646, 5
      %v1922 = vsel %vm801, %v1920, %v1921
      %v1923 = vrot.slane %v1890, 5
      %v1924 = vrot.slane %v1923, 4
      %v1925 = vrot.slane %v1648, 5
      %v1926 = vsel %vm801, %v1924, %v1925
      %v1927 = vrot.slane %v1891, 5
      %v1928 = vrot.slane %v1927, 4
      %v1929 = vrot.slane %v1650, 5
      %v1930 = vsel %vm801, %v1928, %v1929
      %v1931 = vrot.slane %v1892, 5
      %v1932 = vrot.slane %v1931, 4
      %v1933 = vrot.slane %v1652, 5
      %v1934 = vsel %vm801, %v1932, %v1933
      %v1935 = vrot.slane %v1893, 5
      %v1936 = vrot.slane %v1935, 4
      %v1937 = vrot.slane %v1654, 5
      %v1938 = vsel %vm801, %v1936, %v1937
      %v1939 = vrot.slane %v1894, 5
      %v1940 = vrot.slane %v1939, 4
      %v1941 = vrot.slane %v1656, 5
      %v1942 = vsel %vm801, %v1940, %v1941
      %s1943 = scalar_lea.vmem %s1, 512
      %v1944 = vld [vmem:[%s1943] sm:$0xf]
      %v1945 = vld [vmem:[%s1943 + $0x4] sm:$0xf]
      %v1946 = vld [vmem:[%s1943 + $0x8] sm:$0xf]
      %v1947 = vld [vmem:[%s1943 + $0xc] sm:$0xf]
      %v1948 = vld [vmem:[%s1943 + $0x10] sm:$0xf]
      %v1949 = vld [vmem:[%s1943 + $0x14] sm:$0xf]
      %v1950 = vld [vmem:[%s1943 + $0x18] sm:$0xf]
      %v1951 = vld [vmem:[%s1943 + $0x1c] sm:$0xf]
      %v1952 = vld [vmem:[%s1943 + $0x20] sm:$0xf]
      %v1953 = vld [vmem:[%s1943 + $0x24] sm:$0xf]
      %v1954 = vld [vmem:[%s1943 + $0x28] sm:$0xf]
      %v1955 = vld [vmem:[%s1943 + $0x2c] sm:$0xf]
      %v1956 = vld [vmem:[%s1943 + $0x30] sm:$0xf]
      %v1957 = vld [vmem:[%s1943 + $0x34] sm:$0xf]
      %v1958 = vld [vmem:[%s1943 + $0x38] sm:$0xf]
      %v1959 = vld [vmem:[%s1943 + $0x3c] sm:$0xf]
      %v1960 = vunpack.c.l.b16 %v1914
      %v1961 = vunpack.c.l.b16 %v1918
      %v1962 = vunpack.c.l.b16 %v1922
      %v1963 = vunpack.c.l.b16 %v1926
      %v1964 = vunpack.c.l.b16 %v1930
      %v1965 = vunpack.c.l.b16 %v1934
      %v1966 = vunpack.c.l.b16 %v1938
      %v1967 = vunpack.c.l.b16 %v1942
      %v1968 = vpack.c.b16 %v1961, %v1960
      %v1969 = vpack.c.b16 %v1963, %v1962
      %v1970 = vpack.c.b16 %v1965, %v1964
      %v1971 = vpack.c.b16 %v1967, %v1966
      %v1992 = vunpack.c.l.b16 %v1944
      %v1993 = vunpack.c.l.b16 %v1945
      %v1994 = vunpack.c.l.b16 %v1946
      %v1995 = vunpack.c.l.b16 %v1947
      %v1996 = vunpack.c.l.b16 %v1948
      %v1997 = vunpack.c.l.b16 %v1949
      %v1998 = vunpack.c.l.b16 %v1950
      %v1999 = vunpack.c.l.b16 %v1951
      %v2000 = vunpack.c.l.b16 %v1952
      %v2001 = vunpack.c.l.b16 %v1953
      %v2002 = vunpack.c.l.b16 %v1954
      %v2003 = vunpack.c.l.b16 %v1955
      %v2004 = vunpack.c.l.b16 %v1956
      %v2005 = vunpack.c.l.b16 %v1957
      %v2006 = vunpack.c.l.b16 %v1958
      %v2007 = vunpack.c.l.b16 %v1959
      %v2008 = vpack.c.b16 %v1993, %v1992
      %v2009 = vpack.c.b16 %v1995, %v1994
      %v2010 = vpack.c.b16 %v1997, %v1996
      %v2011 = vpack.c.b16 %v1999, %v1998
      %v2012 = vpack.c.b16 %v2001, %v2000
      %v2013 = vpack.c.b16 %v2003, %v2002
      %v2014 = vpack.c.b16 %v2005, %v2004
      %v2015 = vpack.c.b16 %v2007, %v2006
      %2024 = vmatpush.bf16.msra.mxu0 %v2015
      %2025 = vmatpush.bf16.msra.mxu0 %v2014
      %2026 = vmatpush.bf16.msra.mxu0 %v2013
      %2027 = vmatpush.bf16.msra.mxu0 %v2012
      %2028 = vmatpush.bf16.msra.mxu0 %v2011
      %2029 = vmatpush.bf16.msra.mxu0 %v2010
      %2030 = vmatpush.bf16.msra.mxu0 %v2009
      %2031 = vmatpush.bf16.msra.mxu0 %v2008
      %2032 = vmatmul.bf16.gmra.mxu0 %v1968
      %v2033 = vpop.f32.mrf.mxu0
      %v2034 = vadd.f32 0.0, %v2033
      %v2035 = vpop.f32.mrf.mxu0
      %v2036 = vadd.f32 0.0, %v2035
      %2037 = vmatmul.bf16.gmra.mxu0 %v1969
      %v2038 = vpop.f32.mrf.mxu0
      %v2039 = vadd.f32 0.0, %v2038
      %v2040 = vpop.f32.mrf.mxu0
      %v2041 = vadd.f32 0.0, %v2040
      %2042 = vmatmul.bf16.gmra.mxu0 %v1970
      %v2043 = vpop.f32.mrf.mxu0
      %v2044 = vadd.f32 0.0, %v2043
      %v2045 = vpop.f32.mrf.mxu0
      %v2046 = vadd.f32 0.0, %v2045
      %2047 = vmatmul.bf16.gmra.mxu0 %v1971
      %v2048 = vpop.f32.mrf.mxu0
      %v2049 = vadd.f32 0.0, %v2048
      %v2050 = vpop.f32.mrf.mxu0
      %v2051 = vadd.f32 0.0, %v2050
      %2052 = vdwg.mxu0
      %v2053 = vadd.f32 %v1879, %v2034
      %v2054 = vadd.f32 %v1880, %v2036
      %v2055 = vadd.f32 %v1881, %v2039
      %v2056 = vadd.f32 %v1882, %v2041
      %v2057 = vadd.f32 %v1883, %v2044
      %v2058 = vadd.f32 %v1884, %v2046
      %v2059 = vadd.f32 %v1885, %v2049
      %v2060 = vadd.f32 %v1886, %v2051
      %v2061 = vld [vmem:[%s2] sm:$0x1]
      %v2063 = vperm.slane %v2061, 0
      %v2065 = vadd.f32 %v2053, %v2063
      %v2066 = vadd.f32 %v2054, %v2063
      %v2067 = vadd.f32 %v2055, %v2063
      %v2068 = vadd.f32 %v2056, %v2063
      %v2069 = vadd.f32 %v2057, %v2063
      %v2070 = vadd.f32 %v2058, %v2063
      %v2071 = vadd.f32 %v2059, %v2063
      %v2072 = vadd.f32 %v2060, %v2063
      %vm2073 = vcmp.ge.f32.partialorder %v2065, 0.0
      %vm2074 = vcmp.ge.f32.partialorder %v2066, 0.0
      %vm2075 = vcmp.ge.f32.partialorder %v2067, 0.0
      %vm2076 = vcmp.ge.f32.partialorder %v2068, 0.0
      %vm2077 = vcmp.ge.f32.partialorder %v2069, 0.0
      %vm2078 = vcmp.ge.f32.partialorder %v2070, 0.0
      %vm2079 = vcmp.ge.f32.partialorder %v2071, 0.0
      %vm2080 = vcmp.ge.f32.partialorder %v2072, 0.0
      %v2081 = vmul.f32 %v2065, 0.01
      %v2082 = vmul.f32 %v2066, 0.01
      %v2083 = vmul.f32 %v2067, 0.01
      %v2084 = vmul.f32 %v2068, 0.01
      %v2085 = vmul.f32 %v2069, 0.01
      %v2086 = vmul.f32 %v2070, 0.01
      %v2087 = vmul.f32 %v2071, 0.01
      %v2088 = vmul.f32 %v2072, 0.01
      %v2089 = vsel %vm2073, %v2065, %v2081
      %v2090 = vsel %vm2074, %v2066, %v2082
      %v2091 = vsel %vm2075, %v2067, %v2083
      %v2092 = vsel %vm2076, %v2068, %v2084
      %v2093 = vsel %vm2077, %v2069, %v2085
      %v2094 = vsel %vm2078, %v2070, %v2086
      %v2095 = vsel %vm2079, %v2071, %v2087
      %v2096 = vsel %vm2080, %v2072, %v2088
      %2097 = vst [vmem:[#allocation3] sm:$0xf] 0
      %2098 = vst [vmem:[#allocation3 + $0x4] sm:$0x1] 0
      %2099 = vst [vmem:[#allocation3 + $0x8] sm:$0xf] 0
      %2100 = vst [vmem:[#allocation3 + $0xc] sm:$0x1] 0
      %2101 = vst [vmem:[#allocation3 + $0x10] sm:$0xf] 0
      %2102 = vst [vmem:[#allocation3 + $0x14] sm:$0x1] 0
      %2103 = vst [vmem:[#allocation3 + $0x18] sm:$0xf] 0
      %2104 = vst [vmem:[#allocation3 + $0x1c] sm:$0x1] 0
      %2105 = vst [vmem:[#allocation3 + $0x20] sm:$0xf] 0
      %2106 = vst [vmem:[#allocation3 + $0x24] sm:$0x1] 0
      %2107 = vst [vmem:[#allocation3 + $0x28] sm:$0xf] 0
      %2108 = vst [vmem:[#allocation3 + $0x2c] sm:$0x1] 0
      %2109 = vst [vmem:[#allocation3 + $0x30] sm:$0xf] 0
      %2110 = vst [vmem:[#allocation3 + $0x34] sm:$0x1] 0
      %2111 = vst [vmem:[#allocation3 + $0x38] sm:$0xf] 0
      %2112 = vst [vmem:[#allocation3 + $0x3c] sm:$0x1] 0
      %2113 = vst [vmem:[#allocation3 + $0x40] sm:$0xf] 0
      %2114 = vst [vmem:[#allocation3 + $0x44] sm:$0x1] 0
      %2115 = vst [vmem:[#allocation3 + $0x48] sm:$0xf] 0
      %2116 = vst [vmem:[#allocation3 + $0x4c] sm:$0x1] 0
      %v2117 = vpack.c.bf16 %v2089, %v2089
      %v2118 = vpack.c.bf16 %v2090, %v2090
      %v2119 = vpack.c.bf16 %v2091, %v2091
      %v2120 = vpack.c.bf16 %v2092, %v2092
      %v2121 = vpack.c.bf16 %v2093, %v2093
      %v2122 = vpack.c.bf16 %v2094, %v2094
      %v2123 = vpack.c.bf16 %v2095, %v2095
      %v2124 = vpack.c.bf16 %v2096, %v2096
      %v2126 = vshrl.u32 %v2117, 16
      %v2128 = vrot.slane %v2126, 7
      %v2129 = vshll.u32 %v2117, 16
      %v2131 = vor.u32 %v2128, %v2129
      %v2132 = vrot.slane %v2128, 4
      %v2134 = vshrl.u32 %v2118, 16
      %v2136 = vrot.slane %v2134, 7
      %v2137 = vshll.u32 %v2118, 16
      %v2139 = vor.u32 %v2136, %v2137
      %v2140 = vrot.slane %v2136, 4
      %v2142 = vshrl.u32 %v2119, 16
      %v2144 = vrot.slane %v2142, 7
      %v2145 = vshll.u32 %v2119, 16
      %v2147 = vor.u32 %v2144, %v2145
      %v2148 = vrot.slane %v2144, 4
      %v2150 = vshrl.u32 %v2120, 16
      %v2152 = vrot.slane %v2150, 7
      %v2153 = vshll.u32 %v2120, 16
      %v2155 = vor.u32 %v2152, %v2153
      %v2156 = vrot.slane %v2152, 4
      %v2158 = vshrl.u32 %v2121, 16
      %v2160 = vrot.slane %v2158, 7
      %v2161 = vshll.u32 %v2121, 16
      %v2163 = vor.u32 %v2160, %v2161
      %v2164 = vrot.slane %v2160, 4
      %v2166 = vshrl.u32 %v2122, 16
      %v2168 = vrot.slane %v2166, 7
      %v2169 = vshll.u32 %v2122, 16
      %v2171 = vor.u32 %v2168, %v2169
      %v2172 = vrot.slane %v2168, 4
      %v2174 = vshrl.u32 %v2123, 16
      %v2176 = vrot.slane %v2174, 7
      %v2177 = vshll.u32 %v2123, 16
      %v2179 = vor.u32 %v2176, %v2177
      %v2180 = vrot.slane %v2176, 4
      %v2182 = vshrl.u32 %v2124, 16
      %v2184 = vrot.slane %v2182, 7
      %v2185 = vshll.u32 %v2124, 16
      %v2187 = vor.u32 %v2184, %v2185
      %v2188 = vrot.slane %v2184, 4
      %s2205 = scalar_lea.vmem [#allocation3], 8
      %v2206 = vld [vmem:[%s2205] sm:$0xf]
      %v2207 = vsel %vm365, %v2131, %v2206
      %2208 = vst [vmem:[%s2205] sm:$0xf] %v2207
      %v2209 = vld [vmem:[%s2205 + $0x4] sm:$0x1]
      %v2210 = vsel %vm371, %v2132, %v2209
      %2211 = vst [vmem:[%s2205 + $0x4] sm:$0x1] %v2210
      %v2212 = vld [vmem:[%s2205 + $0x8] sm:$0xf]
      %v2213 = vsel %vm365, %v2139, %v2212
      %2214 = vst [vmem:[%s2205 + $0x8] sm:$0xf] %v2213
      %v2215 = vld [vmem:[%s2205 + $0xc] sm:$0x1]
      %v2216 = vsel %vm371, %v2140, %v2215
      %2217 = vst [vmem:[%s2205 + $0xc] sm:$0x1] %v2216
      %v2218 = vld [vmem:[%s2205 + $0x10] sm:$0xf]
      %v2219 = vsel %vm365, %v2147, %v2218
      %2220 = vst [vmem:[%s2205 + $0x10] sm:$0xf] %v2219
      %v2221 = vld [vmem:[%s2205 + $0x14] sm:$0x1]
      %v2222 = vsel %vm371, %v2148, %v2221
      %2223 = vst [vmem:[%s2205 + $0x14] sm:$0x1] %v2222
      %v2224 = vld [vmem:[%s2205 + $0x18] sm:$0xf]
      %v2225 = vsel %vm365, %v2155, %v2224
      %2226 = vst [vmem:[%s2205 + $0x18] sm:$0xf] %v2225
      %v2227 = vld [vmem:[%s2205 + $0x1c] sm:$0x1]
      %v2228 = vsel %vm371, %v2156, %v2227
      %2229 = vst [vmem:[%s2205 + $0x1c] sm:$0x1] %v2228
      %v2230 = vld [vmem:[%s2205 + $0x20] sm:$0xf]
      %v2231 = vsel %vm365, %v2163, %v2230
      %2232 = vst [vmem:[%s2205 + $0x20] sm:$0xf] %v2231
      %v2233 = vld [vmem:[%s2205 + $0x24] sm:$0x1]
      %v2234 = vsel %vm371, %v2164, %v2233
      %2235 = vst [vmem:[%s2205 + $0x24] sm:$0x1] %v2234
      %v2236 = vld [vmem:[%s2205 + $0x28] sm:$0xf]
      %v2237 = vsel %vm365, %v2171, %v2236
      %2238 = vst [vmem:[%s2205 + $0x28] sm:$0xf] %v2237
      %v2239 = vld [vmem:[%s2205 + $0x2c] sm:$0x1]
      %v2240 = vsel %vm371, %v2172, %v2239
      %2241 = vst [vmem:[%s2205 + $0x2c] sm:$0x1] %v2240
      %v2242 = vld [vmem:[%s2205 + $0x30] sm:$0xf]
      %v2243 = vsel %vm365, %v2179, %v2242
      %2244 = vst [vmem:[%s2205 + $0x30] sm:$0xf] %v2243
      %v2245 = vld [vmem:[%s2205 + $0x34] sm:$0x1]
      %v2246 = vsel %vm371, %v2180, %v2245
      %2247 = vst [vmem:[%s2205 + $0x34] sm:$0x1] %v2246
      %v2248 = vld [vmem:[%s2205 + $0x38] sm:$0xf]
      %v2249 = vsel %vm365, %v2187, %v2248
      %2250 = vst [vmem:[%s2205 + $0x38] sm:$0xf] %v2249
      %v2251 = vld [vmem:[%s2205 + $0x3c] sm:$0x1]
      %v2252 = vsel %vm371, %v2188, %v2251
      %2253 = vst [vmem:[%s2205 + $0x3c] sm:$0x1] %v2252
      %v2254 = vld [vmem:[#allocation3] sm:$0xf]
      %v2255 = vld [vmem:[#allocation3 + $0x8] sm:$0xf]
      %v2256 = vld [vmem:[#allocation3 + $0x10] sm:$0xf]
      %v2257 = vld [vmem:[#allocation3 + $0x18] sm:$0xf]
      %v2258 = vld [vmem:[#allocation3 + $0x20] sm:$0xf]
      %v2259 = vld [vmem:[#allocation3 + $0x28] sm:$0xf]
      %v2260 = vld [vmem:[#allocation3 + $0x30] sm:$0xf]
      %v2261 = vld [vmem:[#allocation3 + $0x38] sm:$0xf]
      %v2262 = vld [vmem:[%s3] sm:$0xf]
      %v2263 = vld [vmem:[%s3 + $0x4] sm:$0xf]
      %v2264 = vld [vmem:[%s3 + $0x8] sm:$0xf]
      %v2265 = vld [vmem:[%s3 + $0xc] sm:$0xf]
      %v2266 = vld [vmem:[%s3 + $0x10] sm:$0xf]
      %v2267 = vld [vmem:[%s3 + $0x14] sm:$0xf]
      %v2268 = vld [vmem:[%s3 + $0x18] sm:$0xf]
      %v2269 = vld [vmem:[%s3 + $0x1c] sm:$0xf]
      %v2270 = vld [vmem:[%s3 + $0x20] sm:$0xf]
      %v2271 = vld [vmem:[%s3 + $0x24] sm:$0xf]
      %v2272 = vld [vmem:[%s3 + $0x28] sm:$0xf]
      %v2273 = vld [vmem:[%s3 + $0x2c] sm:$0xf]
      %v2274 = vld [vmem:[%s3 + $0x30] sm:$0xf]
      %v2275 = vld [vmem:[%s3 + $0x34] sm:$0xf]
      %v2276 = vld [vmem:[%s3 + $0x38] sm:$0xf]
      %v2277 = vld [vmem:[%s3 + $0x3c] sm:$0xf]
      %v2278 = vld [vmem:[#allocation3 + $0x4] sm:$0x1]
      %v2279 = vld [vmem:[#allocation3 + $0xc] sm:$0x1]
      %v2280 = vld [vmem:[#allocation3 + $0x14] sm:$0x1]
      %v2281 = vld [vmem:[#allocation3 + $0x1c] sm:$0x1]
      %v2282 = vld [vmem:[#allocation3 + $0x24] sm:$0x1]
      %v2283 = vld [vmem:[#allocation3 + $0x2c] sm:$0x1]
      %v2284 = vld [vmem:[#allocation3 + $0x34] sm:$0x1]
      %v2285 = vld [vmem:[#allocation3 + $0x3c] sm:$0x1]
      %v2287 = vshrl.u32 %v2254, 16
      %v2289 = vrot.slane %v2287, 4
      %v2290 = vshll.u32 %v2254, 16
      %v2292 = vrot.slane %v2290, 5
      %v2293 = vor.u32 %v2289, %v2292
      %v2294 = vrot.slane %v2293, 4
      %v2296 = vshll.u32 %v2278, 16
      %v2298 = vrot.slane %v2296, 5
      %v2299 = vsel %vm451, %v2294, %v2298
      %v2301 = vshrl.u32 %v2255, 16
      %v2303 = vrot.slane %v2301, 4
      %v2304 = vshll.u32 %v2255, 16
      %v2306 = vrot.slane %v2304, 5
      %v2307 = vor.u32 %v2303, %v2306
      %v2308 = vrot.slane %v2307, 4
      %v2310 = vshll.u32 %v2279, 16
      %v2312 = vrot.slane %v2310, 5
      %v2313 = vsel %vm451, %v2308, %v2312
      %v2315 = vshrl.u32 %v2256, 16
      %v2317 = vrot.slane %v2315, 4
      %v2318 = vshll.u32 %v2256, 16
      %v2320 = vrot.slane %v2318, 5
      %v2321 = vor.u32 %v2317, %v2320
      %v2322 = vrot.slane %v2321, 4
      %v2324 = vshll.u32 %v2280, 16
      %v2326 = vrot.slane %v2324, 5
      %v2327 = vsel %vm451, %v2322, %v2326
      %v2329 = vshrl.u32 %v2257, 16
      %v2331 = vrot.slane %v2329, 4
      %v2332 = vshll.u32 %v2257, 16
      %v2334 = vrot.slane %v2332, 5
      %v2335 = vor.u32 %v2331, %v2334
      %v2336 = vrot.slane %v2335, 4
      %v2338 = vshll.u32 %v2281, 16
      %v2340 = vrot.slane %v2338, 5
      %v2341 = vsel %vm451, %v2336, %v2340
      %v2343 = vshrl.u32 %v2258, 16
      %v2345 = vrot.slane %v2343, 4
      %v2346 = vshll.u32 %v2258, 16
      %v2348 = vrot.slane %v2346, 5
      %v2349 = vor.u32 %v2345, %v2348
      %v2350 = vrot.slane %v2349, 4
      %v2352 = vshll.u32 %v2282, 16
      %v2354 = vrot.slane %v2352, 5
      %v2355 = vsel %vm451, %v2350, %v2354
      %v2357 = vshrl.u32 %v2259, 16
      %v2359 = vrot.slane %v2357, 4
      %v2360 = vshll.u32 %v2259, 16
      %v2362 = vrot.slane %v2360, 5
      %v2363 = vor.u32 %v2359, %v2362
      %v2364 = vrot.slane %v2363, 4
      %v2366 = vshll.u32 %v2283, 16
      %v2368 = vrot.slane %v2366, 5
      %v2369 = vsel %vm451, %v2364, %v2368
      %v2371 = vshrl.u32 %v2260, 16
      %v2373 = vrot.slane %v2371, 4
      %v2374 = vshll.u32 %v2260, 16
      %v2376 = vrot.slane %v2374, 5
      %v2377 = vor.u32 %v2373, %v2376
      %v2378 = vrot.slane %v2377, 4
      %v2380 = vshll.u32 %v2284, 16
      %v2382 = vrot.slane %v2380, 5
      %v2383 = vsel %vm451, %v2378, %v2382
      %v2385 = vshrl.u32 %v2261, 16
      %v2387 = vrot.slane %v2385, 4
      %v2388 = vshll.u32 %v2261, 16
      %v2390 = vrot.slane %v2388, 5
      %v2391 = vor.u32 %v2387, %v2390
      %v2392 = vrot.slane %v2391, 4
      %v2394 = vshll.u32 %v2285, 16
      %v2396 = vrot.slane %v2394, 5
      %v2397 = vsel %vm451, %v2392, %v2396
      %s2398 = scalar_lea.vmem %s3, 64
      %v2399 = vld [vmem:[%s2398] sm:$0xf]
      %v2400 = vld [vmem:[%s2398 + $0x4] sm:$0xf]
      %v2401 = vld [vmem:[%s2398 + $0x8] sm:$0xf]
      %v2402 = vld [vmem:[%s2398 + $0xc] sm:$0xf]
      %v2403 = vld [vmem:[%s2398 + $0x10] sm:$0xf]
      %v2404 = vld [vmem:[%s2398 + $0x14] sm:$0xf]
      %v2405 = vld [vmem:[%s2398 + $0x18] sm:$0xf]
      %v2406 = vld [vmem:[%s2398 + $0x1c] sm:$0xf]
      %v2407 = vld [vmem:[%s2398 + $0x20] sm:$0xf]
      %v2408 = vld [vmem:[%s2398 + $0x24] sm:$0xf]
      %v2409 = vld [vmem:[%s2398 + $0x28] sm:$0xf]
      %v2410 = vld [vmem:[%s2398 + $0x2c] sm:$0xf]
      %v2411 = vld [vmem:[%s2398 + $0x30] sm:$0xf]
      %v2412 = vld [vmem:[%s2398 + $0x34] sm:$0xf]
      %v2413 = vld [vmem:[%s2398 + $0x38] sm:$0xf]
      %v2414 = vld [vmem:[%s2398 + $0x3c] sm:$0xf]
      %v2415 = vunpack.c.l.b16 %v2299
      %v2416 = vunpack.c.l.b16 %v2313
      %v2417 = vunpack.c.l.b16 %v2327
      %v2418 = vunpack.c.l.b16 %v2341
      %v2419 = vunpack.c.l.b16 %v2355
      %v2420 = vunpack.c.l.b16 %v2369
      %v2421 = vunpack.c.l.b16 %v2383
      %v2422 = vunpack.c.l.b16 %v2397
      %v2423 = vpack.c.b16 %v2416, %v2415
      %v2424 = vpack.c.b16 %v2418, %v2417
      %v2425 = vpack.c.b16 %v2420, %v2419
      %v2426 = vpack.c.b16 %v2422, %v2421
      %v2447 = vunpack.c.l.b16 %v2399
      %v2448 = vunpack.c.l.b16 %v2400
      %v2449 = vunpack.c.l.b16 %v2401
      %v2450 = vunpack.c.l.b16 %v2402
      %v2451 = vunpack.c.l.b16 %v2403
      %v2452 = vunpack.c.l.b16 %v2404
      %v2453 = vunpack.c.l.b16 %v2405
      %v2454 = vunpack.c.l.b16 %v2406
      %v2455 = vunpack.c.l.b16 %v2407
      %v2456 = vunpack.c.l.b16 %v2408
      %v2457 = vunpack.c.l.b16 %v2409
      %v2458 = vunpack.c.l.b16 %v2410
      %v2459 = vunpack.c.l.b16 %v2411
      %v2460 = vunpack.c.l.b16 %v2412
      %v2461 = vunpack.c.l.b16 %v2413
      %v2462 = vunpack.c.l.b16 %v2414
      %v2463 = vpack.c.b16 %v2448, %v2447
      %v2464 = vpack.c.b16 %v2450, %v2449
      %v2465 = vpack.c.b16 %v2452, %v2451
      %v2466 = vpack.c.b16 %v2454, %v2453
      %v2467 = vpack.c.b16 %v2456, %v2455
      %v2468 = vpack.c.b16 %v2458, %v2457
      %v2469 = vpack.c.b16 %v2460, %v2459
      %v2470 = vpack.c.b16 %v2462, %v2461
      %2479 = vmatpush.bf16.msra.mxu0 %v2470
      %2480 = vmatpush.bf16.msra.mxu0 %v2469
      %2481 = vmatpush.bf16.msra.mxu0 %v2468
      %2482 = vmatpush.bf16.msra.mxu0 %v2467
      %2483 = vmatpush.bf16.msra.mxu0 %v2466
      %2484 = vmatpush.bf16.msra.mxu0 %v2465
      %2485 = vmatpush.bf16.msra.mxu0 %v2464
      %2486 = vmatpush.bf16.msra.mxu0 %v2463
      %2487 = vmatmul.bf16.gmra.mxu0 %v2423
      %v2488 = vpop.f32.mrf.mxu0
      %v2489 = vadd.f32 0.0, %v2488
      %v2490 = vpop.f32.mrf.mxu0
      %v2491 = vadd.f32 0.0, %v2490
      %2492 = vmatmul.bf16.gmra.mxu0 %v2424
      %v2493 = vpop.f32.mrf.mxu0
      %v2494 = vadd.f32 0.0, %v2493
      %v2495 = vpop.f32.mrf.mxu0
      %v2496 = vadd.f32 0.0, %v2495
      %2497 = vmatmul.bf16.gmra.mxu0 %v2425
      %v2498 = vpop.f32.mrf.mxu0
      %v2499 = vadd.f32 0.0, %v2498
      %v2500 = vpop.f32.mrf.mxu0
      %v2501 = vadd.f32 0.0, %v2500
      %2502 = vmatmul.bf16.gmra.mxu0 %v2426
      %v2503 = vpop.f32.mrf.mxu0
      %v2504 = vadd.f32 0.0, %v2503
      %v2505 = vpop.f32.mrf.mxu0
      %v2506 = vadd.f32 0.0, %v2505
      %2507 = vdwg.mxu0
      %v2516 = vunpack.c.l.b16 %v2254
      %v2517 = vunpack.c.l.b16 %v2255
      %v2518 = vunpack.c.l.b16 %v2256
      %v2519 = vunpack.c.l.b16 %v2257
      %v2520 = vunpack.c.l.b16 %v2258
      %v2521 = vunpack.c.l.b16 %v2259
      %v2522 = vunpack.c.l.b16 %v2260
      %v2523 = vunpack.c.l.b16 %v2261
      %v2524 = vpack.c.b16 %v2517, %v2516
      %v2525 = vpack.c.b16 %v2519, %v2518
      %v2526 = vpack.c.b16 %v2521, %v2520
      %v2527 = vpack.c.b16 %v2523, %v2522
      %v2548 = vunpack.c.l.b16 %v2262
      %v2549 = vunpack.c.l.b16 %v2263
      %v2550 = vunpack.c.l.b16 %v2264
      %v2551 = vunpack.c.l.b16 %v2265
      %v2552 = vunpack.c.l.b16 %v2266
      %v2553 = vunpack.c.l.b16 %v2267
      %v2554 = vunpack.c.l.b16 %v2268
      %v2555 = vunpack.c.l.b16 %v2269
      %v2556 = vunpack.c.l.b16 %v2270
      %v2557 = vunpack.c.l.b16 %v2271
      %v2558 = vunpack.c.l.b16 %v2272
      %v2559 = vunpack.c.l.b16 %v2273
      %v2560 = vunpack.c.l.b16 %v2274
      %v2561 = vunpack.c.l.b16 %v2275
      %v2562 = vunpack.c.l.b16 %v2276
      %v2563 = vunpack.c.l.b16 %v2277
      %v2564 = vpack.c.b16 %v2549, %v2548
      %v2565 = vpack.c.b16 %v2551, %v2550
      %v2566 = vpack.c.b16 %v2553, %v2552
      %v2567 = vpack.c.b16 %v2555, %v2554
      %v2568 = vpack.c.b16 %v2557, %v2556
      %v2569 = vpack.c.b16 %v2559, %v2558
      %v2570 = vpack.c.b16 %v2561, %v2560
      %v2571 = vpack.c.b16 %v2563, %v2562
      %2580 = vmatpush.bf16.msra.mxu0 %v2571
      %2581 = vmatpush.bf16.msra.mxu0 %v2570
      %2582 = vmatpush.bf16.msra.mxu0 %v2569
      %2583 = vmatpush.bf16.msra.mxu0 %v2568
      %2584 = vmatpush.bf16.msra.mxu0 %v2567
      %2585 = vmatpush.bf16.msra.mxu0 %v2566
      %2586 = vmatpush.bf16.msra.mxu0 %v2565
      %2587 = vmatpush.bf16.msra.mxu0 %v2564
      %2588 = vmatmul.bf16.gmra.mxu0 %v2524
      %v2589 = vpop.f32.mrf.mxu0
      %v2590 = vadd.f32 %v2489, %v2589
      %v2591 = vpop.f32.mrf.mxu0
      %v2592 = vadd.f32 %v2491, %v2591
      %2593 = vmatmul.bf16.gmra.mxu0 %v2525
      %v2594 = vpop.f32.mrf.mxu0
      %v2595 = vadd.f32 %v2494, %v2594
      %v2596 = vpop.f32.mrf.mxu0
      %v2597 = vadd.f32 %v2496, %v2596
      %2598 = vmatmul.bf16.gmra.mxu0 %v2526
      %v2599 = vpop.f32.mrf.mxu0
      %v2600 = vadd.f32 %v2499, %v2599
      %v2601 = vpop.f32.mrf.mxu0
      %v2602 = vadd.f32 %v2501, %v2601
      %2603 = vmatmul.bf16.gmra.mxu0 %v2527
      %v2604 = vpop.f32.mrf.mxu0
      %v2605 = vadd.f32 %v2504, %v2604
      %v2606 = vpop.f32.mrf.mxu0
      %v2607 = vadd.f32 %v2506, %v2606
      %2608 = vdwg.mxu0
      %v2609 = vld [vmem:[#allocation3] sm:$0xe]
      %v2610 = vld [vmem:[#allocation3 + $0x8] sm:$0xe]
      %v2611 = vld [vmem:[#allocation3 + $0x10] sm:$0xe]
      %v2612 = vld [vmem:[#allocation3 + $0x18] sm:$0xe]
      %v2613 = vld [vmem:[#allocation3 + $0x20] sm:$0xe]
      %v2614 = vld [vmem:[#allocation3 + $0x28] sm:$0xe]
      %v2615 = vld [vmem:[#allocation3 + $0x30] sm:$0xe]
      %v2616 = vld [vmem:[#allocation3 + $0x38] sm:$0xe]
      %v2633 = vrot.slane %v2609, 5
      %v2634 = vrot.slane %v2633, 4
      %v2635 = vrot.slane %v2278, 5
      %v2636 = vsel %vm801, %v2634, %v2635
      %v2637 = vrot.slane %v2610, 5
      %v2638 = vrot.slane %v2637, 4
      %v2639 = vrot.slane %v2279, 5
      %v2640 = vsel %vm801, %v2638, %v2639
      %v2641 = vrot.slane %v2611, 5
      %v2642 = vrot.slane %v2641, 4
      %v2643 = vrot.slane %v2280, 5
      %v2644 = vsel %vm801, %v2642, %v2643
      %v2645 = vrot.slane %v2612, 5
      %v2646 = vrot.slane %v2645, 4
      %v2647 = vrot.slane %v2281, 5
      %v2648 = vsel %vm801, %v2646, %v2647
      %v2649 = vrot.slane %v2613, 5
      %v2650 = vrot.slane %v2649, 4
      %v2651 = vrot.slane %v2282, 5
      %v2652 = vsel %vm801, %v2650, %v2651
      %v2653 = vrot.slane %v2614, 5
      %v2654 = vrot.slane %v2653, 4
      %v2655 = vrot.slane %v2283, 5
      %v2656 = vsel %vm801, %v2654, %v2655
      %v2657 = vrot.slane %v2615, 5
      %v2658 = vrot.slane %v2657, 4
      %v2659 = vrot.slane %v2284, 5
      %v2660 = vsel %vm801, %v2658, %v2659
      %v2661 = vrot.slane %v2616, 5
      %v2662 = vrot.slane %v2661, 4
      %v2663 = vrot.slane %v2285, 5
      %v2664 = vsel %vm801, %v2662, %v2663
      %s2665 = scalar_lea.vmem %s3, 128
      %v2666 = vld [vmem:[%s2665] sm:$0xf]
      %v2667 = vld [vmem:[%s2665 + $0x4] sm:$0xf]
      %v2668 = vld [vmem:[%s2665 + $0x8] sm:$0xf]
      %v2669 = vld [vmem:[%s2665 + $0xc] sm:$0xf]
      %v2670 = vld [vmem:[%s2665 + $0x10] sm:$0xf]
      %v2671 = vld [vmem:[%s2665 + $0x14] sm:$0xf]
      %v2672 = vld [vmem:[%s2665 + $0x18] sm:$0xf]
      %v2673 = vld [vmem:[%s2665 + $0x1c] sm:$0xf]
      %v2674 = vld [vmem:[%s2665 + $0x20] sm:$0xf]
      %v2675 = vld [vmem:[%s2665 + $0x24] sm:$0xf]
      %v2676 = vld [vmem:[%s2665 + $0x28] sm:$0xf]
      %v2677 = vld [vmem:[%s2665 + $0x2c] sm:$0xf]
      %v2678 = vld [vmem:[%s2665 + $0x30] sm:$0xf]
      %v2679 = vld [vmem:[%s2665 + $0x34] sm:$0xf]
      %v2680 = vld [vmem:[%s2665 + $0x38] sm:$0xf]
      %v2681 = vld [vmem:[%s2665 + $0x3c] sm:$0xf]
      %v2682 = vunpack.c.l.b16 %v2636
      %v2683 = vunpack.c.l.b16 %v2640
      %v2684 = vunpack.c.l.b16 %v2644
      %v2685 = vunpack.c.l.b16 %v2648
      %v2686 = vunpack.c.l.b16 %v2652
      %v2687 = vunpack.c.l.b16 %v2656
      %v2688 = vunpack.c.l.b16 %v2660
      %v2689 = vunpack.c.l.b16 %v2664
      %v2690 = vpack.c.b16 %v2683, %v2682
      %v2691 = vpack.c.b16 %v2685, %v2684
      %v2692 = vpack.c.b16 %v2687, %v2686
      %v2693 = vpack.c.b16 %v2689, %v2688
      %v2714 = vunpack.c.l.b16 %v2666
      %v2715 = vunpack.c.l.b16 %v2667
      %v2716 = vunpack.c.l.b16 %v2668
      %v2717 = vunpack.c.l.b16 %v2669
      %v2718 = vunpack.c.l.b16 %v2670
      %v2719 = vunpack.c.l.b16 %v2671
      %v2720 = vunpack.c.l.b16 %v2672
      %v2721 = vunpack.c.l.b16 %v2673
      %v2722 = vunpack.c.l.b16 %v2674
      %v2723 = vunpack.c.l.b16 %v2675
      %v2724 = vunpack.c.l.b16 %v2676
      %v2725 = vunpack.c.l.b16 %v2677
      %v2726 = vunpack.c.l.b16 %v2678
      %v2727 = vunpack.c.l.b16 %v2679
      %v2728 = vunpack.c.l.b16 %v2680
      %v2729 = vunpack.c.l.b16 %v2681
      %v2730 = vpack.c.b16 %v2715, %v2714
      %v2731 = vpack.c.b16 %v2717, %v2716
      %v2732 = vpack.c.b16 %v2719, %v2718
      %v2733 = vpack.c.b16 %v2721, %v2720
      %v2734 = vpack.c.b16 %v2723, %v2722
      %v2735 = vpack.c.b16 %v2725, %v2724
      %v2736 = vpack.c.b16 %v2727, %v2726
      %v2737 = vpack.c.b16 %v2729, %v2728
      %2746 = vmatpush.bf16.msra.mxu0 %v2737
      %2747 = vmatpush.bf16.msra.mxu0 %v2736
      %2748 = vmatpush.bf16.msra.mxu0 %v2735
      %2749 = vmatpush.bf16.msra.mxu0 %v2734
      %2750 = vmatpush.bf16.msra.mxu0 %v2733
      %2751 = vmatpush.bf16.msra.mxu0 %v2732
      %2752 = vmatpush.bf16.msra.mxu0 %v2731
      %2753 = vmatpush.bf16.msra.mxu0 %v2730
      %2754 = vmatmul.bf16.gmra.mxu0 %v2690
      %v2755 = vpop.f32.mrf.mxu0
      %v2756 = vadd.f32 0.0, %v2755
      %v2757 = vpop.f32.mrf.mxu0
      %v2758 = vadd.f32 0.0, %v2757
      %2759 = vmatmul.bf16.gmra.mxu0 %v2691
      %v2760 = vpop.f32.mrf.mxu0
      %v2761 = vadd.f32 0.0, %v2760
      %v2762 = vpop.f32.mrf.mxu0
      %v2763 = vadd.f32 0.0, %v2762
      %2764 = vmatmul.bf16.gmra.mxu0 %v2692
      %v2765 = vpop.f32.mrf.mxu0
      %v2766 = vadd.f32 0.0, %v2765
      %v2767 = vpop.f32.mrf.mxu0
      %v2768 = vadd.f32 0.0, %v2767
      %2769 = vmatmul.bf16.gmra.mxu0 %v2693
      %v2770 = vpop.f32.mrf.mxu0
      %v2771 = vadd.f32 0.0, %v2770
      %v2772 = vpop.f32.mrf.mxu0
      %v2773 = vadd.f32 0.0, %v2772
      %2774 = vdwg.mxu0
      %v2775 = vadd.f32 %v2590, %v2756
      %v2776 = vadd.f32 %v2592, %v2758
      %v2777 = vadd.f32 %v2595, %v2761
      %v2778 = vadd.f32 %v2597, %v2763
      %v2779 = vadd.f32 %v2600, %v2766
      %v2780 = vadd.f32 %v2602, %v2768
      %v2781 = vadd.f32 %v2605, %v2771
      %v2782 = vadd.f32 %v2607, %v2773
      %v2783 = vld [vmem:[%s2205] sm:$0xf]
      %v2784 = vld [vmem:[%s2205 + $0x8] sm:$0xf]
      %v2785 = vld [vmem:[%s2205 + $0x10] sm:$0xf]
      %v2786 = vld [vmem:[%s2205 + $0x18] sm:$0xf]
      %v2787 = vld [vmem:[%s2205 + $0x20] sm:$0xf]
      %v2788 = vld [vmem:[%s2205 + $0x28] sm:$0xf]
      %v2789 = vld [vmem:[%s2205 + $0x30] sm:$0xf]
      %v2790 = vld [vmem:[%s2205 + $0x38] sm:$0xf]
      %s2791 = scalar_lea.vmem %s3, 192
      %v2792 = vld [vmem:[%s2791] sm:$0xf]
      %v2793 = vld [vmem:[%s2791 + $0x4] sm:$0xf]
      %v2794 = vld [vmem:[%s2791 + $0x8] sm:$0xf]
      %v2795 = vld [vmem:[%s2791 + $0xc] sm:$0xf]
      %v2796 = vld [vmem:[%s2791 + $0x10] sm:$0xf]
      %v2797 = vld [vmem:[%s2791 + $0x14] sm:$0xf]
      %v2798 = vld [vmem:[%s2791 + $0x18] sm:$0xf]
      %v2799 = vld [vmem:[%s2791 + $0x1c] sm:$0xf]
      %v2800 = vld [vmem:[%s2791 + $0x20] sm:$0xf]
      %v2801 = vld [vmem:[%s2791 + $0x24] sm:$0xf]
      %v2802 = vld [vmem:[%s2791 + $0x28] sm:$0xf]
      %v2803 = vld [vmem:[%s2791 + $0x2c] sm:$0xf]
      %v2804 = vld [vmem:[%s2791 + $0x30] sm:$0xf]
      %v2805 = vld [vmem:[%s2791 + $0x34] sm:$0xf]
      %v2806 = vld [vmem:[%s2791 + $0x38] sm:$0xf]
      %v2807 = vld [vmem:[%s2791 + $0x3c] sm:$0xf]
      %v2816 = vunpack.c.l.b16 %v2783
      %v2817 = vunpack.c.l.b16 %v2784
      %v2818 = vunpack.c.l.b16 %v2785
      %v2819 = vunpack.c.l.b16 %v2786
      %v2820 = vunpack.c.l.b16 %v2787
      %v2821 = vunpack.c.l.b16 %v2788
      %v2822 = vunpack.c.l.b16 %v2789
      %v2823 = vunpack.c.l.b16 %v2790
      %v2824 = vpack.c.b16 %v2817, %v2816
      %v2825 = vpack.c.b16 %v2819, %v2818
      %v2826 = vpack.c.b16 %v2821, %v2820
      %v2827 = vpack.c.b16 %v2823, %v2822
      %v2848 = vunpack.c.l.b16 %v2792
      %v2849 = vunpack.c.l.b16 %v2793
      %v2850 = vunpack.c.l.b16 %v2794
      %v2851 = vunpack.c.l.b16 %v2795
      %v2852 = vunpack.c.l.b16 %v2796
      %v2853 = vunpack.c.l.b16 %v2797
      %v2854 = vunpack.c.l.b16 %v2798
      %v2855 = vunpack.c.l.b16 %v2799
      %v2856 = vunpack.c.l.b16 %v2800
      %v2857 = vunpack.c.l.b16 %v2801
      %v2858 = vunpack.c.l.b16 %v2802
      %v2859 = vunpack.c.l.b16 %v2803
      %v2860 = vunpack.c.l.b16 %v2804
      %v2861 = vunpack.c.l.b16 %v2805
      %v2862 = vunpack.c.l.b16 %v2806
      %v2863 = vunpack.c.l.b16 %v2807
      %v2864 = vpack.c.b16 %v2849, %v2848
      %v2865 = vpack.c.b16 %v2851, %v2850
      %v2866 = vpack.c.b16 %v2853, %v2852
      %v2867 = vpack.c.b16 %v2855, %v2854
      %v2868 = vpack.c.b16 %v2857, %v2856
      %v2869 = vpack.c.b16 %v2859, %v2858
      %v2870 = vpack.c.b16 %v2861, %v2860
      %v2871 = vpack.c.b16 %v2863, %v2862
      %2880 = vmatpush.bf16.msra.mxu0 %v2871
      %2881 = vmatpush.bf16.msra.mxu0 %v2870
      %2882 = vmatpush.bf16.msra.mxu0 %v2869
      %2883 = vmatpush.bf16.msra.mxu0 %v2868
      %2884 = vmatpush.bf16.msra.mxu0 %v2867
      %2885 = vmatpush.bf16.msra.mxu0 %v2866
      %2886 = vmatpush.bf16.msra.mxu0 %v2865
      %2887 = vmatpush.bf16.msra.mxu0 %v2864
      %2888 = vmatmul.bf16.gmra.mxu0 %v2824
      %v2889 = vpop.f32.mrf.mxu0
      %v2890 = vadd.f32 0.0, %v2889
      %v2891 = vpop.f32.mrf.mxu0
      %v2892 = vadd.f32 0.0, %v2891
      %2893 = vmatmul.bf16.gmra.mxu0 %v2825
      %v2894 = vpop.f32.mrf.mxu0
      %v2895 = vadd.f32 0.0, %v2894
      %v2896 = vpop.f32.mrf.mxu0
      %v2897 = vadd.f32 0.0, %v2896
      %2898 = vmatmul.bf16.gmra.mxu0 %v2826
      %v2899 = vpop.f32.mrf.mxu0
      %v2900 = vadd.f32 0.0, %v2899
      %v2901 = vpop.f32.mrf.mxu0
      %v2902 = vadd.f32 0.0, %v2901
      %2903 = vmatmul.bf16.gmra.mxu0 %v2827
      %v2904 = vpop.f32.mrf.mxu0
      %v2905 = vadd.f32 0.0, %v2904
      %v2906 = vpop.f32.mrf.mxu0
      %v2907 = vadd.f32 0.0, %v2906
      %2908 = vdwg.mxu0
      %v2909 = vadd.f32 %v2775, %v2890
      %v2910 = vadd.f32 %v2776, %v2892
      %v2911 = vadd.f32 %v2777, %v2895
      %v2912 = vadd.f32 %v2778, %v2897
      %v2913 = vadd.f32 %v2779, %v2900
      %v2914 = vadd.f32 %v2780, %v2902
      %v2915 = vadd.f32 %v2781, %v2905
      %v2916 = vadd.f32 %v2782, %v2907
      %v2917 = vld [vmem:[%s2205] sm:$0xf]
      %v2918 = vld [vmem:[%s2205 + $0x4] sm:$0x1]
      %v2919 = vld [vmem:[%s2205 + $0x8] sm:$0xf]
      %v2920 = vld [vmem:[%s2205 + $0xc] sm:$0x1]
      %v2921 = vld [vmem:[%s2205 + $0x10] sm:$0xf]
      %v2922 = vld [vmem:[%s2205 + $0x14] sm:$0x1]
      %v2923 = vld [vmem:[%s2205 + $0x18] sm:$0xf]
      %v2924 = vld [vmem:[%s2205 + $0x1c] sm:$0x1]
      %v2925 = vld [vmem:[%s2205 + $0x20] sm:$0xf]
      %v2926 = vld [vmem:[%s2205 + $0x24] sm:$0x1]
      %v2927 = vld [vmem:[%s2205 + $0x28] sm:$0xf]
      %v2928 = vld [vmem:[%s2205 + $0x2c] sm:$0x1]
      %v2929 = vld [vmem:[%s2205 + $0x30] sm:$0xf]
      %v2930 = vld [vmem:[%s2205 + $0x34] sm:$0x1]
      %v2931 = vld [vmem:[%s2205 + $0x38] sm:$0xf]
      %v2932 = vld [vmem:[%s2205 + $0x3c] sm:$0x1]
      %v2934 = vshrl.u32 %v2917, 16
      %v2936 = vrot.slane %v2934, 4
      %v2937 = vshll.u32 %v2917, 16
      %v2939 = vrot.slane %v2937, 5
      %v2940 = vor.u32 %v2936, %v2939
      %v2941 = vrot.slane %v2940, 4
      %v2943 = vshll.u32 %v2918, 16
      %v2945 = vrot.slane %v2943, 5
      %v2946 = vsel %vm451, %v2941, %v2945
      %v2948 = vshrl.u32 %v2919, 16
      %v2950 = vrot.slane %v2948, 4
      %v2951 = vshll.u32 %v2919, 16
      %v2953 = vrot.slane %v2951, 5
      %v2954 = vor.u32 %v2950, %v2953
      %v2955 = vrot.slane %v2954, 4
      %v2957 = vshll.u32 %v2920, 16
      %v2959 = vrot.slane %v2957, 5
      %v2960 = vsel %vm451, %v2955, %v2959
      %v2962 = vshrl.u32 %v2921, 16
      %v2964 = vrot.slane %v2962, 4
      %v2965 = vshll.u32 %v2921, 16
      %v2967 = vrot.slane %v2965, 5
      %v2968 = vor.u32 %v2964, %v2967
      %v2969 = vrot.slane %v2968, 4
      %v2971 = vshll.u32 %v2922, 16
      %v2973 = vrot.slane %v2971, 5
      %v2974 = vsel %vm451, %v2969, %v2973
      %v2976 = vshrl.u32 %v2923, 16
      %v2978 = vrot.slane %v2976, 4
      %v2979 = vshll.u32 %v2923, 16
      %v2981 = vrot.slane %v2979, 5
      %v2982 = vor.u32 %v2978, %v2981
      %v2983 = vrot.slane %v2982, 4
      %v2985 = vshll.u32 %v2924, 16
      %v2987 = vrot.slane %v2985, 5
      %v2988 = vsel %vm451, %v2983, %v2987
      %v2990 = vshrl.u32 %v2925, 16
      %v2992 = vrot.slane %v2990, 4
      %v2993 = vshll.u32 %v2925, 16
      %v2995 = vrot.slane %v2993, 5
      %v2996 = vor.u32 %v2992, %v2995
      %v2997 = vrot.slane %v2996, 4
      %v2999 = vshll.u32 %v2926, 16
      %v3001 = vrot.slane %v2999, 5
      %v3002 = vsel %vm451, %v2997, %v3001
      %v3004 = vshrl.u32 %v2927, 16
      %v3006 = vrot.slane %v3004, 4
      %v3007 = vshll.u32 %v2927, 16
      %v3009 = vrot.slane %v3007, 5
      %v3010 = vor.u32 %v3006, %v3009
      %v3011 = vrot.slane %v3010, 4
      %v3013 = vshll.u32 %v2928, 16
      %v3015 = vrot.slane %v3013, 5
      %v3016 = vsel %vm451, %v3011, %v3015
      %v3018 = vshrl.u32 %v2929, 16
      %v3020 = vrot.slane %v3018, 4
      %v3021 = vshll.u32 %v2929, 16
      %v3023 = vrot.slane %v3021, 5
      %v3024 = vor.u32 %v3020, %v3023
      %v3025 = vrot.slane %v3024, 4
      %v3027 = vshll.u32 %v2930, 16
      %v3029 = vrot.slane %v3027, 5
      %v3030 = vsel %vm451, %v3025, %v3029
      %v3032 = vshrl.u32 %v2931, 16
      %v3034 = vrot.slane %v3032, 4
      %v3035 = vshll.u32 %v2931, 16
      %v3037 = vrot.slane %v3035, 5
      %v3038 = vor.u32 %v3034, %v3037
      %v3039 = vrot.slane %v3038, 4
      %v3041 = vshll.u32 %v2932, 16
      %v3043 = vrot.slane %v3041, 5
      %v3044 = vsel %vm451, %v3039, %v3043
      %s3045 = scalar_lea.vmem %s3, 256
      %v3046 = vld [vmem:[%s3045] sm:$0xf]
      %v3047 = vld [vmem:[%s3045 + $0x4] sm:$0xf]
      %v3048 = vld [vmem:[%s3045 + $0x8] sm:$0xf]
      %v3049 = vld [vmem:[%s3045 + $0xc] sm:$0xf]
      %v3050 = vld [vmem:[%s3045 + $0x10] sm:$0xf]
      %v3051 = vld [vmem:[%s3045 + $0x14] sm:$0xf]
      %v3052 = vld [vmem:[%s3045 + $0x18] sm:$0xf]
      %v3053 = vld [vmem:[%s3045 + $0x1c] sm:$0xf]
      %v3054 = vld [vmem:[%s3045 + $0x20] sm:$0xf]
      %v3055 = vld [vmem:[%s3045 + $0x24] sm:$0xf]
      %v3056 = vld [vmem:[%s3045 + $0x28] sm:$0xf]
      %v3057 = vld [vmem:[%s3045 + $0x2c] sm:$0xf]
      %v3058 = vld [vmem:[%s3045 + $0x30] sm:$0xf]
      %v3059 = vld [vmem:[%s3045 + $0x34] sm:$0xf]
      %v3060 = vld [vmem:[%s3045 + $0x38] sm:$0xf]
      %v3061 = vld [vmem:[%s3045 + $0x3c] sm:$0xf]
      %v3062 = vunpack.c.l.b16 %v2946
      %v3063 = vunpack.c.l.b16 %v2960
      %v3064 = vunpack.c.l.b16 %v2974
      %v3065 = vunpack.c.l.b16 %v2988
      %v3066 = vunpack.c.l.b16 %v3002
      %v3067 = vunpack.c.l.b16 %v3016
      %v3068 = vunpack.c.l.b16 %v3030
      %v3069 = vunpack.c.l.b16 %v3044
      %v3070 = vpack.c.b16 %v3063, %v3062
      %v3071 = vpack.c.b16 %v3065, %v3064
      %v3072 = vpack.c.b16 %v3067, %v3066
      %v3073 = vpack.c.b16 %v3069, %v3068
      %v3094 = vunpack.c.l.b16 %v3046
      %v3095 = vunpack.c.l.b16 %v3047
      %v3096 = vunpack.c.l.b16 %v3048
      %v3097 = vunpack.c.l.b16 %v3049
      %v3098 = vunpack.c.l.b16 %v3050
      %v3099 = vunpack.c.l.b16 %v3051
      %v3100 = vunpack.c.l.b16 %v3052
      %v3101 = vunpack.c.l.b16 %v3053
      %v3102 = vunpack.c.l.b16 %v3054
      %v3103 = vunpack.c.l.b16 %v3055
      %v3104 = vunpack.c.l.b16 %v3056
      %v3105 = vunpack.c.l.b16 %v3057
      %v3106 = vunpack.c.l.b16 %v3058
      %v3107 = vunpack.c.l.b16 %v3059
      %v3108 = vunpack.c.l.b16 %v3060
      %v3109 = vunpack.c.l.b16 %v3061
      %v3110 = vpack.c.b16 %v3095, %v3094
      %v3111 = vpack.c.b16 %v3097, %v3096
      %v3112 = vpack.c.b16 %v3099, %v3098
      %v3113 = vpack.c.b16 %v3101, %v3100
      %v3114 = vpack.c.b16 %v3103, %v3102
      %v3115 = vpack.c.b16 %v3105, %v3104
      %v3116 = vpack.c.b16 %v3107, %v3106
      %v3117 = vpack.c.b16 %v3109, %v3108
      %3126 = vmatpush.bf16.msra.mxu0 %v3117
      %3127 = vmatpush.bf16.msra.mxu0 %v3116
      %3128 = vmatpush.bf16.msra.mxu0 %v3115
      %3129 = vmatpush.bf16.msra.mxu0 %v3114
      %3130 = vmatpush.bf16.msra.mxu0 %v3113
      %3131 = vmatpush.bf16.msra.mxu0 %v3112
      %3132 = vmatpush.bf16.msra.mxu0 %v3111
      %3133 = vmatpush.bf16.msra.mxu0 %v3110
      %3134 = vmatmul.bf16.gmra.mxu0 %v3070
      %v3135 = vpop.f32.mrf.mxu0
      %v3136 = vadd.f32 0.0, %v3135
      %v3137 = vpop.f32.mrf.mxu0
      %v3138 = vadd.f32 0.0, %v3137
      %3139 = vmatmul.bf16.gmra.mxu0 %v3071
      %v3140 = vpop.f32.mrf.mxu0
      %v3141 = vadd.f32 0.0, %v3140
      %v3142 = vpop.f32.mrf.mxu0
      %v3143 = vadd.f32 0.0, %v3142
      %3144 = vmatmul.bf16.gmra.mxu0 %v3072
      %v3145 = vpop.f32.mrf.mxu0
      %v3146 = vadd.f32 0.0, %v3145
      %v3147 = vpop.f32.mrf.mxu0
      %v3148 = vadd.f32 0.0, %v3147
      %3149 = vmatmul.bf16.gmra.mxu0 %v3073
      %v3150 = vpop.f32.mrf.mxu0
      %v3151 = vadd.f32 0.0, %v3150
      %v3152 = vpop.f32.mrf.mxu0
      %v3153 = vadd.f32 0.0, %v3152
      %3154 = vdwg.mxu0
      %v3155 = vadd.f32 %v2909, %v3136
      %v3156 = vadd.f32 %v2910, %v3138
      %v3157 = vadd.f32 %v2911, %v3141
      %v3158 = vadd.f32 %v2912, %v3143
      %v3159 = vadd.f32 %v2913, %v3146
      %v3160 = vadd.f32 %v2914, %v3148
      %v3161 = vadd.f32 %v2915, %v3151
      %v3162 = vadd.f32 %v2916, %v3153
      %v3163 = vld [vmem:[%s2205] sm:$0xe]
      %v3164 = vld [vmem:[%s2205 + $0x8] sm:$0xe]
      %v3165 = vld [vmem:[%s2205 + $0x10] sm:$0xe]
      %v3166 = vld [vmem:[%s2205 + $0x18] sm:$0xe]
      %v3167 = vld [vmem:[%s2205 + $0x20] sm:$0xe]
      %v3168 = vld [vmem:[%s2205 + $0x28] sm:$0xe]
      %v3169 = vld [vmem:[%s2205 + $0x30] sm:$0xe]
      %v3170 = vld [vmem:[%s2205 + $0x38] sm:$0xe]
      %v3187 = vrot.slane %v3163, 5
      %v3188 = vrot.slane %v3187, 4
      %v3189 = vrot.slane %v2918, 5
      %v3190 = vsel %vm801, %v3188, %v3189
      %v3191 = vrot.slane %v3164, 5
      %v3192 = vrot.slane %v3191, 4
      %v3193 = vrot.slane %v2920, 5
      %v3194 = vsel %vm801, %v3192, %v3193
      %v3195 = vrot.slane %v3165, 5
      %v3196 = vrot.slane %v3195, 4
      %v3197 = vrot.slane %v2922, 5
      %v3198 = vsel %vm801, %v3196, %v3197
      %v3199 = vrot.slane %v3166, 5
      %v3200 = vrot.slane %v3199, 4
      %v3201 = vrot.slane %v2924, 5
      %v3202 = vsel %vm801, %v3200, %v3201
      %v3203 = vrot.slane %v3167, 5
      %v3204 = vrot.slane %v3203, 4
      %v3205 = vrot.slane %v2926, 5
      %v3206 = vsel %vm801, %v3204, %v3205
      %v3207 = vrot.slane %v3168, 5
      %v3208 = vrot.slane %v3207, 4
      %v3209 = vrot.slane %v2928, 5
      %v3210 = vsel %vm801, %v3208, %v3209
      %v3211 = vrot.slane %v3169, 5
      %v3212 = vrot.slane %v3211, 4
      %v3213 = vrot.slane %v2930, 5
      %v3214 = vsel %vm801, %v3212, %v3213
      %v3215 = vrot.slane %v3170, 5
      %v3216 = vrot.slane %v3215, 4
      %v3217 = vrot.slane %v2932, 5
      %v3218 = vsel %vm801, %v3216, %v3217
      %s3219 = scalar_lea.vmem %s3, 320
      %v3220 = vld [vmem:[%s3219] sm:$0xf]
      %v3221 = vld [vmem:[%s3219 + $0x4] sm:$0xf]
      %v3222 = vld [vmem:[%s3219 + $0x8] sm:$0xf]
      %v3223 = vld [vmem:[%s3219 + $0xc] sm:$0xf]
      %v3224 = vld [vmem:[%s3219 + $0x10] sm:$0xf]
      %v3225 = vld [vmem:[%s3219 + $0x14] sm:$0xf]
      %v3226 = vld [vmem:[%s3219 + $0x18] sm:$0xf]
      %v3227 = vld [vmem:[%s3219 + $0x1c] sm:$0xf]
      %v3228 = vld [vmem:[%s3219 + $0x20] sm:$0xf]
      %v3229 = vld [vmem:[%s3219 + $0x24] sm:$0xf]
      %v3230 = vld [vmem:[%s3219 + $0x28] sm:$0xf]
      %v3231 = vld [vmem:[%s3219 + $0x2c] sm:$0xf]
      %v3232 = vld [vmem:[%s3219 + $0x30] sm:$0xf]
      %v3233 = vld [vmem:[%s3219 + $0x34] sm:$0xf]
      %v3234 = vld [vmem:[%s3219 + $0x38] sm:$0xf]
      %v3235 = vld [vmem:[%s3219 + $0x3c] sm:$0xf]
      %v3236 = vunpack.c.l.b16 %v3190
      %v3237 = vunpack.c.l.b16 %v3194
      %v3238 = vunpack.c.l.b16 %v3198
      %v3239 = vunpack.c.l.b16 %v3202
      %v3240 = vunpack.c.l.b16 %v3206
      %v3241 = vunpack.c.l.b16 %v3210
      %v3242 = vunpack.c.l.b16 %v3214
      %v3243 = vunpack.c.l.b16 %v3218
      %v3244 = vpack.c.b16 %v3237, %v3236
      %v3245 = vpack.c.b16 %v3239, %v3238
      %v3246 = vpack.c.b16 %v3241, %v3240
      %v3247 = vpack.c.b16 %v3243, %v3242
      %v3268 = vunpack.c.l.b16 %v3220
      %v3269 = vunpack.c.l.b16 %v3221
      %v3270 = vunpack.c.l.b16 %v3222
      %v3271 = vunpack.c.l.b16 %v3223
      %v3272 = vunpack.c.l.b16 %v3224
      %v3273 = vunpack.c.l.b16 %v3225
      %v3274 = vunpack.c.l.b16 %v3226
      %v3275 = vunpack.c.l.b16 %v3227
      %v3276 = vunpack.c.l.b16 %v3228
      %v3277 = vunpack.c.l.b16 %v3229
      %v3278 = vunpack.c.l.b16 %v3230
      %v3279 = vunpack.c.l.b16 %v3231
      %v3280 = vunpack.c.l.b16 %v3232
      %v3281 = vunpack.c.l.b16 %v3233
      %v3282 = vunpack.c.l.b16 %v3234
      %v3283 = vunpack.c.l.b16 %v3235
      %v3284 = vpack.c.b16 %v3269, %v3268
      %v3285 = vpack.c.b16 %v3271, %v3270
      %v3286 = vpack.c.b16 %v3273, %v3272
      %v3287 = vpack.c.b16 %v3275, %v3274
      %v3288 = vpack.c.b16 %v3277, %v3276
      %v3289 = vpack.c.b16 %v3279, %v3278
      %v3290 = vpack.c.b16 %v3281, %v3280
      %v3291 = vpack.c.b16 %v3283, %v3282
      %3300 = vmatpush.bf16.msra.mxu0 %v3291
      %3301 = vmatpush.bf16.msra.mxu0 %v3290
      %3302 = vmatpush.bf16.msra.mxu0 %v3289
      %3303 = vmatpush.bf16.msra.mxu0 %v3288
      %3304 = vmatpush.bf16.msra.mxu0 %v3287
      %3305 = vmatpush.bf16.msra.mxu0 %v3286
      %3306 = vmatpush.bf16.msra.mxu0 %v3285
      %3307 = vmatpush.bf16.msra.mxu0 %v3284
      %3308 = vmatmul.bf16.gmra.mxu0 %v3244
      %v3309 = vpop.f32.mrf.mxu0
      %v3310 = vadd.f32 0.0, %v3309
      %v3311 = vpop.f32.mrf.mxu0
      %v3312 = vadd.f32 0.0, %v3311
      %3313 = vmatmul.bf16.gmra.mxu0 %v3245
      %v3314 = vpop.f32.mrf.mxu0
      %v3315 = vadd.f32 0.0, %v3314
      %v3316 = vpop.f32.mrf.mxu0
      %v3317 = vadd.f32 0.0, %v3316
      %3318 = vmatmul.bf16.gmra.mxu0 %v3246
      %v3319 = vpop.f32.mrf.mxu0
      %v3320 = vadd.f32 0.0, %v3319
      %v3321 = vpop.f32.mrf.mxu0
      %v3322 = vadd.f32 0.0, %v3321
      %3323 = vmatmul.bf16.gmra.mxu0 %v3247
      %v3324 = vpop.f32.mrf.mxu0
      %v3325 = vadd.f32 0.0, %v3324
      %v3326 = vpop.f32.mrf.mxu0
      %v3327 = vadd.f32 0.0, %v3326
      %3328 = vdwg.mxu0
      %v3329 = vadd.f32 %v3155, %v3310
      %v3330 = vadd.f32 %v3156, %v3312
      %v3331 = vadd.f32 %v3157, %v3315
      %v3332 = vadd.f32 %v3158, %v3317
      %v3333 = vadd.f32 %v3159, %v3320
      %v3334 = vadd.f32 %v3160, %v3322
      %v3335 = vadd.f32 %v3161, %v3325
      %v3336 = vadd.f32 %v3162, %v3327
      %s3337 = scalar_lea.vmem [#allocation3], 16
      %v3338 = vld [vmem:[%s3337] sm:$0xf]
      %v3339 = vld [vmem:[%s3337 + $0x8] sm:$0xf]
      %v3340 = vld [vmem:[%s3337 + $0x10] sm:$0xf]
      %v3341 = vld [vmem:[%s3337 + $0x18] sm:$0xf]
      %v3342 = vld [vmem:[%s3337 + $0x20] sm:$0xf]
      %v3343 = vld [vmem:[%s3337 + $0x28] sm:$0xf]
      %v3344 = vld [vmem:[%s3337 + $0x30] sm:$0xf]
      %v3345 = vld [vmem:[%s3337 + $0x38] sm:$0xf]
      %s3346 = scalar_lea.vmem %s3, 384
      %v3347 = vld [vmem:[%s3346] sm:$0xf]
      %v3348 = vld [vmem:[%s3346 + $0x4] sm:$0xf]
      %v3349 = vld [vmem:[%s3346 + $0x8] sm:$0xf]
      %v3350 = vld [vmem:[%s3346 + $0xc] sm:$0xf]
      %v3351 = vld [vmem:[%s3346 + $0x10] sm:$0xf]
      %v3352 = vld [vmem:[%s3346 + $0x14] sm:$0xf]
      %v3353 = vld [vmem:[%s3346 + $0x18] sm:$0xf]
      %v3354 = vld [vmem:[%s3346 + $0x1c] sm:$0xf]
      %v3355 = vld [vmem:[%s3346 + $0x20] sm:$0xf]
      %v3356 = vld [vmem:[%s3346 + $0x24] sm:$0xf]
      %v3357 = vld [vmem:[%s3346 + $0x28] sm:$0xf]
      %v3358 = vld [vmem:[%s3346 + $0x2c] sm:$0xf]
      %v3359 = vld [vmem:[%s3346 + $0x30] sm:$0xf]
      %v3360 = vld [vmem:[%s3346 + $0x34] sm:$0xf]
      %v3361 = vld [vmem:[%s3346 + $0x38] sm:$0xf]
      %v3362 = vld [vmem:[%s3346 + $0x3c] sm:$0xf]
      %v3371 = vunpack.c.l.b16 %v3338
      %v3372 = vunpack.c.l.b16 %v3339
      %v3373 = vunpack.c.l.b16 %v3340
      %v3374 = vunpack.c.l.b16 %v3341
      %v3375 = vunpack.c.l.b16 %v3342
      %v3376 = vunpack.c.l.b16 %v3343
      %v3377 = vunpack.c.l.b16 %v3344
      %v3378 = vunpack.c.l.b16 %v3345
      %v3379 = vpack.c.b16 %v3372, %v3371
      %v3380 = vpack.c.b16 %v3374, %v3373
      %v3381 = vpack.c.b16 %v3376, %v3375
      %v3382 = vpack.c.b16 %v3378, %v3377
      %v3403 = vunpack.c.l.b16 %v3347
      %v3404 = vunpack.c.l.b16 %v3348
      %v3405 = vunpack.c.l.b16 %v3349
      %v3406 = vunpack.c.l.b16 %v3350
      %v3407 = vunpack.c.l.b16 %v3351
      %v3408 = vunpack.c.l.b16 %v3352
      %v3409 = vunpack.c.l.b16 %v3353
      %v3410 = vunpack.c.l.b16 %v3354
      %v3411 = vunpack.c.l.b16 %v3355
      %v3412 = vunpack.c.l.b16 %v3356
      %v3413 = vunpack.c.l.b16 %v3357
      %v3414 = vunpack.c.l.b16 %v3358
      %v3415 = vunpack.c.l.b16 %v3359
      %v3416 = vunpack.c.l.b16 %v3360
      %v3417 = vunpack.c.l.b16 %v3361
      %v3418 = vunpack.c.l.b16 %v3362
      %v3419 = vpack.c.b16 %v3404, %v3403
      %v3420 = vpack.c.b16 %v3406, %v3405
      %v3421 = vpack.c.b16 %v3408, %v3407
      %v3422 = vpack.c.b16 %v3410, %v3409
      %v3423 = vpack.c.b16 %v3412, %v3411
      %v3424 = vpack.c.b16 %v3414, %v3413
      %v3425 = vpack.c.b16 %v3416, %v3415
      %v3426 = vpack.c.b16 %v3418, %v3417
      %3435 = vmatpush.bf16.msra.mxu0 %v3426
      %3436 = vmatpush.bf16.msra.mxu0 %v3425
      %3437 = vmatpush.bf16.msra.mxu0 %v3424
      %3438 = vmatpush.bf16.msra.mxu0 %v3423
      %3439 = vmatpush.bf16.msra.mxu0 %v3422
      %3440 = vmatpush.bf16.msra.mxu0 %v3421
      %3441 = vmatpush.bf16.msra.mxu0 %v3420
      %3442 = vmatpush.bf16.msra.mxu0 %v3419
      %3443 = vmatmul.bf16.gmra.mxu0 %v3379
      %v3444 = vpop.f32.mrf.mxu0
      %v3445 = vadd.f32 0.0, %v3444
      %v3446 = vpop.f32.mrf.mxu0
      %v3447 = vadd.f32 0.0, %v3446
      %3448 = vmatmul.bf16.gmra.mxu0 %v3380
      %v3449 = vpop.f32.mrf.mxu0
      %v3450 = vadd.f32 0.0, %v3449
      %v3451 = vpop.f32.mrf.mxu0
      %v3452 = vadd.f32 0.0, %v3451
      %3453 = vmatmul.bf16.gmra.mxu0 %v3381
      %v3454 = vpop.f32.mrf.mxu0
      %v3455 = vadd.f32 0.0, %v3454
      %v3456 = vpop.f32.mrf.mxu0
      %v3457 = vadd.f32 0.0, %v3456
      %3458 = vmatmul.bf16.gmra.mxu0 %v3382
      %v3459 = vpop.f32.mrf.mxu0
      %v3460 = vadd.f32 0.0, %v3459
      %v3461 = vpop.f32.mrf.mxu0
      %v3462 = vadd.f32 0.0, %v3461
      %3463 = vdwg.mxu0
      %v3464 = vadd.f32 %v3329, %v3445
      %v3465 = vadd.f32 %v3330, %v3447
      %v3466 = vadd.f32 %v3331, %v3450
      %v3467 = vadd.f32 %v3332, %v3452
      %v3468 = vadd.f32 %v3333, %v3455
      %v3469 = vadd.f32 %v3334, %v3457
      %v3470 = vadd.f32 %v3335, %v3460
      %v3471 = vadd.f32 %v3336, %v3462
      %v3472 = vld [vmem:[%s3337] sm:$0xf]
      %v3473 = vld [vmem:[%s3337 + $0x4] sm:$0x1]
      %v3474 = vld [vmem:[%s3337 + $0x8] sm:$0xf]
      %v3475 = vld [vmem:[%s3337 + $0xc] sm:$0x1]
      %v3476 = vld [vmem:[%s3337 + $0x10] sm:$0xf]
      %v3477 = vld [vmem:[%s3337 + $0x14] sm:$0x1]
      %v3478 = vld [vmem:[%s3337 + $0x18] sm:$0xf]
      %v3479 = vld [vmem:[%s3337 + $0x1c] sm:$0x1]
      %v3480 = vld [vmem:[%s3337 + $0x20] sm:$0xf]
      %v3481 = vld [vmem:[%s3337 + $0x24] sm:$0x1]
      %v3482 = vld [vmem:[%s3337 + $0x28] sm:$0xf]
      %v3483 = vld [vmem:[%s3337 + $0x2c] sm:$0x1]
      %v3484 = vld [vmem:[%s3337 + $0x30] sm:$0xf]
      %v3485 = vld [vmem:[%s3337 + $0x34] sm:$0x1]
      %v3486 = vld [vmem:[%s3337 + $0x38] sm:$0xf]
      %v3487 = vld [vmem:[%s3337 + $0x3c] sm:$0x1]
      %v3489 = vshrl.u32 %v3472, 16
      %v3491 = vrot.slane %v3489, 4
      %v3492 = vshll.u32 %v3472, 16
      %v3494 = vrot.slane %v3492, 5
      %v3495 = vor.u32 %v3491, %v3494
      %v3496 = vrot.slane %v3495, 4
      %v3498 = vshll.u32 %v3473, 16
      %v3500 = vrot.slane %v3498, 5
      %v3501 = vsel %vm451, %v3496, %v3500
      %v3503 = vshrl.u32 %v3474, 16
      %v3505 = vrot.slane %v3503, 4
      %v3506 = vshll.u32 %v3474, 16
      %v3508 = vrot.slane %v3506, 5
      %v3509 = vor.u32 %v3505, %v3508
      %v3510 = vrot.slane %v3509, 4
      %v3512 = vshll.u32 %v3475, 16
      %v3514 = vrot.slane %v3512, 5
      %v3515 = vsel %vm451, %v3510, %v3514
      %v3517 = vshrl.u32 %v3476, 16
      %v3519 = vrot.slane %v3517, 4
      %v3520 = vshll.u32 %v3476, 16
      %v3522 = vrot.slane %v3520, 5
      %v3523 = vor.u32 %v3519, %v3522
      %v3524 = vrot.slane %v3523, 4
      %v3526 = vshll.u32 %v3477, 16
      %v3528 = vrot.slane %v3526, 5
      %v3529 = vsel %vm451, %v3524, %v3528
      %v3531 = vshrl.u32 %v3478, 16
      %v3533 = vrot.slane %v3531, 4
      %v3534 = vshll.u32 %v3478, 16
      %v3536 = vrot.slane %v3534, 5
      %v3537 = vor.u32 %v3533, %v3536
      %v3538 = vrot.slane %v3537, 4
      %v3540 = vshll.u32 %v3479, 16
      %v3542 = vrot.slane %v3540, 5
      %v3543 = vsel %vm451, %v3538, %v3542
      %v3545 = vshrl.u32 %v3480, 16
      %v3547 = vrot.slane %v3545, 4
      %v3548 = vshll.u32 %v3480, 16
      %v3550 = vrot.slane %v3548, 5
      %v3551 = vor.u32 %v3547, %v3550
      %v3552 = vrot.slane %v3551, 4
      %v3554 = vshll.u32 %v3481, 16
      %v3556 = vrot.slane %v3554, 5
      %v3557 = vsel %vm451, %v3552, %v3556
      %v3559 = vshrl.u32 %v3482, 16
      %v3561 = vrot.slane %v3559, 4
      %v3562 = vshll.u32 %v3482, 16
      %v3564 = vrot.slane %v3562, 5
      %v3565 = vor.u32 %v3561, %v3564
      %v3566 = vrot.slane %v3565, 4
      %v3568 = vshll.u32 %v3483, 16
      %v3570 = vrot.slane %v3568, 5
      %v3571 = vsel %vm451, %v3566, %v3570
      %v3573 = vshrl.u32 %v3484, 16
      %v3575 = vrot.slane %v3573, 4
      %v3576 = vshll.u32 %v3484, 16
      %v3578 = vrot.slane %v3576, 5
      %v3579 = vor.u32 %v3575, %v3578
      %v3580 = vrot.slane %v3579, 4
      %v3582 = vshll.u32 %v3485, 16
      %v3584 = vrot.slane %v3582, 5
      %v3585 = vsel %vm451, %v3580, %v3584
      %v3587 = vshrl.u32 %v3486, 16
      %v3589 = vrot.slane %v3587, 4
      %v3590 = vshll.u32 %v3486, 16
      %v3592 = vrot.slane %v3590, 5
      %v3593 = vor.u32 %v3589, %v3592
      %v3594 = vrot.slane %v3593, 4
      %v3596 = vshll.u32 %v3487, 16
      %v3598 = vrot.slane %v3596, 5
      %v3599 = vsel %vm451, %v3594, %v3598
      %s3600 = scalar_lea.vmem %s3, 448
      %v3601 = vld [vmem:[%s3600] sm:$0xf]
      %v3602 = vld [vmem:[%s3600 + $0x4] sm:$0xf]
      %v3603 = vld [vmem:[%s3600 + $0x8] sm:$0xf]
      %v3604 = vld [vmem:[%s3600 + $0xc] sm:$0xf]
      %v3605 = vld [vmem:[%s3600 + $0x10] sm:$0xf]
      %v3606 = vld [vmem:[%s3600 + $0x14] sm:$0xf]
      %v3607 = vld [vmem:[%s3600 + $0x18] sm:$0xf]
      %v3608 = vld [vmem:[%s3600 + $0x1c] sm:$0xf]
      %v3609 = vld [vmem:[%s3600 + $0x20] sm:$0xf]
      %v3610 = vld [vmem:[%s3600 + $0x24] sm:$0xf]
      %v3611 = vld [vmem:[%s3600 + $0x28] sm:$0xf]
      %v3612 = vld [vmem:[%s3600 + $0x2c] sm:$0xf]
      %v3613 = vld [vmem:[%s3600 + $0x30] sm:$0xf]
      %v3614 = vld [vmem:[%s3600 + $0x34] sm:$0xf]
      %v3615 = vld [vmem:[%s3600 + $0x38] sm:$0xf]
      %v3616 = vld [vmem:[%s3600 + $0x3c] sm:$0xf]
      %v3617 = vunpack.c.l.b16 %v3501
      %v3618 = vunpack.c.l.b16 %v3515
      %v3619 = vunpack.c.l.b16 %v3529
      %v3620 = vunpack.c.l.b16 %v3543
      %v3621 = vunpack.c.l.b16 %v3557
      %v3622 = vunpack.c.l.b16 %v3571
      %v3623 = vunpack.c.l.b16 %v3585
      %v3624 = vunpack.c.l.b16 %v3599
      %v3625 = vpack.c.b16 %v3618, %v3617
      %v3626 = vpack.c.b16 %v3620, %v3619
      %v3627 = vpack.c.b16 %v3622, %v3621
      %v3628 = vpack.c.b16 %v3624, %v3623
      %v3649 = vunpack.c.l.b16 %v3601
      %v3650 = vunpack.c.l.b16 %v3602
      %v3651 = vunpack.c.l.b16 %v3603
      %v3652 = vunpack.c.l.b16 %v3604
      %v3653 = vunpack.c.l.b16 %v3605
      %v3654 = vunpack.c.l.b16 %v3606
      %v3655 = vunpack.c.l.b16 %v3607
      %v3656 = vunpack.c.l.b16 %v3608
      %v3657 = vunpack.c.l.b16 %v3609
      %v3658 = vunpack.c.l.b16 %v3610
      %v3659 = vunpack.c.l.b16 %v3611
      %v3660 = vunpack.c.l.b16 %v3612
      %v3661 = vunpack.c.l.b16 %v3613
      %v3662 = vunpack.c.l.b16 %v3614
      %v3663 = vunpack.c.l.b16 %v3615
      %v3664 = vunpack.c.l.b16 %v3616
      %v3665 = vpack.c.b16 %v3650, %v3649
      %v3666 = vpack.c.b16 %v3652, %v3651
      %v3667 = vpack.c.b16 %v3654, %v3653
      %v3668 = vpack.c.b16 %v3656, %v3655
      %v3669 = vpack.c.b16 %v3658, %v3657
      %v3670 = vpack.c.b16 %v3660, %v3659
      %v3671 = vpack.c.b16 %v3662, %v3661
      %v3672 = vpack.c.b16 %v3664, %v3663
      %3681 = vmatpush.bf16.msra.mxu0 %v3672
      %3682 = vmatpush.bf16.msra.mxu0 %v3671
      %3683 = vmatpush.bf16.msra.mxu0 %v3670
      %3684 = vmatpush.bf16.msra.mxu0 %v3669
      %3685 = vmatpush.bf16.msra.mxu0 %v3668
      %3686 = vmatpush.bf16.msra.mxu0 %v3667
      %3687 = vmatpush.bf16.msra.mxu0 %v3666
      %3688 = vmatpush.bf16.msra.mxu0 %v3665
      %3689 = vmatmul.bf16.gmra.mxu0 %v3625
      %v3690 = vpop.f32.mrf.mxu0
      %v3691 = vadd.f32 0.0, %v3690
      %v3692 = vpop.f32.mrf.mxu0
      %v3693 = vadd.f32 0.0, %v3692
      %3694 = vmatmul.bf16.gmra.mxu0 %v3626
      %v3695 = vpop.f32.mrf.mxu0
      %v3696 = vadd.f32 0.0, %v3695
      %v3697 = vpop.f32.mrf.mxu0
      %v3698 = vadd.f32 0.0, %v3697
      %3699 = vmatmul.bf16.gmra.mxu0 %v3627
      %v3700 = vpop.f32.mrf.mxu0
      %v3701 = vadd.f32 0.0, %v3700
      %v3702 = vpop.f32.mrf.mxu0
      %v3703 = vadd.f32 0.0, %v3702
      %3704 = vmatmul.bf16.gmra.mxu0 %v3628
      %v3705 = vpop.f32.mrf.mxu0
      %v3706 = vadd.f32 0.0, %v3705
      %v3707 = vpop.f32.mrf.mxu0
      %v3708 = vadd.f32 0.0, %v3707
      %3709 = vdwg.mxu0
      %v3710 = vadd.f32 %v3464, %v3691
      %v3711 = vadd.f32 %v3465, %v3693
      %v3712 = vadd.f32 %v3466, %v3696
      %v3713 = vadd.f32 %v3467, %v3698
      %v3714 = vadd.f32 %v3468, %v3701
      %v3715 = vadd.f32 %v3469, %v3703
      %v3716 = vadd.f32 %v3470, %v3706
      %v3717 = vadd.f32 %v3471, %v3708
      %v3718 = vld [vmem:[%s3337] sm:$0xe]
      %v3719 = vld [vmem:[%s3337 + $0x8] sm:$0xe]
      %v3720 = vld [vmem:[%s3337 + $0x10] sm:$0xe]
      %v3721 = vld [vmem:[%s3337 + $0x18] sm:$0xe]
      %v3722 = vld [vmem:[%s3337 + $0x20] sm:$0xe]
      %v3723 = vld [vmem:[%s3337 + $0x28] sm:$0xe]
      %v3724 = vld [vmem:[%s3337 + $0x30] sm:$0xe]
      %v3725 = vld [vmem:[%s3337 + $0x38] sm:$0xe]
      %v3742 = vrot.slane %v3718, 5
      %v3743 = vrot.slane %v3742, 4
      %v3744 = vrot.slane %v3473, 5
      %v3745 = vsel %vm801, %v3743, %v3744
      %v3746 = vrot.slane %v3719, 5
      %v3747 = vrot.slane %v3746, 4
      %v3748 = vrot.slane %v3475, 5
      %v3749 = vsel %vm801, %v3747, %v3748
      %v3750 = vrot.slane %v3720, 5
      %v3751 = vrot.slane %v3750, 4
      %v3752 = vrot.slane %v3477, 5
      %v3753 = vsel %vm801, %v3751, %v3752
      %v3754 = vrot.slane %v3721, 5
      %v3755 = vrot.slane %v3754, 4
      %v3756 = vrot.slane %v3479, 5
      %v3757 = vsel %vm801, %v3755, %v3756
      %v3758 = vrot.slane %v3722, 5
      %v3759 = vrot.slane %v3758, 4
      %v3760 = vrot.slane %v3481, 5
      %v3761 = vsel %vm801, %v3759, %v3760
      %v3762 = vrot.slane %v3723, 5
      %v3763 = vrot.slane %v3762, 4
      %v3764 = vrot.slane %v3483, 5
      %v3765 = vsel %vm801, %v3763, %v3764
      %v3766 = vrot.slane %v3724, 5
      %v3767 = vrot.slane %v3766, 4
      %v3768 = vrot.slane %v3485, 5
      %v3769 = vsel %vm801, %v3767, %v3768
      %v3770 = vrot.slane %v3725, 5
      %v3771 = vrot.slane %v3770, 4
      %v3772 = vrot.slane %v3487, 5
      %v3773 = vsel %vm801, %v3771, %v3772
      %s3774 = scalar_lea.vmem %s3, 512
      %v3775 = vld [vmem:[%s3774] sm:$0xf]
      %v3776 = vld [vmem:[%s3774 + $0x4] sm:$0xf]
      %v3777 = vld [vmem:[%s3774 + $0x8] sm:$0xf]
      %v3778 = vld [vmem:[%s3774 + $0xc] sm:$0xf]
      %v3779 = vld [vmem:[%s3774 + $0x10] sm:$0xf]
      %v3780 = vld [vmem:[%s3774 + $0x14] sm:$0xf]
      %v3781 = vld [vmem:[%s3774 + $0x18] sm:$0xf]
      %v3782 = vld [vmem:[%s3774 + $0x1c] sm:$0xf]
      %v3783 = vld [vmem:[%s3774 + $0x20] sm:$0xf]
      %v3784 = vld [vmem:[%s3774 + $0x24] sm:$0xf]
      %v3785 = vld [vmem:[%s3774 + $0x28] sm:$0xf]
      %v3786 = vld [vmem:[%s3774 + $0x2c] sm:$0xf]
      %v3787 = vld [vmem:[%s3774 + $0x30] sm:$0xf]
      %v3788 = vld [vmem:[%s3774 + $0x34] sm:$0xf]
      %v3789 = vld [vmem:[%s3774 + $0x38] sm:$0xf]
      %v3790 = vld [vmem:[%s3774 + $0x3c] sm:$0xf]
      %v3791 = vunpack.c.l.b16 %v3745
      %v3792 = vunpack.c.l.b16 %v3749
      %v3793 = vunpack.c.l.b16 %v3753
      %v3794 = vunpack.c.l.b16 %v3757
      %v3795 = vunpack.c.l.b16 %v3761
      %v3796 = vunpack.c.l.b16 %v3765
      %v3797 = vunpack.c.l.b16 %v3769
      %v3798 = vunpack.c.l.b16 %v3773
      %v3799 = vpack.c.b16 %v3792, %v3791
      %v3800 = vpack.c.b16 %v3794, %v3793
      %v3801 = vpack.c.b16 %v3796, %v3795
      %v3802 = vpack.c.b16 %v3798, %v3797
      %v3823 = vunpack.c.l.b16 %v3775
      %v3824 = vunpack.c.l.b16 %v3776
      %v3825 = vunpack.c.l.b16 %v3777
      %v3826 = vunpack.c.l.b16 %v3778
      %v3827 = vunpack.c.l.b16 %v3779
      %v3828 = vunpack.c.l.b16 %v3780
      %v3829 = vunpack.c.l.b16 %v3781
      %v3830 = vunpack.c.l.b16 %v3782
      %v3831 = vunpack.c.l.b16 %v3783
      %v3832 = vunpack.c.l.b16 %v3784
      %v3833 = vunpack.c.l.b16 %v3785
      %v3834 = vunpack.c.l.b16 %v3786
      %v3835 = vunpack.c.l.b16 %v3787
      %v3836 = vunpack.c.l.b16 %v3788
      %v3837 = vunpack.c.l.b16 %v3789
      %v3838 = vunpack.c.l.b16 %v3790
      %v3839 = vpack.c.b16 %v3824, %v3823
      %v3840 = vpack.c.b16 %v3826, %v3825
      %v3841 = vpack.c.b16 %v3828, %v3827
      %v3842 = vpack.c.b16 %v3830, %v3829
      %v3843 = vpack.c.b16 %v3832, %v3831
      %v3844 = vpack.c.b16 %v3834, %v3833
      %v3845 = vpack.c.b16 %v3836, %v3835
      %v3846 = vpack.c.b16 %v3838, %v3837
      %3855 = vmatpush.bf16.msra.mxu0 %v3846
      %3856 = vmatpush.bf16.msra.mxu0 %v3845
      %3857 = vmatpush.bf16.msra.mxu0 %v3844
      %3858 = vmatpush.bf16.msra.mxu0 %v3843
      %3859 = vmatpush.bf16.msra.mxu0 %v3842
      %3860 = vmatpush.bf16.msra.mxu0 %v3841
      %3861 = vmatpush.bf16.msra.mxu0 %v3840
      %3862 = vmatpush.bf16.msra.mxu0 %v3839
      %3863 = vmatmul.bf16.gmra.mxu0 %v3799
      %v3864 = vpop.f32.mrf.mxu0
      %v3865 = vadd.f32 0.0, %v3864
      %v3866 = vpop.f32.mrf.mxu0
      %v3867 = vadd.f32 0.0, %v3866
      %3868 = vmatmul.bf16.gmra.mxu0 %v3800
      %v3869 = vpop.f32.mrf.mxu0
      %v3870 = vadd.f32 0.0, %v3869
      %v3871 = vpop.f32.mrf.mxu0
      %v3872 = vadd.f32 0.0, %v3871
      %3873 = vmatmul.bf16.gmra.mxu0 %v3801
      %v3874 = vpop.f32.mrf.mxu0
      %v3875 = vadd.f32 0.0, %v3874
      %v3876 = vpop.f32.mrf.mxu0
      %v3877 = vadd.f32 0.0, %v3876
      %3878 = vmatmul.bf16.gmra.mxu0 %v3802
      %v3879 = vpop.f32.mrf.mxu0
      %v3880 = vadd.f32 0.0, %v3879
      %v3881 = vpop.f32.mrf.mxu0
      %v3882 = vadd.f32 0.0, %v3881
      %3883 = vdwg.mxu0
      %v3884 = vadd.f32 %v3710, %v3865
      %v3885 = vadd.f32 %v3711, %v3867
      %v3886 = vadd.f32 %v3712, %v3870
      %v3887 = vadd.f32 %v3713, %v3872
      %v3888 = vadd.f32 %v3714, %v3875
      %v3889 = vadd.f32 %v3715, %v3877
      %v3890 = vadd.f32 %v3716, %v3880
      %v3891 = vadd.f32 %v3717, %v3882
      %v3892 = vld [vmem:[%s4] sm:$0x1]
      %v3894 = vperm.slane %v3892, 0
      %v3896 = vadd.f32 %v3884, %v3894
      %v3897 = vadd.f32 %v3885, %v3894
      %v3898 = vadd.f32 %v3886, %v3894
      %v3899 = vadd.f32 %v3887, %v3894
      %v3900 = vadd.f32 %v3888, %v3894
      %v3901 = vadd.f32 %v3889, %v3894
      %v3902 = vadd.f32 %v3890, %v3894
      %v3903 = vadd.f32 %v3891, %v3894
      %vm3904 = vcmp.ge.f32.partialorder %v3896, 0.0
      %vm3905 = vcmp.ge.f32.partialorder %v3897, 0.0
      %vm3906 = vcmp.ge.f32.partialorder %v3898, 0.0
      %vm3907 = vcmp.ge.f32.partialorder %v3899, 0.0
      %vm3908 = vcmp.ge.f32.partialorder %v3900, 0.0
      %vm3909 = vcmp.ge.f32.partialorder %v3901, 0.0
      %vm3910 = vcmp.ge.f32.partialorder %v3902, 0.0
      %vm3911 = vcmp.ge.f32.partialorder %v3903, 0.0
      %v3912 = vmul.f32 %v3896, 0.01
      %v3913 = vmul.f32 %v3897, 0.01
      %v3914 = vmul.f32 %v3898, 0.01
      %v3915 = vmul.f32 %v3899, 0.01
      %v3916 = vmul.f32 %v3900, 0.01
      %v3917 = vmul.f32 %v3901, 0.01
      %v3918 = vmul.f32 %v3902, 0.01
      %v3919 = vmul.f32 %v3903, 0.01
      %v3920 = vsel %vm3904, %v3896, %v3912
      %v3921 = vsel %vm3905, %v3897, %v3913
      %v3922 = vsel %vm3906, %v3898, %v3914
      %v3923 = vsel %vm3907, %v3899, %v3915
      %v3924 = vsel %vm3908, %v3900, %v3916
      %v3925 = vsel %vm3909, %v3901, %v3917
      %v3926 = vsel %vm3910, %v3902, %v3918
      %v3927 = vsel %vm3911, %v3903, %v3919
      %v3928 = vld [vmem:[%s247] sm:$0xf]
      %v3929 = vld [vmem:[%s247 + $0x4] sm:$0xf]
      %v3930 = vld [vmem:[%s247 + $0x8] sm:$0xf]
      %v3931 = vld [vmem:[%s247 + $0xc] sm:$0xf]
      %v3932 = vld [vmem:[%s247 + $0x10] sm:$0xf]
      %v3933 = vld [vmem:[%s247 + $0x14] sm:$0xf]
      %v3934 = vld [vmem:[%s247 + $0x18] sm:$0xf]
      %v3935 = vld [vmem:[%s247 + $0x1c] sm:$0xf]
      %v3936 = vunpack.c.l.bf16 %v3928
      %v3937 = vunpack.c.l.bf16 %v3929
      %v3938 = vunpack.c.l.bf16 %v3930
      %v3939 = vunpack.c.l.bf16 %v3931
      %v3940 = vunpack.c.l.bf16 %v3932
      %v3941 = vunpack.c.l.bf16 %v3933
      %v3942 = vunpack.c.l.bf16 %v3934
      %v3943 = vunpack.c.l.bf16 %v3935
      %s3944 = sld [smem:[#allocation4]]
      %v3945 = vstv %s3944
      %v3946 = vmul.f32 %v3945, %v3920
      %v3947 = vmul.f32 %v3945, %v3921
      %v3948 = vmul.f32 %v3945, %v3922
      %v3949 = vmul.f32 %v3945, %v3923
      %v3950 = vmul.f32 %v3945, %v3924
      %v3951 = vmul.f32 %v3945, %v3925
      %v3952 = vmul.f32 %v3945, %v3926
      %v3953 = vmul.f32 %v3945, %v3927
      %v3954 = vadd.f32 %v3936, %v3946
      %v3955 = vadd.f32 %v3937, %v3947
      %v3956 = vadd.f32 %v3938, %v3948
      %v3957 = vadd.f32 %v3939, %v3949
      %v3958 = vadd.f32 %v3940, %v3950
      %v3959 = vadd.f32 %v3941, %v3951
      %v3960 = vadd.f32 %v3942, %v3952
      %v3961 = vadd.f32 %v3943, %v3953
      %v3962 = vpack.c.bf16 %v3954, %v3954
      %v3963 = vpack.c.bf16 %v3955, %v3955
      %v3964 = vpack.c.bf16 %v3956, %v3956
      %v3965 = vpack.c.bf16 %v3957, %v3957
      %v3966 = vpack.c.bf16 %v3958, %v3958
      %v3967 = vpack.c.bf16 %v3959, %v3959
      %v3968 = vpack.c.bf16 %v3960, %v3960
      %v3969 = vpack.c.bf16 %v3961, %v3961
      %3970 = vst [vmem:[%s252] sm:$0xf] %v3962
      %3971 = vst [vmem:[%s252 + $0x4] sm:$0xf] %v3963
      %3972 = vst [vmem:[%s252 + $0x8] sm:$0xf] %v3964
      %3973 = vst [vmem:[%s252 + $0xc] sm:$0xf] %v3965
      %3974 = vst [vmem:[%s252 + $0x10] sm:$0xf] %v3966
      %3975 = vst [vmem:[%s252 + $0x14] sm:$0xf] %v3967
      %3976 = vst [vmem:[%s252 + $0x18] sm:$0xf] %v3968
      %3977 = vst [vmem:[%s252 + $0x1c] sm:$0xf] %v3969
      %p3978 = scmp.lt.s32.totalorder %s18, 1
      %s3979 = scalar_select %p3978, %s18, 1
      %s3980 = smul.addr %s3979, 8
      %s3981 = smul.addr %s3980, 4
      %s3982 = scalar_lea.vmem %s6, %s3981
      // Predicated region
      $region45: #{unet_forward.9} parent=43 // pred_check
        %p3983 = pneg %p167
      $region46: #{unet_forward.9} parent=43 // pred_check_branch
        %3985 = sbr.rel (%p3983) target = $region48
      $region47: #{unet_forward.9} parent=43 // pred_region
        _
      $region48: #{unet_forward.9} parent=43 // pred_fallthru
        _
    $region44: #{unet_forward.9} parent=5 // pred_fallthru
      _
    %p3986 = scmp.le.s32.totalorder 2, %s13
    // Predicated region
    $region49: #{unet_forward.9} parent=5 // pred_check
      %p3987 = pneg %p3986
    $region50: #{unet_forward.9} parent=5 // pred_check_branch
      %3989 = sbr.rel (%p3987) target = $region52
    $region51: #{unet_forward.9} parent=5 // pred_region
      %s3990 = ssub.s32 %s13, 2
      // Predicated region
      $region53: #{unet_forward.9} parent=51 // pred_check
        %p3991 = pneg %p173
      $region54: #{unet_forward.9} parent=51 // pred_check_branch
        %3993 = sbr.rel (%p3991) target = $region56
      $region55: #{unet_forward.9} parent=51 // pred_region
        %p3994 = scmp.lt.s32.totalorder %s19, 1
        %s3995 = scalar_select %p3994, %s19, 1
        %s3996 = smul.addr %s3995, 8
        %s3997 = smul.addr %s3996, 4
        %s3998 = scalar_lea.vmem %s6, %s3997
      $region56: #{unet_forward.9} parent=51 // pred_fallthru
        _
    $region52: #{unet_forward.9} parent=5 // pred_fallthru
      _
  $region6: #{unet_forward.9} parent=0 // loop_footer
    %s17 = sadd.s32 1, %s13
  $region7: #{unet_forward.9} parent=0 // loop_footer_branch
    %12 = sbr.rel target = $region3
  $region8: #{unet_forward.9} parent=0 // loop_exit
    _

</llo_original>
